<compile_context>
chip_gen: v7x
topology: tpu7x:2x2x1
jax: 0.10.0
libtpu: 0.0.40
codegen_flags: <defaults>
</compile_context>

<pallas_src>
import numpy as np
import jax
import jax.numpy as jnp
from jax.experimental import pallas as pl
from jax.experimental.pallas import tpu as pltpu

# ----------------------------- configuration ------------------------------ #
SEQ_LEN    = 16
LABEL_LEN  = 8             # = SEQ_LEN // 2
PRED_LEN   = 8
ENC_IN     = 7
DEC_IN     = 7
C_OUT      = 7
D_MODEL    = 32
N_HEADS    = 8
D_FF       = 32
MODES      = 4
E_LAYERS   = 2
D_LAYERS   = 1
MOVING_AVG = 5             # single odd kernel -> series_decomp
MARK_DIM   = 4             # freq='h', embed='timeF'
BATCH      = 2

L_DEC  = SEQ_LEN // 2 + PRED_LEN            # 16 (== SEQ_LEN, asserted)
E_HEAD = D_MODEL // N_HEADS                 # 4
M      = min(MODES, SEQ_LEN // 2)           # 4 (all four mode counts equal)

BL  = BATCH * SEQ_LEN                       # 32 (== BATCH * L_DEC == D_MODEL)
BM  = BATCH * M                             # 8
BHM = BATCH * N_HEADS * M                   # 64
ED  = E_HEAD * D_MODEL                      # 128

CIN  = 8                                    # channels padded 7 -> 8
CMRK = 8                                    # mark dim padded 4 -> 8
CPO  = 8                                    # output channels padded 7 -> 8

MM_DTYPE = jnp.bfloat16                     # matmul-input dtype (f32 accumulate)

# ----------------------- packed-slab static layouts ------------------------ #
def _mk_layout(entries, align=16):
    offs, nrows, n = {}, {}, 0
    for name, r in entries:
        offs[name] = n
        nrows[name] = r
        n += -(-r // align) * align
    return offs, nrows, n


_W32_ENTRIES = (
    [('ts_init', 2 * BL), ('a_enc', BL), ('a_dec', BL),
     ('mt_enc', BL), ('mt_dec', BL),
     ('sp_enc', BL), ('sm_enc', BL), ('sp_dec', BL), ('sm_dec', BL),
     ('f_enc', 2 * BM), ('f_dec', 2 * BM), ('s_fold', ED)]
    + [(f'e{l}_{w}', D_MODEL) for l in range(E_LAYERS)
       for w in ('wq', 'wo', 'c1', 'c2')]
    + [('d_wq', D_MODEL), ('d_wo', D_MODEL),
       ('x_wq', D_MODEL), ('x_wk', D_MODEL), ('x_wo', D_MODEL),
       ('d_c1', D_MODEL), ('d_c2', D_FF)]
    + [(f'{s}_conv{j}', CIN) for s in ('enc', 'dec') for j in range(3)]
    + [('enc_temp', CMRK), ('dec_temp', CMRK)]
)
W32_OFF, W32_NROWS, W32_ROWS = _mk_layout(_W32_ENTRIES)

_I16_ENTRIES = [('irit_enc', BL), ('irit_dec', BL), ('rep2', 2 * BHM)]
I16_OFF, I16_NROWS, I16_ROWS = _mk_layout(_I16_ENTRIES)

BIAS_NAMES = tuple([f'e{l}_{b}' for l in range(E_LAYERS) for b in ('bq', 'bo')]
                   + ['d_bq', 'd_bo', 'x_bq', 'x_bk', 'x_bo',
                      'enc_nw', 'enc_nb', 'dec_nw', 'dec_nb'])
BIAS_IDX = {n: i for i, n in enumerate(BIAS_NAMES)}
NB = len(BIAS_NAMES)

# mode-mix weight slab: 3 blocks (enc shared / dec-self / cross), each WA + WB
MMW_BLOCK_ROWS = 2 * BM                     # 16 rows per WA (or WB) slab


# ------------------------------ fused kernel ------------------------------ #
def _fedformer_kernel(xe_ref, xme_ref, xmd_ref, w32_ref, i16_ref, pcat_ref,
                      mmw_ref, hmask_ref, blkmask_ref, bias_ref, proj_ref,
                      pb_ref, out_ref):
    f32 = jnp.float32

    def mm(a, b):                       # MXU matmul, bf16 in / f32 accumulate
        return jnp.dot(a.astype(MM_DTYPE), b.astype(MM_DTYPE),
                       preferred_element_type=f32)

    def mm_t(a, b):                     # a @ b.T (contract last dims)
        return jax.lax.dot_general(a.astype(MM_DTYPE), b.astype(MM_DTYPE),
                                   (((1,), (1,)), ((), ())),
                                   preferred_element_type=f32)

    def w32(name):
        off = W32_OFF[name]
        return w32_ref[off:off + W32_NROWS[name], :]

    def i16(name):
        off = I16_OFF[name]
        return i16_ref[off:off + I16_NROWS[name], :]

    def bias(name):
        return bias_ref[BIAS_IDX[name]]                     # [1, D] f32

    def swap_ri(x):                     # swap the [real; imag] row halves
        h = x.shape[0] // 2
        return jnp.concatenate([x[h:], x[:h]], axis=0)

    def erf(x):
        # Abramowitz & Stegun 7.1.26 (exp-only), max abs error ~1.5e-7
        p = 0.3275911
        a1, a2, a3, a4, a5 = (0.254829592, -0.284496736, 1.421413741,
                              -1.453152027, 1.061405429)
        ax = jnp.abs(x)
        t = 1.0 / (1.0 + p * ax)
        poly = ((((a5 * t + a4) * t + a3) * t + a2) * t + a1) * t
        y = 1.0 - poly * jnp.exp(-ax * ax)
        return jnp.where(x >= 0.0, y, -y)

    def gelu(x):                        # exact (erf) GELU, matching F.gelu
        return 0.5 * x * (1.0 + erf(x * 0.7071067811865476))

    def ctanh(ar, ai):
        # complex tanh: (sinh 2a + i sin 2b)/(cosh 2a + cos 2b), overflow-safe
        t2a = jnp.tanh(2.0 * ar)
        ea = jnp.exp(-2.0 * jnp.abs(ar))
        sech2a = 2.0 * ea / (1.0 + ea * ea)
        c2b = jnp.cos(2.0 * ai)
        s2b = jnp.sin(2.0 * ai)
        den = 1.0 + c2b * sech2a
        return t2a / den, s2b * sech2a / den

    def my_layernorm(x, wname, bname, mt):
        mu = jnp.mean(x, axis=-1, keepdims=True)
        xc = x - mu
        var = jnp.mean(xc * xc, axis=-1, keepdims=True)
        xh = xc * jax.lax.rsqrt(var + 1e-5) * bias(wname) + bias(bname)
        return xh - mm(mt, xh)          # my_Layernorm: subtract per-b time mean

    def embed(x, mark, stream):
        # TokenEmbedding (Conv1d k=3 circular, no bias) + TimeFeatureEmbedding
        sp = w32('sp_' + stream)
        sm = w32('sm_' + stream)
        tok = (mm(mm(sp, x), w32(stream + '_conv0'))
               + mm(x, w32(stream + '_conv1'))
               + mm(mm(sm, x), w32(stream + '_conv2')))
        return tok + mm(mark, w32(stream + '_temp'))        # dropout = identity

    def mode_mix_cat(x_cat, block):
        # x_cat: [2*BM, D] stacked [re; im]; returns [2*BM, D] stacked [re; im]
        # einsum('bhem,heom->bhom') via selection matmul + lane-dense complex
        # elementwise mix + one K=128 fold matmul.
        a_cat = mm(x_cat, pcat_ref[...])                    # [2*BM, ED]
        wa = mmw_ref[(2 * block + 0) * MMW_BLOCK_ROWS:
                     (2 * block + 1) * MMW_BLOCK_ROWS, :]
        wb = mmw_ref[(2 * block + 1) * MMW_BLOCK_ROWS:
                     (2 * block + 2) * MMW_BLOCK_ROWS, :]
        out_cat = a_cat * wa + swap_ri(a_cat) * wb          # [2*BM, ED] f32 VPU
        return mm(out_cat, w32('s_fold'))                   # [2*BM, D]

    def fourier_self_attn(x, wq, bq, wo, bo, fmat, irit, block):
        # AutoCorrelationLayer(FourierBlock); k/v projections are unused by the
        # reference FourierBlock, so they are skipped (output identical).
        q = mm(x, w32(wq)) + bias(bq)                       # [BL, D]
        x_cat = mm(w32(fmat), q)                            # [2*BM, D]  rFFT
        folded = mode_mix_cat(x_cat, block)                 # [2*BM, D]
        t = mm(i16(irit), folded)                           # [BL, D]    irFFT
        return mm(t, w32(wo)) + bias(bo)

    def cross_attention(xq_in, xkv_in):
        q = mm(xq_in, w32('x_wq')) + bias('x_bq')           # [BL, D]
        k = mm(xkv_in, w32('x_wk')) + bias('x_bk')          # [BL, D]
        q_cat = mm(w32('f_dec'), q)                         # [2*BM, D]
        k_cat = mm(w32('f_enc'), k)                         # [2*BM, D]
        # replicate K per head and mask to head channels -> block-structured K
        k_blk = mm(i16('rep2'), k_cat) * hmask_ref[...]     # [2*BHM, D]
        k_blk_r = k_blk[:BHM]
        k_blk_i = k_blk[BHM:]
        # complex scores A = Q_f K_f^T for all (b, h) at once: [BM, BHM]
        s1 = mm_t(q_cat, k_blk_r)                           # [2*BM, BHM]
        s2 = mm_t(q_cat, k_blk_i)
        blk = blkmask_ref[...]                              # zero cross-batch
        a_r = (s1[:BM] - s2[BM:]) * blk
        a_i = (s2[:BM] + s1[BM:]) * blk
        t_r, t_i = ctanh(a_r, a_i)                          # single EUP pass
        t_cat = jnp.concatenate([t_r, t_i], axis=0)         # [2*BM, BHM]
        v1 = mm(t_cat, k_blk_r)                             # [2*BM, D]
        v2 = mm(t_cat, k_blk_i)
        c_r = v1[:BM] - v2[BM:]
        c_i = v2[:BM] + v1[BM:]
        v_cat = jnp.concatenate([c_r, c_i], axis=0)         # [2*BM, D]
        folded = mode_mix_cat(v_cat, 2)     # cross weights (1/(D*D) folded in)
        xt = mm(i16('irit_dec'), folded)                    # [BL, D]
        return mm(xt, w32('x_wo')) + bias('x_bo')

    # ----------------------------- load inputs ----------------------------- #
    xe = xe_ref[...]                                        # [BL, CIN]
    xme = xme_ref[...]                                      # [BL, CMRK]
    xmd = xmd_ref[...]                                      # [BL, CMRK]

    # initial decomposition + seasonal / trend init (one stacked matmul)
    ts = mm(w32('ts_init'), xe)                             # [2*BL, CIN]
    trend_init = ts[:BL]
    seasonal_init = ts[BL:]

    # -------------------------------- encoder ------------------------------ #
    enc = embed(xe, xme, 'enc')
    a_enc = w32('a_enc')
    for l in range(E_LAYERS):
        att = fourier_self_attn(enc, f'e{l}_wq', f'e{l}_bq',
                                f'e{l}_wo', f'e{l}_bo', 'f_enc', 'irit_enc', 0)
        s = enc + att
        x = s - mm(a_enc, s)                                # series_decomp (res)
        y = mm(gelu(mm(x, w32(f'e{l}_c1'))), w32(f'e{l}_c2'))
        s = x + y
        enc = s - mm(a_enc, s)
    enc = my_layernorm(enc, 'enc_nw', 'enc_nb', w32('mt_enc'))

    # ---------------------- decoder (single layer) ------------------------- #
    dec = embed(seasonal_init, xmd, 'dec')
    a_dec = w32('a_dec')
    att = fourier_self_attn(dec, 'd_wq', 'd_bq', 'd_wo', 'd_bo',
                            'f_dec', 'irit_dec', 1)
    s = dec + att
    t1 = mm(a_dec, s)
    x = s - t1
    catt = cross_attention(x, enc)
    s = x + catt
    t2 = mm(a_dec, s)
    x = s - t2
    y = mm(gelu(mm(x, w32('d_c1'))), w32('d_c2'))
    s = x + y
    t3 = mm(a_dec, s)
    x = s - t3

    tsum = t1 + t2 + t3
    pw = proj_ref[0 * D_MODEL:1 * D_MODEL, :]
    pc0 = proj_ref[1 * D_MODEL:2 * D_MODEL, :]
    pc1 = proj_ref[2 * D_MODEL:3 * D_MODEL, :]
    pc2 = proj_ref[3 * D_MODEL:4 * D_MODEL, :]
    residual_trend = (mm(mm(w32('sp_dec'), tsum), pc0)      # Conv1d k=3 circular
                      + mm(tsum, pc1)
                      + mm(mm(w32('sm_dec'), tsum), pc2))
    trend = trend_init + residual_trend

    x = my_layernorm(x, 'dec_nw', 'dec_nb', w32('mt_dec'))
    seasonal_part = mm(x, pw) + pb_ref[...]
    out_ref[...] = trend + seasonal_part


# ---------------------------- host-side constants -------------------------- #
def _moving_avg_matrix(L, k):
    pad = (k - 1) // 2
    A = np.zeros((L, L), np.float64)
    for t in range(L):
        for j in range(k):
            s = min(max(t - pad + j, 0), L - 1)      # replicate-pad boundaries
            A[t, s] += 1.0 / k
    return A


def _dft_coeffs(L, modes):
    """Real-matrix rFFT (first M modes) and irFFT (only first M modes nonzero)."""
    l = np.arange(L)[:, None].astype(np.float64)
    m = np.arange(modes)[None, :].astype(np.float64)
    ang = 2.0 * np.pi * l * m / L                    # [L, M]
    fre_t = np.cos(ang).T                            # [M, L]
    fim_t = (-np.sin(ang)).T                         # [M, L]
    w = np.ones((1, modes))
    w[0, 1:] = 2.0
    ir_t = w * np.cos(ang) / L                       # [L, M]
    ii_t = -(w * np.sin(ang)) / L                    # [L, M]
    return fre_t, fim_t, ir_t, ii_t


class _KeyGen:
    def __init__(self, key):
        self.key = key

    def __call__(self):
        self.key, sub = jax.random.split(self.key)
        return sub


def init_model(key):
    assert SEQ_LEN == L_DEC, "layout assumes equal enc/dec lengths"
    assert BL == D_MODEL, "unified 32-col slab assumes B*SEQ_LEN == d_model"
    assert min(MODES, SEQ_LEN // 2) == M and min(MODES, L_DEC // 2) == M
    assert D_FF == D_MODEL and ENC_IN == DEC_IN and D_LAYERS == 1
    assert ED == E_HEAD * D_MODEL

    kg = _KeyGen(key)
    D = D_MODEL

    def dense(shape, scale=0.1):
        return np.asarray(scale * jax.random.normal(kg(), shape), np.float32)

    def fb_uniform():
        s = 1.0 / (D * D)
        wr = np.asarray(s * jax.random.uniform(kg(), (N_HEADS, E_HEAD, E_HEAD, M)), np.float32)
        wi = np.asarray(s * jax.random.uniform(kg(), (N_HEADS, E_HEAD, E_HEAD, M)), np.float32)
        return wr, wi

    eyeB = np.eye(BATCH)

    # ---- structural matrices -------------------------------------------- #
    A_e = _moving_avg_matrix(SEQ_LEN, MOVING_AVG)
    A_d = _moving_avg_matrix(L_DEC, MOVING_AVG)
    T_single = np.zeros((L_DEC, SEQ_LEN))
    S_single = np.zeros((L_DEC, SEQ_LEN))
    for t in range(LABEL_LEN):
        src = SEQ_LEN - LABEL_LEN + t
        T_single[t, :] = A_e[src, :]
        S_single[t, :] = -A_e[src, :]
        S_single[t, src] += 1.0
    T_single[LABEL_LEN:, :] = 1.0 / SEQ_LEN          # tiled time-mean rows

    fre_e, fim_e, ir_e, ii_e = _dft_coeffs(SEQ_LEN, M)
    fre_d, fim_d, ir_d, ii_d = _dft_coeffs(L_DEC, M)

    w32 = {
        'ts_init': np.concatenate([np.kron(eyeB, T_single),
                                   np.kron(eyeB, S_single)], axis=0),
        'a_enc': np.kron(eyeB, A_e),
        'a_dec': np.kron(eyeB, A_d),
        'mt_enc': np.kron(eyeB, np.full((SEQ_LEN, SEQ_LEN), 1.0 / SEQ_LEN)),
        'mt_dec': np.kron(eyeB, np.full((L_DEC, L_DEC), 1.0 / L_DEC)),
        'sp_enc': np.kron(eyeB, np.roll(np.eye(SEQ_LEN), -1, axis=1)),   # t-1
        'sm_enc': np.kron(eyeB, np.roll(np.eye(SEQ_LEN), 1, axis=1)),    # t+1
        'sp_dec': np.kron(eyeB, np.roll(np.eye(L_DEC), -1, axis=1)),
        'sm_dec': np.kron(eyeB, np.roll(np.eye(L_DEC), 1, axis=1)),
        'f_enc': np.concatenate([np.kron(eyeB, fre_e), np.kron(eyeB, fim_e)], 0),
        'f_dec': np.concatenate([np.kron(eyeB, fre_d), np.kron(eyeB, fim_d)], 0),
        's_fold': np.tile(np.eye(D), (E_HEAD, 1)),
    }

    # ---- learned dense weights ------------------------------------------- #
    for l in range(E_LAYERS):
        w32[f'e{l}_wq'] = dense((D, D))
        w32[f'e{l}_wo'] = dense((D, D))
        w32[f'e{l}_c1'] = dense((D, D_FF))
        w32[f'e{l}_c2'] = dense((D_FF, D))
    for name in ('d_wq', 'd_wo', 'x_wq', 'x_wk', 'x_wo'):
        w32[name] = dense((D, D))
    w32['d_c1'] = dense((D, D_FF))
    w32['d_c2'] = dense((D_FF, D))

    def pad_rows(mat, rows):
        out = np.zeros((rows, mat.shape[1]), np.float32)
        out[:mat.shape[0]] = mat
        return out

    conv_e = dense((3 * ENC_IN, D)).reshape(3, ENC_IN, D)
    conv_d = dense((3 * DEC_IN, D)).reshape(3, DEC_IN, D)
    for j in range(3):
        w32[f'enc_conv{j}'] = pad_rows(conv_e[j], CIN)
        w32[f'dec_conv{j}'] = pad_rows(conv_d[j], CIN)
    w32['enc_temp'] = pad_rows(dense((MARK_DIM, D)), CMRK)
    w32['dec_temp'] = pad_rows(dense((MARK_DIM, D)), CMRK)

    W32 = np.zeros((W32_ROWS, D), np.float32)
    for name, r in _W32_ENTRIES:
        mat = np.asarray(w32[name], np.float32)
        assert mat.shape == (r, D), (name, mat.shape)
        W32[W32_OFF[name]:W32_OFF[name] + r] = mat

    # ---- 16-column slab: irFFT [irt|iit] + per-head replication ----------- #
    REP = np.zeros((BHM, BM), np.float64)
    for b in range(BATCH):
        for h in range(N_HEADS):
            for mm_ in range(M):
                REP[(b * N_HEADS + h) * M + mm_, b * M + mm_] = 1.0
    i16 = {
        'irit_enc': np.concatenate([np.kron(eyeB, ir_e), np.kron(eyeB, ii_e)], 1),
        'irit_dec': np.concatenate([np.kron(eyeB, ir_d), np.kron(eyeB, ii_d)], 1),
        'rep2': np.kron(np.eye(2), REP),
    }
    I16 = np.zeros((I16_ROWS, 2 * BM), np.float32)
    for name, r in _I16_ENTRIES:
        mat = np.asarray(i16[name], np.float32)
        assert mat.shape == (r, 2 * BM), (name, mat.shape)
        I16[I16_OFF[name]:I16_OFF[name] + r] = mat

    # ---- mode-mix selection / fold / weight slabs -------------------------- #
    PCAT = np.zeros((D, ED), np.float32)
    for e in range(E_HEAD):
        for h in range(N_HEADS):
            PCAT[h * E_HEAD + e,
                 e * D + h * E_HEAD:e * D + (h + 1) * E_HEAD] = 1.0

    def mode_slabs(extra_scale=1.0):
        wr, wi = fb_uniform()

        def widen(w):                     # [H,E,O,M] -> [BM, ED] (e slowest)
            ww = np.transpose(w.astype(np.float64), (3, 1, 0, 2)).reshape(M, ED)
            return np.tile(ww, (BATCH, 1))

        Wr = widen(wr) * extra_scale
        Wi = widen(wi) * extra_scale
        return (np.concatenate([Wr, Wr], axis=0),
                np.concatenate([-Wi, Wi], axis=0))

    wa_e, wb_e = mode_slabs()                         # shared across enc layers
    wa_d, wb_d = mode_slabs()                         # decoder self-attention
    wa_x, wb_x = mode_slabs(extra_scale=1.0 / (D * D))  # cross (scale folded in)
    MMW = np.concatenate([wa_e, wb_e, wa_d, wb_d, wa_x, wb_x], 0).astype(np.float32)
    assert MMW.shape == (6 * MMW_BLOCK_ROWS, ED)

    # ---- head masks / block masks for the vectorized cross attention ------ #
    HM1 = np.zeros((BHM, D), np.float32)
    for b in range(BATCH):
        for h in range(N_HEADS):
            HM1[(b * N_HEADS + h) * M:(b * N_HEADS + h) * M + M,
                h * E_HEAD:(h + 1) * E_HEAD] = 1.0
    HMASK = np.concatenate([HM1, HM1], axis=0)        # [2*BHM, D]

    BLK = np.zeros((BM, BHM), np.float32)
    for b in range(BATCH):
        BLK[b * M:(b + 1) * M, b * N_HEADS * M:(b + 1) * N_HEADS * M] = 1.0

    # ---- output projections ------------------------------------------------ #
    def pad_cols(mat):
        return np.concatenate(
            [mat, np.zeros((mat.shape[0], CPO - C_OUT), np.float32)], axis=1)

    PW = dense((D, C_OUT))
    PC = dense((3 * D, C_OUT)).reshape(3, D, C_OUT)
    PROJ = np.concatenate([pad_cols(PW), pad_cols(PC[0]),
                           pad_cols(PC[1]), pad_cols(PC[2])], axis=0)
    PB = np.zeros((1, CPO), np.float32)

    BIAS = np.zeros((NB, 1, D), np.float32)
    BIAS[BIAS_IDX['enc_nw'], 0, :] = 1.0              # layernorm weights
    BIAS[BIAS_IDX['dec_nw'], 0, :] = 1.0

    return {
        'W32': jnp.asarray(W32, MM_DTYPE),
        'I16': jnp.asarray(I16, MM_DTYPE),
        'PCAT': jnp.asarray(PCAT, MM_DTYPE),
        'MMW': jnp.asarray(MMW, jnp.float32),
        'HMASK': jnp.asarray(HMASK, jnp.float32),
        'BLKMASK': jnp.asarray(BLK, jnp.float32),
        'BIAS': jnp.asarray(BIAS, jnp.float32),
        'PROJ': jnp.asarray(PROJ, MM_DTYPE),
        'PB': jnp.asarray(PB, jnp.float32),
    }


# --------------------------------- wrapper --------------------------------- #
def forward(model, x_enc, x_mark_enc, x_dec, x_mark_dec):
    """use_mask=False path of Model.forward (x_dec values are unused there)."""
    del x_dec
    B = x_enc.shape[0]
    assert B == BATCH
    xe = jnp.pad(x_enc.reshape(B * SEQ_LEN, ENC_IN).astype(jnp.float32),
                 ((0, 0), (0, CIN - ENC_IN)))
    xme = jnp.pad(x_mark_enc.reshape(B * SEQ_LEN, MARK_DIM).astype(jnp.float32),
                  ((0, 0), (0, CMRK - MARK_DIM)))
    xmd = jnp.pad(x_mark_dec.reshape(B * L_DEC, MARK_DIM).astype(jnp.float32),
                  ((0, 0), (0, CMRK - MARK_DIM)))

    operands = (xe, xme, xmd, model['W32'], model['I16'], model['PCAT'],
                model['MMW'], model['HMASK'], model['BLKMASK'], model['BIAS'],
                model['PROJ'], model['PB'])

    out = pl.pallas_call(
        _fedformer_kernel,
        in_specs=[pl.BlockSpec(memory_space=pltpu.MemorySpace.VMEM)
                  for _ in operands],
        out_specs=pl.BlockSpec(memory_space=pltpu.MemorySpace.VMEM),
        out_shape=jax.ShapeDtypeStruct((BL, CPO), jnp.float32),
    )(*operands)
    return out.reshape(B, L_DEC, CPO)[:, -PRED_LEN:, :C_OUT]


# ----------------------------------- main ---------------------------------- #
if __name__ == "__main__":
    key = jax.random.PRNGKey(0)
    k1, k2, k3, k4 = jax.random.split(key, 4)
    x_enc = jax.random.normal(k1, (BATCH, SEQ_LEN, ENC_IN), jnp.float32)
    x_mark_enc = jax.random.normal(k2, (BATCH, SEQ_LEN, MARK_DIM), jnp.float32)
    x_dec = jax.random.normal(k3, (BATCH, L_DEC, DEC_IN), jnp.float32)
    x_mark_dec = jax.random.normal(k4, (BATCH, L_DEC, MARK_DIM), jnp.float32)

    model = init_model(jax.random.PRNGKey(42))
    fwd = jax.jit(forward)
    out = jax.block_until_ready(fwd(model, x_enc, x_mark_enc, x_dec, x_mark_dec))
    assert out.shape == (BATCH, PRED_LEN, C_OUT), out.shape
    assert bool(jnp.all(jnp.isfinite(out)))
    print("KERNEL_OK")
</pallas_src>

<mosaic_0001>
module attributes {stable_mosaic.version = 11 : i64} {
  func.func @_fedformer_kernel(%arg0: memref<32x8xf32, #tpu.memory_space<vmem>>, %arg1: memref<32x8xf32, #tpu.memory_space<vmem>>, %arg2: memref<32x8xf32, #tpu.memory_space<vmem>>, %arg3: memref<1088x32xbf16, #tpu.memory_space<vmem>>, %arg4: memref<192x16xbf16, #tpu.memory_space<vmem>>, %arg5: memref<32x128xbf16, #tpu.memory_space<vmem>>, %arg6: memref<96x128xf32, #tpu.memory_space<vmem>>, %arg7: memref<128x32xf32, #tpu.memory_space<vmem>>, %arg8: memref<8x64xf32, #tpu.memory_space<vmem>>, %arg9: memref<13x1x32xf32, #tpu.memory_space<vmem>>, %arg10: memref<128x8xbf16, #tpu.memory_space<vmem>>, %arg11: memref<1x8xf32, #tpu.memory_space<vmem>>, %arg12: memref<32x8xf32, #tpu.memory_space<vmem>>) attributes {dimension_semantics = [], scalar_prefetch = 0 : i64, scratch_operands = 0 : i64, tpu.core_type = #tpu.core_type<tc>} {
    %c0 = arith.constant 0 : index
    %c0_0 = arith.constant 0 : index
    %0 = vector.load %arg0[%c0, %c0_0] : memref<32x8xf32, #tpu.memory_space<vmem>>, vector<32x8xf32>
    %c0_1 = arith.constant 0 : index
    %c0_2 = arith.constant 0 : index
    %1 = vector.load %arg1[%c0_1, %c0_2] : memref<32x8xf32, #tpu.memory_space<vmem>>, vector<32x8xf32>
    %c0_3 = arith.constant 0 : index
    %c0_4 = arith.constant 0 : index
    %2 = vector.load %arg2[%c0_3, %c0_4] : memref<32x8xf32, #tpu.memory_space<vmem>>, vector<32x8xf32>
    %c0_5 = arith.constant 0 : index
    %c0_6 = arith.constant 0 : index
    %3 = vector.load %arg3[%c0_5, %c0_6] : memref<1088x32xbf16, #tpu.memory_space<vmem>>, vector<64x32xbf16>
    %4 = arith.truncf %0 : vector<32x8xf32> to vector<32x8xbf16>
    %cst = arith.constant dense<0.000000e+00> : vector<64x8xf32>
    %5 = tpu.matmul %3, %4, %cst {dimension_numbers = #tpu.dot_dimension_numbers<[1], [0], [0], [1], [0, 0, 1, 1], [], []>} : vector<64x32xbf16>, vector<32x8xbf16>, vector<64x8xf32> -> vector<64x8xf32>
    %6 = vector.extract_strided_slice %5 {offsets = [0, 0], sizes = [32, 8], strides = [1, 1]} : vector<64x8xf32> to vector<32x8xf32>
    %7 = vector.extract_strided_slice %5 {offsets = [32, 0], sizes = [32, 8], strides = [1, 1]} : vector<64x8xf32> to vector<32x8xf32>
    %c192 = arith.constant 192 : index
    %c0_7 = arith.constant 0 : index
    %8 = vector.load %arg3[%c192, %c0_7] : memref<1088x32xbf16, #tpu.memory_space<vmem>>, vector<32x32xbf16>
    %c224 = arith.constant 224 : index
    %c0_8 = arith.constant 0 : index
    %9 = vector.load %arg3[%c224, %c0_8] : memref<1088x32xbf16, #tpu.memory_space<vmem>>, vector<32x32xbf16>
    %10 = arith.truncf %0 : vector<32x8xf32> to vector<32x8xbf16>
    %cst_9 = arith.constant dense<0.000000e+00> : vector<32x8xf32>
    %11 = tpu.matmul %8, %10, %cst_9 {dimension_numbers = #tpu.dot_dimension_numbers<[1], [0], [0], [1], [0, 0, 1, 1], [], []>} : vector<32x32xbf16>, vector<32x8xbf16>, vector<32x8xf32> -> vector<32x8xf32>
    %c960 = arith.constant 960 : index
    %c0_10 = arith.constant 0 : index
    %12 = vector.load %arg3[%c960, %c0_10] : memref<1088x32xbf16, #tpu.memory_space<vmem>>, vector<8x32xbf16>
    %13 = arith.truncf %11 : vector<32x8xf32> to vector<32x8xbf16>
    %cst_11 = arith.constant dense<0.000000e+00> : vector<32x32xf32>
    %14 = tpu.matmul %13, %12, %cst_11 {dimension_numbers = #tpu.dot_dimension_numbers<[1], [0], [0], [1], [0, 0, 1, 1], [], []>} : vector<32x8xbf16>, vector<8x32xbf16>, vector<32x32xf32> -> vector<32x32xf32>
    %c976 = arith.constant 976 : index
    %c0_12 = arith.constant 0 : index
    %15 = vector.load %arg3[%c976, %c0_12] : memref<1088x32xbf16, #tpu.memory_space<vmem>>, vector<8x32xbf16>
    %16 = arith.truncf %0 : vector<32x8xf32> to vector<32x8xbf16>
    %cst_13 = arith.constant dense<0.000000e+00> : vector<32x32xf32>
    %17 = tpu.matmul %16, %15, %cst_13 {dimension_numbers = #tpu.dot_dimension_numbers<[1], [0], [0], [1], [0, 0, 1, 1], [], []>} : vector<32x8xbf16>, vector<8x32xbf16>, vector<32x32xf32> -> vector<32x32xf32>
    %18 = arith.addf %14, %17 : vector<32x32xf32>
    %19 = arith.truncf %0 : vector<32x8xf32> to vector<32x8xbf16>
    %cst_14 = arith.constant dense<0.000000e+00> : vector<32x8xf32>
    %20 = tpu.matmul %9, %19, %cst_14 {dimension_numbers = #tpu.dot_dimension_numbers<[1], [0], [0], [1], [0, 0, 1, 1], [], []>} : vector<32x32xbf16>, vector<32x8xbf16>, vector<32x8xf32> -> vector<32x8xf32>
    %c992 = arith.constant 992 : index
    %c0_15 = arith.constant 0 : index
    %21 = vector.load %arg3[%c992, %c0_15] : memref<1088x32xbf16, #tpu.memory_space<vmem>>, vector<8x32xbf16>
    %22 = arith.truncf %20 : vector<32x8xf32> to vector<32x8xbf16>
    %cst_16 = arith.constant dense<0.000000e+00> : vector<32x32xf32>
    %23 = tpu.matmul %22, %21, %cst_16 {dimension_numbers = #tpu.dot_dimension_numbers<[1], [0], [0], [1], [0, 0, 1, 1], [], []>} : vector<32x8xbf16>, vector<8x32xbf16>, vector<32x32xf32> -> vector<32x32xf32>
    %24 = arith.addf %18, %23 : vector<32x32xf32>
    %c1056 = arith.constant 1056 : index
    %c0_17 = arith.constant 0 : index
    %25 = vector.load %arg3[%c1056, %c0_17] : memref<1088x32xbf16, #tpu.memory_space<vmem>>, vector<8x32xbf16>
    %26 = arith.truncf %1 : vector<32x8xf32> to vector<32x8xbf16>
    %cst_18 = arith.constant dense<0.000000e+00> : vector<32x32xf32>
    %27 = tpu.matmul %26, %25, %cst_18 {dimension_numbers = #tpu.dot_dimension_numbers<[1], [0], [0], [1], [0, 0, 1, 1], [], []>} : vector<32x8xbf16>, vector<8x32xbf16>, vector<32x32xf32> -> vector<32x32xf32>
    %28 = arith.addf %24, %27 : vector<32x32xf32>
    %c64 = arith.constant 64 : index
    %c0_19 = arith.constant 0 : index
    %29 = vector.load %arg3[%c64, %c0_19] : memref<1088x32xbf16, #tpu.memory_space<vmem>>, vector<32x32xbf16>
    %c480 = arith.constant 480 : index
    %c0_20 = arith.constant 0 : index
    %30 = vector.load %arg3[%c480, %c0_20] : memref<1088x32xbf16, #tpu.memory_space<vmem>>, vector<32x32xbf16>
    %31 = arith.truncf %28 : vector<32x32xf32> to vector<32x32xbf16>
    %cst_21 = arith.constant dense<0.000000e+00> : vector<32x32xf32>
    %32 = tpu.matmul %31, %30, %cst_21 {dimension_numbers = #tpu.dot_dimension_numbers<[1], [0], [0], [1], [0, 0, 1, 1], [], []>} : vector<32x32xbf16>, vector<32x32xbf16>, vector<32x32xf32> -> vector<32x32xf32>
    %c0_22 = arith.constant 0 : index
    %c0_23 = arith.constant 0 : index
    %c0_24 = arith.constant 0 : index
    %33 = vector.load %arg9[%c0_22, %c0_23, %c0_24] : memref<13x1x32xf32, #tpu.memory_space<vmem>>, vector<1x1x32xf32>
    %34 = vector.shape_cast %33 : vector<1x1x32xf32> to vector<1x32xf32>
    %35 = vector.broadcast %34 : vector<1x32xf32> to vector<32x32xf32>
    %36 = arith.addf %32, %35 : vector<32x32xf32>
    %c320 = arith.constant 320 : index
    %c0_25 = arith.constant 0 : index
    %37 = vector.load %arg3[%c320, %c0_25] : memref<1088x32xbf16, #tpu.memory_space<vmem>>, vector<16x32xbf16>
    %38 = arith.truncf %36 : vector<32x32xf32> to vector<32x32xbf16>
    %cst_26 = arith.constant dense<0.000000e+00> : vector<16x32xf32>
    %39 = tpu.matmul %37, %38, %cst_26 {dimension_numbers = #tpu.dot_dimension_numbers<[1], [0], [0], [1], [0, 0, 1, 1], [], []>} : vector<16x32xbf16>, vector<32x32xbf16>, vector<16x32xf32> -> vector<16x32xf32>
    %c0_27 = arith.constant 0 : index
    %c0_28 = arith.constant 0 : index
    %40 = vector.load %arg5[%c0_27, %c0_28] : memref<32x128xbf16, #tpu.memory_space<vmem>>, vector<32x128xbf16>
    %41 = arith.truncf %39 : vector<16x32xf32> to vector<16x32xbf16>
    %cst_29 = arith.constant dense<0.000000e+00> : vector<16x128xf32>
    %42 = tpu.matmul %41, %40, %cst_29 {dimension_numbers = #tpu.dot_dimension_numbers<[1], [0], [0], [1], [0, 0, 1, 1], [], []>} : vector<16x32xbf16>, vector<32x128xbf16>, vector<16x128xf32> -> vector<16x128xf32>
    %c0_30 = arith.constant 0 : index
    %c0_31 = arith.constant 0 : index
    %43 = vector.load %arg6[%c0_30, %c0_31] : memref<96x128xf32, #tpu.memory_space<vmem>>, vector<16x128xf32>
    %c16 = arith.constant 16 : index
    %c0_32 = arith.constant 0 : index
    %44 = vector.load %arg6[%c16, %c0_32] : memref<96x128xf32, #tpu.memory_space<vmem>>, vector<16x128xf32>
    %45 = arith.mulf %42, %43 : vector<16x128xf32>
    %46 = vector.extract_strided_slice %42 {offsets = [8, 0], sizes = [8, 128], strides = [1, 1]} : vector<16x128xf32> to vector<8x128xf32>
    %47 = vector.extract_strided_slice %42 {offsets = [0, 0], sizes = [8, 128], strides = [1, 1]} : vector<16x128xf32> to vector<8x128xf32>
    %48 = tpu.concatenate %46, %47 in 0 : vector<8x128xf32>, vector<8x128xf32> -> vector<16x128xf32>
    %49 = arith.mulf %48, %44 : vector<16x128xf32>
    %50 = arith.addf %45, %49 : vector<16x128xf32>
    %c352 = arith.constant 352 : index
    %c0_33 = arith.constant 0 : index
    %51 = vector.load %arg3[%c352, %c0_33] : memref<1088x32xbf16, #tpu.memory_space<vmem>>, vector<128x32xbf16>
    %52 = arith.truncf %50 : vector<16x128xf32> to vector<16x128xbf16>
    %cst_34 = arith.constant dense<0.000000e+00> : vector<16x32xf32>
    %53 = tpu.matmul %52, %51, %cst_34 {dimension_numbers = #tpu.dot_dimension_numbers<[1], [0], [0], [1], [0, 0, 1, 1], [], []>} : vector<16x128xbf16>, vector<128x32xbf16>, vector<16x32xf32> -> vector<16x32xf32>
    %c0_35 = arith.constant 0 : index
    %c0_36 = arith.constant 0 : index
    %54 = vector.load %arg4[%c0_35, %c0_36] : memref<192x16xbf16, #tpu.memory_space<vmem>>, vector<32x16xbf16>
    %55 = arith.truncf %53 : vector<16x32xf32> to vector<16x32xbf16>
    %cst_37 = arith.constant dense<0.000000e+00> : vector<32x32xf32>
    %56 = tpu.matmul %54, %55, %cst_37 {dimension_numbers = #tpu.dot_dimension_numbers<[1], [0], [0], [1], [0, 0, 1, 1], [], []>} : vector<32x16xbf16>, vector<16x32xbf16>, vector<32x32xf32> -> vector<32x32xf32>
    %c512 = arith.constant 512 : index
    %c0_38 = arith.constant 0 : index
    %57 = vector.load %arg3[%c512, %c0_38] : memref<1088x32xbf16, #tpu.memory_space<vmem>>, vector<32x32xbf16>
    %58 = arith.truncf %56 : vector<32x32xf32> to vector<32x32xbf16>
    %cst_39 = arith.constant dense<0.000000e+00> : vector<32x32xf32>
    %59 = tpu.matmul %58, %57, %cst_39 {dimension_numbers = #tpu.dot_dimension_numbers<[1], [0], [0], [1], [0, 0, 1, 1], [], []>} : vector<32x32xbf16>, vector<32x32xbf16>, vector<32x32xf32> -> vector<32x32xf32>
    %c1 = arith.constant 1 : index
    %c0_40 = arith.constant 0 : index
    %c0_41 = arith.constant 0 : index
    %60 = vector.load %arg9[%c1, %c0_40, %c0_41] : memref<13x1x32xf32, #tpu.memory_space<vmem>>, vector<1x1x32xf32>
    %61 = vector.shape_cast %60 : vector<1x1x32xf32> to vector<1x32xf32>
    %62 = vector.broadcast %61 : vector<1x32xf32> to vector<32x32xf32>
    %63 = arith.addf %59, %62 : vector<32x32xf32>
    %64 = arith.addf %28, %63 : vector<32x32xf32>
    %65 = arith.truncf %64 : vector<32x32xf32> to vector<32x32xbf16>
    %cst_42 = arith.constant dense<0.000000e+00> : vector<32x32xf32>
    %66 = tpu.matmul %29, %65, %cst_42 {dimension_numbers = #tpu.dot_dimension_numbers<[1], [0], [0], [1], [0, 0, 1, 1], [], []>} : vector<32x32xbf16>, vector<32x32xbf16>, vector<32x32xf32> -> vector<32x32xf32>
    %67 = arith.subf %64, %66 : vector<32x32xf32>
    %c544 = arith.constant 544 : index
    %c0_43 = arith.constant 0 : index
    %68 = vector.load %arg3[%c544, %c0_43] : memref<1088x32xbf16, #tpu.memory_space<vmem>>, vector<32x32xbf16>
    %69 = arith.truncf %67 : vector<32x32xf32> to vector<32x32xbf16>
    %cst_44 = arith.constant dense<0.000000e+00> : vector<32x32xf32>
    %70 = tpu.matmul %69, %68, %cst_44 {dimension_numbers = #tpu.dot_dimension_numbers<[1], [0], [0], [1], [0, 0, 1, 1], [], []>} : vector<32x32xbf16>, vector<32x32xbf16>, vector<32x32xf32> -> vector<32x32xf32>
    %cst_45 = arith.constant 5.000000e-01 : f32
    %71 = vector.broadcast %cst_45 : f32 to vector<32x32xf32>
    %72 = arith.mulf %71, %70 : vector<32x32xf32>
    %cst_46 = arith.constant 0.707106769 : f32
    %73 = vector.broadcast %cst_46 : f32 to vector<32x32xf32>
    %74 = arith.mulf %70, %73 : vector<32x32xf32>
    %75 = math.absf %74 : vector<32x32xf32>
    %cst_47 = arith.constant 0.327591091 : f32
    %76 = vector.broadcast %cst_47 : f32 to vector<32x32xf32>
    %77 = arith.mulf %76, %75 : vector<32x32xf32>
    %cst_48 = arith.constant 1.000000e+00 : f32
    %78 = vector.broadcast %cst_48 : f32 to vector<32x32xf32>
    %79 = arith.addf %78, %77 : vector<32x32xf32>
    %cst_49 = arith.constant 1.000000e+00 : f32
    %80 = vector.broadcast %cst_49 : f32 to vector<32x32xf32>
    %81 = arith.divf %80, %79 : vector<32x32xf32>
    %cst_50 = arith.constant 1.06140542 : f32
    %82 = vector.broadcast %cst_50 : f32 to vector<32x32xf32>
    %83 = arith.mulf %82, %81 : vector<32x32xf32>
    %cst_51 = arith.constant -1.45315206 : f32
    %84 = vector.broadcast %cst_51 : f32 to vector<32x32xf32>
    %85 = arith.addf %83, %84 : vector<32x32xf32>
    %86 = arith.mulf %85, %81 : vector<32x32xf32>
    %cst_52 = arith.constant 1.42141378 : f32
    %87 = vector.broadcast %cst_52 : f32 to vector<32x32xf32>
    %88 = arith.addf %86, %87 : vector<32x32xf32>
    %89 = arith.mulf %88, %81 : vector<32x32xf32>
    %cst_53 = arith.constant -0.284496725 : f32
    %90 = vector.broadcast %cst_53 : f32 to vector<32x32xf32>
    %91 = arith.addf %89, %90 : vector<32x32xf32>
    %92 = arith.mulf %91, %81 : vector<32x32xf32>
    %cst_54 = arith.constant 0.254829586 : f32
    %93 = vector.broadcast %cst_54 : f32 to vector<32x32xf32>
    %94 = arith.addf %92, %93 : vector<32x32xf32>
    %95 = arith.mulf %94, %81 : vector<32x32xf32>
    %cst_55 = arith.constant 0.000000e+00 : f32
    %96 = vector.broadcast %cst_55 : f32 to vector<32x32xf32>
    %97 = arith.subf %96, %75 : vector<32x32xf32>
    %98 = arith.mulf %97, %75 : vector<32x32xf32>
    %99 = math.exp %98 : vector<32x32xf32>
    %100 = arith.mulf %95, %99 : vector<32x32xf32>
    %cst_56 = arith.constant 1.000000e+00 : f32
    %101 = vector.broadcast %cst_56 : f32 to vector<32x32xf32>
    %102 = arith.subf %101, %100 : vector<32x32xf32>
    %cst_57 = arith.constant 0.000000e+00 : f32
    %103 = vector.broadcast %cst_57 : f32 to vector<32x32xf32>
    %104 = arith.cmpf oge, %74, %103 : vector<32x32xf32>
    %cst_58 = arith.constant 0.000000e+00 : f32
    %105 = vector.broadcast %cst_58 : f32 to vector<32x32xf32>
    %106 = arith.subf %105, %102 : vector<32x32xf32>
    %107 = arith.select %104, %102, %106 : vector<32x32xi1>, vector<32x32xf32>
    %cst_59 = arith.constant 1.000000e+00 : f32
    %108 = vector.broadcast %cst_59 : f32 to vector<32x32xf32>
    %109 = arith.addf %108, %107 : vector<32x32xf32>
    %110 = arith.mulf %72, %109 : vector<32x32xf32>
    %c576 = arith.constant 576 : index
    %c0_60 = arith.constant 0 : index
    %111 = vector.load %arg3[%c576, %c0_60] : memref<1088x32xbf16, #tpu.memory_space<vmem>>, vector<32x32xbf16>
    %112 = arith.truncf %110 : vector<32x32xf32> to vector<32x32xbf16>
    %cst_61 = arith.constant dense<0.000000e+00> : vector<32x32xf32>
    %113 = tpu.matmul %112, %111, %cst_61 {dimension_numbers = #tpu.dot_dimension_numbers<[1], [0], [0], [1], [0, 0, 1, 1], [], []>} : vector<32x32xbf16>, vector<32x32xbf16>, vector<32x32xf32> -> vector<32x32xf32>
    %114 = arith.addf %67, %113 : vector<32x32xf32>
    %115 = arith.truncf %114 : vector<32x32xf32> to vector<32x32xbf16>
    %cst_62 = arith.constant dense<0.000000e+00> : vector<32x32xf32>
    %116 = tpu.matmul %29, %115, %cst_62 {dimension_numbers = #tpu.dot_dimension_numbers<[1], [0], [0], [1], [0, 0, 1, 1], [], []>} : vector<32x32xbf16>, vector<32x32xbf16>, vector<32x32xf32> -> vector<32x32xf32>
    %117 = arith.subf %114, %116 : vector<32x32xf32>
    %c608 = arith.constant 608 : index
    %c0_63 = arith.constant 0 : index
    %118 = vector.load %arg3[%c608, %c0_63] : memref<1088x32xbf16, #tpu.memory_space<vmem>>, vector<32x32xbf16>
    %119 = arith.truncf %117 : vector<32x32xf32> to vector<32x32xbf16>
    %cst_64 = arith.constant dense<0.000000e+00> : vector<32x32xf32>
    %120 = tpu.matmul %119, %118, %cst_64 {dimension_numbers = #tpu.dot_dimension_numbers<[1], [0], [0], [1], [0, 0, 1, 1], [], []>} : vector<32x32xbf16>, vector<32x32xbf16>, vector<32x32xf32> -> vector<32x32xf32>
    %c2 = arith.constant 2 : index
    %c0_65 = arith.constant 0 : index
    %c0_66 = arith.constant 0 : index
    %121 = vector.load %arg9[%c2, %c0_65, %c0_66] : memref<13x1x32xf32, #tpu.memory_space<vmem>>, vector<1x1x32xf32>
    %122 = vector.shape_cast %121 : vector<1x1x32xf32> to vector<1x32xf32>
    %123 = vector.broadcast %122 : vector<1x32xf32> to vector<32x32xf32>
    %124 = arith.addf %120, %123 : vector<32x32xf32>
    %c320_67 = arith.constant 320 : index
    %c0_68 = arith.constant 0 : index
    %125 = vector.load %arg3[%c320_67, %c0_68] : memref<1088x32xbf16, #tpu.memory_space<vmem>>, vector<16x32xbf16>
    %126 = arith.truncf %124 : vector<32x32xf32> to vector<32x32xbf16>
    %cst_69 = arith.constant dense<0.000000e+00> : vector<16x32xf32>
    %127 = tpu.matmul %125, %126, %cst_69 {dimension_numbers = #tpu.dot_dimension_numbers<[1], [0], [0], [1], [0, 0, 1, 1], [], []>} : vector<16x32xbf16>, vector<32x32xbf16>, vector<16x32xf32> -> vector<16x32xf32>
    %c0_70 = arith.constant 0 : index
    %c0_71 = arith.constant 0 : index
    %128 = vector.load %arg5[%c0_70, %c0_71] : memref<32x128xbf16, #tpu.memory_space<vmem>>, vector<32x128xbf16>
    %129 = arith.truncf %127 : vector<16x32xf32> to vector<16x32xbf16>
    %cst_72 = arith.constant dense<0.000000e+00> : vector<16x128xf32>
    %130 = tpu.matmul %129, %128, %cst_72 {dimension_numbers = #tpu.dot_dimension_numbers<[1], [0], [0], [1], [0, 0, 1, 1], [], []>} : vector<16x32xbf16>, vector<32x128xbf16>, vector<16x128xf32> -> vector<16x128xf32>
    %c0_73 = arith.constant 0 : index
    %c0_74 = arith.constant 0 : index
    %131 = vector.load %arg6[%c0_73, %c0_74] : memref<96x128xf32, #tpu.memory_space<vmem>>, vector<16x128xf32>
    %c16_75 = arith.constant 16 : index
    %c0_76 = arith.constant 0 : index
    %132 = vector.load %arg6[%c16_75, %c0_76] : memref<96x128xf32, #tpu.memory_space<vmem>>, vector<16x128xf32>
    %133 = arith.mulf %130, %131 : vector<16x128xf32>
    %134 = vector.extract_strided_slice %130 {offsets = [8, 0], sizes = [8, 128], strides = [1, 1]} : vector<16x128xf32> to vector<8x128xf32>
    %135 = vector.extract_strided_slice %130 {offsets = [0, 0], sizes = [8, 128], strides = [1, 1]} : vector<16x128xf32> to vector<8x128xf32>
    %136 = tpu.concatenate %134, %135 in 0 : vector<8x128xf32>, vector<8x128xf32> -> vector<16x128xf32>
    %137 = arith.mulf %136, %132 : vector<16x128xf32>
    %138 = arith.addf %133, %137 : vector<16x128xf32>
    %c352_77 = arith.constant 352 : index
    %c0_78 = arith.constant 0 : index
    %139 = vector.load %arg3[%c352_77, %c0_78] : memref<1088x32xbf16, #tpu.memory_space<vmem>>, vector<128x32xbf16>
    %140 = arith.truncf %138 : vector<16x128xf32> to vector<16x128xbf16>
    %cst_79 = arith.constant dense<0.000000e+00> : vector<16x32xf32>
    %141 = tpu.matmul %140, %139, %cst_79 {dimension_numbers = #tpu.dot_dimension_numbers<[1], [0], [0], [1], [0, 0, 1, 1], [], []>} : vector<16x128xbf16>, vector<128x32xbf16>, vector<16x32xf32> -> vector<16x32xf32>
    %c0_80 = arith.constant 0 : index
    %c0_81 = arith.constant 0 : index
    %142 = vector.load %arg4[%c0_80, %c0_81] : memref<192x16xbf16, #tpu.memory_space<vmem>>, vector<32x16xbf16>
    %143 = arith.truncf %141 : vector<16x32xf32> to vector<16x32xbf16>
    %cst_82 = arith.constant dense<0.000000e+00> : vector<32x32xf32>
    %144 = tpu.matmul %142, %143, %cst_82 {dimension_numbers = #tpu.dot_dimension_numbers<[1], [0], [0], [1], [0, 0, 1, 1], [], []>} : vector<32x16xbf16>, vector<16x32xbf16>, vector<32x32xf32> -> vector<32x32xf32>
    %c640 = arith.constant 640 : index
    %c0_83 = arith.constant 0 : index
    %145 = vector.load %arg3[%c640, %c0_83] : memref<1088x32xbf16, #tpu.memory_space<vmem>>, vector<32x32xbf16>
    %146 = arith.truncf %144 : vector<32x32xf32> to vector<32x32xbf16>
    %cst_84 = arith.constant dense<0.000000e+00> : vector<32x32xf32>
    %147 = tpu.matmul %146, %145, %cst_84 {dimension_numbers = #tpu.dot_dimension_numbers<[1], [0], [0], [1], [0, 0, 1, 1], [], []>} : vector<32x32xbf16>, vector<32x32xbf16>, vector<32x32xf32> -> vector<32x32xf32>
    %c3 = arith.constant 3 : index
    %c0_85 = arith.constant 0 : index
    %c0_86 = arith.constant 0 : index
    %148 = vector.load %arg9[%c3, %c0_85, %c0_86] : memref<13x1x32xf32, #tpu.memory_space<vmem>>, vector<1x1x32xf32>
    %149 = vector.shape_cast %148 : vector<1x1x32xf32> to vector<1x32xf32>
    %150 = vector.broadcast %149 : vector<1x32xf32> to vector<32x32xf32>
    %151 = arith.addf %147, %150 : vector<32x32xf32>
    %152 = arith.addf %117, %151 : vector<32x32xf32>
    %153 = arith.truncf %152 : vector<32x32xf32> to vector<32x32xbf16>
    %cst_87 = arith.constant dense<0.000000e+00> : vector<32x32xf32>
    %154 = tpu.matmul %29, %153, %cst_87 {dimension_numbers = #tpu.dot_dimension_numbers<[1], [0], [0], [1], [0, 0, 1, 1], [], []>} : vector<32x32xbf16>, vector<32x32xbf16>, vector<32x32xf32> -> vector<32x32xf32>
    %155 = arith.subf %152, %154 : vector<32x32xf32>
    %c672 = arith.constant 672 : index
    %c0_88 = arith.constant 0 : index
    %156 = vector.load %arg3[%c672, %c0_88] : memref<1088x32xbf16, #tpu.memory_space<vmem>>, vector<32x32xbf16>
    %157 = arith.truncf %155 : vector<32x32xf32> to vector<32x32xbf16>
    %cst_89 = arith.constant dense<0.000000e+00> : vector<32x32xf32>
    %158 = tpu.matmul %157, %156, %cst_89 {dimension_numbers = #tpu.dot_dimension_numbers<[1], [0], [0], [1], [0, 0, 1, 1], [], []>} : vector<32x32xbf16>, vector<32x32xbf16>, vector<32x32xf32> -> vector<32x32xf32>
    %cst_90 = arith.constant 5.000000e-01 : f32
    %159 = vector.broadcast %cst_90 : f32 to vector<32x32xf32>
    %160 = arith.mulf %159, %158 : vector<32x32xf32>
    %cst_91 = arith.constant 0.707106769 : f32
    %161 = vector.broadcast %cst_91 : f32 to vector<32x32xf32>
    %162 = arith.mulf %158, %161 : vector<32x32xf32>
    %163 = math.absf %162 : vector<32x32xf32>
    %cst_92 = arith.constant 0.327591091 : f32
    %164 = vector.broadcast %cst_92 : f32 to vector<32x32xf32>
    %165 = arith.mulf %164, %163 : vector<32x32xf32>
    %cst_93 = arith.constant 1.000000e+00 : f32
    %166 = vector.broadcast %cst_93 : f32 to vector<32x32xf32>
    %167 = arith.addf %166, %165 : vector<32x32xf32>
    %cst_94 = arith.constant 1.000000e+00 : f32
    %168 = vector.broadcast %cst_94 : f32 to vector<32x32xf32>
    %169 = arith.divf %168, %167 : vector<32x32xf32>
    %cst_95 = arith.constant 1.06140542 : f32
    %170 = vector.broadcast %cst_95 : f32 to vector<32x32xf32>
    %171 = arith.mulf %170, %169 : vector<32x32xf32>
    %cst_96 = arith.constant -1.45315206 : f32
    %172 = vector.broadcast %cst_96 : f32 to vector<32x32xf32>
    %173 = arith.addf %171, %172 : vector<32x32xf32>
    %174 = arith.mulf %173, %169 : vector<32x32xf32>
    %cst_97 = arith.constant 1.42141378 : f32
    %175 = vector.broadcast %cst_97 : f32 to vector<32x32xf32>
    %176 = arith.addf %174, %175 : vector<32x32xf32>
    %177 = arith.mulf %176, %169 : vector<32x32xf32>
    %cst_98 = arith.constant -0.284496725 : f32
    %178 = vector.broadcast %cst_98 : f32 to vector<32x32xf32>
    %179 = arith.addf %177, %178 : vector<32x32xf32>
    %180 = arith.mulf %179, %169 : vector<32x32xf32>
    %cst_99 = arith.constant 0.254829586 : f32
    %181 = vector.broadcast %cst_99 : f32 to vector<32x32xf32>
    %182 = arith.addf %180, %181 : vector<32x32xf32>
    %183 = arith.mulf %182, %169 : vector<32x32xf32>
    %cst_100 = arith.constant 0.000000e+00 : f32
    %184 = vector.broadcast %cst_100 : f32 to vector<32x32xf32>
    %185 = arith.subf %184, %163 : vector<32x32xf32>
    %186 = arith.mulf %185, %163 : vector<32x32xf32>
    %187 = math.exp %186 : vector<32x32xf32>
    %188 = arith.mulf %183, %187 : vector<32x32xf32>
    %cst_101 = arith.constant 1.000000e+00 : f32
    %189 = vector.broadcast %cst_101 : f32 to vector<32x32xf32>
    %190 = arith.subf %189, %188 : vector<32x32xf32>
    %cst_102 = arith.constant 0.000000e+00 : f32
    %191 = vector.broadcast %cst_102 : f32 to vector<32x32xf32>
    %192 = arith.cmpf oge, %162, %191 : vector<32x32xf32>
    %cst_103 = arith.constant 0.000000e+00 : f32
    %193 = vector.broadcast %cst_103 : f32 to vector<32x32xf32>
    %194 = arith.subf %193, %190 : vector<32x32xf32>
    %195 = arith.select %192, %190, %194 : vector<32x32xi1>, vector<32x32xf32>
    %cst_104 = arith.constant 1.000000e+00 : f32
    %196 = vector.broadcast %cst_104 : f32 to vector<32x32xf32>
    %197 = arith.addf %196, %195 : vector<32x32xf32>
    %198 = arith.mulf %160, %197 : vector<32x32xf32>
    %c704 = arith.constant 704 : index
    %c0_105 = arith.constant 0 : index
    %199 = vector.load %arg3[%c704, %c0_105] : memref<1088x32xbf16, #tpu.memory_space<vmem>>, vector<32x32xbf16>
    %200 = arith.truncf %198 : vector<32x32xf32> to vector<32x32xbf16>
    %cst_106 = arith.constant dense<0.000000e+00> : vector<32x32xf32>
    %201 = tpu.matmul %200, %199, %cst_106 {dimension_numbers = #tpu.dot_dimension_numbers<[1], [0], [0], [1], [0, 0, 1, 1], [], []>} : vector<32x32xbf16>, vector<32x32xbf16>, vector<32x32xf32> -> vector<32x32xf32>
    %202 = arith.addf %155, %201 : vector<32x32xf32>
    %203 = arith.truncf %202 : vector<32x32xf32> to vector<32x32xbf16>
    %cst_107 = arith.constant dense<0.000000e+00> : vector<32x32xf32>
    %204 = tpu.matmul %29, %203, %cst_107 {dimension_numbers = #tpu.dot_dimension_numbers<[1], [0], [0], [1], [0, 0, 1, 1], [], []>} : vector<32x32xbf16>, vector<32x32xbf16>, vector<32x32xf32> -> vector<32x32xf32>
    %205 = arith.subf %202, %204 : vector<32x32xf32>
    %c128 = arith.constant 128 : index
    %c0_108 = arith.constant 0 : index
    %206 = vector.load %arg3[%c128, %c0_108] : memref<1088x32xbf16, #tpu.memory_space<vmem>>, vector<32x32xbf16>
    %cst_109 = arith.constant dense<0.000000e+00> : vector<32xf32>
    %207 = vector.multi_reduction <add>, %205, %cst_109 [1] : vector<32x32xf32> to vector<32xf32>
    %208 = vector.shape_cast %207 : vector<32xf32> to vector<32x1xf32>
    %cst_110 = arith.constant 3.200000e+01 : f32
    %209 = vector.broadcast %cst_110 : f32 to vector<32x1xf32>
    %210 = arith.divf %208, %209 : vector<32x1xf32>
    %211 = vector.broadcast %210 : vector<32x1xf32> to vector<32x32xf32>
    %212 = arith.subf %205, %211 : vector<32x32xf32>
    %213 = arith.mulf %212, %212 : vector<32x32xf32>
    %cst_111 = arith.constant dense<0.000000e+00> : vector<32xf32>
    %214 = vector.multi_reduction <add>, %213, %cst_111 [1] : vector<32x32xf32> to vector<32xf32>
    %215 = vector.shape_cast %214 : vector<32xf32> to vector<32x1xf32>
    %cst_112 = arith.constant 3.200000e+01 : f32
    %216 = vector.broadcast %cst_112 : f32 to vector<32x1xf32>
    %217 = arith.divf %215, %216 : vector<32x1xf32>
    %cst_113 = arith.constant 9.99999974E-6 : f32
    %218 = vector.broadcast %cst_113 : f32 to vector<32x1xf32>
    %219 = arith.addf %217, %218 : vector<32x1xf32>
    %220 = math.rsqrt %219 : vector<32x1xf32>
    %221 = vector.broadcast %220 : vector<32x1xf32> to vector<32x32xf32>
    %222 = arith.mulf %212, %221 : vector<32x32xf32>
    %c9 = arith.constant 9 : index
    %c0_114 = arith.constant 0 : index
    %c0_115 = arith.constant 0 : index
    %223 = vector.load %arg9[%c9, %c0_114, %c0_115] : memref<13x1x32xf32, #tpu.memory_space<vmem>>, vector<1x1x32xf32>
    %224 = vector.shape_cast %223 : vector<1x1x32xf32> to vector<1x32xf32>
    %225 = vector.broadcast %224 : vector<1x32xf32> to vector<32x32xf32>
    %226 = arith.mulf %222, %225 : vector<32x32xf32>
    %c10 = arith.constant 10 : index
    %c0_116 = arith.constant 0 : index
    %c0_117 = arith.constant 0 : index
    %227 = vector.load %arg9[%c10, %c0_116, %c0_117] : memref<13x1x32xf32, #tpu.memory_space<vmem>>, vector<1x1x32xf32>
    %228 = vector.shape_cast %227 : vector<1x1x32xf32> to vector<1x32xf32>
    %229 = vector.broadcast %228 : vector<1x32xf32> to vector<32x32xf32>
    %230 = arith.addf %226, %229 : vector<32x32xf32>
    %231 = arith.truncf %230 : vector<32x32xf32> to vector<32x32xbf16>
    %cst_118 = arith.constant dense<0.000000e+00> : vector<32x32xf32>
    %232 = tpu.matmul %206, %231, %cst_118 {dimension_numbers = #tpu.dot_dimension_numbers<[1], [0], [0], [1], [0, 0, 1, 1], [], []>} : vector<32x32xbf16>, vector<32x32xbf16>, vector<32x32xf32> -> vector<32x32xf32>
    %233 = arith.subf %230, %232 : vector<32x32xf32>
    %c256 = arith.constant 256 : index
    %c0_119 = arith.constant 0 : index
    %234 = vector.load %arg3[%c256, %c0_119] : memref<1088x32xbf16, #tpu.memory_space<vmem>>, vector<32x32xbf16>
    %c288 = arith.constant 288 : index
    %c0_120 = arith.constant 0 : index
    %235 = vector.load %arg3[%c288, %c0_120] : memref<1088x32xbf16, #tpu.memory_space<vmem>>, vector<32x32xbf16>
    %236 = arith.truncf %7 : vector<32x8xf32> to vector<32x8xbf16>
    %cst_121 = arith.constant dense<0.000000e+00> : vector<32x8xf32>
    %237 = tpu.matmul %234, %236, %cst_121 {dimension_numbers = #tpu.dot_dimension_numbers<[1], [0], [0], [1], [0, 0, 1, 1], [], []>} : vector<32x32xbf16>, vector<32x8xbf16>, vector<32x8xf32> -> vector<32x8xf32>
    %c1008 = arith.constant 1008 : index
    %c0_122 = arith.constant 0 : index
    %238 = vector.load %arg3[%c1008, %c0_122] : memref<1088x32xbf16, #tpu.memory_space<vmem>>, vector<8x32xbf16>
    %239 = arith.truncf %237 : vector<32x8xf32> to vector<32x8xbf16>
    %cst_123 = arith.constant dense<0.000000e+00> : vector<32x32xf32>
    %240 = tpu.matmul %239, %238, %cst_123 {dimension_numbers = #tpu.dot_dimension_numbers<[1], [0], [0], [1], [0, 0, 1, 1], [], []>} : vector<32x8xbf16>, vector<8x32xbf16>, vector<32x32xf32> -> vector<32x32xf32>
    %c1024 = arith.constant 1024 : index
    %c0_124 = arith.constant 0 : index
    %241 = vector.load %arg3[%c1024, %c0_124] : memref<1088x32xbf16, #tpu.memory_space<vmem>>, vector<8x32xbf16>
    %242 = arith.truncf %7 : vector<32x8xf32> to vector<32x8xbf16>
    %cst_125 = arith.constant dense<0.000000e+00> : vector<32x32xf32>
    %243 = tpu.matmul %242, %241, %cst_125 {dimension_numbers = #tpu.dot_dimension_numbers<[1], [0], [0], [1], [0, 0, 1, 1], [], []>} : vector<32x8xbf16>, vector<8x32xbf16>, vector<32x32xf32> -> vector<32x32xf32>
    %244 = arith.addf %240, %243 : vector<32x32xf32>
    %245 = arith.truncf %7 : vector<32x8xf32> to vector<32x8xbf16>
    %cst_126 = arith.constant dense<0.000000e+00> : vector<32x8xf32>
    %246 = tpu.matmul %235, %245, %cst_126 {dimension_numbers = #tpu.dot_dimension_numbers<[1], [0], [0], [1], [0, 0, 1, 1], [], []>} : vector<32x32xbf16>, vector<32x8xbf16>, vector<32x8xf32> -> vector<32x8xf32>
    %c1040 = arith.constant 1040 : index
    %c0_127 = arith.constant 0 : index
    %247 = vector.load %arg3[%c1040, %c0_127] : memref<1088x32xbf16, #tpu.memory_space<vmem>>, vector<8x32xbf16>
    %248 = arith.truncf %246 : vector<32x8xf32> to vector<32x8xbf16>
    %cst_128 = arith.constant dense<0.000000e+00> : vector<32x32xf32>
    %249 = tpu.matmul %248, %247, %cst_128 {dimension_numbers = #tpu.dot_dimension_numbers<[1], [0], [0], [1], [0, 0, 1, 1], [], []>} : vector<32x8xbf16>, vector<8x32xbf16>, vector<32x32xf32> -> vector<32x32xf32>
    %250 = arith.addf %244, %249 : vector<32x32xf32>
    %c1072 = arith.constant 1072 : index
    %c0_129 = arith.constant 0 : index
    %251 = vector.load %arg3[%c1072, %c0_129] : memref<1088x32xbf16, #tpu.memory_space<vmem>>, vector<8x32xbf16>
    %252 = arith.truncf %2 : vector<32x8xf32> to vector<32x8xbf16>
    %cst_130 = arith.constant dense<0.000000e+00> : vector<32x32xf32>
    %253 = tpu.matmul %252, %251, %cst_130 {dimension_numbers = #tpu.dot_dimension_numbers<[1], [0], [0], [1], [0, 0, 1, 1], [], []>} : vector<32x8xbf16>, vector<8x32xbf16>, vector<32x32xf32> -> vector<32x32xf32>
    %254 = arith.addf %250, %253 : vector<32x32xf32>
    %c96 = arith.constant 96 : index
    %c0_131 = arith.constant 0 : index
    %255 = vector.load %arg3[%c96, %c0_131] : memref<1088x32xbf16, #tpu.memory_space<vmem>>, vector<32x32xbf16>
    %c736 = arith.constant 736 : index
    %c0_132 = arith.constant 0 : index
    %256 = vector.load %arg3[%c736, %c0_132] : memref<1088x32xbf16, #tpu.memory_space<vmem>>, vector<32x32xbf16>
    %257 = arith.truncf %254 : vector<32x32xf32> to vector<32x32xbf16>
    %cst_133 = arith.constant dense<0.000000e+00> : vector<32x32xf32>
    %258 = tpu.matmul %257, %256, %cst_133 {dimension_numbers = #tpu.dot_dimension_numbers<[1], [0], [0], [1], [0, 0, 1, 1], [], []>} : vector<32x32xbf16>, vector<32x32xbf16>, vector<32x32xf32> -> vector<32x32xf32>
    %c4 = arith.constant 4 : index
    %c0_134 = arith.constant 0 : index
    %c0_135 = arith.constant 0 : index
    %259 = vector.load %arg9[%c4, %c0_134, %c0_135] : memref<13x1x32xf32, #tpu.memory_space<vmem>>, vector<1x1x32xf32>
    %260 = vector.shape_cast %259 : vector<1x1x32xf32> to vector<1x32xf32>
    %261 = vector.broadcast %260 : vector<1x32xf32> to vector<32x32xf32>
    %262 = arith.addf %258, %261 : vector<32x32xf32>
    %c336 = arith.constant 336 : index
    %c0_136 = arith.constant 0 : index
    %263 = vector.load %arg3[%c336, %c0_136] : memref<1088x32xbf16, #tpu.memory_space<vmem>>, vector<16x32xbf16>
    %264 = arith.truncf %262 : vector<32x32xf32> to vector<32x32xbf16>
    %cst_137 = arith.constant dense<0.000000e+00> : vector<16x32xf32>
    %265 = tpu.matmul %263, %264, %cst_137 {dimension_numbers = #tpu.dot_dimension_numbers<[1], [0], [0], [1], [0, 0, 1, 1], [], []>} : vector<16x32xbf16>, vector<32x32xbf16>, vector<16x32xf32> -> vector<16x32xf32>
    %c0_138 = arith.constant 0 : index
    %c0_139 = arith.constant 0 : index
    %266 = vector.load %arg5[%c0_138, %c0_139] : memref<32x128xbf16, #tpu.memory_space<vmem>>, vector<32x128xbf16>
    %267 = arith.truncf %265 : vector<16x32xf32> to vector<16x32xbf16>
    %cst_140 = arith.constant dense<0.000000e+00> : vector<16x128xf32>
    %268 = tpu.matmul %267, %266, %cst_140 {dimension_numbers = #tpu.dot_dimension_numbers<[1], [0], [0], [1], [0, 0, 1, 1], [], []>} : vector<16x32xbf16>, vector<32x128xbf16>, vector<16x128xf32> -> vector<16x128xf32>
    %c32 = arith.constant 32 : index
    %c0_141 = arith.constant 0 : index
    %269 = vector.load %arg6[%c32, %c0_141] : memref<96x128xf32, #tpu.memory_space<vmem>>, vector<16x128xf32>
    %c48 = arith.constant 48 : index
    %c0_142 = arith.constant 0 : index
    %270 = vector.load %arg6[%c48, %c0_142] : memref<96x128xf32, #tpu.memory_space<vmem>>, vector<16x128xf32>
    %271 = arith.mulf %268, %269 : vector<16x128xf32>
    %272 = vector.extract_strided_slice %268 {offsets = [8, 0], sizes = [8, 128], strides = [1, 1]} : vector<16x128xf32> to vector<8x128xf32>
    %273 = vector.extract_strided_slice %268 {offsets = [0, 0], sizes = [8, 128], strides = [1, 1]} : vector<16x128xf32> to vector<8x128xf32>
    %274 = tpu.concatenate %272, %273 in 0 : vector<8x128xf32>, vector<8x128xf32> -> vector<16x128xf32>
    %275 = arith.mulf %274, %270 : vector<16x128xf32>
    %276 = arith.addf %271, %275 : vector<16x128xf32>
    %c352_143 = arith.constant 352 : index
    %c0_144 = arith.constant 0 : index
    %277 = vector.load %arg3[%c352_143, %c0_144] : memref<1088x32xbf16, #tpu.memory_space<vmem>>, vector<128x32xbf16>
    %278 = arith.truncf %276 : vector<16x128xf32> to vector<16x128xbf16>
    %cst_145 = arith.constant dense<0.000000e+00> : vector<16x32xf32>
    %279 = tpu.matmul %278, %277, %cst_145 {dimension_numbers = #tpu.dot_dimension_numbers<[1], [0], [0], [1], [0, 0, 1, 1], [], []>} : vector<16x128xbf16>, vector<128x32xbf16>, vector<16x32xf32> -> vector<16x32xf32>
    %c32_146 = arith.constant 32 : index
    %c0_147 = arith.constant 0 : index
    %280 = vector.load %arg4[%c32_146, %c0_147] : memref<192x16xbf16, #tpu.memory_space<vmem>>, vector<32x16xbf16>
    %281 = arith.truncf %279 : vector<16x32xf32> to vector<16x32xbf16>
    %cst_148 = arith.constant dense<0.000000e+00> : vector<32x32xf32>
    %282 = tpu.matmul %280, %281, %cst_148 {dimension_numbers = #tpu.dot_dimension_numbers<[1], [0], [0], [1], [0, 0, 1, 1], [], []>} : vector<32x16xbf16>, vector<16x32xbf16>, vector<32x32xf32> -> vector<32x32xf32>
    %c768 = arith.constant 768 : index
    %c0_149 = arith.constant 0 : index
    %283 = vector.load %arg3[%c768, %c0_149] : memref<1088x32xbf16, #tpu.memory_space<vmem>>, vector<32x32xbf16>
    %284 = arith.truncf %282 : vector<32x32xf32> to vector<32x32xbf16>
    %cst_150 = arith.constant dense<0.000000e+00> : vector<32x32xf32>
    %285 = tpu.matmul %284, %283, %cst_150 {dimension_numbers = #tpu.dot_dimension_numbers<[1], [0], [0], [1], [0, 0, 1, 1], [], []>} : vector<32x32xbf16>, vector<32x32xbf16>, vector<32x32xf32> -> vector<32x32xf32>
    %c5 = arith.constant 5 : index
    %c0_151 = arith.constant 0 : index
    %c0_152 = arith.constant 0 : index
    %286 = vector.load %arg9[%c5, %c0_151, %c0_152] : memref<13x1x32xf32, #tpu.memory_space<vmem>>, vector<1x1x32xf32>
    %287 = vector.shape_cast %286 : vector<1x1x32xf32> to vector<1x32xf32>
    %288 = vector.broadcast %287 : vector<1x32xf32> to vector<32x32xf32>
    %289 = arith.addf %285, %288 : vector<32x32xf32>
    %290 = arith.addf %254, %289 : vector<32x32xf32>
    %291 = arith.truncf %290 : vector<32x32xf32> to vector<32x32xbf16>
    %cst_153 = arith.constant dense<0.000000e+00> : vector<32x32xf32>
    %292 = tpu.matmul %255, %291, %cst_153 {dimension_numbers = #tpu.dot_dimension_numbers<[1], [0], [0], [1], [0, 0, 1, 1], [], []>} : vector<32x32xbf16>, vector<32x32xbf16>, vector<32x32xf32> -> vector<32x32xf32>
    %293 = arith.subf %290, %292 : vector<32x32xf32>
    %c800 = arith.constant 800 : index
    %c0_154 = arith.constant 0 : index
    %294 = vector.load %arg3[%c800, %c0_154] : memref<1088x32xbf16, #tpu.memory_space<vmem>>, vector<32x32xbf16>
    %295 = arith.truncf %293 : vector<32x32xf32> to vector<32x32xbf16>
    %cst_155 = arith.constant dense<0.000000e+00> : vector<32x32xf32>
    %296 = tpu.matmul %295, %294, %cst_155 {dimension_numbers = #tpu.dot_dimension_numbers<[1], [0], [0], [1], [0, 0, 1, 1], [], []>} : vector<32x32xbf16>, vector<32x32xbf16>, vector<32x32xf32> -> vector<32x32xf32>
    %c6 = arith.constant 6 : index
    %c0_156 = arith.constant 0 : index
    %c0_157 = arith.constant 0 : index
    %297 = vector.load %arg9[%c6, %c0_156, %c0_157] : memref<13x1x32xf32, #tpu.memory_space<vmem>>, vector<1x1x32xf32>
    %298 = vector.shape_cast %297 : vector<1x1x32xf32> to vector<1x32xf32>
    %299 = vector.broadcast %298 : vector<1x32xf32> to vector<32x32xf32>
    %300 = arith.addf %296, %299 : vector<32x32xf32>
    %c832 = arith.constant 832 : index
    %c0_158 = arith.constant 0 : index
    %301 = vector.load %arg3[%c832, %c0_158] : memref<1088x32xbf16, #tpu.memory_space<vmem>>, vector<32x32xbf16>
    %302 = arith.truncf %233 : vector<32x32xf32> to vector<32x32xbf16>
    %cst_159 = arith.constant dense<0.000000e+00> : vector<32x32xf32>
    %303 = tpu.matmul %302, %301, %cst_159 {dimension_numbers = #tpu.dot_dimension_numbers<[1], [0], [0], [1], [0, 0, 1, 1], [], []>} : vector<32x32xbf16>, vector<32x32xbf16>, vector<32x32xf32> -> vector<32x32xf32>
    %c7 = arith.constant 7 : index
    %c0_160 = arith.constant 0 : index
    %c0_161 = arith.constant 0 : index
    %304 = vector.load %arg9[%c7, %c0_160, %c0_161] : memref<13x1x32xf32, #tpu.memory_space<vmem>>, vector<1x1x32xf32>
    %305 = vector.shape_cast %304 : vector<1x1x32xf32> to vector<1x32xf32>
    %306 = vector.broadcast %305 : vector<1x32xf32> to vector<32x32xf32>
    %307 = arith.addf %303, %306 : vector<32x32xf32>
    %c336_162 = arith.constant 336 : index
    %c0_163 = arith.constant 0 : index
    %308 = vector.load %arg3[%c336_162, %c0_163] : memref<1088x32xbf16, #tpu.memory_space<vmem>>, vector<16x32xbf16>
    %309 = arith.truncf %300 : vector<32x32xf32> to vector<32x32xbf16>
    %cst_164 = arith.constant dense<0.000000e+00> : vector<16x32xf32>
    %310 = tpu.matmul %308, %309, %cst_164 {dimension_numbers = #tpu.dot_dimension_numbers<[1], [0], [0], [1], [0, 0, 1, 1], [], []>} : vector<16x32xbf16>, vector<32x32xbf16>, vector<16x32xf32> -> vector<16x32xf32>
    %c320_165 = arith.constant 320 : index
    %c0_166 = arith.constant 0 : index
    %311 = vector.load %arg3[%c320_165, %c0_166] : memref<1088x32xbf16, #tpu.memory_space<vmem>>, vector<16x32xbf16>
    %312 = arith.truncf %307 : vector<32x32xf32> to vector<32x32xbf16>
    %cst_167 = arith.constant dense<0.000000e+00> : vector<16x32xf32>
    %313 = tpu.matmul %311, %312, %cst_167 {dimension_numbers = #tpu.dot_dimension_numbers<[1], [0], [0], [1], [0, 0, 1, 1], [], []>} : vector<16x32xbf16>, vector<32x32xbf16>, vector<16x32xf32> -> vector<16x32xf32>
    %c64_168 = arith.constant 64 : index
    %c0_169 = arith.constant 0 : index
    %314 = vector.load %arg4[%c64_168, %c0_169] : memref<192x16xbf16, #tpu.memory_space<vmem>>, vector<128x16xbf16>
    %315 = arith.truncf %313 : vector<16x32xf32> to vector<16x32xbf16>
    %cst_170 = arith.constant dense<0.000000e+00> : vector<128x32xf32>
    %316 = tpu.matmul %314, %315, %cst_170 {dimension_numbers = #tpu.dot_dimension_numbers<[1], [0], [0], [1], [0, 0, 1, 1], [], []>} : vector<128x16xbf16>, vector<16x32xbf16>, vector<128x32xf32> -> vector<128x32xf32>
    %c0_171 = arith.constant 0 : index
    %c0_172 = arith.constant 0 : index
    %317 = vector.load %arg7[%c0_171, %c0_172] : memref<128x32xf32, #tpu.memory_space<vmem>>, vector<128x32xf32>
    %318 = arith.mulf %316, %317 : vector<128x32xf32>
    %319 = vector.extract_strided_slice %318 {offsets = [0, 0], sizes = [64, 32], strides = [1, 1]} : vector<128x32xf32> to vector<64x32xf32>
    %320 = vector.extract_strided_slice %318 {offsets = [64, 0], sizes = [64, 32], strides = [1, 1]} : vector<128x32xf32> to vector<64x32xf32>
    %321 = arith.truncf %310 : vector<16x32xf32> to vector<16x32xbf16>
    %322 = arith.truncf %319 : vector<64x32xf32> to vector<64x32xbf16>
    %cst_173 = arith.constant dense<0.000000e+00> : vector<16x64xf32>
    %323 = tpu.matmul %321, %322, %cst_173 {dimension_numbers = #tpu.dot_dimension_numbers<[1], [1], [0], [0], [0, 0, 1, 0], [], []>} : vector<16x32xbf16>, vector<64x32xbf16>, vector<16x64xf32> -> vector<16x64xf32>
    %324 = arith.truncf %310 : vector<16x32xf32> to vector<16x32xbf16>
    %325 = arith.truncf %320 : vector<64x32xf32> to vector<64x32xbf16>
    %cst_174 = arith.constant dense<0.000000e+00> : vector<16x64xf32>
    %326 = tpu.matmul %324, %325, %cst_174 {dimension_numbers = #tpu.dot_dimension_numbers<[1], [1], [0], [0], [0, 0, 1, 0], [], []>} : vector<16x32xbf16>, vector<64x32xbf16>, vector<16x64xf32> -> vector<16x64xf32>
    %c0_175 = arith.constant 0 : index
    %c0_176 = arith.constant 0 : index
    %327 = vector.load %arg8[%c0_175, %c0_176] : memref<8x64xf32, #tpu.memory_space<vmem>>, vector<8x64xf32>
    %328 = vector.extract_strided_slice %323 {offsets = [0, 0], sizes = [8, 64], strides = [1, 1]} : vector<16x64xf32> to vector<8x64xf32>
    %329 = vector.extract_strided_slice %326 {offsets = [8, 0], sizes = [8, 64], strides = [1, 1]} : vector<16x64xf32> to vector<8x64xf32>
    %330 = arith.subf %328, %329 : vector<8x64xf32>
    %331 = arith.mulf %330, %327 : vector<8x64xf32>
    %332 = vector.extract_strided_slice %326 {offsets = [0, 0], sizes = [8, 64], strides = [1, 1]} : vector<16x64xf32> to vector<8x64xf32>
    %333 = vector.extract_strided_slice %323 {offsets = [8, 0], sizes = [8, 64], strides = [1, 1]} : vector<16x64xf32> to vector<8x64xf32>
    %334 = arith.addf %332, %333 : vector<8x64xf32>
    %335 = arith.mulf %334, %327 : vector<8x64xf32>
    %cst_177 = arith.constant 2.000000e+00 : f32
    %336 = vector.broadcast %cst_177 : f32 to vector<8x64xf32>
    %337 = arith.mulf %336, %331 : vector<8x64xf32>
    %338 = math.tanh %337 : vector<8x64xf32>
    %339 = math.absf %331 : vector<8x64xf32>
    %cst_178 = arith.constant -2.000000e+00 : f32
    %340 = vector.broadcast %cst_178 : f32 to vector<8x64xf32>
    %341 = arith.mulf %340, %339 : vector<8x64xf32>
    %342 = math.exp %341 : vector<8x64xf32>
    %cst_179 = arith.constant 2.000000e+00 : f32
    %343 = vector.broadcast %cst_179 : f32 to vector<8x64xf32>
    %344 = arith.mulf %343, %342 : vector<8x64xf32>
    %345 = arith.mulf %342, %342 : vector<8x64xf32>
    %cst_180 = arith.constant 1.000000e+00 : f32
    %346 = vector.broadcast %cst_180 : f32 to vector<8x64xf32>
    %347 = arith.addf %346, %345 : vector<8x64xf32>
    %348 = arith.divf %344, %347 : vector<8x64xf32>
    %cst_181 = arith.constant 2.000000e+00 : f32
    %349 = vector.broadcast %cst_181 : f32 to vector<8x64xf32>
    %350 = arith.mulf %349, %335 : vector<8x64xf32>
    %351 = math.cos %350 : vector<8x64xf32>
    %cst_182 = arith.constant 2.000000e+00 : f32
    %352 = vector.broadcast %cst_182 : f32 to vector<8x64xf32>
    %353 = arith.mulf %352, %335 : vector<8x64xf32>
    %354 = math.sin %353 : vector<8x64xf32>
    %355 = arith.mulf %351, %348 : vector<8x64xf32>
    %cst_183 = arith.constant 1.000000e+00 : f32
    %356 = vector.broadcast %cst_183 : f32 to vector<8x64xf32>
    %357 = arith.addf %356, %355 : vector<8x64xf32>
    %358 = arith.divf %338, %357 : vector<8x64xf32>
    %359 = arith.mulf %354, %348 : vector<8x64xf32>
    %360 = arith.divf %359, %357 : vector<8x64xf32>
    %361 = tpu.concatenate %358, %360 in 0 : vector<8x64xf32>, vector<8x64xf32> -> vector<16x64xf32>
    %362 = arith.truncf %361 : vector<16x64xf32> to vector<16x64xbf16>
    %363 = arith.truncf %319 : vector<64x32xf32> to vector<64x32xbf16>
    %cst_184 = arith.constant dense<0.000000e+00> : vector<16x32xf32>
    %364 = tpu.matmul %362, %363, %cst_184 {dimension_numbers = #tpu.dot_dimension_numbers<[1], [0], [0], [1], [0, 0, 1, 1], [], []>} : vector<16x64xbf16>, vector<64x32xbf16>, vector<16x32xf32> -> vector<16x32xf32>
    %365 = arith.truncf %361 : vector<16x64xf32> to vector<16x64xbf16>
    %366 = arith.truncf %320 : vector<64x32xf32> to vector<64x32xbf16>
    %cst_185 = arith.constant dense<0.000000e+00> : vector<16x32xf32>
    %367 = tpu.matmul %365, %366, %cst_185 {dimension_numbers = #tpu.dot_dimension_numbers<[1], [0], [0], [1], [0, 0, 1, 1], [], []>} : vector<16x64xbf16>, vector<64x32xbf16>, vector<16x32xf32> -> vector<16x32xf32>
    %368 = vector.extract_strided_slice %364 {offsets = [0, 0], sizes = [8, 32], strides = [1, 1]} : vector<16x32xf32> to vector<8x32xf32>
    %369 = vector.extract_strided_slice %367 {offsets = [8, 0], sizes = [8, 32], strides = [1, 1]} : vector<16x32xf32> to vector<8x32xf32>
    %370 = arith.subf %368, %369 : vector<8x32xf32>
    %371 = vector.extract_strided_slice %367 {offsets = [0, 0], sizes = [8, 32], strides = [1, 1]} : vector<16x32xf32> to vector<8x32xf32>
    %372 = vector.extract_strided_slice %364 {offsets = [8, 0], sizes = [8, 32], strides = [1, 1]} : vector<16x32xf32> to vector<8x32xf32>
    %373 = arith.addf %371, %372 : vector<8x32xf32>
    %374 = tpu.concatenate %370, %373 in 0 : vector<8x32xf32>, vector<8x32xf32> -> vector<16x32xf32>
    %c0_186 = arith.constant 0 : index
    %c0_187 = arith.constant 0 : index
    %375 = vector.load %arg5[%c0_186, %c0_187] : memref<32x128xbf16, #tpu.memory_space<vmem>>, vector<32x128xbf16>
    %376 = arith.truncf %374 : vector<16x32xf32> to vector<16x32xbf16>
    %cst_188 = arith.constant dense<0.000000e+00> : vector<16x128xf32>
    %377 = tpu.matmul %376, %375, %cst_188 {dimension_numbers = #tpu.dot_dimension_numbers<[1], [0], [0], [1], [0, 0, 1, 1], [], []>} : vector<16x32xbf16>, vector<32x128xbf16>, vector<16x128xf32> -> vector<16x128xf32>
    %c64_189 = arith.constant 64 : index
    %c0_190 = arith.constant 0 : index
    %378 = vector.load %arg6[%c64_189, %c0_190] : memref<96x128xf32, #tpu.memory_space<vmem>>, vector<16x128xf32>
    %c80 = arith.constant 80 : index
    %c0_191 = arith.constant 0 : index
    %379 = vector.load %arg6[%c80, %c0_191] : memref<96x128xf32, #tpu.memory_space<vmem>>, vector<16x128xf32>
    %380 = arith.mulf %377, %378 : vector<16x128xf32>
    %381 = vector.extract_strided_slice %377 {offsets = [8, 0], sizes = [8, 128], strides = [1, 1]} : vector<16x128xf32> to vector<8x128xf32>
    %382 = vector.extract_strided_slice %377 {offsets = [0, 0], sizes = [8, 128], strides = [1, 1]} : vector<16x128xf32> to vector<8x128xf32>
    %383 = tpu.concatenate %381, %382 in 0 : vector<8x128xf32>, vector<8x128xf32> -> vector<16x128xf32>
    %384 = arith.mulf %383, %379 : vector<16x128xf32>
    %385 = arith.addf %380, %384 : vector<16x128xf32>
    %c352_192 = arith.constant 352 : index
    %c0_193 = arith.constant 0 : index
    %386 = vector.load %arg3[%c352_192, %c0_193] : memref<1088x32xbf16, #tpu.memory_space<vmem>>, vector<128x32xbf16>
    %387 = arith.truncf %385 : vector<16x128xf32> to vector<16x128xbf16>
    %cst_194 = arith.constant dense<0.000000e+00> : vector<16x32xf32>
    %388 = tpu.matmul %387, %386, %cst_194 {dimension_numbers = #tpu.dot_dimension_numbers<[1], [0], [0], [1], [0, 0, 1, 1], [], []>} : vector<16x128xbf16>, vector<128x32xbf16>, vector<16x32xf32> -> vector<16x32xf32>
    %c32_195 = arith.constant 32 : index
    %c0_196 = arith.constant 0 : index
    %389 = vector.load %arg4[%c32_195, %c0_196] : memref<192x16xbf16, #tpu.memory_space<vmem>>, vector<32x16xbf16>
    %390 = arith.truncf %388 : vector<16x32xf32> to vector<16x32xbf16>
    %cst_197 = arith.constant dense<0.000000e+00> : vector<32x32xf32>
    %391 = tpu.matmul %389, %390, %cst_197 {dimension_numbers = #tpu.dot_dimension_numbers<[1], [0], [0], [1], [0, 0, 1, 1], [], []>} : vector<32x16xbf16>, vector<16x32xbf16>, vector<32x32xf32> -> vector<32x32xf32>
    %c864 = arith.constant 864 : index
    %c0_198 = arith.constant 0 : index
    %392 = vector.load %arg3[%c864, %c0_198] : memref<1088x32xbf16, #tpu.memory_space<vmem>>, vector<32x32xbf16>
    %393 = arith.truncf %391 : vector<32x32xf32> to vector<32x32xbf16>
    %cst_199 = arith.constant dense<0.000000e+00> : vector<32x32xf32>
    %394 = tpu.matmul %393, %392, %cst_199 {dimension_numbers = #tpu.dot_dimension_numbers<[1], [0], [0], [1], [0, 0, 1, 1], [], []>} : vector<32x32xbf16>, vector<32x32xbf16>, vector<32x32xf32> -> vector<32x32xf32>
    %c8 = arith.constant 8 : index
    %c0_200 = arith.constant 0 : index
    %c0_201 = arith.constant 0 : index
    %395 = vector.load %arg9[%c8, %c0_200, %c0_201] : memref<13x1x32xf32, #tpu.memory_space<vmem>>, vector<1x1x32xf32>
    %396 = vector.shape_cast %395 : vector<1x1x32xf32> to vector<1x32xf32>
    %397 = vector.broadcast %396 : vector<1x32xf32> to vector<32x32xf32>
    %398 = arith.addf %394, %397 : vector<32x32xf32>
    %399 = arith.addf %293, %398 : vector<32x32xf32>
    %400 = arith.truncf %399 : vector<32x32xf32> to vector<32x32xbf16>
    %cst_202 = arith.constant dense<0.000000e+00> : vector<32x32xf32>
    %401 = tpu.matmul %255, %400, %cst_202 {dimension_numbers = #tpu.dot_dimension_numbers<[1], [0], [0], [1], [0, 0, 1, 1], [], []>} : vector<32x32xbf16>, vector<32x32xbf16>, vector<32x32xf32> -> vector<32x32xf32>
    %402 = arith.subf %399, %401 : vector<32x32xf32>
    %c896 = arith.constant 896 : index
    %c0_203 = arith.constant 0 : index
    %403 = vector.load %arg3[%c896, %c0_203] : memref<1088x32xbf16, #tpu.memory_space<vmem>>, vector<32x32xbf16>
    %404 = arith.truncf %402 : vector<32x32xf32> to vector<32x32xbf16>
    %cst_204 = arith.constant dense<0.000000e+00> : vector<32x32xf32>
    %405 = tpu.matmul %404, %403, %cst_204 {dimension_numbers = #tpu.dot_dimension_numbers<[1], [0], [0], [1], [0, 0, 1, 1], [], []>} : vector<32x32xbf16>, vector<32x32xbf16>, vector<32x32xf32> -> vector<32x32xf32>
    %cst_205 = arith.constant 5.000000e-01 : f32
    %406 = vector.broadcast %cst_205 : f32 to vector<32x32xf32>
    %407 = arith.mulf %406, %405 : vector<32x32xf32>
    %cst_206 = arith.constant 0.707106769 : f32
    %408 = vector.broadcast %cst_206 : f32 to vector<32x32xf32>
    %409 = arith.mulf %405, %408 : vector<32x32xf32>
    %410 = math.absf %409 : vector<32x32xf32>
    %cst_207 = arith.constant 0.327591091 : f32
    %411 = vector.broadcast %cst_207 : f32 to vector<32x32xf32>
    %412 = arith.mulf %411, %410 : vector<32x32xf32>
    %cst_208 = arith.constant 1.000000e+00 : f32
    %413 = vector.broadcast %cst_208 : f32 to vector<32x32xf32>
    %414 = arith.addf %413, %412 : vector<32x32xf32>
    %cst_209 = arith.constant 1.000000e+00 : f32
    %415 = vector.broadcast %cst_209 : f32 to vector<32x32xf32>
    %416 = arith.divf %415, %414 : vector<32x32xf32>
    %cst_210 = arith.constant 1.06140542 : f32
    %417 = vector.broadcast %cst_210 : f32 to vector<32x32xf32>
    %418 = arith.mulf %417, %416 : vector<32x32xf32>
    %cst_211 = arith.constant -1.45315206 : f32
    %419 = vector.broadcast %cst_211 : f32 to vector<32x32xf32>
    %420 = arith.addf %418, %419 : vector<32x32xf32>
    %421 = arith.mulf %420, %416 : vector<32x32xf32>
    %cst_212 = arith.constant 1.42141378 : f32
    %422 = vector.broadcast %cst_212 : f32 to vector<32x32xf32>
    %423 = arith.addf %421, %422 : vector<32x32xf32>
    %424 = arith.mulf %423, %416 : vector<32x32xf32>
    %cst_213 = arith.constant -0.284496725 : f32
    %425 = vector.broadcast %cst_213 : f32 to vector<32x32xf32>
    %426 = arith.addf %424, %425 : vector<32x32xf32>
    %427 = arith.mulf %426, %416 : vector<32x32xf32>
    %cst_214 = arith.constant 0.254829586 : f32
    %428 = vector.broadcast %cst_214 : f32 to vector<32x32xf32>
    %429 = arith.addf %427, %428 : vector<32x32xf32>
    %430 = arith.mulf %429, %416 : vector<32x32xf32>
    %cst_215 = arith.constant 0.000000e+00 : f32
    %431 = vector.broadcast %cst_215 : f32 to vector<32x32xf32>
    %432 = arith.subf %431, %410 : vector<32x32xf32>
    %433 = arith.mulf %432, %410 : vector<32x32xf32>
    %434 = math.exp %433 : vector<32x32xf32>
    %435 = arith.mulf %430, %434 : vector<32x32xf32>
    %cst_216 = arith.constant 1.000000e+00 : f32
    %436 = vector.broadcast %cst_216 : f32 to vector<32x32xf32>
    %437 = arith.subf %436, %435 : vector<32x32xf32>
    %cst_217 = arith.constant 0.000000e+00 : f32
    %438 = vector.broadcast %cst_217 : f32 to vector<32x32xf32>
    %439 = arith.cmpf oge, %409, %438 : vector<32x32xf32>
    %cst_218 = arith.constant 0.000000e+00 : f32
    %440 = vector.broadcast %cst_218 : f32 to vector<32x32xf32>
    %441 = arith.subf %440, %437 : vector<32x32xf32>
    %442 = arith.select %439, %437, %441 : vector<32x32xi1>, vector<32x32xf32>
    %cst_219 = arith.constant 1.000000e+00 : f32
    %443 = vector.broadcast %cst_219 : f32 to vector<32x32xf32>
    %444 = arith.addf %443, %442 : vector<32x32xf32>
    %445 = arith.mulf %407, %444 : vector<32x32xf32>
    %c928 = arith.constant 928 : index
    %c0_220 = arith.constant 0 : index
    %446 = vector.load %arg3[%c928, %c0_220] : memref<1088x32xbf16, #tpu.memory_space<vmem>>, vector<32x32xbf16>
    %447 = arith.truncf %445 : vector<32x32xf32> to vector<32x32xbf16>
    %cst_221 = arith.constant dense<0.000000e+00> : vector<32x32xf32>
    %448 = tpu.matmul %447, %446, %cst_221 {dimension_numbers = #tpu.dot_dimension_numbers<[1], [0], [0], [1], [0, 0, 1, 1], [], []>} : vector<32x32xbf16>, vector<32x32xbf16>, vector<32x32xf32> -> vector<32x32xf32>
    %449 = arith.addf %402, %448 : vector<32x32xf32>
    %450 = arith.truncf %449 : vector<32x32xf32> to vector<32x32xbf16>
    %cst_222 = arith.constant dense<0.000000e+00> : vector<32x32xf32>
    %451 = tpu.matmul %255, %450, %cst_222 {dimension_numbers = #tpu.dot_dimension_numbers<[1], [0], [0], [1], [0, 0, 1, 1], [], []>} : vector<32x32xbf16>, vector<32x32xbf16>, vector<32x32xf32> -> vector<32x32xf32>
    %452 = arith.subf %449, %451 : vector<32x32xf32>
    %453 = arith.addf %292, %401 : vector<32x32xf32>
    %454 = arith.addf %453, %451 : vector<32x32xf32>
    %c0_223 = arith.constant 0 : index
    %c0_224 = arith.constant 0 : index
    %455 = vector.load %arg10[%c0_223, %c0_224] : memref<128x8xbf16, #tpu.memory_space<vmem>>, vector<32x8xbf16>
    %c32_225 = arith.constant 32 : index
    %c0_226 = arith.constant 0 : index
    %456 = vector.load %arg10[%c32_225, %c0_226] : memref<128x8xbf16, #tpu.memory_space<vmem>>, vector<32x8xbf16>
    %c64_227 = arith.constant 64 : index
    %c0_228 = arith.constant 0 : index
    %457 = vector.load %arg10[%c64_227, %c0_228] : memref<128x8xbf16, #tpu.memory_space<vmem>>, vector<32x8xbf16>
    %c96_229 = arith.constant 96 : index
    %c0_230 = arith.constant 0 : index
    %458 = vector.load %arg10[%c96_229, %c0_230] : memref<128x8xbf16, #tpu.memory_space<vmem>>, vector<32x8xbf16>
    %c256_231 = arith.constant 256 : index
    %c0_232 = arith.constant 0 : index
    %459 = vector.load %arg3[%c256_231, %c0_232] : memref<1088x32xbf16, #tpu.memory_space<vmem>>, vector<32x32xbf16>
    %460 = arith.truncf %454 : vector<32x32xf32> to vector<32x32xbf16>
    %cst_233 = arith.constant dense<0.000000e+00> : vector<32x32xf32>
    %461 = tpu.matmul %459, %460, %cst_233 {dimension_numbers = #tpu.dot_dimension_numbers<[1], [0], [0], [1], [0, 0, 1, 1], [], []>} : vector<32x32xbf16>, vector<32x32xbf16>, vector<32x32xf32> -> vector<32x32xf32>
    %462 = arith.truncf %461 : vector<32x32xf32> to vector<32x32xbf16>
    %cst_234 = arith.constant dense<0.000000e+00> : vector<32x8xf32>
    %463 = tpu.matmul %462, %456, %cst_234 {dimension_numbers = #tpu.dot_dimension_numbers<[1], [0], [0], [1], [0, 0, 1, 1], [], []>} : vector<32x32xbf16>, vector<32x8xbf16>, vector<32x8xf32> -> vector<32x8xf32>
    %464 = arith.truncf %454 : vector<32x32xf32> to vector<32x32xbf16>
    %cst_235 = arith.constant dense<0.000000e+00> : vector<32x8xf32>
    %465 = tpu.matmul %464, %457, %cst_235 {dimension_numbers = #tpu.dot_dimension_numbers<[1], [0], [0], [1], [0, 0, 1, 1], [], []>} : vector<32x32xbf16>, vector<32x8xbf16>, vector<32x8xf32> -> vector<32x8xf32>
    %466 = arith.addf %463, %465 : vector<32x8xf32>
    %c288_236 = arith.constant 288 : index
    %c0_237 = arith.constant 0 : index
    %467 = vector.load %arg3[%c288_236, %c0_237] : memref<1088x32xbf16, #tpu.memory_space<vmem>>, vector<32x32xbf16>
    %468 = arith.truncf %454 : vector<32x32xf32> to vector<32x32xbf16>
    %cst_238 = arith.constant dense<0.000000e+00> : vector<32x32xf32>
    %469 = tpu.matmul %467, %468, %cst_238 {dimension_numbers = #tpu.dot_dimension_numbers<[1], [0], [0], [1], [0, 0, 1, 1], [], []>} : vector<32x32xbf16>, vector<32x32xbf16>, vector<32x32xf32> -> vector<32x32xf32>
    %470 = arith.truncf %469 : vector<32x32xf32> to vector<32x32xbf16>
    %cst_239 = arith.constant dense<0.000000e+00> : vector<32x8xf32>
    %471 = tpu.matmul %470, %458, %cst_239 {dimension_numbers = #tpu.dot_dimension_numbers<[1], [0], [0], [1], [0, 0, 1, 1], [], []>} : vector<32x32xbf16>, vector<32x8xbf16>, vector<32x8xf32> -> vector<32x8xf32>
    %472 = arith.addf %466, %471 : vector<32x8xf32>
    %473 = arith.addf %6, %472 : vector<32x8xf32>
    %c160 = arith.constant 160 : index
    %c0_240 = arith.constant 0 : index
    %474 = vector.load %arg3[%c160, %c0_240] : memref<1088x32xbf16, #tpu.memory_space<vmem>>, vector<32x32xbf16>
    %cst_241 = arith.constant dense<0.000000e+00> : vector<32xf32>
    %475 = vector.multi_reduction <add>, %452, %cst_241 [1] : vector<32x32xf32> to vector<32xf32>
    %476 = vector.shape_cast %475 : vector<32xf32> to vector<32x1xf32>
    %cst_242 = arith.constant 3.200000e+01 : f32
    %477 = vector.broadcast %cst_242 : f32 to vector<32x1xf32>
    %478 = arith.divf %476, %477 : vector<32x1xf32>
    %479 = vector.broadcast %478 : vector<32x1xf32> to vector<32x32xf32>
    %480 = arith.subf %452, %479 : vector<32x32xf32>
    %481 = arith.mulf %480, %480 : vector<32x32xf32>
    %cst_243 = arith.constant dense<0.000000e+00> : vector<32xf32>
    %482 = vector.multi_reduction <add>, %481, %cst_243 [1] : vector<32x32xf32> to vector<32xf32>
    %483 = vector.shape_cast %482 : vector<32xf32> to vector<32x1xf32>
    %cst_244 = arith.constant 3.200000e+01 : f32
    %484 = vector.broadcast %cst_244 : f32 to vector<32x1xf32>
    %485 = arith.divf %483, %484 : vector<32x1xf32>
    %cst_245 = arith.constant 9.99999974E-6 : f32
    %486 = vector.broadcast %cst_245 : f32 to vector<32x1xf32>
    %487 = arith.addf %485, %486 : vector<32x1xf32>
    %488 = math.rsqrt %487 : vector<32x1xf32>
    %489 = vector.broadcast %488 : vector<32x1xf32> to vector<32x32xf32>
    %490 = arith.mulf %480, %489 : vector<32x32xf32>
    %c11 = arith.constant 11 : index
    %c0_246 = arith.constant 0 : index
    %c0_247 = arith.constant 0 : index
    %491 = vector.load %arg9[%c11, %c0_246, %c0_247] : memref<13x1x32xf32, #tpu.memory_space<vmem>>, vector<1x1x32xf32>
    %492 = vector.shape_cast %491 : vector<1x1x32xf32> to vector<1x32xf32>
    %493 = vector.broadcast %492 : vector<1x32xf32> to vector<32x32xf32>
    %494 = arith.mulf %490, %493 : vector<32x32xf32>
    %c12 = arith.constant 12 : index
    %c0_248 = arith.constant 0 : index
    %c0_249 = arith.constant 0 : index
    %495 = vector.load %arg9[%c12, %c0_248, %c0_249] : memref<13x1x32xf32, #tpu.memory_space<vmem>>, vector<1x1x32xf32>
    %496 = vector.shape_cast %495 : vector<1x1x32xf32> to vector<1x32xf32>
    %497 = vector.broadcast %496 : vector<1x32xf32> to vector<32x32xf32>
    %498 = arith.addf %494, %497 : vector<32x32xf32>
    %499 = arith.truncf %498 : vector<32x32xf32> to vector<32x32xbf16>
    %cst_250 = arith.constant dense<0.000000e+00> : vector<32x32xf32>
    %500 = tpu.matmul %474, %499, %cst_250 {dimension_numbers = #tpu.dot_dimension_numbers<[1], [0], [0], [1], [0, 0, 1, 1], [], []>} : vector<32x32xbf16>, vector<32x32xbf16>, vector<32x32xf32> -> vector<32x32xf32>
    %501 = arith.subf %498, %500 : vector<32x32xf32>
    %502 = arith.truncf %501 : vector<32x32xf32> to vector<32x32xbf16>
    %cst_251 = arith.constant dense<0.000000e+00> : vector<32x8xf32>
    %503 = tpu.matmul %502, %455, %cst_251 {dimension_numbers = #tpu.dot_dimension_numbers<[1], [0], [0], [1], [0, 0, 1, 1], [], []>} : vector<32x32xbf16>, vector<32x8xbf16>, vector<32x8xf32> -> vector<32x8xf32>
    %c0_252 = arith.constant 0 : index
    %c0_253 = arith.constant 0 : index
    %504 = vector.load %arg11[%c0_252, %c0_253] : memref<1x8xf32, #tpu.memory_space<vmem>>, vector<1x8xf32>
    %505 = vector.broadcast %504 : vector<1x8xf32> to vector<32x8xf32>
    %506 = arith.addf %503, %505 : vector<32x8xf32>
    %507 = arith.addf %473, %506 : vector<32x8xf32>
    %c0_254 = arith.constant 0 : index
    %c0_255 = arith.constant 0 : index
    %508 = vector.load %arg12[%c0_254, %c0_255] : memref<32x8xf32, #tpu.memory_space<vmem>>, vector<32x8xf32>
    tpu.vector_store %arg12[%c0_254, %c0_255], %507 {strides = array<i32>} : memref<32x8xf32, #tpu.memory_space<vmem>>, vector<32x8xf32>,
    return
  }
}

</mosaic_0001>

<llo_original>
// kernel: forward.1
$region0: #{forward.1}
  #allocation0 [shape = 'u32[]', space=smem, size = 0x4, offset = 0x4, fixed_abs, tag = 'smem constant byte address 0x4 - core index']
  #allocation1 [shape = 'u32[144,128]{1,0:T(1,128)}', space=vmem, size = 0x12000, scoped, tag = 'internal scratch']
  %s0 = inlined_call_operand.vmem [shape: f32[32,8], index: 0, kind: input, shape index: {}]
  %s1 = inlined_call_operand.vmem [shape: f32[32,8], index: 1, kind: input, shape index: {}]
  %s2 = inlined_call_operand.vmem [shape: f32[32,8], index: 2, kind: input, shape index: {}]
  %s3 = inlined_call_operand.vmem [shape: bf16[1088,32], index: 3, kind: input, shape index: {}]
  %s4 = inlined_call_operand.vmem [shape: bf16[192,16], index: 4, kind: input, shape index: {}]
  %s5 = inlined_call_operand.vmem [shape: bf16[32,128], index: 5, kind: input, shape index: {}]
  %s6 = inlined_call_operand.vmem [shape: f32[96,128], index: 6, kind: input, shape index: {}]
  %s7 = inlined_call_operand.vmem [shape: f32[128,32], index: 7, kind: input, shape index: {}]
  %s8 = inlined_call_operand.vmem [shape: f32[8,64], index: 8, kind: input, shape index: {}]
  %s9 = inlined_call_operand.vmem [shape: f32[13,1,32], index: 9, kind: input, shape index: {}]
  %s10 = inlined_call_operand.vmem [shape: bf16[128,8], index: 10, kind: input, shape index: {}]
  %s11 = inlined_call_operand.vmem [shape: f32[1,8], index: 11, kind: input, shape index: {}]
  %s12 = inlined_call_operand.vmem [shape: f32[32,8], index: 12, kind: output, shape index: {}]
  %s13 = sld [smem:[#allocation0]]
  $region58: #{forward.1} parent=0
    _
  %s15 = ssub.s32 1, %s13
  %s16 = scalar_select 0, %s15, %s13
  // Predicated region
  $region2: #{forward.1} parent=0 // pred_check
    _
  $region3: #{forward.1} parent=0 // pred_check_branch
    %18 = sbr.rel (0) target = $region5
  $region4: #{forward.1} parent=0 // pred_region
    _
  $region5: #{forward.1} parent=0 // pred_fallthru
    _
  // Predicated region
  $region6: #{forward.1} parent=0 // pred_check
    _
  $region7: #{forward.1} parent=0 // pred_check_branch
    %20 = sbr.rel (0) target = $region9
  $region8: #{forward.1} parent=0 // pred_region
    _
  $region9: #{forward.1} parent=0 // pred_fallthru
    _
  // Predicated region
  $region10: #{forward.1} parent=0 // pred_check
    _
  $region11: #{forward.1} parent=0 // pred_check_branch
    %22 = sbr.rel (0) target = $region13
  $region12: #{forward.1} parent=0 // pred_region
    _
  $region13: #{forward.1} parent=0 // pred_fallthru
    _
  // Predicated region
  $region14: #{forward.1} parent=0 // pred_check
    _
  $region15: #{forward.1} parent=0 // pred_check_branch
    %24 = sbr.rel (0) target = $region17
  $region16: #{forward.1} parent=0 // pred_region
    _
  $region17: #{forward.1} parent=0 // pred_fallthru
    _
  // Predicated region
  $region18: #{forward.1} parent=0 // pred_check
    _
  $region19: #{forward.1} parent=0 // pred_check_branch
    %26 = sbr.rel (0) target = $region21
  $region20: #{forward.1} parent=0 // pred_region
    _
  $region21: #{forward.1} parent=0 // pred_fallthru
    _
  // Predicated region
  $region22: #{forward.1} parent=0 // pred_check
    _
  $region23: #{forward.1} parent=0 // pred_check_branch
    %28 = sbr.rel (0) target = $region25
  $region24: #{forward.1} parent=0 // pred_region
    _
  $region25: #{forward.1} parent=0 // pred_fallthru
    _
  // Predicated region
  $region26: #{forward.1} parent=0 // pred_check
    _
  $region27: #{forward.1} parent=0 // pred_check_branch
    %30 = sbr.rel (0) target = $region29
  $region28: #{forward.1} parent=0 // pred_region
    _
  $region29: #{forward.1} parent=0 // pred_fallthru
    _
  // Predicated region
  $region30: #{forward.1} parent=0 // pred_check
    _
  $region31: #{forward.1} parent=0 // pred_check_branch
    %32 = sbr.rel (0) target = $region33
  $region32: #{forward.1} parent=0 // pred_region
    _
  $region33: #{forward.1} parent=0 // pred_fallthru
    _
  // Predicated region
  $region34: #{forward.1} parent=0 // pred_check
    _
  $region35: #{forward.1} parent=0 // pred_check_branch
    %34 = sbr.rel (0) target = $region37
  $region36: #{forward.1} parent=0 // pred_region
    _
  $region37: #{forward.1} parent=0 // pred_fallthru
    _
  // Predicated region
  $region38: #{forward.1} parent=0 // pred_check
    _
  $region39: #{forward.1} parent=0 // pred_check_branch
    %36 = sbr.rel (0) target = $region41
  $region40: #{forward.1} parent=0 // pred_region
    _
  $region41: #{forward.1} parent=0 // pred_fallthru
    _
  // Predicated region
  $region42: #{forward.1} parent=0 // pred_check
    _
  $region43: #{forward.1} parent=0 // pred_check_branch
    %38 = sbr.rel (0) target = $region45
  $region44: #{forward.1} parent=0 // pred_region
    _
  $region45: #{forward.1} parent=0 // pred_fallthru
    _
  // Predicated region
  $region46: #{forward.1} parent=0 // pred_check
    _
  $region47: #{forward.1} parent=0 // pred_check_branch
    %40 = sbr.rel (0) target = $region49
  $region48: #{forward.1} parent=0 // pred_region
    _
  $region49: #{forward.1} parent=0 // pred_fallthru
    _
  %v42 = vld [vmem:[%s0] sm:$0xff]
  %v43 = vld [vmem:[%s0 + $0x8] sm:$0xff]
  %v44 = vld [vmem:[%s0 + $0x10] sm:$0xff]
  %v45 = vld [vmem:[%s0 + $0x18] sm:$0xff]
  %v46 = vld [vmem:[%s1] sm:$0xff]
  %v47 = vld [vmem:[%s1 + $0x8] sm:$0xff]
  %v48 = vld [vmem:[%s1 + $0x10] sm:$0xff]
  %v49 = vld [vmem:[%s1 + $0x18] sm:$0xff]
  %v50 = vld [vmem:[%s2] sm:$0xff]
  %v51 = vld [vmem:[%s2 + $0x8] sm:$0xff]
  %v52 = vld [vmem:[%s2 + $0x10] sm:$0xff]
  %v53 = vld [vmem:[%s2 + $0x18] sm:$0xff]
  %v54 = vld [vmem:[%s3] sm:$0xf]
  %v55 = vld [vmem:[%s3 + $0x4] sm:$0xf]
  %v56 = vld [vmem:[%s3 + $0x8] sm:$0xf]
  %v57 = vld [vmem:[%s3 + $0xc] sm:$0xf]
  %v58 = vld [vmem:[%s3 + $0x10] sm:$0xf]
  %v59 = vld [vmem:[%s3 + $0x14] sm:$0xf]
  %v60 = vld [vmem:[%s3 + $0x18] sm:$0xf]
  %v61 = vld [vmem:[%s3 + $0x1c] sm:$0xf]
  %v62 = vpack.c.bf16 %v43, %v42
  %v63 = vpack.c.bf16 %v45, %v44
  %v72 = vunpack.c.l.b16 %v54
  %v73 = vunpack.c.l.b16 %v55
  %v74 = vunpack.c.l.b16 %v56
  %v75 = vunpack.c.l.b16 %v57
  %v76 = vunpack.c.l.b16 %v58
  %v77 = vunpack.c.l.b16 %v59
  %v78 = vunpack.c.l.b16 %v60
  %v79 = vunpack.c.l.b16 %v61
  %v80 = vpack.c.b16 %v73, %v72
  %v81 = vpack.c.b16 %v75, %v74
  %v82 = vpack.c.b16 %v77, %v76
  %v83 = vpack.c.b16 %v79, %v78
  %vm84 = vcmask 261120
  %v86 = vsel %vm84, %v80, 0
  %v89 = vsel %vm84, %v81, 0
  %v92 = vsel %vm84, %v82, 0
  %v95 = vsel %vm84, %v83, 0
  %97 = vmatprep.subr.bf16.mxu0 0
  %98 = vmatpush1.bf16.msra.mxu0 %v62
  %99 = vmatprep.subr.bf16.mxu0 0
  %100 = vmatpush1.bf16.msra.mxu0 %v63
  %101 = vmatprep.subr.bf16.mxu0 0
  %102 = vmatpush1.bf16.msra.mxu0 0
  %103 = vmatprep.subr.bf16.mxu0 0
  %104 = vmatpush1.bf16.msra.mxu0 0
  %105 = vmatprep.subr.bf16.mxu0 0
  %106 = vmatpush1.bf16.msra.mxu0 0
  %107 = vmatprep.subr.bf16.mxu0 0
  %108 = vmatpush1.bf16.msra.mxu0 0
  %109 = vmatprep.subr.bf16.mxu0 0
  %110 = vmatpush1.bf16.msra.mxu0 0
  %111 = vmatprep.subr.bf16.mxu0 0
  %112 = vmatpush1.bf16.msra.mxu0 0
  %113 = vmatprep.subr.bf16.mxu0 0
  %114 = vmatpush1.bf16.msra.mxu0 0
  %115 = vmatprep.subr.bf16.mxu0 0
  %116 = vmatpush1.bf16.msra.mxu0 0
  %117 = vmatprep.subr.bf16.mxu0 0
  %118 = vmatpush1.bf16.msra.mxu0 0
  %119 = vmatprep.subr.bf16.mxu0 0
  %120 = vmatpush1.bf16.msra.mxu0 0
  %121 = vmatprep.subr.bf16.mxu0 0
  %122 = vmatpush1.bf16.msra.mxu0 0
  %123 = vmatprep.subr.bf16.mxu0 0
  %124 = vmatpush1.bf16.msra.mxu0 0
  %125 = vmatprep.subr.bf16.mxu0 0
  %126 = vmatpush1.bf16.msra.mxu0 0
  %127 = vmatprep.subr.bf16.mxu0 0
  %128 = vmatpush1.bf16.msra.mxu0 0
  %129 = vmatprep.mubr.bf16.mxu0 0
  %130 = vmatmul.mubr.bf16.gmra.mrb[0].mxu0 %v86
  %v131 = vpop.f32.mrb[0].mxu0
  %v132 = vadd.f32 0.0, %v131
  %v133 = vpop.f32.mrb[0].mxu0
  %v134 = vpop.f32.mrb[0].mxu0
  %v135 = vadd.f32 0.0, %v134
  %v136 = vpop.f32.mrb[0].mxu0
  %137 = vmatprep.mubr.bf16.mxu0 0
  %138 = vmatmul.mubr.bf16.gmra.mrb[0].mxu0 %v89
  %v139 = vpop.f32.mrb[0].mxu0
  %v140 = vadd.f32 0.0, %v139
  %v141 = vpop.f32.mrb[0].mxu0
  %v142 = vpop.f32.mrb[0].mxu0
  %v143 = vadd.f32 0.0, %v142
  %v144 = vpop.f32.mrb[0].mxu0
  %145 = vmatprep.mubr.bf16.mxu0 0
  %146 = vmatmul.mubr.bf16.gmra.mrb[0].mxu0 %v92
  %v147 = vpop.f32.mrb[0].mxu0
  %v148 = vadd.f32 0.0, %v147
  %v149 = vpop.f32.mrb[0].mxu0
  %v150 = vpop.f32.mrb[0].mxu0
  %v151 = vadd.f32 0.0, %v150
  %v152 = vpop.f32.mrb[0].mxu0
  %153 = vmatprep.mubr.bf16.mxu0 0
  %154 = vmatmul.mubr.bf16.gmra.mrb[0].mxu0 %v95
  %v155 = vpop.f32.mrb[0].mxu0
  %v156 = vadd.f32 0.0, %v155
  %v157 = vpop.f32.mrb[0].mxu0
  %v158 = vpop.f32.mrb[0].mxu0
  %v159 = vadd.f32 0.0, %v158
  %v160 = vpop.f32.mrb[0].mxu0
  %161 = vdwg.mxu0
  %v162 = vld [vmem:[%s3 + $0x60] sm:$0xf]
  %v163 = vld [vmem:[%s3 + $0x64] sm:$0xf]
  %v164 = vld [vmem:[%s3 + $0x68] sm:$0xf]
  %v165 = vld [vmem:[%s3 + $0x6c] sm:$0xf]
  %v166 = vld [vmem:[%s3 + $0x70] sm:$0xf]
  %v167 = vld [vmem:[%s3 + $0x74] sm:$0xf]
  %v168 = vld [vmem:[%s3 + $0x78] sm:$0xf]
  %v169 = vld [vmem:[%s3 + $0x7c] sm:$0xf]
  %v174 = vunpack.c.l.b16 %v162
  %v175 = vunpack.c.l.b16 %v163
  %v176 = vunpack.c.l.b16 %v164
  %v177 = vunpack.c.l.b16 %v165
  %v178 = vpack.c.b16 %v175, %v174
  %v179 = vpack.c.b16 %v177, %v176
  %v181 = vsel %vm84, %v178, 0
  %v184 = vsel %vm84, %v179, 0
  %186 = vmatprep.subr.bf16.mxu0 0
  %187 = vmatpush1.bf16.msra.mxu0 %v62
  %188 = vmatprep.subr.bf16.mxu0 0
  %189 = vmatpush1.bf16.msra.mxu0 %v63
  %190 = vmatprep.subr.bf16.mxu0 0
  %191 = vmatpush1.bf16.msra.mxu0 0
  %192 = vmatprep.subr.bf16.mxu0 0
  %193 = vmatpush1.bf16.msra.mxu0 0
  %194 = vmatprep.subr.bf16.mxu0 0
  %195 = vmatpush1.bf16.msra.mxu0 0
  %196 = vmatprep.subr.bf16.mxu0 0
  %197 = vmatpush1.bf16.msra.mxu0 0
  %198 = vmatprep.subr.bf16.mxu0 0
  %199 = vmatpush1.bf16.msra.mxu0 0
  %200 = vmatprep.subr.bf16.mxu0 0
  %201 = vmatpush1.bf16.msra.mxu0 0
  %202 = vmatprep.subr.bf16.mxu0 0
  %203 = vmatpush1.bf16.msra.mxu0 0
  %204 = vmatprep.subr.bf16.mxu0 0
  %205 = vmatpush1.bf16.msra.mxu0 0
  %206 = vmatprep.subr.bf16.mxu0 0
  %207 = vmatpush1.bf16.msra.mxu0 0
  %208 = vmatprep.subr.bf16.mxu0 0
  %209 = vmatpush1.bf16.msra.mxu0 0
  %210 = vmatprep.subr.bf16.mxu0 0
  %211 = vmatpush1.bf16.msra.mxu0 0
  %212 = vmatprep.subr.bf16.mxu0 0
  %213 = vmatpush1.bf16.msra.mxu0 0
  %214 = vmatprep.subr.bf16.mxu0 0
  %215 = vmatpush1.bf16.msra.mxu0 0
  %216 = vmatprep.subr.bf16.mxu0 0
  %217 = vmatpush1.bf16.msra.mxu0 0
  %218 = vmatprep.mubr.bf16.mxu0 0
  %219 = vmatmul.mubr.bf16.gmra.mrb[0].mxu0 %v181
  %v220 = vpop.f32.mrb[0].mxu0
  %v221 = vadd.f32 0.0, %v220
  %v222 = vpop.f32.mrb[0].mxu0
  %v223 = vpop.f32.mrb[0].mxu0
  %v224 = vadd.f32 0.0, %v223
  %v225 = vpop.f32.mrb[0].mxu0
  %226 = vmatprep.mubr.bf16.mxu0 0
  %227 = vmatmul.mubr.bf16.gmra.mrb[0].mxu0 %v184
  %v228 = vpop.f32.mrb[0].mxu0
  %v229 = vadd.f32 0.0, %v228
  %v230 = vpop.f32.mrb[0].mxu0
  %v231 = vpop.f32.mrb[0].mxu0
  %v232 = vadd.f32 0.0, %v231
  %v233 = vpop.f32.mrb[0].mxu0
  %234 = vdwg.mxu0
  %v235 = vld [vmem:[%s3 + $0x1e0] sm:$0xf]
  %v236 = vpack.c.bf16 %v224, %v221
  %v237 = vpack.c.bf16 %v232, %v229
  %v238 = vld [vmem:[%s3 + $0x1e8] sm:$0xf]
  %vm239 = vcmask 64512
  %v241 = vsel %vm239, %v62, 0
  %v244 = vsel %vm239, %v63, 0
  %vm246 = vcmask 1043456
  %v248 = vsel %vm246, %v238, 0
  %250 = vmatprep.subr.bf16.mxu0 0
  %251 = vmatpush1.bf16.msra.mxu0 %v248
  %252 = vmatprep.subr.bf16.mxu0 0
  %253 = vmatpush1.bf16.msra.mxu0 0
  %254 = vmatprep.subr.bf16.mxu0 0
  %255 = vmatpush1.bf16.msra.mxu0 0
  %256 = vmatprep.subr.bf16.mxu0 0
  %257 = vmatpush1.bf16.msra.mxu0 0
  %258 = vmatprep.subr.bf16.mxu0 0
  %259 = vmatpush1.bf16.msra.mxu0 0
  %260 = vmatprep.subr.bf16.mxu0 0
  %261 = vmatpush1.bf16.msra.mxu0 0
  %262 = vmatprep.subr.bf16.mxu0 0
  %263 = vmatpush1.bf16.msra.mxu0 0
  %264 = vmatprep.subr.bf16.mxu0 0
  %265 = vmatpush1.bf16.msra.mxu0 0
  %266 = vmatprep.subr.bf16.mxu0 0
  %267 = vmatpush1.bf16.msra.mxu0 0
  %268 = vmatprep.subr.bf16.mxu0 0
  %269 = vmatpush1.bf16.msra.mxu0 0
  %270 = vmatprep.subr.bf16.mxu0 0
  %271 = vmatpush1.bf16.msra.mxu0 0
  %272 = vmatprep.subr.bf16.mxu0 0
  %273 = vmatpush1.bf16.msra.mxu0 0
  %274 = vmatprep.subr.bf16.mxu0 0
  %275 = vmatpush1.bf16.msra.mxu0 0
  %276 = vmatprep.subr.bf16.mxu0 0
  %277 = vmatpush1.bf16.msra.mxu0 0
  %278 = vmatprep.subr.bf16.mxu0 0
  %279 = vmatpush1.bf16.msra.mxu0 0
  %280 = vmatprep.subr.bf16.mxu0 0
  %281 = vmatpush1.bf16.msra.mxu0 0
  %282 = vmatprep.mubr.bf16.mxu0 0
  %283 = vmatmul.mubr.bf16.gmra.mrb[0].mxu0 %v241
  %v284 = vpop.f32.mrb[0].mxu0
  %v285 = vadd.f32 0.0, %v284
  %v286 = vpop.f32.mrb[0].mxu0
  %v287 = vpop.f32.mrb[0].mxu0
  %v288 = vadd.f32 0.0, %v287
  %v289 = vpop.f32.mrb[0].mxu0
  %290 = vmatprep.mubr.bf16.mxu0 0
  %291 = vmatmul.mubr.bf16.gmra.mrb[0].mxu0 %v244
  %v292 = vpop.f32.mrb[0].mxu0
  %v293 = vadd.f32 0.0, %v292
  %v294 = vpop.f32.mrb[0].mxu0
  %v295 = vpop.f32.mrb[0].mxu0
  %v296 = vadd.f32 0.0, %v295
  %v297 = vpop.f32.mrb[0].mxu0
  %298 = vdwg.mxu0
  %v300 = vsel %vm239, %v236, 0
  %v303 = vsel %vm239, %v237, 0
  %v306 = vsel %vm246, %v235, 0
  %308 = vmatprep.subr.bf16.mxu0 0
  %309 = vmatpush1.bf16.msra.mxu0 %v306
  %310 = vmatprep.subr.bf16.mxu0 0
  %311 = vmatpush1.bf16.msra.mxu0 0
  %312 = vmatprep.subr.bf16.mxu0 0
  %313 = vmatpush1.bf16.msra.mxu0 0
  %314 = vmatprep.subr.bf16.mxu0 0
  %315 = vmatpush1.bf16.msra.mxu0 0
  %316 = vmatprep.subr.bf16.mxu0 0
  %317 = vmatpush1.bf16.msra.mxu0 0
  %318 = vmatprep.subr.bf16.mxu0 0
  %319 = vmatpush1.bf16.msra.mxu0 0
  %320 = vmatprep.subr.bf16.mxu0 0
  %321 = vmatpush1.bf16.msra.mxu0 0
  %322 = vmatprep.subr.bf16.mxu0 0
  %323 = vmatpush1.bf16.msra.mxu0 0
  %324 = vmatprep.subr.bf16.mxu0 0
  %325 = vmatpush1.bf16.msra.mxu0 0
  %326 = vmatprep.subr.bf16.mxu0 0
  %327 = vmatpush1.bf16.msra.mxu0 0
  %328 = vmatprep.subr.bf16.mxu0 0
  %329 = vmatpush1.bf16.msra.mxu0 0
  %330 = vmatprep.subr.bf16.mxu0 0
  %331 = vmatpush1.bf16.msra.mxu0 0
  %332 = vmatprep.subr.bf16.mxu0 0
  %333 = vmatpush1.bf16.msra.mxu0 0
  %334 = vmatprep.subr.bf16.mxu0 0
  %335 = vmatpush1.bf16.msra.mxu0 0
  %336 = vmatprep.subr.bf16.mxu0 0
  %337 = vmatpush1.bf16.msra.mxu0 0
  %338 = vmatprep.subr.bf16.mxu0 0
  %339 = vmatpush1.bf16.msra.mxu0 0
  %340 = vmatprep.mubr.bf16.mxu0 0
  %341 = vmatmul.mubr.bf16.gmra.mrb[0].mxu0 %v300
  %v342 = vpop.f32.mrb[0].mxu0
  %v343 = vadd.f32 %v285, %v342
  %v344 = vpop.f32.mrb[0].mxu0
  %v345 = vpop.f32.mrb[0].mxu0
  %v346 = vadd.f32 %v288, %v345
  %v347 = vpop.f32.mrb[0].mxu0
  %348 = vmatprep.mubr.bf16.mxu0 0
  %349 = vmatmul.mubr.bf16.gmra.mrb[0].mxu0 %v303
  %v350 = vpop.f32.mrb[0].mxu0
  %v351 = vadd.f32 %v293, %v350
  %v352 = vpop.f32.mrb[0].mxu0
  %v353 = vpop.f32.mrb[0].mxu0
  %v354 = vadd.f32 %v296, %v353
  %v355 = vpop.f32.mrb[0].mxu0
  %356 = vdwg.mxu0
  %v361 = vunpack.c.l.b16 %v166
  %v362 = vunpack.c.l.b16 %v167
  %v363 = vunpack.c.l.b16 %v168
  %v364 = vunpack.c.l.b16 %v169
  %v365 = vpack.c.b16 %v362, %v361
  %v366 = vpack.c.b16 %v364, %v363
  %v368 = vsel %vm84, %v365, 0
  %v371 = vsel %vm84, %v366, 0
  %373 = vmatprep.subr.bf16.mxu0 0
  %374 = vmatpush1.bf16.msra.mxu0 %v62
  %375 = vmatprep.subr.bf16.mxu0 0
  %376 = vmatpush1.bf16.msra.mxu0 %v63
  %377 = vmatprep.subr.bf16.mxu0 0
  %378 = vmatpush1.bf16.msra.mxu0 0
  %379 = vmatprep.subr.bf16.mxu0 0
  %380 = vmatpush1.bf16.msra.mxu0 0
  %381 = vmatprep.subr.bf16.mxu0 0
  %382 = vmatpush1.bf16.msra.mxu0 0
  %383 = vmatprep.subr.bf16.mxu0 0
  %384 = vmatpush1.bf16.msra.mxu0 0
  %385 = vmatprep.subr.bf16.mxu0 0
  %386 = vmatpush1.bf16.msra.mxu0 0
  %387 = vmatprep.subr.bf16.mxu0 0
  %388 = vmatpush1.bf16.msra.mxu0 0
  %389 = vmatprep.subr.bf16.mxu0 0
  %390 = vmatpush1.bf16.msra.mxu0 0
  %391 = vmatprep.subr.bf16.mxu0 0
  %392 = vmatpush1.bf16.msra.mxu0 0
  %393 = vmatprep.subr.bf16.mxu0 0
  %394 = vmatpush1.bf16.msra.mxu0 0
  %395 = vmatprep.subr.bf16.mxu0 0
  %396 = vmatpush1.bf16.msra.mxu0 0
  %397 = vmatprep.subr.bf16.mxu0 0
  %398 = vmatpush1.bf16.msra.mxu0 0
  %399 = vmatprep.subr.bf16.mxu0 0
  %400 = vmatpush1.bf16.msra.mxu0 0
  %401 = vmatprep.subr.bf16.mxu0 0
  %402 = vmatpush1.bf16.msra.mxu0 0
  %403 = vmatprep.subr.bf16.mxu0 0
  %404 = vmatpush1.bf16.msra.mxu0 0
  %405 = vmatprep.mubr.bf16.mxu0 0
  %406 = vmatmul.mubr.bf16.gmra.mrb[0].mxu0 %v368
  %v407 = vpop.f32.mrb[0].mxu0
  %v408 = vadd.f32 0.0, %v407
  %v409 = vpop.f32.mrb[0].mxu0
  %v410 = vpop.f32.mrb[0].mxu0
  %v411 = vadd.f32 0.0, %v410
  %v412 = vpop.f32.mrb[0].mxu0
  %413 = vmatprep.mubr.bf16.mxu0 0
  %414 = vmatmul.mubr.bf16.gmra.mrb[0].mxu0 %v371
  %v415 = vpop.f32.mrb[0].mxu0
  %v416 = vadd.f32 0.0, %v415
  %v417 = vpop.f32.mrb[0].mxu0
  %v418 = vpop.f32.mrb[0].mxu0
  %v419 = vadd.f32 0.0, %v418
  %v420 = vpop.f32.mrb[0].mxu0
  %421 = vdwg.mxu0
  %v422 = vld [vmem:[%s3 + $0x1f0] sm:$0xf]
  %v423 = vpack.c.bf16 %v411, %v408
  %v424 = vpack.c.bf16 %v419, %v416
  %v426 = vsel %vm239, %v423, 0
  %v429 = vsel %vm239, %v424, 0
  %v432 = vsel %vm246, %v422, 0
  %434 = vmatprep.subr.bf16.mxu0 0
  %435 = vmatpush1.bf16.msra.mxu0 %v432
  %436 = vmatprep.subr.bf16.mxu0 0
  %437 = vmatpush1.bf16.msra.mxu0 0
  %438 = vmatprep.subr.bf16.mxu0 0
  %439 = vmatpush1.bf16.msra.mxu0 0
  %440 = vmatprep.subr.bf16.mxu0 0
  %441 = vmatpush1.bf16.msra.mxu0 0
  %442 = vmatprep.subr.bf16.mxu0 0
  %443 = vmatpush1.bf16.msra.mxu0 0
  %444 = vmatprep.subr.bf16.mxu0 0
  %445 = vmatpush1.bf16.msra.mxu0 0
  %446 = vmatprep.subr.bf16.mxu0 0
  %447 = vmatpush1.bf16.msra.mxu0 0
  %448 = vmatprep.subr.bf16.mxu0 0
  %449 = vmatpush1.bf16.msra.mxu0 0
  %450 = vmatprep.subr.bf16.mxu0 0
  %451 = vmatpush1.bf16.msra.mxu0 0
  %452 = vmatprep.subr.bf16.mxu0 0
  %453 = vmatpush1.bf16.msra.mxu0 0
  %454 = vmatprep.subr.bf16.mxu0 0
  %455 = vmatpush1.bf16.msra.mxu0 0
  %456 = vmatprep.subr.bf16.mxu0 0
  %457 = vmatpush1.bf16.msra.mxu0 0
  %458 = vmatprep.subr.bf16.mxu0 0
  %459 = vmatpush1.bf16.msra.mxu0 0
  %460 = vmatprep.subr.bf16.mxu0 0
  %461 = vmatpush1.bf16.msra.mxu0 0
  %462 = vmatprep.subr.bf16.mxu0 0
  %463 = vmatpush1.bf16.msra.mxu0 0
  %464 = vmatprep.subr.bf16.mxu0 0
  %465 = vmatpush1.bf16.msra.mxu0 0
  %466 = vmatprep.mubr.bf16.mxu0 0
  %467 = vmatmul.mubr.bf16.gmra.mrb[0].mxu0 %v426
  %v468 = vpop.f32.mrb[0].mxu0
  %v469 = vadd.f32 0.0, %v468
  %v470 = vpop.f32.mrb[0].mxu0
  %v471 = vpop.f32.mrb[0].mxu0
  %v472 = vadd.f32 0.0, %v471
  %v473 = vpop.f32.mrb[0].mxu0
  %474 = vmatprep.mubr.bf16.mxu0 0
  %475 = vmatmul.mubr.bf16.gmra.mrb[0].mxu0 %v429
  %v476 = vpop.f32.mrb[0].mxu0
  %v477 = vadd.f32 0.0, %v476
  %v478 = vpop.f32.mrb[0].mxu0
  %v479 = vpop.f32.mrb[0].mxu0
  %v480 = vadd.f32 0.0, %v479
  %v481 = vpop.f32.mrb[0].mxu0
  %482 = vdwg.mxu0
  %v483 = vadd.f32 %v343, %v469
  %v484 = vadd.f32 %v346, %v472
  %v485 = vadd.f32 %v351, %v477
  %v486 = vadd.f32 %v354, %v480
  %v487 = vld [vmem:[%s3 + $0x210] sm:$0xf]
  %v488 = vpack.c.bf16 %v47, %v46
  %v489 = vpack.c.bf16 %v49, %v48
  %v491 = vsel %vm239, %v488, 0
  %v494 = vsel %vm239, %v489, 0
  %v497 = vsel %vm246, %v487, 0
  %499 = vmatprep.subr.bf16.mxu0 0
  %500 = vmatpush1.bf16.msra.mxu0 %v497
  %501 = vmatprep.subr.bf16.mxu0 0
  %502 = vmatpush1.bf16.msra.mxu0 0
  %503 = vmatprep.subr.bf16.mxu0 0
  %504 = vmatpush1.bf16.msra.mxu0 0
  %505 = vmatprep.subr.bf16.mxu0 0
  %506 = vmatpush1.bf16.msra.mxu0 0
  %507 = vmatprep.subr.bf16.mxu0 0
  %508 = vmatpush1.bf16.msra.mxu0 0
  %509 = vmatprep.subr.bf16.mxu0 0
  %510 = vmatpush1.bf16.msra.mxu0 0
  %511 = vmatprep.subr.bf16.mxu0 0
  %512 = vmatpush1.bf16.msra.mxu0 0
  %513 = vmatprep.subr.bf16.mxu0 0
  %514 = vmatpush1.bf16.msra.mxu0 0
  %515 = vmatprep.subr.bf16.mxu0 0
  %516 = vmatpush1.bf16.msra.mxu0 0
  %517 = vmatprep.subr.bf16.mxu0 0
  %518 = vmatpush1.bf16.msra.mxu0 0
  %519 = vmatprep.subr.bf16.mxu0 0
  %520 = vmatpush1.bf16.msra.mxu0 0
  %521 = vmatprep.subr.bf16.mxu0 0
  %522 = vmatpush1.bf16.msra.mxu0 0
  %523 = vmatprep.subr.bf16.mxu0 0
  %524 = vmatpush1.bf16.msra.mxu0 0
  %525 = vmatprep.subr.bf16.mxu0 0
  %526 = vmatpush1.bf16.msra.mxu0 0
  %527 = vmatprep.subr.bf16.mxu0 0
  %528 = vmatpush1.bf16.msra.mxu0 0
  %529 = vmatprep.subr.bf16.mxu0 0
  %530 = vmatpush1.bf16.msra.mxu0 0
  %531 = vmatprep.mubr.bf16.mxu0 0
  %532 = vmatmul.mubr.bf16.gmra.mrb[0].mxu0 %v491
  %v533 = vpop.f32.mrb[0].mxu0
  %v534 = vadd.f32 0.0, %v533
  %v535 = vpop.f32.mrb[0].mxu0
  %v536 = vpop.f32.mrb[0].mxu0
  %v537 = vadd.f32 0.0, %v536
  %v538 = vpop.f32.mrb[0].mxu0
  %539 = vmatprep.mubr.bf16.mxu0 0
  %540 = vmatmul.mubr.bf16.gmra.mrb[0].mxu0 %v494
  %v541 = vpop.f32.mrb[0].mxu0
  %v542 = vadd.f32 0.0, %v541
  %v543 = vpop.f32.mrb[0].mxu0
  %v544 = vpop.f32.mrb[0].mxu0
  %v545 = vadd.f32 0.0, %v544
  %v546 = vpop.f32.mrb[0].mxu0
  %547 = vdwg.mxu0
  %v548 = vadd.f32 %v483, %v534
  %v549 = vadd.f32 %v484, %v537
  %v550 = vadd.f32 %v485, %v542
  %v551 = vadd.f32 %v486, %v545
  %v552 = vld [vmem:[%s3 + $0x20] sm:$0xf]
  %v553 = vld [vmem:[%s3 + $0x24] sm:$0xf]
  %v554 = vld [vmem:[%s3 + $0x28] sm:$0xf]
  %v555 = vld [vmem:[%s3 + $0x2c] sm:$0xf]
  %v556 = vld [vmem:[%s3 + $0xf0] sm:$0xf]
  %v557 = vld [vmem:[%s3 + $0xf4] sm:$0xf]
  %v558 = vld [vmem:[%s3 + $0xf8] sm:$0xf]
  %v559 = vld [vmem:[%s3 + $0xfc] sm:$0xf]
  %v560 = vpack.c.bf16 %v549, %v548
  %v561 = vpack.c.bf16 %v551, %v550
  %v562 = vld [vmem:[%s9] sm:$0x1]
  %v564 = vlaneseq
  %v565 = vshrl.u32 %v564, 7
  %v566 = vsub.s32 0, %v565
  %v567 = vrot.slane %v562, %v566
  %v573 = vunpack.c.l.b16 %v556
  %v574 = vunpack.c.l.b16 %v557
  %v575 = vunpack.c.l.b16 %v558
  %v576 = vunpack.c.l.b16 %v559
  %v577 = vpack.c.b16 %v574, %v573
  %v578 = vpack.c.b16 %v576, %v575
  %v582 = vsel %vm84, %v560, 0
  %v585 = vsel %vm84, %v561, 0
  %587 = vmatprep.subr.bf16.mxu0 0
  %588 = vmatpush1.bf16.msra.mxu0 %v577
  %589 = vmatprep.subr.bf16.mxu0 0
  %590 = vmatpush1.bf16.msra.mxu0 %v578
  %591 = vmatprep.subr.bf16.mxu0 0
  %592 = vmatpush1.bf16.msra.mxu0 0
  %593 = vmatprep.subr.bf16.mxu0 0
  %594 = vmatpush1.bf16.msra.mxu0 0
  %595 = vmatprep.subr.bf16.mxu0 0
  %596 = vmatpush1.bf16.msra.mxu0 0
  %597 = vmatprep.subr.bf16.mxu0 0
  %598 = vmatpush1.bf16.msra.mxu0 0
  %599 = vmatprep.subr.bf16.mxu0 0
  %600 = vmatpush1.bf16.msra.mxu0 0
  %601 = vmatprep.subr.bf16.mxu0 0
  %602 = vmatpush1.bf16.msra.mxu0 0
  %603 = vmatprep.subr.bf16.mxu0 0
  %604 = vmatpush1.bf16.msra.mxu0 0
  %605 = vmatprep.subr.bf16.mxu0 0
  %606 = vmatpush1.bf16.msra.mxu0 0
  %607 = vmatprep.subr.bf16.mxu0 0
  %608 = vmatpush1.bf16.msra.mxu0 0
  %609 = vmatprep.subr.bf16.mxu0 0
  %610 = vmatpush1.bf16.msra.mxu0 0
  %611 = vmatprep.subr.bf16.mxu0 0
  %612 = vmatpush1.bf16.msra.mxu0 0
  %613 = vmatprep.subr.bf16.mxu0 0
  %614 = vmatpush1.bf16.msra.mxu0 0
  %615 = vmatprep.subr.bf16.mxu0 0
  %616 = vmatpush1.bf16.msra.mxu0 0
  %617 = vmatprep.subr.bf16.mxu0 0
  %618 = vmatpush1.bf16.msra.mxu0 0
  %619 = vmatprep.mubr.bf16.mxu0 0
  %620 = vmatmul.mubr.bf16.gmra.mrb[0].mxu0 %v582
  %v621 = vpop.f32.mrb[0].mxu0
  %v622 = vadd.f32 %v567, %v621
  %v623 = vpop.f32.mrb[0].mxu0
  %v624 = vpop.f32.mrb[0].mxu0
  %v625 = vadd.f32 %v567, %v624
  %v626 = vpop.f32.mrb[0].mxu0
  %627 = vmatprep.mubr.bf16.mxu0 0
  %628 = vmatmul.mubr.bf16.gmra.mrb[0].mxu0 %v585
  %v629 = vpop.f32.mrb[0].mxu0
  %v630 = vadd.f32 %v567, %v629
  %v631 = vpop.f32.mrb[0].mxu0
  %v632 = vpop.f32.mrb[0].mxu0
  %v633 = vadd.f32 %v567, %v632
  %v634 = vpop.f32.mrb[0].mxu0
  %635 = vdwg.mxu0
  %v636 = vld [vmem:[%s3 + $0xa0] sm:$0xf]
  %v637 = vld [vmem:[%s3 + $0xa4] sm:$0xf]
  %v638 = vpack.c.bf16 %v625, %v622
  %v639 = vpack.c.bf16 %v633, %v630
  %v642 = vunpack.c.l.b16 %v636
  %v643 = vunpack.c.l.b16 %v637
  %v644 = vpack.c.b16 %v643, %v642
  %v646 = vsel %vm84, %v644, 0
  %648 = vmatprep.subr.bf16.mxu0 0
  %649 = vmatpush1.bf16.msra.mxu0 %v638
  %650 = vmatprep.subr.bf16.mxu0 0
  %651 = vmatpush1.bf16.msra.mxu0 %v639
  %652 = vmatprep.subr.bf16.mxu0 0
  %653 = vmatpush1.bf16.msra.mxu0 0
  %654 = vmatprep.subr.bf16.mxu0 0
  %655 = vmatpush1.bf16.msra.mxu0 0
  %656 = vmatprep.subr.bf16.mxu0 0
  %657 = vmatpush1.bf16.msra.mxu0 0
  %658 = vmatprep.subr.bf16.mxu0 0
  %659 = vmatpush1.bf16.msra.mxu0 0
  %660 = vmatprep.subr.bf16.mxu0 0
  %661 = vmatpush1.bf16.msra.mxu0 0
  %662 = vmatprep.subr.bf16.mxu0 0
  %663 = vmatpush1.bf16.msra.mxu0 0
  %664 = vmatprep.subr.bf16.mxu0 0
  %665 = vmatpush1.bf16.msra.mxu0 0
  %666 = vmatprep.subr.bf16.mxu0 0
  %667 = vmatpush1.bf16.msra.mxu0 0
  %668 = vmatprep.subr.bf16.mxu0 0
  %669 = vmatpush1.bf16.msra.mxu0 0
  %670 = vmatprep.subr.bf16.mxu0 0
  %671 = vmatpush1.bf16.msra.mxu0 0
  %672 = vmatprep.subr.bf16.mxu0 0
  %673 = vmatpush1.bf16.msra.mxu0 0
  %674 = vmatprep.subr.bf16.mxu0 0
  %675 = vmatpush1.bf16.msra.mxu0 0
  %676 = vmatprep.subr.bf16.mxu0 0
  %677 = vmatpush1.bf16.msra.mxu0 0
  %678 = vmatprep.subr.bf16.mxu0 0
  %679 = vmatpush1.bf16.msra.mxu0 0
  %680 = vmatprep.mubr.bf16.mxu0 0
  %681 = vmatmul.mubr.bf16.gmra.mrb[0].mxu0 %v646
  %v682 = vpop.f32.mrb[0].mxu0
  %v683 = vadd.f32 0.0, %v682
  %v684 = vpop.f32.mrb[0].mxu0
  %v685 = vpop.f32.mrb[0].mxu0
  %v686 = vadd.f32 0.0, %v685
  %v687 = vpop.f32.mrb[0].mxu0
  %688 = vdwg.mxu0
  %v689 = vld [vmem:[%s5] sm:$0xf]
  %v690 = vld [vmem:[%s5 + $0x4] sm:$0xf]
  %v691 = vld [vmem:[%s5 + $0x8] sm:$0xf]
  %v692 = vld [vmem:[%s5 + $0xc] sm:$0xf]
  %v693 = vpack.c.bf16 %v686, %v683
  %v698 = vunpack.c.l.b16 %v689
  %v699 = vunpack.c.l.b16 %v690
  %v700 = vunpack.c.l.b16 %v691
  %v701 = vunpack.c.l.b16 %v692
  %v702 = vpack.c.b16 %v699, %v698
  %v703 = vpack.c.b16 %v701, %v700
  %v707 = vsel %vm84, %v693, 0
  %709 = vmatprep.subr.bf16.mxu0 0
  %710 = vmatpush1.bf16.msra.mxu0 %v702
  %711 = vmatprep.subr.bf16.mxu0 0
  %712 = vmatpush1.bf16.msra.mxu0 %v703
  %713 = vmatprep.subr.bf16.mxu0 0
  %714 = vmatpush1.bf16.msra.mxu0 0
  %715 = vmatprep.subr.bf16.mxu0 0
  %716 = vmatpush1.bf16.msra.mxu0 0
  %717 = vmatprep.subr.bf16.mxu0 0
  %718 = vmatpush1.bf16.msra.mxu0 0
  %719 = vmatprep.subr.bf16.mxu0 0
  %720 = vmatpush1.bf16.msra.mxu0 0
  %721 = vmatprep.subr.bf16.mxu0 0
  %722 = vmatpush1.bf16.msra.mxu0 0
  %723 = vmatprep.subr.bf16.mxu0 0
  %724 = vmatpush1.bf16.msra.mxu0 0
  %725 = vmatprep.subr.bf16.mxu0 0
  %726 = vmatpush1.bf16.msra.mxu0 0
  %727 = vmatprep.subr.bf16.mxu0 0
  %728 = vmatpush1.bf16.msra.mxu0 0
  %729 = vmatprep.subr.bf16.mxu0 0
  %730 = vmatpush1.bf16.msra.mxu0 0
  %731 = vmatprep.subr.bf16.mxu0 0
  %732 = vmatpush1.bf16.msra.mxu0 0
  %733 = vmatprep.subr.bf16.mxu0 0
  %734 = vmatpush1.bf16.msra.mxu0 0
  %735 = vmatprep.subr.bf16.mxu0 0
  %736 = vmatpush1.bf16.msra.mxu0 0
  %737 = vmatprep.subr.bf16.mxu0 0
  %738 = vmatpush1.bf16.msra.mxu0 0
  %739 = vmatprep.subr.bf16.mxu0 0
  %740 = vmatpush1.bf16.msra.mxu0 0
  %741 = vmatprep.mubr.bf16.mxu0 0
  %742 = vmatmul.mubr.bf16.gmra.mrb[0].mxu0 %v707
  %v743 = vpop.f32.mrb[0].mxu0
  %v744 = vadd.f32 0.0, %v743
  %v745 = vpop.f32.mrb[0].mxu0
  %v746 = vpop.f32.mrb[0].mxu0
  %v747 = vadd.f32 0.0, %v746
  %v748 = vpop.f32.mrb[0].mxu0
  %749 = vdwg.mxu0
  %v750 = vld [vmem:[%s6] sm:$0xff]
  %v751 = vld [vmem:[%s6 + $0x8] sm:$0xff]
  %v752 = vld [vmem:[%s6 + $0x10] sm:$0xff]
  %v753 = vld [vmem:[%s6 + $0x18] sm:$0xff]
  %v754 = vmul.f32 %v744, %v750
  %v755 = vmul.f32 %v747, %v751
  %v756 = vmul.f32 %v747, %v752
  %v757 = vmul.f32 %v744, %v753
  %v758 = vadd.f32 %v754, %v756
  %v759 = vadd.f32 %v755, %v757
  %v760 = vld [vmem:[%s3 + $0xb0] sm:$0xf]
  %v761 = vld [vmem:[%s3 + $0xb4] sm:$0xf]
  %v762 = vld [vmem:[%s3 + $0xb8] sm:$0xf]
  %v763 = vld [vmem:[%s3 + $0xbc] sm:$0xf]
  %v764 = vld [vmem:[%s3 + $0xc0] sm:$0xf]
  %v765 = vld [vmem:[%s3 + $0xc4] sm:$0xf]
  %v766 = vld [vmem:[%s3 + $0xc8] sm:$0xf]
  %v767 = vld [vmem:[%s3 + $0xcc] sm:$0xf]
  %v768 = vld [vmem:[%s3 + $0xd0] sm:$0xf]
  %v769 = vld [vmem:[%s3 + $0xd4] sm:$0xf]
  %v770 = vld [vmem:[%s3 + $0xd8] sm:$0xf]
  %v771 = vld [vmem:[%s3 + $0xdc] sm:$0xf]
  %v772 = vld [vmem:[%s3 + $0xe0] sm:$0xf]
  %v773 = vld [vmem:[%s3 + $0xe4] sm:$0xf]
  %v774 = vld [vmem:[%s3 + $0xe8] sm:$0xf]
  %v775 = vld [vmem:[%s3 + $0xec] sm:$0xf]
  %v776 = vpack.c.bf16 %v759, %v758
  %v793 = vunpack.c.l.b16 %v760
  %v794 = vunpack.c.l.b16 %v761
  %v795 = vunpack.c.l.b16 %v762
  %v796 = vunpack.c.l.b16 %v763
  %v797 = vunpack.c.l.b16 %v764
  %v798 = vunpack.c.l.b16 %v765
  %v799 = vunpack.c.l.b16 %v766
  %v800 = vunpack.c.l.b16 %v767
  %v801 = vunpack.c.l.b16 %v768
  %v802 = vunpack.c.l.b16 %v769
  %v803 = vunpack.c.l.b16 %v770
  %v804 = vunpack.c.l.b16 %v771
  %v805 = vunpack.c.l.b16 %v772
  %v806 = vunpack.c.l.b16 %v773
  %v807 = vunpack.c.l.b16 %v774
  %v808 = vunpack.c.l.b16 %v775
  %v809 = vpack.c.b16 %v794, %v793
  %v810 = vpack.c.b16 %v796, %v795
  %v811 = vpack.c.b16 %v798, %v797
  %v812 = vpack.c.b16 %v800, %v799
  %v813 = vpack.c.b16 %v802, %v801
  %v814 = vpack.c.b16 %v804, %v803
  %v815 = vpack.c.b16 %v806, %v805
  %v816 = vpack.c.b16 %v808, %v807
  %825 = vmatprep.subr.bf16.mxu0 0
  %826 = vmatpush1.bf16.msra.mxu0 %v809
  %827 = vmatprep.subr.bf16.mxu0 0
  %828 = vmatpush1.bf16.msra.mxu0 %v810
  %829 = vmatprep.subr.bf16.mxu0 0
  %830 = vmatpush1.bf16.msra.mxu0 %v811
  %831 = vmatprep.subr.bf16.mxu0 0
  %832 = vmatpush1.bf16.msra.mxu0 %v812
  %833 = vmatprep.subr.bf16.mxu0 0
  %834 = vmatpush1.bf16.msra.mxu0 %v813
  %835 = vmatprep.subr.bf16.mxu0 0
  %836 = vmatpush1.bf16.msra.mxu0 %v814
  %837 = vmatprep.subr.bf16.mxu0 0
  %838 = vmatpush1.bf16.msra.mxu0 %v815
  %839 = vmatprep.subr.bf16.mxu0 0
  %840 = vmatpush1.bf16.msra.mxu0 %v816
  %841 = vmatprep.subr.bf16.mxu0 0
  %842 = vmatpush1.bf16.msra.mxu0 0
  %843 = vmatprep.subr.bf16.mxu0 0
  %844 = vmatpush1.bf16.msra.mxu0 0
  %845 = vmatprep.subr.bf16.mxu0 0
  %846 = vmatpush1.bf16.msra.mxu0 0
  %847 = vmatprep.subr.bf16.mxu0 0
  %848 = vmatpush1.bf16.msra.mxu0 0
  %849 = vmatprep.subr.bf16.mxu0 0
  %850 = vmatpush1.bf16.msra.mxu0 0
  %851 = vmatprep.subr.bf16.mxu0 0
  %852 = vmatpush1.bf16.msra.mxu0 0
  %853 = vmatprep.subr.bf16.mxu0 0
  %854 = vmatpush1.bf16.msra.mxu0 0
  %855 = vmatprep.subr.bf16.mxu0 0
  %856 = vmatpush1.bf16.msra.mxu0 0
  %857 = vmatprep.mubr.bf16.mxu0 0
  %858 = vmatmul.mubr.bf16.gmra.mrb[0].mxu0 %v776
  %v859 = vpop.f32.mrb[0].mxu0
  %v860 = vadd.f32 0.0, %v859
  %v861 = vpop.f32.mrb[0].mxu0
  %v862 = vpop.f32.mrb[0].mxu0
  %v863 = vadd.f32 0.0, %v862
  %v864 = vpop.f32.mrb[0].mxu0
  %865 = vdwg.mxu0
  %v866 = vld [vmem:[%s4] sm:$0xf]
  %v867 = vld [vmem:[%s4 + $0x4] sm:$0xf]
  %v868 = vld [vmem:[%s4 + $0x8] sm:$0xf]
  %v869 = vld [vmem:[%s4 + $0xc] sm:$0xf]
  %v870 = vpack.c.bf16 %v863, %v860
  %v875 = vunpack.c.l.b16 %v866
  %v876 = vunpack.c.l.b16 %v867
  %v877 = vunpack.c.l.b16 %v868
  %v878 = vunpack.c.l.b16 %v869
  %v879 = vpack.c.b16 %v876, %v875
  %v880 = vpack.c.b16 %v878, %v877
  %vm881 = vcmask 130048
  %v883 = vsel %vm881, %v879, 0
  %v886 = vsel %vm881, %v880, 0
  %888 = vmatprep.subr.bf16.mxu0 0
  %889 = vmatpush1.bf16.msra.mxu0 %v870
  %890 = vmatprep.subr.bf16.mxu0 0
  %891 = vmatpush1.bf16.msra.mxu0 0
  %892 = vmatprep.subr.bf16.mxu0 0
  %893 = vmatpush1.bf16.msra.mxu0 0
  %894 = vmatprep.subr.bf16.mxu0 0
  %895 = vmatpush1.bf16.msra.mxu0 0
  %896 = vmatprep.subr.bf16.mxu0 0
  %897 = vmatpush1.bf16.msra.mxu0 0
  %898 = vmatprep.subr.bf16.mxu0 0
  %899 = vmatpush1.bf16.msra.mxu0 0
  %900 = vmatprep.subr.bf16.mxu0 0
  %901 = vmatpush1.bf16.msra.mxu0 0
  %902 = vmatprep.subr.bf16.mxu0 0
  %903 = vmatpush1.bf16.msra.mxu0 0
  %904 = vmatprep.subr.bf16.mxu0 0
  %905 = vmatpush1.bf16.msra.mxu0 0
  %906 = vmatprep.subr.bf16.mxu0 0
  %907 = vmatpush1.bf16.msra.mxu0 0
  %908 = vmatprep.subr.bf16.mxu0 0
  %909 = vmatpush1.bf16.msra.mxu0 0
  %910 = vmatprep.subr.bf16.mxu0 0
  %911 = vmatpush1.bf16.msra.mxu0 0
  %912 = vmatprep.subr.bf16.mxu0 0
  %913 = vmatpush1.bf16.msra.mxu0 0
  %914 = vmatprep.subr.bf16.mxu0 0
  %915 = vmatpush1.bf16.msra.mxu0 0
  %916 = vmatprep.subr.bf16.mxu0 0
  %917 = vmatpush1.bf16.msra.mxu0 0
  %918 = vmatprep.subr.bf16.mxu0 0
  %919 = vmatpush1.bf16.msra.mxu0 0
  %920 = vmatprep.mubr.bf16.mxu0 0
  %921 = vmatmul.mubr.bf16.gmra.mrb[0].mxu0 %v883
  %v922 = vpop.f32.mrb[0].mxu0
  %v923 = vadd.f32 0.0, %v922
  %v924 = vpop.f32.mrb[0].mxu0
  %v925 = vpop.f32.mrb[0].mxu0
  %v926 = vadd.f32 0.0, %v925
  %v927 = vpop.f32.mrb[0].mxu0
  %928 = vmatprep.mubr.bf16.mxu0 0
  %929 = vmatmul.mubr.bf16.gmra.mrb[0].mxu0 %v886
  %v930 = vpop.f32.mrb[0].mxu0
  %v931 = vadd.f32 0.0, %v930
  %v932 = vpop.f32.mrb[0].mxu0
  %v933 = vpop.f32.mrb[0].mxu0
  %v934 = vadd.f32 0.0, %v933
  %v935 = vpop.f32.mrb[0].mxu0
  %936 = vdwg.mxu0
  %v937 = vld [vmem:[%s3 + $0x100] sm:$0xf]
  %v938 = vld [vmem:[%s3 + $0x104] sm:$0xf]
  %v939 = vld [vmem:[%s3 + $0x108] sm:$0xf]
  %v940 = vld [vmem:[%s3 + $0x10c] sm:$0xf]
  %v941 = vpack.c.bf16 %v926, %v923
  %v942 = vpack.c.bf16 %v934, %v931
  %s943 = scalar_lea.vmem %s9, 1
  %v944 = vld [vmem:[%s943] sm:$0x1]
  %v946 = vlaneseq
  %v947 = vshrl.u32 %v946, 7
  %v948 = vsub.s32 0, %v947
  %v949 = vrot.slane %v944, %v948
  %v955 = vunpack.c.l.b16 %v937
  %v956 = vunpack.c.l.b16 %v938
  %v957 = vunpack.c.l.b16 %v939
  %v958 = vunpack.c.l.b16 %v940
  %v959 = vpack.c.b16 %v956, %v955
  %v960 = vpack.c.b16 %v958, %v957
  %v964 = vsel %vm84, %v941, 0
  %v967 = vsel %vm84, %v942, 0
  %969 = vmatprep.subr.bf16.mxu0 0
  %970 = vmatpush1.bf16.msra.mxu0 %v959
  %971 = vmatprep.subr.bf16.mxu0 0
  %972 = vmatpush1.bf16.msra.mxu0 %v960
  %973 = vmatprep.subr.bf16.mxu0 0
  %974 = vmatpush1.bf16.msra.mxu0 0
  %975 = vmatprep.subr.bf16.mxu0 0
  %976 = vmatpush1.bf16.msra.mxu0 0
  %977 = vmatprep.subr.bf16.mxu0 0
  %978 = vmatpush1.bf16.msra.mxu0 0
  %979 = vmatprep.subr.bf16.mxu0 0
  %980 = vmatpush1.bf16.msra.mxu0 0
  %981 = vmatprep.subr.bf16.mxu0 0
  %982 = vmatpush1.bf16.msra.mxu0 0
  %983 = vmatprep.subr.bf16.mxu0 0
  %984 = vmatpush1.bf16.msra.mxu0 0
  %985 = vmatprep.subr.bf16.mxu0 0
  %986 = vmatpush1.bf16.msra.mxu0 0
  %987 = vmatprep.subr.bf16.mxu0 0
  %988 = vmatpush1.bf16.msra.mxu0 0
  %989 = vmatprep.subr.bf16.mxu0 0
  %990 = vmatpush1.bf16.msra.mxu0 0
  %991 = vmatprep.subr.bf16.mxu0 0
  %992 = vmatpush1.bf16.msra.mxu0 0
  %993 = vmatprep.subr.bf16.mxu0 0
  %994 = vmatpush1.bf16.msra.mxu0 0
  %995 = vmatprep.subr.bf16.mxu0 0
  %996 = vmatpush1.bf16.msra.mxu0 0
  %997 = vmatprep.subr.bf16.mxu0 0
  %998 = vmatpush1.bf16.msra.mxu0 0
  %999 = vmatprep.subr.bf16.mxu0 0
  %1000 = vmatpush1.bf16.msra.mxu0 0
  %1001 = vmatprep.mubr.bf16.mxu0 0
  %1002 = vmatmul.mubr.bf16.gmra.mrb[0].mxu0 %v964
  %v1003 = vpop.f32.mrb[0].mxu0
  %v1004 = vadd.f32 %v949, %v1003
  %v1005 = vpop.f32.mrb[0].mxu0
  %v1006 = vpop.f32.mrb[0].mxu0
  %v1007 = vadd.f32 %v949, %v1006
  %v1008 = vpop.f32.mrb[0].mxu0
  %1009 = vmatprep.mubr.bf16.mxu0 0
  %1010 = vmatmul.mubr.bf16.gmra.mrb[0].mxu0 %v967
  %v1011 = vpop.f32.mrb[0].mxu0
  %v1012 = vadd.f32 %v949, %v1011
  %v1013 = vpop.f32.mrb[0].mxu0
  %v1014 = vpop.f32.mrb[0].mxu0
  %v1015 = vadd.f32 %v949, %v1014
  %v1016 = vpop.f32.mrb[0].mxu0
  %1017 = vdwg.mxu0
  %v1018 = vadd.f32 %v548, %v1004
  %v1019 = vadd.f32 %v549, %v1007
  %v1020 = vadd.f32 %v550, %v1012
  %v1021 = vadd.f32 %v551, %v1015
  %v1022 = vpack.c.bf16 %v1019, %v1018
  %v1023 = vpack.c.bf16 %v1021, %v1020
  %v1028 = vunpack.c.l.b16 %v552
  %v1029 = vunpack.c.l.b16 %v553
  %v1030 = vunpack.c.l.b16 %v554
  %v1031 = vunpack.c.l.b16 %v555
  %v1032 = vpack.c.b16 %v1029, %v1028
  %v1033 = vpack.c.b16 %v1031, %v1030
  %v1035 = vsel %vm84, %v1032, 0
  %v1038 = vsel %vm84, %v1033, 0
  %1040 = vmatprep.subr.bf16.mxu0 0
  %1041 = vmatpush1.bf16.msra.mxu0 %v1022
  %1042 = vmatprep.subr.bf16.mxu0 0
  %1043 = vmatpush1.bf16.msra.mxu0 %v1023
  %1044 = vmatprep.subr.bf16.mxu0 0
  %1045 = vmatpush1.bf16.msra.mxu0 0
  %1046 = vmatprep.subr.bf16.mxu0 0
  %1047 = vmatpush1.bf16.msra.mxu0 0
  %1048 = vmatprep.subr.bf16.mxu0 0
  %1049 = vmatpush1.bf16.msra.mxu0 0
  %1050 = vmatprep.subr.bf16.mxu0 0
  %1051 = vmatpush1.bf16.msra.mxu0 0
  %1052 = vmatprep.subr.bf16.mxu0 0
  %1053 = vmatpush1.bf16.msra.mxu0 0
  %1054 = vmatprep.subr.bf16.mxu0 0
  %1055 = vmatpush1.bf16.msra.mxu0 0
  %1056 = vmatprep.subr.bf16.mxu0 0
  %1057 = vmatpush1.bf16.msra.mxu0 0
  %1058 = vmatprep.subr.bf16.mxu0 0
  %1059 = vmatpush1.bf16.msra.mxu0 0
  %1060 = vmatprep.subr.bf16.mxu0 0
  %1061 = vmatpush1.bf16.msra.mxu0 0
  %1062 = vmatprep.subr.bf16.mxu0 0
  %1063 = vmatpush1.bf16.msra.mxu0 0
  %1064 = vmatprep.subr.bf16.mxu0 0
  %1065 = vmatpush1.bf16.msra.mxu0 0
  %1066 = vmatprep.subr.bf16.mxu0 0
  %1067 = vmatpush1.bf16.msra.mxu0 0
  %1068 = vmatprep.subr.bf16.mxu0 0
  %1069 = vmatpush1.bf16.msra.mxu0 0
  %1070 = vmatprep.subr.bf16.mxu0 0
  %1071 = vmatpush1.bf16.msra.mxu0 0
  %1072 = vmatprep.mubr.bf16.mxu0 0
  %1073 = vmatmul.mubr.bf16.gmra.mrb[0].mxu0 %v1035
  %v1074 = vpop.f32.mrb[0].mxu0
  %v1075 = vadd.f32 0.0, %v1074
  %v1076 = vpop.f32.mrb[0].mxu0
  %v1077 = vpop.f32.mrb[0].mxu0
  %v1078 = vadd.f32 0.0, %v1077
  %v1079 = vpop.f32.mrb[0].mxu0
  %1080 = vmatprep.mubr.bf16.mxu0 0
  %1081 = vmatmul.mubr.bf16.gmra.mrb[0].mxu0 %v1038
  %v1082 = vpop.f32.mrb[0].mxu0
  %v1083 = vadd.f32 0.0, %v1082
  %v1084 = vpop.f32.mrb[0].mxu0
  %v1085 = vpop.f32.mrb[0].mxu0
  %v1086 = vadd.f32 0.0, %v1085
  %v1087 = vpop.f32.mrb[0].mxu0
  %1088 = vdwg.mxu0
  %v1089 = vsub.f32 %v1018, %v1075
  %v1090 = vsub.f32 %v1019, %v1078
  %v1091 = vsub.f32 %v1020, %v1083
  %v1092 = vsub.f32 %v1021, %v1086
  %v1093 = vld [vmem:[%s3 + $0x110] sm:$0xf]
  %v1094 = vld [vmem:[%s3 + $0x114] sm:$0xf]
  %v1095 = vld [vmem:[%s3 + $0x118] sm:$0xf]
  %v1096 = vld [vmem:[%s3 + $0x11c] sm:$0xf]
  %v1097 = vpack.c.bf16 %v1090, %v1089
  %v1098 = vpack.c.bf16 %v1092, %v1091
  %v1103 = vunpack.c.l.b16 %v1093
  %v1104 = vunpack.c.l.b16 %v1094
  %v1105 = vunpack.c.l.b16 %v1095
  %v1106 = vunpack.c.l.b16 %v1096
  %v1107 = vpack.c.b16 %v1104, %v1103
  %v1108 = vpack.c.b16 %v1106, %v1105
  %v1112 = vsel %vm84, %v1097, 0
  %v1115 = vsel %vm84, %v1098, 0
  %1117 = vmatprep.subr.bf16.mxu0 0
  %1118 = vmatpush1.bf16.msra.mxu0 %v1107
  %1119 = vmatprep.subr.bf16.mxu0 0
  %1120 = vmatpush1.bf16.msra.mxu0 %v1108
  %1121 = vmatprep.subr.bf16.mxu0 0
  %1122 = vmatpush1.bf16.msra.mxu0 0
  %1123 = vmatprep.subr.bf16.mxu0 0
  %1124 = vmatpush1.bf16.msra.mxu0 0
  %1125 = vmatprep.subr.bf16.mxu0 0
  %1126 = vmatpush1.bf16.msra.mxu0 0
  %1127 = vmatprep.subr.bf16.mxu0 0
  %1128 = vmatpush1.bf16.msra.mxu0 0
  %1129 = vmatprep.subr.bf16.mxu0 0
  %1130 = vmatpush1.bf16.msra.mxu0 0
  %1131 = vmatprep.subr.bf16.mxu0 0
  %1132 = vmatpush1.bf16.msra.mxu0 0
  %1133 = vmatprep.subr.bf16.mxu0 0
  %1134 = vmatpush1.bf16.msra.mxu0 0
  %1135 = vmatprep.subr.bf16.mxu0 0
  %1136 = vmatpush1.bf16.msra.mxu0 0
  %1137 = vmatprep.subr.bf16.mxu0 0
  %1138 = vmatpush1.bf16.msra.mxu0 0
  %1139 = vmatprep.subr.bf16.mxu0 0
  %1140 = vmatpush1.bf16.msra.mxu0 0
  %1141 = vmatprep.subr.bf16.mxu0 0
  %1142 = vmatpush1.bf16.msra.mxu0 0
  %1143 = vmatprep.subr.bf16.mxu0 0
  %1144 = vmatpush1.bf16.msra.mxu0 0
  %1145 = vmatprep.subr.bf16.mxu0 0
  %1146 = vmatpush1.bf16.msra.mxu0 0
  %1147 = vmatprep.subr.bf16.mxu0 0
  %1148 = vmatpush1.bf16.msra.mxu0 0
  %1149 = vmatprep.mubr.bf16.mxu0 0
  %1150 = vmatmul.mubr.bf16.gmra.mrb[0].mxu0 %v1112
  %v1151 = vpop.f32.mrb[0].mxu0
  %v1152 = vadd.f32 0.0, %v1151
  %v1153 = vpop.f32.mrb[0].mxu0
  %v1154 = vpop.f32.mrb[0].mxu0
  %v1155 = vadd.f32 0.0, %v1154
  %v1156 = vpop.f32.mrb[0].mxu0
  %1157 = vmatprep.mubr.bf16.mxu0 0
  %1158 = vmatmul.mubr.bf16.gmra.mrb[0].mxu0 %v1115
  %v1159 = vpop.f32.mrb[0].mxu0
  %v1160 = vadd.f32 0.0, %v1159
  %v1161 = vpop.f32.mrb[0].mxu0
  %v1162 = vpop.f32.mrb[0].mxu0
  %v1163 = vadd.f32 0.0, %v1162
  %v1164 = vpop.f32.mrb[0].mxu0
  %1165 = vdwg.mxu0
  %v1166 = vmul.f32 %v1152, 0.5
  %v1167 = vmul.f32 %v1155, 0.5
  %v1168 = vmul.f32 %v1160, 0.5
  %v1169 = vmul.f32 %v1163, 0.5
  %v1170 = vmul.f32 %v1152, 0.70710677
  %v1171 = vmul.f32 %v1155, 0.70710677
  %v1172 = vmul.f32 %v1160, 0.70710677
  %v1173 = vmul.f32 %v1163, 0.70710677
  %v1174 = vand.u32 2147483647, %v1170
  %v1175 = vand.u32 2147483647, %v1171
  %v1176 = vand.u32 2147483647, %v1172
  %v1177 = vand.u32 2147483647, %v1173
  %v1178 = vmul.f32 %v1174, 0.3275911
  %v1179 = vmul.f32 %v1175, 0.3275911
  %v1180 = vmul.f32 %v1176, 0.3275911
  %v1181 = vmul.f32 %v1177, 0.3275911
  %v1182 = vadd.f32 %v1178, 1.0
  %v1183 = vadd.f32 %v1179, 1.0
  %v1184 = vadd.f32 %v1180, 1.0
  %v1185 = vadd.f32 %v1181, 1.0
  %v1186 = vrcp.pop %v1182
  %v1187 = vmul.f32 1.0, %v1186
  %v1188 = vrcp.pop %v1183
  %v1189 = vmul.f32 1.0, %v1188
  %v1190 = vrcp.pop %v1184
  %v1191 = vmul.f32 1.0, %v1190
  %v1192 = vrcp.pop %v1185
  %v1193 = vmul.f32 1.0, %v1192
  %v1194 = vmul.f32 %v1187, 1.0614054
  %v1195 = vmul.f32 %v1189, 1.0614054
  %v1196 = vmul.f32 %v1191, 1.0614054
  %v1197 = vmul.f32 %v1193, 1.0614054
  %v1198 = vadd.f32 %v1194, -1.4531521
  %v1199 = vadd.f32 %v1195, -1.4531521
  %v1200 = vadd.f32 %v1196, -1.4531521
  %v1201 = vadd.f32 %v1197, -1.4531521
  %v1202 = vmul.f32 %v1198, %v1187
  %v1203 = vmul.f32 %v1199, %v1189
  %v1204 = vmul.f32 %v1200, %v1191
  %v1205 = vmul.f32 %v1201, %v1193
  %v1206 = vadd.f32 %v1202, 1.4214138
  %v1207 = vadd.f32 %v1203, 1.4214138
  %v1208 = vadd.f32 %v1204, 1.4214138
  %v1209 = vadd.f32 %v1205, 1.4214138
  %v1210 = vmul.f32 %v1206, %v1187
  %v1211 = vmul.f32 %v1207, %v1189
  %v1212 = vmul.f32 %v1208, %v1191
  %v1213 = vmul.f32 %v1209, %v1193
  %v1214 = vadd.f32 %v1210, -0.28449672
  %v1215 = vadd.f32 %v1211, -0.28449672
  %v1216 = vadd.f32 %v1212, -0.28449672
  %v1217 = vadd.f32 %v1213, -0.28449672
  %v1218 = vmul.f32 %v1214, %v1187
  %v1219 = vmul.f32 %v1215, %v1189
  %v1220 = vmul.f32 %v1216, %v1191
  %v1221 = vmul.f32 %v1217, %v1193
  %v1222 = vadd.f32 %v1218, 0.2548296
  %v1223 = vadd.f32 %v1219, 0.2548296
  %v1224 = vadd.f32 %v1220, 0.2548296
  %v1225 = vadd.f32 %v1221, 0.2548296
  %v1226 = vmul.f32 %v1222, %v1187
  %v1227 = vmul.f32 %v1223, %v1189
  %v1228 = vmul.f32 %v1224, %v1191
  %v1229 = vmul.f32 %v1225, %v1193
  %v1230 = vsub.f32 0.0, %v1174
  %v1231 = vsub.f32 0.0, %v1175
  %v1232 = vsub.f32 0.0, %v1176
  %v1233 = vsub.f32 0.0, %v1177
  %v1234 = vmul.f32 %v1230, %v1174
  %v1235 = vmul.f32 %v1231, %v1175
  %v1236 = vmul.f32 %v1232, %v1176
  %v1237 = vmul.f32 %v1233, %v1177
  %v1238 = vmul.f32 %v1234, 1.442695
  %v1239 = vpow.pop %v1238
  %v1240 = vmul.f32 %v1235, 1.442695
  %v1241 = vpow.pop %v1240
  %v1242 = vmul.f32 %v1236, 1.442695
  %v1243 = vpow.pop %v1242
  %v1244 = vmul.f32 %v1237, 1.442695
  %v1245 = vpow.pop %v1244
  %v1246 = vmul.f32 %v1226, %v1239
  %v1247 = vmul.f32 %v1227, %v1241
  %v1248 = vmul.f32 %v1228, %v1243
  %v1249 = vmul.f32 %v1229, %v1245
  %v1250 = vsub.f32 1.0, %v1246
  %v1251 = vsub.f32 1.0, %v1247
  %v1252 = vsub.f32 1.0, %v1248
  %v1253 = vsub.f32 1.0, %v1249
  %vm1254 = vcmp.ge.f32.partialorder %v1170, 0.0
  %vm1255 = vcmp.ge.f32.partialorder %v1171, 0.0
  %vm1256 = vcmp.ge.f32.partialorder %v1172, 0.0
  %vm1257 = vcmp.ge.f32.partialorder %v1173, 0.0
  %v1258 = vsub.f32 0.0, %v1250
  %v1259 = vsub.f32 0.0, %v1251
  %v1260 = vsub.f32 0.0, %v1252
  %v1261 = vsub.f32 0.0, %v1253
  %v1262 = vsel %vm1254, %v1250, %v1258
  %v1263 = vsel %vm1255, %v1251, %v1259
  %v1264 = vsel %vm1256, %v1252, %v1260
  %v1265 = vsel %vm1257, %v1253, %v1261
  %v1266 = vadd.f32 %v1262, 1.0
  %v1267 = vadd.f32 %v1263, 1.0
  %v1268 = vadd.f32 %v1264, 1.0
  %v1269 = vadd.f32 %v1265, 1.0
  %v1270 = vmul.f32 %v1166, %v1266
  %v1271 = vmul.f32 %v1167, %v1267
  %v1272 = vmul.f32 %v1168, %v1268
  %v1273 = vmul.f32 %v1169, %v1269
  %v1274 = vld [vmem:[%s3 + $0x120] sm:$0xf]
  %v1275 = vld [vmem:[%s3 + $0x124] sm:$0xf]
  %v1276 = vld [vmem:[%s3 + $0x128] sm:$0xf]
  %v1277 = vld [vmem:[%s3 + $0x12c] sm:$0xf]
  %v1278 = vpack.c.bf16 %v1271, %v1270
  %v1279 = vpack.c.bf16 %v1273, %v1272
  %v1284 = vunpack.c.l.b16 %v1274
  %v1285 = vunpack.c.l.b16 %v1275
  %v1286 = vunpack.c.l.b16 %v1276
  %v1287 = vunpack.c.l.b16 %v1277
  %v1288 = vpack.c.b16 %v1285, %v1284
  %v1289 = vpack.c.b16 %v1287, %v1286
  %v1293 = vsel %vm84, %v1278, 0
  %v1296 = vsel %vm84, %v1279, 0
  %1298 = vmatprep.subr.bf16.mxu0 0
  %1299 = vmatpush1.bf16.msra.mxu0 %v1288
  %1300 = vmatprep.subr.bf16.mxu0 0
  %1301 = vmatpush1.bf16.msra.mxu0 %v1289
  %1302 = vmatprep.subr.bf16.mxu0 0
  %1303 = vmatpush1.bf16.msra.mxu0 0
  %1304 = vmatprep.subr.bf16.mxu0 0
  %1305 = vmatpush1.bf16.msra.mxu0 0
  %1306 = vmatprep.subr.bf16.mxu0 0
  %1307 = vmatpush1.bf16.msra.mxu0 0
  %1308 = vmatprep.subr.bf16.mxu0 0
  %1309 = vmatpush1.bf16.msra.mxu0 0
  %1310 = vmatprep.subr.bf16.mxu0 0
  %1311 = vmatpush1.bf16.msra.mxu0 0
  %1312 = vmatprep.subr.bf16.mxu0 0
  %1313 = vmatpush1.bf16.msra.mxu0 0
  %1314 = vmatprep.subr.bf16.mxu0 0
  %1315 = vmatpush1.bf16.msra.mxu0 0
  %1316 = vmatprep.subr.bf16.mxu0 0
  %1317 = vmatpush1.bf16.msra.mxu0 0
  %1318 = vmatprep.subr.bf16.mxu0 0
  %1319 = vmatpush1.bf16.msra.mxu0 0
  %1320 = vmatprep.subr.bf16.mxu0 0
  %1321 = vmatpush1.bf16.msra.mxu0 0
  %1322 = vmatprep.subr.bf16.mxu0 0
  %1323 = vmatpush1.bf16.msra.mxu0 0
  %1324 = vmatprep.subr.bf16.mxu0 0
  %1325 = vmatpush1.bf16.msra.mxu0 0
  %1326 = vmatprep.subr.bf16.mxu0 0
  %1327 = vmatpush1.bf16.msra.mxu0 0
  %1328 = vmatprep.subr.bf16.mxu0 0
  %1329 = vmatpush1.bf16.msra.mxu0 0
  %1330 = vmatprep.mubr.bf16.mxu0 0
  %1331 = vmatmul.mubr.bf16.gmra.mrb[0].mxu0 %v1293
  %v1332 = vpop.f32.mrb[0].mxu0
  %v1333 = vadd.f32 0.0, %v1332
  %v1334 = vpop.f32.mrb[0].mxu0
  %v1335 = vpop.f32.mrb[0].mxu0
  %v1336 = vadd.f32 0.0, %v1335
  %v1337 = vpop.f32.mrb[0].mxu0
  %1338 = vmatprep.mubr.bf16.mxu0 0
  %1339 = vmatmul.mubr.bf16.gmra.mrb[0].mxu0 %v1296
  %v1340 = vpop.f32.mrb[0].mxu0
  %v1341 = vadd.f32 0.0, %v1340
  %v1342 = vpop.f32.mrb[0].mxu0
  %v1343 = vpop.f32.mrb[0].mxu0
  %v1344 = vadd.f32 0.0, %v1343
  %v1345 = vpop.f32.mrb[0].mxu0
  %1346 = vdwg.mxu0
  %v1347 = vadd.f32 %v1089, %v1333
  %v1348 = vadd.f32 %v1090, %v1336
  %v1349 = vadd.f32 %v1091, %v1341
  %v1350 = vadd.f32 %v1092, %v1344
  %v1351 = vpack.c.bf16 %v1348, %v1347
  %v1352 = vpack.c.bf16 %v1350, %v1349
  %1353 = vmatprep.subr.bf16.mxu0 0
  %1354 = vmatpush1.bf16.msra.mxu0 %v1351
  %1355 = vmatprep.subr.bf16.mxu0 0
  %1356 = vmatpush1.bf16.msra.mxu0 %v1352
  %1357 = vmatprep.subr.bf16.mxu0 0
  %1358 = vmatpush1.bf16.msra.mxu0 0
  %1359 = vmatprep.subr.bf16.mxu0 0
  %1360 = vmatpush1.bf16.msra.mxu0 0
  %1361 = vmatprep.subr.bf16.mxu0 0
  %1362 = vmatpush1.bf16.msra.mxu0 0
  %1363 = vmatprep.subr.bf16.mxu0 0
  %1364 = vmatpush1.bf16.msra.mxu0 0
  %1365 = vmatprep.subr.bf16.mxu0 0
  %1366 = vmatpush1.bf16.msra.mxu0 0
  %1367 = vmatprep.subr.bf16.mxu0 0
  %1368 = vmatpush1.bf16.msra.mxu0 0
  %1369 = vmatprep.subr.bf16.mxu0 0
  %1370 = vmatpush1.bf16.msra.mxu0 0
  %1371 = vmatprep.subr.bf16.mxu0 0
  %1372 = vmatpush1.bf16.msra.mxu0 0
  %1373 = vmatprep.subr.bf16.mxu0 0
  %1374 = vmatpush1.bf16.msra.mxu0 0
  %1375 = vmatprep.subr.bf16.mxu0 0
  %1376 = vmatpush1.bf16.msra.mxu0 0
  %1377 = vmatprep.subr.bf16.mxu0 0
  %1378 = vmatpush1.bf16.msra.mxu0 0
  %1379 = vmatprep.subr.bf16.mxu0 0
  %1380 = vmatpush1.bf16.msra.mxu0 0
  %1381 = vmatprep.subr.bf16.mxu0 0
  %1382 = vmatpush1.bf16.msra.mxu0 0
  %1383 = vmatprep.subr.bf16.mxu0 0
  %1384 = vmatpush1.bf16.msra.mxu0 0
  %1385 = vmatprep.mubr.bf16.mxu0 0
  %1386 = vmatmul.mubr.bf16.gmra.mrb[0].mxu0 %v1035
  %v1387 = vpop.f32.mrb[0].mxu0
  %v1388 = vadd.f32 0.0, %v1387
  %v1389 = vpop.f32.mrb[0].mxu0
  %v1390 = vpop.f32.mrb[0].mxu0
  %v1391 = vadd.f32 0.0, %v1390
  %v1392 = vpop.f32.mrb[0].mxu0
  %1393 = vmatprep.mubr.bf16.mxu0 0
  %1394 = vmatmul.mubr.bf16.gmra.mrb[0].mxu0 %v1038
  %v1395 = vpop.f32.mrb[0].mxu0
  %v1396 = vadd.f32 0.0, %v1395
  %v1397 = vpop.f32.mrb[0].mxu0
  %v1398 = vpop.f32.mrb[0].mxu0
  %v1399 = vadd.f32 0.0, %v1398
  %v1400 = vpop.f32.mrb[0].mxu0
  %1401 = vdwg.mxu0
  %v1402 = vsub.f32 %v1347, %v1388
  %v1403 = vsub.f32 %v1348, %v1391
  %v1404 = vsub.f32 %v1349, %v1396
  %v1405 = vsub.f32 %v1350, %v1399
  %v1406 = vld [vmem:[%s3 + $0x130] sm:$0xf]
  %v1407 = vld [vmem:[%s3 + $0x134] sm:$0xf]
  %v1408 = vld [vmem:[%s3 + $0x138] sm:$0xf]
  %v1409 = vld [vmem:[%s3 + $0x13c] sm:$0xf]
  %v1410 = vpack.c.bf16 %v1403, %v1402
  %v1411 = vpack.c.bf16 %v1405, %v1404
  %s1412 = scalar_lea.vmem %s9, 2
  %v1413 = vld [vmem:[%s1412] sm:$0x1]
  %v1415 = vlaneseq
  %v1416 = vshrl.u32 %v1415, 7
  %v1417 = vsub.s32 0, %v1416
  %v1418 = vrot.slane %v1413, %v1417
  %v1424 = vunpack.c.l.b16 %v1406
  %v1425 = vunpack.c.l.b16 %v1407
  %v1426 = vunpack.c.l.b16 %v1408
  %v1427 = vunpack.c.l.b16 %v1409
  %v1428 = vpack.c.b16 %v1425, %v1424
  %v1429 = vpack.c.b16 %v1427, %v1426
  %v1433 = vsel %vm84, %v1410, 0
  %v1436 = vsel %vm84, %v1411, 0
  %1438 = vmatprep.subr.bf16.mxu0 0
  %1439 = vmatpush1.bf16.msra.mxu0 %v1428
  %1440 = vmatprep.subr.bf16.mxu0 0
  %1441 = vmatpush1.bf16.msra.mxu0 %v1429
  %1442 = vmatprep.subr.bf16.mxu0 0
  %1443 = vmatpush1.bf16.msra.mxu0 0
  %1444 = vmatprep.subr.bf16.mxu0 0
  %1445 = vmatpush1.bf16.msra.mxu0 0
  %1446 = vmatprep.subr.bf16.mxu0 0
  %1447 = vmatpush1.bf16.msra.mxu0 0
  %1448 = vmatprep.subr.bf16.mxu0 0
  %1449 = vmatpush1.bf16.msra.mxu0 0
  %1450 = vmatprep.subr.bf16.mxu0 0
  %1451 = vmatpush1.bf16.msra.mxu0 0
  %1452 = vmatprep.subr.bf16.mxu0 0
  %1453 = vmatpush1.bf16.msra.mxu0 0
  %1454 = vmatprep.subr.bf16.mxu0 0
  %1455 = vmatpush1.bf16.msra.mxu0 0
  %1456 = vmatprep.subr.bf16.mxu0 0
  %1457 = vmatpush1.bf16.msra.mxu0 0
  %1458 = vmatprep.subr.bf16.mxu0 0
  %1459 = vmatpush1.bf16.msra.mxu0 0
  %1460 = vmatprep.subr.bf16.mxu0 0
  %1461 = vmatpush1.bf16.msra.mxu0 0
  %1462 = vmatprep.subr.bf16.mxu0 0
  %1463 = vmatpush1.bf16.msra.mxu0 0
  %1464 = vmatprep.subr.bf16.mxu0 0
  %1465 = vmatpush1.bf16.msra.mxu0 0
  %1466 = vmatprep.subr.bf16.mxu0 0
  %1467 = vmatpush1.bf16.msra.mxu0 0
  %1468 = vmatprep.subr.bf16.mxu0 0
  %1469 = vmatpush1.bf16.msra.mxu0 0
  %1470 = vmatprep.mubr.bf16.mxu0 0
  %1471 = vmatmul.mubr.bf16.gmra.mrb[0].mxu0 %v1433
  %v1472 = vpop.f32.mrb[0].mxu0
  %v1473 = vadd.f32 %v1418, %v1472
  %v1474 = vpop.f32.mrb[0].mxu0
  %v1475 = vpop.f32.mrb[0].mxu0
  %v1476 = vadd.f32 %v1418, %v1475
  %v1477 = vpop.f32.mrb[0].mxu0
  %1478 = vmatprep.mubr.bf16.mxu0 0
  %1479 = vmatmul.mubr.bf16.gmra.mrb[0].mxu0 %v1436
  %v1480 = vpop.f32.mrb[0].mxu0
  %v1481 = vadd.f32 %v1418, %v1480
  %v1482 = vpop.f32.mrb[0].mxu0
  %v1483 = vpop.f32.mrb[0].mxu0
  %v1484 = vadd.f32 %v1418, %v1483
  %v1485 = vpop.f32.mrb[0].mxu0
  %1486 = vdwg.mxu0
  %v1487 = vpack.c.bf16 %v1476, %v1473
  %v1488 = vpack.c.bf16 %v1484, %v1481
  %1489 = vmatprep.subr.bf16.mxu0 0
  %1490 = vmatpush1.bf16.msra.mxu0 %v1487
  %1491 = vmatprep.subr.bf16.mxu0 0
  %1492 = vmatpush1.bf16.msra.mxu0 %v1488
  %1493 = vmatprep.subr.bf16.mxu0 0
  %1494 = vmatpush1.bf16.msra.mxu0 0
  %1495 = vmatprep.subr.bf16.mxu0 0
  %1496 = vmatpush1.bf16.msra.mxu0 0
  %1497 = vmatprep.subr.bf16.mxu0 0
  %1498 = vmatpush1.bf16.msra.mxu0 0
  %1499 = vmatprep.subr.bf16.mxu0 0
  %1500 = vmatpush1.bf16.msra.mxu0 0
  %1501 = vmatprep.subr.bf16.mxu0 0
  %1502 = vmatpush1.bf16.msra.mxu0 0
  %1503 = vmatprep.subr.bf16.mxu0 0
  %1504 = vmatpush1.bf16.msra.mxu0 0
  %1505 = vmatprep.subr.bf16.mxu0 0
  %1506 = vmatpush1.bf16.msra.mxu0 0
  %1507 = vmatprep.subr.bf16.mxu0 0
  %1508 = vmatpush1.bf16.msra.mxu0 0
  %1509 = vmatprep.subr.bf16.mxu0 0
  %1510 = vmatpush1.bf16.msra.mxu0 0
  %1511 = vmatprep.subr.bf16.mxu0 0
  %1512 = vmatpush1.bf16.msra.mxu0 0
  %1513 = vmatprep.subr.bf16.mxu0 0
  %1514 = vmatpush1.bf16.msra.mxu0 0
  %1515 = vmatprep.subr.bf16.mxu0 0
  %1516 = vmatpush1.bf16.msra.mxu0 0
  %1517 = vmatprep.subr.bf16.mxu0 0
  %1518 = vmatpush1.bf16.msra.mxu0 0
  %1519 = vmatprep.subr.bf16.mxu0 0
  %1520 = vmatpush1.bf16.msra.mxu0 0
  %1521 = vmatprep.mubr.bf16.mxu0 0
  %1522 = vmatmul.mubr.bf16.gmra.mrb[0].mxu0 %v646
  %v1523 = vpop.f32.mrb[0].mxu0
  %v1524 = vadd.f32 0.0, %v1523
  %v1525 = vpop.f32.mrb[0].mxu0
  %v1526 = vpop.f32.mrb[0].mxu0
  %v1527 = vadd.f32 0.0, %v1526
  %v1528 = vpop.f32.mrb[0].mxu0
  %1529 = vdwg.mxu0
  %v1530 = vpack.c.bf16 %v1527, %v1524
  %v1532 = vsel %vm84, %v1530, 0
  %1534 = vmatprep.subr.bf16.mxu0 0
  %1535 = vmatpush1.bf16.msra.mxu0 %v702
  %1536 = vmatprep.subr.bf16.mxu0 0
  %1537 = vmatpush1.bf16.msra.mxu0 %v703
  %1538 = vmatprep.subr.bf16.mxu0 0
  %1539 = vmatpush1.bf16.msra.mxu0 0
  %1540 = vmatprep.subr.bf16.mxu0 0
  %1541 = vmatpush1.bf16.msra.mxu0 0
  %1542 = vmatprep.subr.bf16.mxu0 0
  %1543 = vmatpush1.bf16.msra.mxu0 0
  %1544 = vmatprep.subr.bf16.mxu0 0
  %1545 = vmatpush1.bf16.msra.mxu0 0
  %1546 = vmatprep.subr.bf16.mxu0 0
  %1547 = vmatpush1.bf16.msra.mxu0 0
  %1548 = vmatprep.subr.bf16.mxu0 0
  %1549 = vmatpush1.bf16.msra.mxu0 0
  %1550 = vmatprep.subr.bf16.mxu0 0
  %1551 = vmatpush1.bf16.msra.mxu0 0
  %1552 = vmatprep.subr.bf16.mxu0 0
  %1553 = vmatpush1.bf16.msra.mxu0 0
  %1554 = vmatprep.subr.bf16.mxu0 0
  %1555 = vmatpush1.bf16.msra.mxu0 0
  %1556 = vmatprep.subr.bf16.mxu0 0
  %1557 = vmatpush1.bf16.msra.mxu0 0
  %1558 = vmatprep.subr.bf16.mxu0 0
  %1559 = vmatpush1.bf16.msra.mxu0 0
  %1560 = vmatprep.subr.bf16.mxu0 0
  %1561 = vmatpush1.bf16.msra.mxu0 0
  %1562 = vmatprep.subr.bf16.mxu0 0
  %1563 = vmatpush1.bf16.msra.mxu0 0
  %1564 = vmatprep.subr.bf16.mxu0 0
  %1565 = vmatpush1.bf16.msra.mxu0 0
  %1566 = vmatprep.mubr.bf16.mxu0 0
  %1567 = vmatmul.mubr.bf16.gmra.mrb[0].mxu0 %v1532
  %v1568 = vpop.f32.mrb[0].mxu0
  %v1569 = vadd.f32 0.0, %v1568
  %v1570 = vpop.f32.mrb[0].mxu0
  %v1571 = vpop.f32.mrb[0].mxu0
  %v1572 = vadd.f32 0.0, %v1571
  %v1573 = vpop.f32.mrb[0].mxu0
  %1574 = vdwg.mxu0
  %v1575 = vmul.f32 %v1569, %v750
  %v1576 = vmul.f32 %v1572, %v751
  %v1577 = vmul.f32 %v1572, %v752
  %v1578 = vmul.f32 %v1569, %v753
  %v1579 = vadd.f32 %v1575, %v1577
  %v1580 = vadd.f32 %v1576, %v1578
  %v1581 = vpack.c.bf16 %v1580, %v1579
  %1582 = vmatprep.subr.bf16.mxu0 0
  %1583 = vmatpush1.bf16.msra.mxu0 %v809
  %1584 = vmatprep.subr.bf16.mxu0 0
  %1585 = vmatpush1.bf16.msra.mxu0 %v810
  %1586 = vmatprep.subr.bf16.mxu0 0
  %1587 = vmatpush1.bf16.msra.mxu0 %v811
  %1588 = vmatprep.subr.bf16.mxu0 0
  %1589 = vmatpush1.bf16.msra.mxu0 %v812
  %1590 = vmatprep.subr.bf16.mxu0 0
  %1591 = vmatpush1.bf16.msra.mxu0 %v813
  %1592 = vmatprep.subr.bf16.mxu0 0
  %1593 = vmatpush1.bf16.msra.mxu0 %v814
  %1594 = vmatprep.subr.bf16.mxu0 0
  %1595 = vmatpush1.bf16.msra.mxu0 %v815
  %1596 = vmatprep.subr.bf16.mxu0 0
  %1597 = vmatpush1.bf16.msra.mxu0 %v816
  %1598 = vmatprep.subr.bf16.mxu0 0
  %1599 = vmatpush1.bf16.msra.mxu0 0
  %1600 = vmatprep.subr.bf16.mxu0 0
  %1601 = vmatpush1.bf16.msra.mxu0 0
  %1602 = vmatprep.subr.bf16.mxu0 0
  %1603 = vmatpush1.bf16.msra.mxu0 0
  %1604 = vmatprep.subr.bf16.mxu0 0
  %1605 = vmatpush1.bf16.msra.mxu0 0
  %1606 = vmatprep.subr.bf16.mxu0 0
  %1607 = vmatpush1.bf16.msra.mxu0 0
  %1608 = vmatprep.subr.bf16.mxu0 0
  %1609 = vmatpush1.bf16.msra.mxu0 0
  %1610 = vmatprep.subr.bf16.mxu0 0
  %1611 = vmatpush1.bf16.msra.mxu0 0
  %1612 = vmatprep.subr.bf16.mxu0 0
  %1613 = vmatpush1.bf16.msra.mxu0 0
  %1614 = vmatprep.mubr.bf16.mxu0 0
  %1615 = vmatmul.mubr.bf16.gmra.mrb[0].mxu0 %v1581
  %v1616 = vpop.f32.mrb[0].mxu0
  %v1617 = vadd.f32 0.0, %v1616
  %v1618 = vpop.f32.mrb[0].mxu0
  %v1619 = vpop.f32.mrb[0].mxu0
  %v1620 = vadd.f32 0.0, %v1619
  %v1621 = vpop.f32.mrb[0].mxu0
  %1622 = vdwg.mxu0
  %v1623 = vpack.c.bf16 %v1620, %v1617
  %1624 = vmatprep.subr.bf16.mxu0 0
  %1625 = vmatpush1.bf16.msra.mxu0 %v1623
  %1626 = vmatprep.subr.bf16.mxu0 0
  %1627 = vmatpush1.bf16.msra.mxu0 0
  %1628 = vmatprep.subr.bf16.mxu0 0
  %1629 = vmatpush1.bf16.msra.mxu0 0
  %1630 = vmatprep.subr.bf16.mxu0 0
  %1631 = vmatpush1.bf16.msra.mxu0 0
  %1632 = vmatprep.subr.bf16.mxu0 0
  %1633 = vmatpush1.bf16.msra.mxu0 0
  %1634 = vmatprep.subr.bf16.mxu0 0
  %1635 = vmatpush1.bf16.msra.mxu0 0
  %1636 = vmatprep.subr.bf16.mxu0 0
  %1637 = vmatpush1.bf16.msra.mxu0 0
  %1638 = vmatprep.subr.bf16.mxu0 0
  %1639 = vmatpush1.bf16.msra.mxu0 0
  %1640 = vmatprep.subr.bf16.mxu0 0
  %1641 = vmatpush1.bf16.msra.mxu0 0
  %1642 = vmatprep.subr.bf16.mxu0 0
  %1643 = vmatpush1.bf16.msra.mxu0 0
  %1644 = vmatprep.subr.bf16.mxu0 0
  %1645 = vmatpush1.bf16.msra.mxu0 0
  %1646 = vmatprep.subr.bf16.mxu0 0
  %1647 = vmatpush1.bf16.msra.mxu0 0
  %1648 = vmatprep.subr.bf16.mxu0 0
  %1649 = vmatpush1.bf16.msra.mxu0 0
  %1650 = vmatprep.subr.bf16.mxu0 0
  %1651 = vmatpush1.bf16.msra.mxu0 0
  %1652 = vmatprep.subr.bf16.mxu0 0
  %1653 = vmatpush1.bf16.msra.mxu0 0
  %1654 = vmatprep.subr.bf16.mxu0 0
  %1655 = vmatpush1.bf16.msra.mxu0 0
  %1656 = vmatprep.mubr.bf16.mxu0 0
  %1657 = vmatmul.mubr.bf16.gmra.mrb[0].mxu0 %v883
  %v1658 = vpop.f32.mrb[0].mxu0
  %v1659 = vadd.f32 0.0, %v1658
  %v1660 = vpop.f32.mrb[0].mxu0
  %v1661 = vpop.f32.mrb[0].mxu0
  %v1662 = vadd.f32 0.0, %v1661
  %v1663 = vpop.f32.mrb[0].mxu0
  %1664 = vmatprep.mubr.bf16.mxu0 0
  %1665 = vmatmul.mubr.bf16.gmra.mrb[0].mxu0 %v886
  %v1666 = vpop.f32.mrb[0].mxu0
  %v1667 = vadd.f32 0.0, %v1666
  %v1668 = vpop.f32.mrb[0].mxu0
  %v1669 = vpop.f32.mrb[0].mxu0
  %v1670 = vadd.f32 0.0, %v1669
  %v1671 = vpop.f32.mrb[0].mxu0
  %1672 = vdwg.mxu0
  %v1673 = vld [vmem:[%s3 + $0x140] sm:$0xf]
  %v1674 = vld [vmem:[%s3 + $0x144] sm:$0xf]
  %v1675 = vld [vmem:[%s3 + $0x148] sm:$0xf]
  %v1676 = vld [vmem:[%s3 + $0x14c] sm:$0xf]
  %v1677 = vpack.c.bf16 %v1662, %v1659
  %v1678 = vpack.c.bf16 %v1670, %v1667
  %s1679 = scalar_lea.vmem %s9, 3
  %v1680 = vld [vmem:[%s1679] sm:$0x1]
  %v1682 = vlaneseq
  %v1683 = vshrl.u32 %v1682, 7
  %v1684 = vsub.s32 0, %v1683
  %v1685 = vrot.slane %v1680, %v1684
  %v1691 = vunpack.c.l.b16 %v1673
  %v1692 = vunpack.c.l.b16 %v1674
  %v1693 = vunpack.c.l.b16 %v1675
  %v1694 = vunpack.c.l.b16 %v1676
  %v1695 = vpack.c.b16 %v1692, %v1691
  %v1696 = vpack.c.b16 %v1694, %v1693
  %v1700 = vsel %vm84, %v1677, 0
  %v1703 = vsel %vm84, %v1678, 0
  %1705 = vmatprep.subr.bf16.mxu0 0
  %1706 = vmatpush1.bf16.msra.mxu0 %v1695
  %1707 = vmatprep.subr.bf16.mxu0 0
  %1708 = vmatpush1.bf16.msra.mxu0 %v1696
  %1709 = vmatprep.subr.bf16.mxu0 0
  %1710 = vmatpush1.bf16.msra.mxu0 0
  %1711 = vmatprep.subr.bf16.mxu0 0
  %1712 = vmatpush1.bf16.msra.mxu0 0
  %1713 = vmatprep.subr.bf16.mxu0 0
  %1714 = vmatpush1.bf16.msra.mxu0 0
  %1715 = vmatprep.subr.bf16.mxu0 0
  %1716 = vmatpush1.bf16.msra.mxu0 0
  %1717 = vmatprep.subr.bf16.mxu0 0
  %1718 = vmatpush1.bf16.msra.mxu0 0
  %1719 = vmatprep.subr.bf16.mxu0 0
  %1720 = vmatpush1.bf16.msra.mxu0 0
  %1721 = vmatprep.subr.bf16.mxu0 0
  %1722 = vmatpush1.bf16.msra.mxu0 0
  %1723 = vmatprep.subr.bf16.mxu0 0
  %1724 = vmatpush1.bf16.msra.mxu0 0
  %1725 = vmatprep.subr.bf16.mxu0 0
  %1726 = vmatpush1.bf16.msra.mxu0 0
  %1727 = vmatprep.subr.bf16.mxu0 0
  %1728 = vmatpush1.bf16.msra.mxu0 0
  %1729 = vmatprep.subr.bf16.mxu0 0
  %1730 = vmatpush1.bf16.msra.mxu0 0
  %1731 = vmatprep.subr.bf16.mxu0 0
  %1732 = vmatpush1.bf16.msra.mxu0 0
  %1733 = vmatprep.subr.bf16.mxu0 0
  %1734 = vmatpush1.bf16.msra.mxu0 0
  %1735 = vmatprep.subr.bf16.mxu0 0
  %1736 = vmatpush1.bf16.msra.mxu0 0
  %1737 = vmatprep.mubr.bf16.mxu0 0
  %1738 = vmatmul.mubr.bf16.gmra.mrb[0].mxu0 %v1700
  %v1739 = vpop.f32.mrb[0].mxu0
  %v1740 = vadd.f32 %v1685, %v1739
  %v1741 = vpop.f32.mrb[0].mxu0
  %v1742 = vpop.f32.mrb[0].mxu0
  %v1743 = vadd.f32 %v1685, %v1742
  %v1744 = vpop.f32.mrb[0].mxu0
  %1745 = vmatprep.mubr.bf16.mxu0 0
  %1746 = vmatmul.mubr.bf16.gmra.mrb[0].mxu0 %v1703
  %v1747 = vpop.f32.mrb[0].mxu0
  %v1748 = vadd.f32 %v1685, %v1747
  %v1749 = vpop.f32.mrb[0].mxu0
  %v1750 = vpop.f32.mrb[0].mxu0
  %v1751 = vadd.f32 %v1685, %v1750
  %v1752 = vpop.f32.mrb[0].mxu0
  %1753 = vdwg.mxu0
  %v1754 = vadd.f32 %v1402, %v1740
  %v1755 = vadd.f32 %v1403, %v1743
  %v1756 = vadd.f32 %v1404, %v1748
  %v1757 = vadd.f32 %v1405, %v1751
  %v1758 = vpack.c.bf16 %v1755, %v1754
  %v1759 = vpack.c.bf16 %v1757, %v1756
  %1760 = vmatprep.subr.bf16.mxu0 0
  %1761 = vmatpush1.bf16.msra.mxu0 %v1758
  %1762 = vmatprep.subr.bf16.mxu0 0
  %1763 = vmatpush1.bf16.msra.mxu0 %v1759
  %1764 = vmatprep.subr.bf16.mxu0 0
  %1765 = vmatpush1.bf16.msra.mxu0 0
  %1766 = vmatprep.subr.bf16.mxu0 0
  %1767 = vmatpush1.bf16.msra.mxu0 0
  %1768 = vmatprep.subr.bf16.mxu0 0
  %1769 = vmatpush1.bf16.msra.mxu0 0
  %1770 = vmatprep.subr.bf16.mxu0 0
  %1771 = vmatpush1.bf16.msra.mxu0 0
  %1772 = vmatprep.subr.bf16.mxu0 0
  %1773 = vmatpush1.bf16.msra.mxu0 0
  %1774 = vmatprep.subr.bf16.mxu0 0
  %1775 = vmatpush1.bf16.msra.mxu0 0
  %1776 = vmatprep.subr.bf16.mxu0 0
  %1777 = vmatpush1.bf16.msra.mxu0 0
  %1778 = vmatprep.subr.bf16.mxu0 0
  %1779 = vmatpush1.bf16.msra.mxu0 0
  %1780 = vmatprep.subr.bf16.mxu0 0
  %1781 = vmatpush1.bf16.msra.mxu0 0
  %1782 = vmatprep.subr.bf16.mxu0 0
  %1783 = vmatpush1.bf16.msra.mxu0 0
  %1784 = vmatprep.subr.bf16.mxu0 0
  %1785 = vmatpush1.bf16.msra.mxu0 0
  %1786 = vmatprep.subr.bf16.mxu0 0
  %1787 = vmatpush1.bf16.msra.mxu0 0
  %1788 = vmatprep.subr.bf16.mxu0 0
  %1789 = vmatpush1.bf16.msra.mxu0 0
  %1790 = vmatprep.subr.bf16.mxu0 0
  %1791 = vmatpush1.bf16.msra.mxu0 0
  %1792 = vmatprep.mubr.bf16.mxu0 0
  %1793 = vmatmul.mubr.bf16.gmra.mrb[0].mxu0 %v1035
  %v1794 = vpop.f32.mrb[0].mxu0
  %v1795 = vadd.f32 0.0, %v1794
  %v1796 = vpop.f32.mrb[0].mxu0
  %v1797 = vpop.f32.mrb[0].mxu0
  %v1798 = vadd.f32 0.0, %v1797
  %v1799 = vpop.f32.mrb[0].mxu0
  %1800 = vmatprep.mubr.bf16.mxu0 0
  %1801 = vmatmul.mubr.bf16.gmra.mrb[0].mxu0 %v1038
  %v1802 = vpop.f32.mrb[0].mxu0
  %v1803 = vadd.f32 0.0, %v1802
  %v1804 = vpop.f32.mrb[0].mxu0
  %v1805 = vpop.f32.mrb[0].mxu0
  %v1806 = vadd.f32 0.0, %v1805
  %v1807 = vpop.f32.mrb[0].mxu0
  %1808 = vdwg.mxu0
  %v1809 = vsub.f32 %v1754, %v1795
  %v1810 = vsub.f32 %v1755, %v1798
  %v1811 = vsub.f32 %v1756, %v1803
  %v1812 = vsub.f32 %v1757, %v1806
  %v1813 = vld [vmem:[%s3 + $0x150] sm:$0xf]
  %v1814 = vld [vmem:[%s3 + $0x154] sm:$0xf]
  %v1815 = vld [vmem:[%s3 + $0x158] sm:$0xf]
  %v1816 = vld [vmem:[%s3 + $0x15c] sm:$0xf]
  %v1817 = vpack.c.bf16 %v1810, %v1809
  %v1818 = vpack.c.bf16 %v1812, %v1811
  %v1823 = vunpack.c.l.b16 %v1813
  %v1824 = vunpack.c.l.b16 %v1814
  %v1825 = vunpack.c.l.b16 %v1815
  %v1826 = vunpack.c.l.b16 %v1816
  %v1827 = vpack.c.b16 %v1824, %v1823
  %v1828 = vpack.c.b16 %v1826, %v1825
  %v1832 = vsel %vm84, %v1817, 0
  %v1835 = vsel %vm84, %v1818, 0
  %1837 = vmatprep.subr.bf16.mxu0 0
  %1838 = vmatpush1.bf16.msra.mxu0 %v1827
  %1839 = vmatprep.subr.bf16.mxu0 0
  %1840 = vmatpush1.bf16.msra.mxu0 %v1828
  %1841 = vmatprep.subr.bf16.mxu0 0
  %1842 = vmatpush1.bf16.msra.mxu0 0
  %1843 = vmatprep.subr.bf16.mxu0 0
  %1844 = vmatpush1.bf16.msra.mxu0 0
  %1845 = vmatprep.subr.bf16.mxu0 0
  %1846 = vmatpush1.bf16.msra.mxu0 0
  %1847 = vmatprep.subr.bf16.mxu0 0
  %1848 = vmatpush1.bf16.msra.mxu0 0
  %1849 = vmatprep.subr.bf16.mxu0 0
  %1850 = vmatpush1.bf16.msra.mxu0 0
  %1851 = vmatprep.subr.bf16.mxu0 0
  %1852 = vmatpush1.bf16.msra.mxu0 0
  %1853 = vmatprep.subr.bf16.mxu0 0
  %1854 = vmatpush1.bf16.msra.mxu0 0
  %1855 = vmatprep.subr.bf16.mxu0 0
  %1856 = vmatpush1.bf16.msra.mxu0 0
  %1857 = vmatprep.subr.bf16.mxu0 0
  %1858 = vmatpush1.bf16.msra.mxu0 0
  %1859 = vmatprep.subr.bf16.mxu0 0
  %1860 = vmatpush1.bf16.msra.mxu0 0
  %1861 = vmatprep.subr.bf16.mxu0 0
  %1862 = vmatpush1.bf16.msra.mxu0 0
  %1863 = vmatprep.subr.bf16.mxu0 0
  %1864 = vmatpush1.bf16.msra.mxu0 0
  %1865 = vmatprep.subr.bf16.mxu0 0
  %1866 = vmatpush1.bf16.msra.mxu0 0
  %1867 = vmatprep.subr.bf16.mxu0 0
  %1868 = vmatpush1.bf16.msra.mxu0 0
  %1869 = vmatprep.mubr.bf16.mxu0 0
  %1870 = vmatmul.mubr.bf16.gmra.mrb[0].mxu0 %v1832
  %v1871 = vpop.f32.mrb[0].mxu0
  %v1872 = vadd.f32 0.0, %v1871
  %v1873 = vpop.f32.mrb[0].mxu0
  %v1874 = vpop.f32.mrb[0].mxu0
  %v1875 = vadd.f32 0.0, %v1874
  %v1876 = vpop.f32.mrb[0].mxu0
  %1877 = vmatprep.mubr.bf16.mxu0 0
  %1878 = vmatmul.mubr.bf16.gmra.mrb[0].mxu0 %v1835
  %v1879 = vpop.f32.mrb[0].mxu0
  %v1880 = vadd.f32 0.0, %v1879
  %v1881 = vpop.f32.mrb[0].mxu0
  %v1882 = vpop.f32.mrb[0].mxu0
  %v1883 = vadd.f32 0.0, %v1882
  %v1884 = vpop.f32.mrb[0].mxu0
  %1885 = vdwg.mxu0
  %v1886 = vmul.f32 %v1872, 0.5
  %v1887 = vmul.f32 %v1875, 0.5
  %v1888 = vmul.f32 %v1880, 0.5
  %v1889 = vmul.f32 %v1883, 0.5
  %v1890 = vmul.f32 %v1872, 0.70710677
  %v1891 = vmul.f32 %v1875, 0.70710677
  %v1892 = vmul.f32 %v1880, 0.70710677
  %v1893 = vmul.f32 %v1883, 0.70710677
  %v1894 = vand.u32 2147483647, %v1890
  %v1895 = vand.u32 2147483647, %v1891
  %v1896 = vand.u32 2147483647, %v1892
  %v1897 = vand.u32 2147483647, %v1893
  %v1898 = vmul.f32 %v1894, 0.3275911
  %v1899 = vmul.f32 %v1895, 0.3275911
  %v1900 = vmul.f32 %v1896, 0.3275911
  %v1901 = vmul.f32 %v1897, 0.3275911
  %v1902 = vadd.f32 %v1898, 1.0
  %v1903 = vadd.f32 %v1899, 1.0
  %v1904 = vadd.f32 %v1900, 1.0
  %v1905 = vadd.f32 %v1901, 1.0
  %v1906 = vrcp.pop %v1902
  %v1907 = vmul.f32 1.0, %v1906
  %v1908 = vrcp.pop %v1903
  %v1909 = vmul.f32 1.0, %v1908
  %v1910 = vrcp.pop %v1904
  %v1911 = vmul.f32 1.0, %v1910
  %v1912 = vrcp.pop %v1905
  %v1913 = vmul.f32 1.0, %v1912
  %v1914 = vmul.f32 %v1907, 1.0614054
  %v1915 = vmul.f32 %v1909, 1.0614054
  %v1916 = vmul.f32 %v1911, 1.0614054
  %v1917 = vmul.f32 %v1913, 1.0614054
  %v1918 = vadd.f32 %v1914, -1.4531521
  %v1919 = vadd.f32 %v1915, -1.4531521
  %v1920 = vadd.f32 %v1916, -1.4531521
  %v1921 = vadd.f32 %v1917, -1.4531521
  %v1922 = vmul.f32 %v1918, %v1907
  %v1923 = vmul.f32 %v1919, %v1909
  %v1924 = vmul.f32 %v1920, %v1911
  %v1925 = vmul.f32 %v1921, %v1913
  %v1926 = vadd.f32 %v1922, 1.4214138
  %v1927 = vadd.f32 %v1923, 1.4214138
  %v1928 = vadd.f32 %v1924, 1.4214138
  %v1929 = vadd.f32 %v1925, 1.4214138
  %v1930 = vmul.f32 %v1926, %v1907
  %v1931 = vmul.f32 %v1927, %v1909
  %v1932 = vmul.f32 %v1928, %v1911
  %v1933 = vmul.f32 %v1929, %v1913
  %v1934 = vadd.f32 %v1930, -0.28449672
  %v1935 = vadd.f32 %v1931, -0.28449672
  %v1936 = vadd.f32 %v1932, -0.28449672
  %v1937 = vadd.f32 %v1933, -0.28449672
  %v1938 = vmul.f32 %v1934, %v1907
  %v1939 = vmul.f32 %v1935, %v1909
  %v1940 = vmul.f32 %v1936, %v1911
  %v1941 = vmul.f32 %v1937, %v1913
  %v1942 = vadd.f32 %v1938, 0.2548296
  %v1943 = vadd.f32 %v1939, 0.2548296
  %v1944 = vadd.f32 %v1940, 0.2548296
  %v1945 = vadd.f32 %v1941, 0.2548296
  %v1946 = vmul.f32 %v1942, %v1907
  %v1947 = vmul.f32 %v1943, %v1909
  %v1948 = vmul.f32 %v1944, %v1911
  %v1949 = vmul.f32 %v1945, %v1913
  %v1950 = vsub.f32 0.0, %v1894
  %v1951 = vsub.f32 0.0, %v1895
  %v1952 = vsub.f32 0.0, %v1896
  %v1953 = vsub.f32 0.0, %v1897
  %v1954 = vmul.f32 %v1950, %v1894
  %v1955 = vmul.f32 %v1951, %v1895
  %v1956 = vmul.f32 %v1952, %v1896
  %v1957 = vmul.f32 %v1953, %v1897
  %v1958 = vmul.f32 %v1954, 1.442695
  %v1959 = vpow.pop %v1958
  %v1960 = vmul.f32 %v1955, 1.442695
  %v1961 = vpow.pop %v1960
  %v1962 = vmul.f32 %v1956, 1.442695
  %v1963 = vpow.pop %v1962
  %v1964 = vmul.f32 %v1957, 1.442695
  %v1965 = vpow.pop %v1964
  %v1966 = vmul.f32 %v1946, %v1959
  %v1967 = vmul.f32 %v1947, %v1961
  %v1968 = vmul.f32 %v1948, %v1963
  %v1969 = vmul.f32 %v1949, %v1965
  %v1970 = vsub.f32 1.0, %v1966
  %v1971 = vsub.f32 1.0, %v1967
  %v1972 = vsub.f32 1.0, %v1968
  %v1973 = vsub.f32 1.0, %v1969
  %vm1974 = vcmp.ge.f32.partialorder %v1890, 0.0
  %vm1975 = vcmp.ge.f32.partialorder %v1891, 0.0
  %vm1976 = vcmp.ge.f32.partialorder %v1892, 0.0
  %vm1977 = vcmp.ge.f32.partialorder %v1893, 0.0
  %v1978 = vsub.f32 0.0, %v1970
  %v1979 = vsub.f32 0.0, %v1971
  %v1980 = vsub.f32 0.0, %v1972
  %v1981 = vsub.f32 0.0, %v1973
  %v1982 = vsel %vm1974, %v1970, %v1978
  %v1983 = vsel %vm1975, %v1971, %v1979
  %v1984 = vsel %vm1976, %v1972, %v1980
  %v1985 = vsel %vm1977, %v1973, %v1981
  %v1986 = vadd.f32 %v1982, 1.0
  %v1987 = vadd.f32 %v1983, 1.0
  %v1988 = vadd.f32 %v1984, 1.0
  %v1989 = vadd.f32 %v1985, 1.0
  %v1990 = vmul.f32 %v1886, %v1986
  %v1991 = vmul.f32 %v1887, %v1987
  %v1992 = vmul.f32 %v1888, %v1988
  %v1993 = vmul.f32 %v1889, %v1989
  %v1994 = vld [vmem:[%s3 + $0x160] sm:$0xf]
  %v1995 = vld [vmem:[%s3 + $0x164] sm:$0xf]
  %v1996 = vld [vmem:[%s3 + $0x168] sm:$0xf]
  %v1997 = vld [vmem:[%s3 + $0x16c] sm:$0xf]
  %v1998 = vpack.c.bf16 %v1991, %v1990
  %v1999 = vpack.c.bf16 %v1993, %v1992
  %v2004 = vunpack.c.l.b16 %v1994
  %v2005 = vunpack.c.l.b16 %v1995
  %v2006 = vunpack.c.l.b16 %v1996
  %v2007 = vunpack.c.l.b16 %v1997
  %v2008 = vpack.c.b16 %v2005, %v2004
  %v2009 = vpack.c.b16 %v2007, %v2006
  %v2013 = vsel %vm84, %v1998, 0
  %v2016 = vsel %vm84, %v1999, 0
  %2018 = vmatprep.subr.bf16.mxu0 0
  %2019 = vmatpush1.bf16.msra.mxu0 %v2008
  %2020 = vmatprep.subr.bf16.mxu0 0
  %2021 = vmatpush1.bf16.msra.mxu0 %v2009
  %2022 = vmatprep.subr.bf16.mxu0 0
  %2023 = vmatpush1.bf16.msra.mxu0 0
  %2024 = vmatprep.subr.bf16.mxu0 0
  %2025 = vmatpush1.bf16.msra.mxu0 0
  %2026 = vmatprep.subr.bf16.mxu0 0
  %2027 = vmatpush1.bf16.msra.mxu0 0
  %2028 = vmatprep.subr.bf16.mxu0 0
  %2029 = vmatpush1.bf16.msra.mxu0 0
  %2030 = vmatprep.subr.bf16.mxu0 0
  %2031 = vmatpush1.bf16.msra.mxu0 0
  %2032 = vmatprep.subr.bf16.mxu0 0
  %2033 = vmatpush1.bf16.msra.mxu0 0
  %2034 = vmatprep.subr.bf16.mxu0 0
  %2035 = vmatpush1.bf16.msra.mxu0 0
  %2036 = vmatprep.subr.bf16.mxu0 0
  %2037 = vmatpush1.bf16.msra.mxu0 0
  %2038 = vmatprep.subr.bf16.mxu0 0
  %2039 = vmatpush1.bf16.msra.mxu0 0
  %2040 = vmatprep.subr.bf16.mxu0 0
  %2041 = vmatpush1.bf16.msra.mxu0 0
  %2042 = vmatprep.subr.bf16.mxu0 0
  %2043 = vmatpush1.bf16.msra.mxu0 0
  %2044 = vmatprep.subr.bf16.mxu0 0
  %2045 = vmatpush1.bf16.msra.mxu0 0
  %2046 = vmatprep.subr.bf16.mxu0 0
  %2047 = vmatpush1.bf16.msra.mxu0 0
  %2048 = vmatprep.subr.bf16.mxu0 0
  %2049 = vmatpush1.bf16.msra.mxu0 0
  %2050 = vmatprep.mubr.bf16.mxu0 0
  %2051 = vmatmul.mubr.bf16.gmra.mrb[0].mxu0 %v2013
  %v2052 = vpop.f32.mrb[0].mxu0
  %v2053 = vadd.f32 0.0, %v2052
  %v2054 = vpop.f32.mrb[0].mxu0
  %v2055 = vpop.f32.mrb[0].mxu0
  %v2056 = vadd.f32 0.0, %v2055
  %v2057 = vpop.f32.mrb[0].mxu0
  %2058 = vmatprep.mubr.bf16.mxu0 0
  %2059 = vmatmul.mubr.bf16.gmra.mrb[0].mxu0 %v2016
  %v2060 = vpop.f32.mrb[0].mxu0
  %v2061 = vadd.f32 0.0, %v2060
  %v2062 = vpop.f32.mrb[0].mxu0
  %v2063 = vpop.f32.mrb[0].mxu0
  %v2064 = vadd.f32 0.0, %v2063
  %v2065 = vpop.f32.mrb[0].mxu0
  %2066 = vdwg.mxu0
  %v2067 = vadd.f32 %v1809, %v2053
  %v2068 = vadd.f32 %v1810, %v2056
  %v2069 = vadd.f32 %v1811, %v2061
  %v2070 = vadd.f32 %v1812, %v2064
  %v2071 = vpack.c.bf16 %v2068, %v2067
  %v2072 = vpack.c.bf16 %v2070, %v2069
  %2073 = vmatprep.subr.bf16.mxu0 0
  %2074 = vmatpush1.bf16.msra.mxu0 %v2071
  %2075 = vmatprep.subr.bf16.mxu0 0
  %2076 = vmatpush1.bf16.msra.mxu0 %v2072
  %2077 = vmatprep.subr.bf16.mxu0 0
  %2078 = vmatpush1.bf16.msra.mxu0 0
  %2079 = vmatprep.subr.bf16.mxu0 0
  %2080 = vmatpush1.bf16.msra.mxu0 0
  %2081 = vmatprep.subr.bf16.mxu0 0
  %2082 = vmatpush1.bf16.msra.mxu0 0
  %2083 = vmatprep.subr.bf16.mxu0 0
  %2084 = vmatpush1.bf16.msra.mxu0 0
  %2085 = vmatprep.subr.bf16.mxu0 0
  %2086 = vmatpush1.bf16.msra.mxu0 0
  %2087 = vmatprep.subr.bf16.mxu0 0
  %2088 = vmatpush1.bf16.msra.mxu0 0
  %2089 = vmatprep.subr.bf16.mxu0 0
  %2090 = vmatpush1.bf16.msra.mxu0 0
  %2091 = vmatprep.subr.bf16.mxu0 0
  %2092 = vmatpush1.bf16.msra.mxu0 0
  %2093 = vmatprep.subr.bf16.mxu0 0
  %2094 = vmatpush1.bf16.msra.mxu0 0
  %2095 = vmatprep.subr.bf16.mxu0 0
  %2096 = vmatpush1.bf16.msra.mxu0 0
  %2097 = vmatprep.subr.bf16.mxu0 0
  %2098 = vmatpush1.bf16.msra.mxu0 0
  %2099 = vmatprep.subr.bf16.mxu0 0
  %2100 = vmatpush1.bf16.msra.mxu0 0
  %2101 = vmatprep.subr.bf16.mxu0 0
  %2102 = vmatpush1.bf16.msra.mxu0 0
  %2103 = vmatprep.subr.bf16.mxu0 0
  %2104 = vmatpush1.bf16.msra.mxu0 0
  %2105 = vmatprep.mubr.bf16.mxu0 0
  %2106 = vmatmul.mubr.bf16.gmra.mrb[0].mxu0 %v1035
  %v2107 = vpop.f32.mrb[0].mxu0
  %v2108 = vadd.f32 0.0, %v2107
  %v2109 = vpop.f32.mrb[0].mxu0
  %v2110 = vpop.f32.mrb[0].mxu0
  %v2111 = vadd.f32 0.0, %v2110
  %v2112 = vpop.f32.mrb[0].mxu0
  %2113 = vmatprep.mubr.bf16.mxu0 0
  %2114 = vmatmul.mubr.bf16.gmra.mrb[0].mxu0 %v1038
  %v2115 = vpop.f32.mrb[0].mxu0
  %v2116 = vadd.f32 0.0, %v2115
  %v2117 = vpop.f32.mrb[0].mxu0
  %v2118 = vpop.f32.mrb[0].mxu0
  %v2119 = vadd.f32 0.0, %v2118
  %v2120 = vpop.f32.mrb[0].mxu0
  %2121 = vdwg.mxu0
  %v2122 = vsub.f32 %v2067, %v2108
  %v2123 = vsub.f32 %v2068, %v2111
  %v2124 = vsub.f32 %v2069, %v2116
  %v2125 = vsub.f32 %v2070, %v2119
  %v2126 = vld [vmem:[%s3 + $0x40] sm:$0xf]
  %v2127 = vld [vmem:[%s3 + $0x44] sm:$0xf]
  %v2128 = vld [vmem:[%s3 + $0x48] sm:$0xf]
  %v2129 = vld [vmem:[%s3 + $0x4c] sm:$0xf]
  %v2130 = vsel %vm84, %v2122, 0.0
  %2131 = vadd.xlane.f32.xlu0 %v2130
  %v2132 = vpop.xlane.xlu0 %2131
  %v2133 = vsel %vm84, %v2123, 0.0
  %2134 = vadd.xlane.f32.xlu0 %v2133
  %v2135 = vpop.xlane.xlu0 %2134
  %v2136 = vsel %vm84, %v2124, 0.0
  %2137 = vadd.xlane.f32.xlu0 %v2136
  %v2138 = vpop.xlane.xlu0 %2137
  %v2139 = vsel %vm84, %v2125, 0.0
  %2140 = vadd.xlane.f32.xlu0 %v2139
  %v2141 = vpop.xlane.xlu0 %2140
  %v2142 = vrcp.pop 32.0
  %v2143 = vmul.f32 %v2132, %v2142
  %v2144 = vmul.f32 %v2135, %v2142
  %v2145 = vmul.f32 %v2138, %v2142
  %v2146 = vmul.f32 %v2141, %v2142
  %v2147 = vsub.f32 %v2122, %v2143
  %v2148 = vsub.f32 %v2123, %v2144
  %v2149 = vsub.f32 %v2124, %v2145
  %v2150 = vsub.f32 %v2125, %v2146
  %v2151 = vmul.f32 %v2147, %v2147
  %v2152 = vmul.f32 %v2148, %v2148
  %v2153 = vmul.f32 %v2149, %v2149
  %v2154 = vmul.f32 %v2150, %v2150
  %v2155 = vsel %vm84, %v2151, 0.0
  %2156 = vadd.xlane.f32.xlu0 %v2155
  %v2157 = vpop.xlane.xlu0 %2156
  %v2158 = vsel %vm84, %v2152, 0.0
  %2159 = vadd.xlane.f32.xlu0 %v2158
  %v2160 = vpop.xlane.xlu0 %2159
  %v2161 = vsel %vm84, %v2153, 0.0
  %2162 = vadd.xlane.f32.xlu0 %v2161
  %v2163 = vpop.xlane.xlu0 %2162
  %v2164 = vsel %vm84, %v2154, 0.0
  %2165 = vadd.xlane.f32.xlu0 %v2164
  %v2166 = vpop.xlane.xlu0 %2165
  %v2167 = vmul.f32 %v2157, %v2142
  %v2168 = vmul.f32 %v2160, %v2142
  %v2169 = vmul.f32 %v2163, %v2142
  %v2170 = vmul.f32 %v2166, %v2142
  %v2171 = vadd.f32 %v2167, 1e-05
  %v2172 = vadd.f32 %v2168, 1e-05
  %v2173 = vadd.f32 %v2169, 1e-05
  %v2174 = vadd.f32 %v2170, 1e-05
  %v2175 = vrsqrt.pop %v2171
  %v2176 = vrsqrt.pop %v2172
  %v2177 = vrsqrt.pop %v2173
  %v2178 = vrsqrt.pop %v2174
  %v2179 = vmul.f32 %v2147, %v2175
  %v2180 = vmul.f32 %v2148, %v2176
  %v2181 = vmul.f32 %v2149, %v2177
  %v2182 = vmul.f32 %v2150, %v2178
  %s2183 = scalar_lea.vmem %s9, 9
  %v2184 = vld [vmem:[%s2183] sm:$0x1]
  %v2186 = vlaneseq
  %v2187 = vshrl.u32 %v2186, 7
  %v2188 = vsub.s32 0, %v2187
  %v2189 = vrot.slane %v2184, %v2188
  %v2191 = vmul.f32 %v2179, %v2189
  %v2192 = vmul.f32 %v2180, %v2189
  %v2193 = vmul.f32 %v2181, %v2189
  %v2194 = vmul.f32 %v2182, %v2189
  %s2195 = scalar_lea.vmem %s9, 10
  %v2196 = vld [vmem:[%s2195] sm:$0x1]
  %v2198 = vlaneseq
  %v2199 = vshrl.u32 %v2198, 7
  %v2200 = vsub.s32 0, %v2199
  %v2201 = vrot.slane %v2196, %v2200
  %v2203 = vadd.f32 %v2191, %v2201
  %v2204 = vadd.f32 %v2192, %v2201
  %v2205 = vadd.f32 %v2193, %v2201
  %v2206 = vadd.f32 %v2194, %v2201
  %v2207 = vpack.c.bf16 %v2204, %v2203
  %v2208 = vpack.c.bf16 %v2206, %v2205
  %v2213 = vunpack.c.l.b16 %v2126
  %v2214 = vunpack.c.l.b16 %v2127
  %v2215 = vunpack.c.l.b16 %v2128
  %v2216 = vunpack.c.l.b16 %v2129
  %v2217 = vpack.c.b16 %v2214, %v2213
  %v2218 = vpack.c.b16 %v2216, %v2215
  %v2220 = vsel %vm84, %v2217, 0
  %v2223 = vsel %vm84, %v2218, 0
  %2225 = vmatprep.subr.bf16.mxu0 0
  %2226 = vmatpush1.bf16.msra.mxu0 %v2207
  %2227 = vmatprep.subr.bf16.mxu0 0
  %2228 = vmatpush1.bf16.msra.mxu0 %v2208
  %2229 = vmatprep.subr.bf16.mxu0 0
  %2230 = vmatpush1.bf16.msra.mxu0 0
  %2231 = vmatprep.subr.bf16.mxu0 0
  %2232 = vmatpush1.bf16.msra.mxu0 0
  %2233 = vmatprep.subr.bf16.mxu0 0
  %2234 = vmatpush1.bf16.msra.mxu0 0
  %2235 = vmatprep.subr.bf16.mxu0 0
  %2236 = vmatpush1.bf16.msra.mxu0 0
  %2237 = vmatprep.subr.bf16.mxu0 0
  %2238 = vmatpush1.bf16.msra.mxu0 0
  %2239 = vmatprep.subr.bf16.mxu0 0
  %2240 = vmatpush1.bf16.msra.mxu0 0
  %2241 = vmatprep.subr.bf16.mxu0 0
  %2242 = vmatpush1.bf16.msra.mxu0 0
  %2243 = vmatprep.subr.bf16.mxu0 0
  %2244 = vmatpush1.bf16.msra.mxu0 0
  %2245 = vmatprep.subr.bf16.mxu0 0
  %2246 = vmatpush1.bf16.msra.mxu0 0
  %2247 = vmatprep.subr.bf16.mxu0 0
  %2248 = vmatpush1.bf16.msra.mxu0 0
  %2249 = vmatprep.subr.bf16.mxu0 0
  %2250 = vmatpush1.bf16.msra.mxu0 0
  %2251 = vmatprep.subr.bf16.mxu0 0
  %2252 = vmatpush1.bf16.msra.mxu0 0
  %2253 = vmatprep.subr.bf16.mxu0 0
  %2254 = vmatpush1.bf16.msra.mxu0 0
  %2255 = vmatprep.subr.bf16.mxu0 0
  %2256 = vmatpush1.bf16.msra.mxu0 0
  %2257 = vmatprep.mubr.bf16.mxu0 0
  %2258 = vmatmul.mubr.bf16.gmra.mrb[0].mxu0 %v2220
  %v2259 = vpop.f32.mrb[0].mxu0
  %v2260 = vadd.f32 0.0, %v2259
  %v2261 = vpop.f32.mrb[0].mxu0
  %v2262 = vpop.f32.mrb[0].mxu0
  %v2263 = vadd.f32 0.0, %v2262
  %v2264 = vpop.f32.mrb[0].mxu0
  %2265 = vmatprep.mubr.bf16.mxu0 0
  %2266 = vmatmul.mubr.bf16.gmra.mrb[0].mxu0 %v2223
  %v2267 = vpop.f32.mrb[0].mxu0
  %v2268 = vadd.f32 0.0, %v2267
  %v2269 = vpop.f32.mrb[0].mxu0
  %v2270 = vpop.f32.mrb[0].mxu0
  %v2271 = vadd.f32 0.0, %v2270
  %v2272 = vpop.f32.mrb[0].mxu0
  %2273 = vdwg.mxu0
  %v2274 = vsub.f32 %v2203, %v2260
  %v2275 = vsub.f32 %v2204, %v2263
  %v2276 = vsub.f32 %v2205, %v2268
  %v2277 = vsub.f32 %v2206, %v2271
  %v2278 = vld [vmem:[%s3 + $0x80] sm:$0xf]
  %v2279 = vld [vmem:[%s3 + $0x84] sm:$0xf]
  %v2280 = vld [vmem:[%s3 + $0x88] sm:$0xf]
  %v2281 = vld [vmem:[%s3 + $0x8c] sm:$0xf]
  %v2282 = vld [vmem:[%s3 + $0x90] sm:$0xf]
  %v2283 = vld [vmem:[%s3 + $0x94] sm:$0xf]
  %v2284 = vld [vmem:[%s3 + $0x98] sm:$0xf]
  %v2285 = vld [vmem:[%s3 + $0x9c] sm:$0xf]
  %v2286 = vpack.c.bf16 %v151, %v148
  %v2287 = vpack.c.bf16 %v159, %v156
  %v2292 = vunpack.c.l.b16 %v2278
  %v2293 = vunpack.c.l.b16 %v2279
  %v2294 = vunpack.c.l.b16 %v2280
  %v2295 = vunpack.c.l.b16 %v2281
  %v2296 = vpack.c.b16 %v2293, %v2292
  %v2297 = vpack.c.b16 %v2295, %v2294
  %v2299 = vsel %vm84, %v2296, 0
  %v2302 = vsel %vm84, %v2297, 0
  %2304 = vmatprep.subr.bf16.mxu0 0
  %2305 = vmatpush1.bf16.msra.mxu0 %v2286
  %2306 = vmatprep.subr.bf16.mxu0 0
  %2307 = vmatpush1.bf16.msra.mxu0 %v2287
  %2308 = vmatprep.subr.bf16.mxu0 0
  %2309 = vmatpush1.bf16.msra.mxu0 0
  %2310 = vmatprep.subr.bf16.mxu0 0
  %2311 = vmatpush1.bf16.msra.mxu0 0
  %2312 = vmatprep.subr.bf16.mxu0 0
  %2313 = vmatpush1.bf16.msra.mxu0 0
  %2314 = vmatprep.subr.bf16.mxu0 0
  %2315 = vmatpush1.bf16.msra.mxu0 0
  %2316 = vmatprep.subr.bf16.mxu0 0
  %2317 = vmatpush1.bf16.msra.mxu0 0
  %2318 = vmatprep.subr.bf16.mxu0 0
  %2319 = vmatpush1.bf16.msra.mxu0 0
  %2320 = vmatprep.subr.bf16.mxu0 0
  %2321 = vmatpush1.bf16.msra.mxu0 0
  %2322 = vmatprep.subr.bf16.mxu0 0
  %2323 = vmatpush1.bf16.msra.mxu0 0
  %2324 = vmatprep.subr.bf16.mxu0 0
  %2325 = vmatpush1.bf16.msra.mxu0 0
  %2326 = vmatprep.subr.bf16.mxu0 0
  %2327 = vmatpush1.bf16.msra.mxu0 0
  %2328 = vmatprep.subr.bf16.mxu0 0
  %2329 = vmatpush1.bf16.msra.mxu0 0
  %2330 = vmatprep.subr.bf16.mxu0 0
  %2331 = vmatpush1.bf16.msra.mxu0 0
  %2332 = vmatprep.subr.bf16.mxu0 0
  %2333 = vmatpush1.bf16.msra.mxu0 0
  %2334 = vmatprep.subr.bf16.mxu0 0
  %2335 = vmatpush1.bf16.msra.mxu0 0
  %2336 = vmatprep.mubr.bf16.mxu0 0
  %2337 = vmatmul.mubr.bf16.gmra.mrb[0].mxu0 %v2299
  %v2338 = vpop.f32.mrb[0].mxu0
  %v2339 = vadd.f32 0.0, %v2338
  %v2340 = vpop.f32.mrb[0].mxu0
  %v2341 = vpop.f32.mrb[0].mxu0
  %v2342 = vadd.f32 0.0, %v2341
  %v2343 = vpop.f32.mrb[0].mxu0
  %2344 = vmatprep.mubr.bf16.mxu0 0
  %2345 = vmatmul.mubr.bf16.gmra.mrb[0].mxu0 %v2302
  %v2346 = vpop.f32.mrb[0].mxu0
  %v2347 = vadd.f32 0.0, %v2346
  %v2348 = vpop.f32.mrb[0].mxu0
  %v2349 = vpop.f32.mrb[0].mxu0
  %v2350 = vadd.f32 0.0, %v2349
  %v2351 = vpop.f32.mrb[0].mxu0
  %2352 = vdwg.mxu0
  %v2353 = vld [vmem:[%s3 + $0x1f8] sm:$0xf]
  %v2354 = vpack.c.bf16 %v2342, %v2339
  %v2355 = vpack.c.bf16 %v2350, %v2347
  %v2356 = vld [vmem:[%s3 + $0x200] sm:$0xf]
  %v2358 = vsel %vm239, %v2286, 0
  %v2361 = vsel %vm239, %v2287, 0
  %v2364 = vsel %vm246, %v2356, 0
  %2366 = vmatprep.subr.bf16.mxu0 0
  %2367 = vmatpush1.bf16.msra.mxu0 %v2364
  %2368 = vmatprep.subr.bf16.mxu0 0
  %2369 = vmatpush1.bf16.msra.mxu0 0
  %2370 = vmatprep.subr.bf16.mxu0 0
  %2371 = vmatpush1.bf16.msra.mxu0 0
  %2372 = vmatprep.subr.bf16.mxu0 0
  %2373 = vmatpush1.bf16.msra.mxu0 0
  %2374 = vmatprep.subr.bf16.mxu0 0
  %2375 = vmatpush1.bf16.msra.mxu0 0
  %2376 = vmatprep.subr.bf16.mxu0 0
  %2377 = vmatpush1.bf16.msra.mxu0 0
  %2378 = vmatprep.subr.bf16.mxu0 0
  %2379 = vmatpush1.bf16.msra.mxu0 0
  %2380 = vmatprep.subr.bf16.mxu0 0
  %2381 = vmatpush1.bf16.msra.mxu0 0
  %2382 = vmatprep.subr.bf16.mxu0 0
  %2383 = vmatpush1.bf16.msra.mxu0 0
  %2384 = vmatprep.subr.bf16.mxu0 0
  %2385 = vmatpush1.bf16.msra.mxu0 0
  %2386 = vmatprep.subr.bf16.mxu0 0
  %2387 = vmatpush1.bf16.msra.mxu0 0
  %2388 = vmatprep.subr.bf16.mxu0 0
  %2389 = vmatpush1.bf16.msra.mxu0 0
  %2390 = vmatprep.subr.bf16.mxu0 0
  %2391 = vmatpush1.bf16.msra.mxu0 0
  %2392 = vmatprep.subr.bf16.mxu0 0
  %2393 = vmatpush1.bf16.msra.mxu0 0
  %2394 = vmatprep.subr.bf16.mxu0 0
  %2395 = vmatpush1.bf16.msra.mxu0 0
  %2396 = vmatprep.subr.bf16.mxu0 0
  %2397 = vmatpush1.bf16.msra.mxu0 0
  %2398 = vmatprep.mubr.bf16.mxu0 0
  %2399 = vmatmul.mubr.bf16.gmra.mrb[0].mxu0 %v2358
  %v2400 = vpop.f32.mrb[0].mxu0
  %v2401 = vadd.f32 0.0, %v2400
  %v2402 = vpop.f32.mrb[0].mxu0
  %v2403 = vpop.f32.mrb[0].mxu0
  %v2404 = vadd.f32 0.0, %v2403
  %v2405 = vpop.f32.mrb[0].mxu0
  %2406 = vmatprep.mubr.bf16.mxu0 0
  %2407 = vmatmul.mubr.bf16.gmra.mrb[0].mxu0 %v2361
  %v2408 = vpop.f32.mrb[0].mxu0
  %v2409 = vadd.f32 0.0, %v2408
  %v2410 = vpop.f32.mrb[0].mxu0
  %v2411 = vpop.f32.mrb[0].mxu0
  %v2412 = vadd.f32 0.0, %v2411
  %v2413 = vpop.f32.mrb[0].mxu0
  %2414 = vdwg.mxu0
  %v2416 = vsel %vm239, %v2354, 0
  %v2419 = vsel %vm239, %v2355, 0
  %v2422 = vsel %vm246, %v2353, 0
  %2424 = vmatprep.subr.bf16.mxu0 0
  %2425 = vmatpush1.bf16.msra.mxu0 %v2422
  %2426 = vmatprep.subr.bf16.mxu0 0
  %2427 = vmatpush1.bf16.msra.mxu0 0
  %2428 = vmatprep.subr.bf16.mxu0 0
  %2429 = vmatpush1.bf16.msra.mxu0 0
  %2430 = vmatprep.subr.bf16.mxu0 0
  %2431 = vmatpush1.bf16.msra.mxu0 0
  %2432 = vmatprep.subr.bf16.mxu0 0
  %2433 = vmatpush1.bf16.msra.mxu0 0
  %2434 = vmatprep.subr.bf16.mxu0 0
  %2435 = vmatpush1.bf16.msra.mxu0 0
  %2436 = vmatprep.subr.bf16.mxu0 0
  %2437 = vmatpush1.bf16.msra.mxu0 0
  %2438 = vmatprep.subr.bf16.mxu0 0
  %2439 = vmatpush1.bf16.msra.mxu0 0
  %2440 = vmatprep.subr.bf16.mxu0 0
  %2441 = vmatpush1.bf16.msra.mxu0 0
  %2442 = vmatprep.subr.bf16.mxu0 0
  %2443 = vmatpush1.bf16.msra.mxu0 0
  %2444 = vmatprep.subr.bf16.mxu0 0
  %2445 = vmatpush1.bf16.msra.mxu0 0
  %2446 = vmatprep.subr.bf16.mxu0 0
  %2447 = vmatpush1.bf16.msra.mxu0 0
  %2448 = vmatprep.subr.bf16.mxu0 0
  %2449 = vmatpush1.bf16.msra.mxu0 0
  %2450 = vmatprep.subr.bf16.mxu0 0
  %2451 = vmatpush1.bf16.msra.mxu0 0
  %2452 = vmatprep.subr.bf16.mxu0 0
  %2453 = vmatpush1.bf16.msra.mxu0 0
  %2454 = vmatprep.subr.bf16.mxu0 0
  %2455 = vmatpush1.bf16.msra.mxu0 0
  %2456 = vmatprep.mubr.bf16.mxu0 0
  %2457 = vmatmul.mubr.bf16.gmra.mrb[0].mxu0 %v2416
  %v2458 = vpop.f32.mrb[0].mxu0
  %v2459 = vadd.f32 %v2401, %v2458
  %v2460 = vpop.f32.mrb[0].mxu0
  %v2461 = vpop.f32.mrb[0].mxu0
  %v2462 = vadd.f32 %v2404, %v2461
  %v2463 = vpop.f32.mrb[0].mxu0
  %2464 = vmatprep.mubr.bf16.mxu0 0
  %2465 = vmatmul.mubr.bf16.gmra.mrb[0].mxu0 %v2419
  %v2466 = vpop.f32.mrb[0].mxu0
  %v2467 = vadd.f32 %v2409, %v2466
  %v2468 = vpop.f32.mrb[0].mxu0
  %v2469 = vpop.f32.mrb[0].mxu0
  %v2470 = vadd.f32 %v2412, %v2469
  %v2471 = vpop.f32.mrb[0].mxu0
  %2472 = vdwg.mxu0
  %v2477 = vunpack.c.l.b16 %v2282
  %v2478 = vunpack.c.l.b16 %v2283
  %v2479 = vunpack.c.l.b16 %v2284
  %v2480 = vunpack.c.l.b16 %v2285
  %v2481 = vpack.c.b16 %v2478, %v2477
  %v2482 = vpack.c.b16 %v2480, %v2479
  %v2484 = vsel %vm84, %v2481, 0
  %v2487 = vsel %vm84, %v2482, 0
  %2489 = vmatprep.subr.bf16.mxu0 0
  %2490 = vmatpush1.bf16.msra.mxu0 %v2286
  %2491 = vmatprep.subr.bf16.mxu0 0
  %2492 = vmatpush1.bf16.msra.mxu0 %v2287
  %2493 = vmatprep.subr.bf16.mxu0 0
  %2494 = vmatpush1.bf16.msra.mxu0 0
  %2495 = vmatprep.subr.bf16.mxu0 0
  %2496 = vmatpush1.bf16.msra.mxu0 0
  %2497 = vmatprep.subr.bf16.mxu0 0
  %2498 = vmatpush1.bf16.msra.mxu0 0
  %2499 = vmatprep.subr.bf16.mxu0 0
  %2500 = vmatpush1.bf16.msra.mxu0 0
  %2501 = vmatprep.subr.bf16.mxu0 0
  %2502 = vmatpush1.bf16.msra.mxu0 0
  %2503 = vmatprep.subr.bf16.mxu0 0
  %2504 = vmatpush1.bf16.msra.mxu0 0
  %2505 = vmatprep.subr.bf16.mxu0 0
  %2506 = vmatpush1.bf16.msra.mxu0 0
  %2507 = vmatprep.subr.bf16.mxu0 0
  %2508 = vmatpush1.bf16.msra.mxu0 0
  %2509 = vmatprep.subr.bf16.mxu0 0
  %2510 = vmatpush1.bf16.msra.mxu0 0
  %2511 = vmatprep.subr.bf16.mxu0 0
  %2512 = vmatpush1.bf16.msra.mxu0 0
  %2513 = vmatprep.subr.bf16.mxu0 0
  %2514 = vmatpush1.bf16.msra.mxu0 0
  %2515 = vmatprep.subr.bf16.mxu0 0
  %2516 = vmatpush1.bf16.msra.mxu0 0
  %2517 = vmatprep.subr.bf16.mxu0 0
  %2518 = vmatpush1.bf16.msra.mxu0 0
  %2519 = vmatprep.subr.bf16.mxu0 0
  %2520 = vmatpush1.bf16.msra.mxu0 0
  %2521 = vmatprep.mubr.bf16.mxu0 0
  %2522 = vmatmul.mubr.bf16.gmra.mrb[0].mxu0 %v2484
  %v2523 = vpop.f32.mrb[0].mxu0
  %v2524 = vadd.f32 0.0, %v2523
  %v2525 = vpop.f32.mrb[0].mxu0
  %v2526 = vpop.f32.mrb[0].mxu0
  %v2527 = vadd.f32 0.0, %v2526
  %v2528 = vpop.f32.mrb[0].mxu0
  %2529 = vmatprep.mubr.bf16.mxu0 0
  %2530 = vmatmul.mubr.bf16.gmra.mrb[0].mxu0 %v2487
  %v2531 = vpop.f32.mrb[0].mxu0
  %v2532 = vadd.f32 0.0, %v2531
  %v2533 = vpop.f32.mrb[0].mxu0
  %v2534 = vpop.f32.mrb[0].mxu0
  %v2535 = vadd.f32 0.0, %v2534
  %v2536 = vpop.f32.mrb[0].mxu0
  %2537 = vdwg.mxu0
  %v2538 = vld [vmem:[%s3 + $0x208] sm:$0xf]
  %v2539 = vpack.c.bf16 %v2527, %v2524
  %v2540 = vpack.c.bf16 %v2535, %v2532
  %v2542 = vsel %vm239, %v2539, 0
  %v2545 = vsel %vm239, %v2540, 0
  %v2548 = vsel %vm246, %v2538, 0
  %2550 = vmatprep.subr.bf16.mxu0 0
  %2551 = vmatpush1.bf16.msra.mxu0 %v2548
  %2552 = vmatprep.subr.bf16.mxu0 0
  %2553 = vmatpush1.bf16.msra.mxu0 0
  %2554 = vmatprep.subr.bf16.mxu0 0
  %2555 = vmatpush1.bf16.msra.mxu0 0
  %2556 = vmatprep.subr.bf16.mxu0 0
  %2557 = vmatpush1.bf16.msra.mxu0 0
  %2558 = vmatprep.subr.bf16.mxu0 0
  %2559 = vmatpush1.bf16.msra.mxu0 0
  %2560 = vmatprep.subr.bf16.mxu0 0
  %2561 = vmatpush1.bf16.msra.mxu0 0
  %2562 = vmatprep.subr.bf16.mxu0 0
  %2563 = vmatpush1.bf16.msra.mxu0 0
  %2564 = vmatprep.subr.bf16.mxu0 0
  %2565 = vmatpush1.bf16.msra.mxu0 0
  %2566 = vmatprep.subr.bf16.mxu0 0
  %2567 = vmatpush1.bf16.msra.mxu0 0
  %2568 = vmatprep.subr.bf16.mxu0 0
  %2569 = vmatpush1.bf16.msra.mxu0 0
  %2570 = vmatprep.subr.bf16.mxu0 0
  %2571 = vmatpush1.bf16.msra.mxu0 0
  %2572 = vmatprep.subr.bf16.mxu0 0
  %2573 = vmatpush1.bf16.msra.mxu0 0
  %2574 = vmatprep.subr.bf16.mxu0 0
  %2575 = vmatpush1.bf16.msra.mxu0 0
  %2576 = vmatprep.subr.bf16.mxu0 0
  %2577 = vmatpush1.bf16.msra.mxu0 0
  %2578 = vmatprep.subr.bf16.mxu0 0
  %2579 = vmatpush1.bf16.msra.mxu0 0
  %2580 = vmatprep.subr.bf16.mxu0 0
  %2581 = vmatpush1.bf16.msra.mxu0 0
  %2582 = vmatprep.mubr.bf16.mxu0 0
  %2583 = vmatmul.mubr.bf16.gmra.mrb[0].mxu0 %v2542
  %v2584 = vpop.f32.mrb[0].mxu0
  %v2585 = vadd.f32 0.0, %v2584
  %v2586 = vpop.f32.mrb[0].mxu0
  %v2587 = vpop.f32.mrb[0].mxu0
  %v2588 = vadd.f32 0.0, %v2587
  %v2589 = vpop.f32.mrb[0].mxu0
  %2590 = vmatprep.mubr.bf16.mxu0 0
  %2591 = vmatmul.mubr.bf16.gmra.mrb[0].mxu0 %v2545
  %v2592 = vpop.f32.mrb[0].mxu0
  %v2593 = vadd.f32 0.0, %v2592
  %v2594 = vpop.f32.mrb[0].mxu0
  %v2595 = vpop.f32.mrb[0].mxu0
  %v2596 = vadd.f32 0.0, %v2595
  %v2597 = vpop.f32.mrb[0].mxu0
  %2598 = vdwg.mxu0
  %v2599 = vadd.f32 %v2459, %v2585
  %v2600 = vadd.f32 %v2462, %v2588
  %v2601 = vadd.f32 %v2467, %v2593
  %v2602 = vadd.f32 %v2470, %v2596
  %v2603 = vld [vmem:[%s3 + $0x218] sm:$0xf]
  %v2604 = vpack.c.bf16 %v51, %v50
  %v2605 = vpack.c.bf16 %v53, %v52
  %v2607 = vsel %vm239, %v2604, 0
  %v2610 = vsel %vm239, %v2605, 0
  %v2613 = vsel %vm246, %v2603, 0
  %2615 = vmatprep.subr.bf16.mxu0 0
  %2616 = vmatpush1.bf16.msra.mxu0 %v2613
  %2617 = vmatprep.subr.bf16.mxu0 0
  %2618 = vmatpush1.bf16.msra.mxu0 0
  %2619 = vmatprep.subr.bf16.mxu0 0
  %2620 = vmatpush1.bf16.msra.mxu0 0
  %2621 = vmatprep.subr.bf16.mxu0 0
  %2622 = vmatpush1.bf16.msra.mxu0 0
  %2623 = vmatprep.subr.bf16.mxu0 0
  %2624 = vmatpush1.bf16.msra.mxu0 0
  %2625 = vmatprep.subr.bf16.mxu0 0
  %2626 = vmatpush1.bf16.msra.mxu0 0
  %2627 = vmatprep.subr.bf16.mxu0 0
  %2628 = vmatpush1.bf16.msra.mxu0 0
  %2629 = vmatprep.subr.bf16.mxu0 0
  %2630 = vmatpush1.bf16.msra.mxu0 0
  %2631 = vmatprep.subr.bf16.mxu0 0
  %2632 = vmatpush1.bf16.msra.mxu0 0
  %2633 = vmatprep.subr.bf16.mxu0 0
  %2634 = vmatpush1.bf16.msra.mxu0 0
  %2635 = vmatprep.subr.bf16.mxu0 0
  %2636 = vmatpush1.bf16.msra.mxu0 0
  %2637 = vmatprep.subr.bf16.mxu0 0
  %2638 = vmatpush1.bf16.msra.mxu0 0
  %2639 = vmatprep.subr.bf16.mxu0 0
  %2640 = vmatpush1.bf16.msra.mxu0 0
  %2641 = vmatprep.subr.bf16.mxu0 0
  %2642 = vmatpush1.bf16.msra.mxu0 0
  %2643 = vmatprep.subr.bf16.mxu0 0
  %2644 = vmatpush1.bf16.msra.mxu0 0
  %2645 = vmatprep.subr.bf16.mxu0 0
  %2646 = vmatpush1.bf16.msra.mxu0 0
  %2647 = vmatprep.mubr.bf16.mxu0 0
  %2648 = vmatmul.mubr.bf16.gmra.mrb[0].mxu0 %v2607
  %v2649 = vpop.f32.mrb[0].mxu0
  %v2650 = vadd.f32 0.0, %v2649
  %v2651 = vpop.f32.mrb[0].mxu0
  %v2652 = vpop.f32.mrb[0].mxu0
  %v2653 = vadd.f32 0.0, %v2652
  %v2654 = vpop.f32.mrb[0].mxu0
  %2655 = vmatprep.mubr.bf16.mxu0 0
  %2656 = vmatmul.mubr.bf16.gmra.mrb[0].mxu0 %v2610
  %v2657 = vpop.f32.mrb[0].mxu0
  %v2658 = vadd.f32 0.0, %v2657
  %v2659 = vpop.f32.mrb[0].mxu0
  %v2660 = vpop.f32.mrb[0].mxu0
  %v2661 = vadd.f32 0.0, %v2660
  %v2662 = vpop.f32.mrb[0].mxu0
  %2663 = vdwg.mxu0
  %v2664 = vadd.f32 %v2599, %v2650
  %v2665 = vadd.f32 %v2600, %v2653
  %v2666 = vadd.f32 %v2601, %v2658
  %v2667 = vadd.f32 %v2602, %v2661
  %v2668 = vld [vmem:[%s3 + $0x30] sm:$0xf]
  %v2669 = vld [vmem:[%s3 + $0x34] sm:$0xf]
  %v2670 = vld [vmem:[%s3 + $0x38] sm:$0xf]
  %v2671 = vld [vmem:[%s3 + $0x3c] sm:$0xf]
  %v2672 = vld [vmem:[%s3 + $0x170] sm:$0xf]
  %v2673 = vld [vmem:[%s3 + $0x174] sm:$0xf]
  %v2674 = vld [vmem:[%s3 + $0x178] sm:$0xf]
  %v2675 = vld [vmem:[%s3 + $0x17c] sm:$0xf]
  %v2676 = vpack.c.bf16 %v2665, %v2664
  %v2677 = vpack.c.bf16 %v2667, %v2666
  %s2678 = scalar_lea.vmem %s9, 4
  %v2679 = vld [vmem:[%s2678] sm:$0x1]
  %v2681 = vlaneseq
  %v2682 = vshrl.u32 %v2681, 7
  %v2683 = vsub.s32 0, %v2682
  %v2684 = vrot.slane %v2679, %v2683
  %v2690 = vunpack.c.l.b16 %v2672
  %v2691 = vunpack.c.l.b16 %v2673
  %v2692 = vunpack.c.l.b16 %v2674
  %v2693 = vunpack.c.l.b16 %v2675
  %v2694 = vpack.c.b16 %v2691, %v2690
  %v2695 = vpack.c.b16 %v2693, %v2692
  %v2699 = vsel %vm84, %v2676, 0
  %v2702 = vsel %vm84, %v2677, 0
  %2704 = vmatprep.subr.bf16.mxu0 0
  %2705 = vmatpush1.bf16.msra.mxu0 %v2694
  %2706 = vmatprep.subr.bf16.mxu0 0
  %2707 = vmatpush1.bf16.msra.mxu0 %v2695
  %2708 = vmatprep.subr.bf16.mxu0 0
  %2709 = vmatpush1.bf16.msra.mxu0 0
  %2710 = vmatprep.subr.bf16.mxu0 0
  %2711 = vmatpush1.bf16.msra.mxu0 0
  %2712 = vmatprep.subr.bf16.mxu0 0
  %2713 = vmatpush1.bf16.msra.mxu0 0
  %2714 = vmatprep.subr.bf16.mxu0 0
  %2715 = vmatpush1.bf16.msra.mxu0 0
  %2716 = vmatprep.subr.bf16.mxu0 0
  %2717 = vmatpush1.bf16.msra.mxu0 0
  %2718 = vmatprep.subr.bf16.mxu0 0
  %2719 = vmatpush1.bf16.msra.mxu0 0
  %2720 = vmatprep.subr.bf16.mxu0 0
  %2721 = vmatpush1.bf16.msra.mxu0 0
  %2722 = vmatprep.subr.bf16.mxu0 0
  %2723 = vmatpush1.bf16.msra.mxu0 0
  %2724 = vmatprep.subr.bf16.mxu0 0
  %2725 = vmatpush1.bf16.msra.mxu0 0
  %2726 = vmatprep.subr.bf16.mxu0 0
  %2727 = vmatpush1.bf16.msra.mxu0 0
  %2728 = vmatprep.subr.bf16.mxu0 0
  %2729 = vmatpush1.bf16.msra.mxu0 0
  %2730 = vmatprep.subr.bf16.mxu0 0
  %2731 = vmatpush1.bf16.msra.mxu0 0
  %2732 = vmatprep.subr.bf16.mxu0 0
  %2733 = vmatpush1.bf16.msra.mxu0 0
  %2734 = vmatprep.subr.bf16.mxu0 0
  %2735 = vmatpush1.bf16.msra.mxu0 0
  %2736 = vmatprep.mubr.bf16.mxu0 0
  %2737 = vmatmul.mubr.bf16.gmra.mrb[0].mxu0 %v2699
  %v2738 = vpop.f32.mrb[0].mxu0
  %v2739 = vadd.f32 %v2684, %v2738
  %v2740 = vpop.f32.mrb[0].mxu0
  %v2741 = vpop.f32.mrb[0].mxu0
  %v2742 = vadd.f32 %v2684, %v2741
  %v2743 = vpop.f32.mrb[0].mxu0
  %2744 = vmatprep.mubr.bf16.mxu0 0
  %2745 = vmatmul.mubr.bf16.gmra.mrb[0].mxu0 %v2702
  %v2746 = vpop.f32.mrb[0].mxu0
  %v2747 = vadd.f32 %v2684, %v2746
  %v2748 = vpop.f32.mrb[0].mxu0
  %v2749 = vpop.f32.mrb[0].mxu0
  %v2750 = vadd.f32 %v2684, %v2749
  %v2751 = vpop.f32.mrb[0].mxu0
  %2752 = vdwg.mxu0
  %v2753 = vld [vmem:[%s3 + $0xa8] sm:$0xf]
  %v2754 = vld [vmem:[%s3 + $0xac] sm:$0xf]
  %v2755 = vpack.c.bf16 %v2742, %v2739
  %v2756 = vpack.c.bf16 %v2750, %v2747
  %v2759 = vunpack.c.l.b16 %v2753
  %v2760 = vunpack.c.l.b16 %v2754
  %v2761 = vpack.c.b16 %v2760, %v2759
  %v2763 = vsel %vm84, %v2761, 0
  %2765 = vmatprep.subr.bf16.mxu0 0
  %2766 = vmatpush1.bf16.msra.mxu0 %v2755
  %2767 = vmatprep.subr.bf16.mxu0 0
  %2768 = vmatpush1.bf16.msra.mxu0 %v2756
  %2769 = vmatprep.subr.bf16.mxu0 0
  %2770 = vmatpush1.bf16.msra.mxu0 0
  %2771 = vmatprep.subr.bf16.mxu0 0
  %2772 = vmatpush1.bf16.msra.mxu0 0
  %2773 = vmatprep.subr.bf16.mxu0 0
  %2774 = vmatpush1.bf16.msra.mxu0 0
  %2775 = vmatprep.subr.bf16.mxu0 0
  %2776 = vmatpush1.bf16.msra.mxu0 0
  %2777 = vmatprep.subr.bf16.mxu0 0
  %2778 = vmatpush1.bf16.msra.mxu0 0
  %2779 = vmatprep.subr.bf16.mxu0 0
  %2780 = vmatpush1.bf16.msra.mxu0 0
  %2781 = vmatprep.subr.bf16.mxu0 0
  %2782 = vmatpush1.bf16.msra.mxu0 0
  %2783 = vmatprep.subr.bf16.mxu0 0
  %2784 = vmatpush1.bf16.msra.mxu0 0
  %2785 = vmatprep.subr.bf16.mxu0 0
  %2786 = vmatpush1.bf16.msra.mxu0 0
  %2787 = vmatprep.subr.bf16.mxu0 0
  %2788 = vmatpush1.bf16.msra.mxu0 0
  %2789 = vmatprep.subr.bf16.mxu0 0
  %2790 = vmatpush1.bf16.msra.mxu0 0
  %2791 = vmatprep.subr.bf16.mxu0 0
  %2792 = vmatpush1.bf16.msra.mxu0 0
  %2793 = vmatprep.subr.bf16.mxu0 0
  %2794 = vmatpush1.bf16.msra.mxu0 0
  %2795 = vmatprep.subr.bf16.mxu0 0
  %2796 = vmatpush1.bf16.msra.mxu0 0
  %2797 = vmatprep.mubr.bf16.mxu0 0
  %2798 = vmatmul.mubr.bf16.gmra.mrb[0].mxu0 %v2763
  %v2799 = vpop.f32.mrb[0].mxu0
  %v2800 = vadd.f32 0.0, %v2799
  %v2801 = vpop.f32.mrb[0].mxu0
  %v2802 = vpop.f32.mrb[0].mxu0
  %v2803 = vadd.f32 0.0, %v2802
  %v2804 = vpop.f32.mrb[0].mxu0
  %2805 = vdwg.mxu0
  %v2806 = vpack.c.bf16 %v2803, %v2800
  %v2808 = vsel %vm84, %v2806, 0
  %2810 = vmatprep.subr.bf16.mxu0 0
  %2811 = vmatpush1.bf16.msra.mxu0 %v702
  %2812 = vmatprep.subr.bf16.mxu0 0
  %2813 = vmatpush1.bf16.msra.mxu0 %v703
  %2814 = vmatprep.subr.bf16.mxu0 0
  %2815 = vmatpush1.bf16.msra.mxu0 0
  %2816 = vmatprep.subr.bf16.mxu0 0
  %2817 = vmatpush1.bf16.msra.mxu0 0
  %2818 = vmatprep.subr.bf16.mxu0 0
  %2819 = vmatpush1.bf16.msra.mxu0 0
  %2820 = vmatprep.subr.bf16.mxu0 0
  %2821 = vmatpush1.bf16.msra.mxu0 0
  %2822 = vmatprep.subr.bf16.mxu0 0
  %2823 = vmatpush1.bf16.msra.mxu0 0
  %2824 = vmatprep.subr.bf16.mxu0 0
  %2825 = vmatpush1.bf16.msra.mxu0 0
  %2826 = vmatprep.subr.bf16.mxu0 0
  %2827 = vmatpush1.bf16.msra.mxu0 0
  %2828 = vmatprep.subr.bf16.mxu0 0
  %2829 = vmatpush1.bf16.msra.mxu0 0
  %2830 = vmatprep.subr.bf16.mxu0 0
  %2831 = vmatpush1.bf16.msra.mxu0 0
  %2832 = vmatprep.subr.bf16.mxu0 0
  %2833 = vmatpush1.bf16.msra.mxu0 0
  %2834 = vmatprep.subr.bf16.mxu0 0
  %2835 = vmatpush1.bf16.msra.mxu0 0
  %2836 = vmatprep.subr.bf16.mxu0 0
  %2837 = vmatpush1.bf16.msra.mxu0 0
  %2838 = vmatprep.subr.bf16.mxu0 0
  %2839 = vmatpush1.bf16.msra.mxu0 0
  %2840 = vmatprep.subr.bf16.mxu0 0
  %2841 = vmatpush1.bf16.msra.mxu0 0
  %2842 = vmatprep.mubr.bf16.mxu0 0
  %2843 = vmatmul.mubr.bf16.gmra.mrb[0].mxu0 %v2808
  %v2844 = vpop.f32.mrb[0].mxu0
  %v2845 = vadd.f32 0.0, %v2844
  %v2846 = vpop.f32.mrb[0].mxu0
  %v2847 = vpop.f32.mrb[0].mxu0
  %v2848 = vadd.f32 0.0, %v2847
  %v2849 = vpop.f32.mrb[0].mxu0
  %2850 = vdwg.mxu0
  %v2851 = vld [vmem:[%s6 + $0x20] sm:$0xff]
  %v2852 = vld [vmem:[%s6 + $0x28] sm:$0xff]
  %v2853 = vld [vmem:[%s6 + $0x30] sm:$0xff]
  %v2854 = vld [vmem:[%s6 + $0x38] sm:$0xff]
  %v2855 = vmul.f32 %v2845, %v2851
  %v2856 = vmul.f32 %v2848, %v2852
  %v2857 = vmul.f32 %v2848, %v2853
  %v2858 = vmul.f32 %v2845, %v2854
  %v2859 = vadd.f32 %v2855, %v2857
  %v2860 = vadd.f32 %v2856, %v2858
  %v2861 = vpack.c.bf16 %v2860, %v2859
  %2862 = vmatprep.subr.bf16.mxu0 0
  %2863 = vmatpush1.bf16.msra.mxu0 %v809
  %2864 = vmatprep.subr.bf16.mxu0 0
  %2865 = vmatpush1.bf16.msra.mxu0 %v810
  %2866 = vmatprep.subr.bf16.mxu0 0
  %2867 = vmatpush1.bf16.msra.mxu0 %v811
  %2868 = vmatprep.subr.bf16.mxu0 0
  %2869 = vmatpush1.bf16.msra.mxu0 %v812
  %2870 = vmatprep.subr.bf16.mxu0 0
  %2871 = vmatpush1.bf16.msra.mxu0 %v813
  %2872 = vmatprep.subr.bf16.mxu0 0
  %2873 = vmatpush1.bf16.msra.mxu0 %v814
  %2874 = vmatprep.subr.bf16.mxu0 0
  %2875 = vmatpush1.bf16.msra.mxu0 %v815
  %2876 = vmatprep.subr.bf16.mxu0 0
  %2877 = vmatpush1.bf16.msra.mxu0 %v816
  %2878 = vmatprep.subr.bf16.mxu0 0
  %2879 = vmatpush1.bf16.msra.mxu0 0
  %2880 = vmatprep.subr.bf16.mxu0 0
  %2881 = vmatpush1.bf16.msra.mxu0 0
  %2882 = vmatprep.subr.bf16.mxu0 0
  %2883 = vmatpush1.bf16.msra.mxu0 0
  %2884 = vmatprep.subr.bf16.mxu0 0
  %2885 = vmatpush1.bf16.msra.mxu0 0
  %2886 = vmatprep.subr.bf16.mxu0 0
  %2887 = vmatpush1.bf16.msra.mxu0 0
  %2888 = vmatprep.subr.bf16.mxu0 0
  %2889 = vmatpush1.bf16.msra.mxu0 0
  %2890 = vmatprep.subr.bf16.mxu0 0
  %2891 = vmatpush1.bf16.msra.mxu0 0
  %2892 = vmatprep.subr.bf16.mxu0 0
  %2893 = vmatpush1.bf16.msra.mxu0 0
  %2894 = vmatprep.mubr.bf16.mxu0 0
  %2895 = vmatmul.mubr.bf16.gmra.mrb[0].mxu0 %v2861
  %v2896 = vpop.f32.mrb[0].mxu0
  %v2897 = vadd.f32 0.0, %v2896
  %v2898 = vpop.f32.mrb[0].mxu0
  %v2899 = vpop.f32.mrb[0].mxu0
  %v2900 = vadd.f32 0.0, %v2899
  %v2901 = vpop.f32.mrb[0].mxu0
  %2902 = vdwg.mxu0
  %v2903 = vld [vmem:[%s4 + $0x10] sm:$0xf]
  %v2904 = vld [vmem:[%s4 + $0x14] sm:$0xf]
  %v2905 = vld [vmem:[%s4 + $0x18] sm:$0xf]
  %v2906 = vld [vmem:[%s4 + $0x1c] sm:$0xf]
  %v2907 = vpack.c.bf16 %v2900, %v2897
  %v2912 = vunpack.c.l.b16 %v2903
  %v2913 = vunpack.c.l.b16 %v2904
  %v2914 = vunpack.c.l.b16 %v2905
  %v2915 = vunpack.c.l.b16 %v2906
  %v2916 = vpack.c.b16 %v2913, %v2912
  %v2917 = vpack.c.b16 %v2915, %v2914
  %v2919 = vsel %vm881, %v2916, 0
  %v2922 = vsel %vm881, %v2917, 0
  %2924 = vmatprep.subr.bf16.mxu0 0
  %2925 = vmatpush1.bf16.msra.mxu0 %v2907
  %2926 = vmatprep.subr.bf16.mxu0 0
  %2927 = vmatpush1.bf16.msra.mxu0 0
  %2928 = vmatprep.subr.bf16.mxu0 0
  %2929 = vmatpush1.bf16.msra.mxu0 0
  %2930 = vmatprep.subr.bf16.mxu0 0
  %2931 = vmatpush1.bf16.msra.mxu0 0
  %2932 = vmatprep.subr.bf16.mxu0 0
  %2933 = vmatpush1.bf16.msra.mxu0 0
  %2934 = vmatprep.subr.bf16.mxu0 0
  %2935 = vmatpush1.bf16.msra.mxu0 0
  %2936 = vmatprep.subr.bf16.mxu0 0
  %2937 = vmatpush1.bf16.msra.mxu0 0
  %2938 = vmatprep.subr.bf16.mxu0 0
  %2939 = vmatpush1.bf16.msra.mxu0 0
  %2940 = vmatprep.subr.bf16.mxu0 0
  %2941 = vmatpush1.bf16.msra.mxu0 0
  %2942 = vmatprep.subr.bf16.mxu0 0
  %2943 = vmatpush1.bf16.msra.mxu0 0
  %2944 = vmatprep.subr.bf16.mxu0 0
  %2945 = vmatpush1.bf16.msra.mxu0 0
  %2946 = vmatprep.subr.bf16.mxu0 0
  %2947 = vmatpush1.bf16.msra.mxu0 0
  %2948 = vmatprep.subr.bf16.mxu0 0
  %2949 = vmatpush1.bf16.msra.mxu0 0
  %2950 = vmatprep.subr.bf16.mxu0 0
  %2951 = vmatpush1.bf16.msra.mxu0 0
  %2952 = vmatprep.subr.bf16.mxu0 0
  %2953 = vmatpush1.bf16.msra.mxu0 0
  %2954 = vmatprep.subr.bf16.mxu0 0
  %2955 = vmatpush1.bf16.msra.mxu0 0
  %2956 = vmatprep.mubr.bf16.mxu0 0
  %2957 = vmatmul.mubr.bf16.gmra.mrb[0].mxu0 %v2919
  %v2958 = vpop.f32.mrb[0].mxu0
  %v2959 = vadd.f32 0.0, %v2958
  %v2960 = vpop.f32.mrb[0].mxu0
  %v2961 = vpop.f32.mrb[0].mxu0
  %v2962 = vadd.f32 0.0, %v2961
  %v2963 = vpop.f32.mrb[0].mxu0
  %2964 = vmatprep.mubr.bf16.mxu0 0
  %2965 = vmatmul.mubr.bf16.gmra.mrb[0].mxu0 %v2922
  %v2966 = vpop.f32.mrb[0].mxu0
  %v2967 = vadd.f32 0.0, %v2966
  %v2968 = vpop.f32.mrb[0].mxu0
  %v2969 = vpop.f32.mrb[0].mxu0
  %v2970 = vadd.f32 0.0, %v2969
  %v2971 = vpop.f32.mrb[0].mxu0
  %2972 = vdwg.mxu0
  %v2973 = vld [vmem:[%s3 + $0x180] sm:$0xf]
  %v2974 = vld [vmem:[%s3 + $0x184] sm:$0xf]
  %v2975 = vld [vmem:[%s3 + $0x188] sm:$0xf]
  %v2976 = vld [vmem:[%s3 + $0x18c] sm:$0xf]
  %v2977 = vpack.c.bf16 %v2962, %v2959
  %v2978 = vpack.c.bf16 %v2970, %v2967
  %s2979 = scalar_lea.vmem %s9, 5
  %v2980 = vld [vmem:[%s2979] sm:$0x1]
  %v2982 = vlaneseq
  %v2983 = vshrl.u32 %v2982, 7
  %v2984 = vsub.s32 0, %v2983
  %v2985 = vrot.slane %v2980, %v2984
  %v2991 = vunpack.c.l.b16 %v2973
  %v2992 = vunpack.c.l.b16 %v2974
  %v2993 = vunpack.c.l.b16 %v2975
  %v2994 = vunpack.c.l.b16 %v2976
  %v2995 = vpack.c.b16 %v2992, %v2991
  %v2996 = vpack.c.b16 %v2994, %v2993
  %v3000 = vsel %vm84, %v2977, 0
  %v3003 = vsel %vm84, %v2978, 0
  %3005 = vmatprep.subr.bf16.mxu0 0
  %3006 = vmatpush1.bf16.msra.mxu0 %v2995
  %3007 = vmatprep.subr.bf16.mxu0 0
  %3008 = vmatpush1.bf16.msra.mxu0 %v2996
  %3009 = vmatprep.subr.bf16.mxu0 0
  %3010 = vmatpush1.bf16.msra.mxu0 0
  %3011 = vmatprep.subr.bf16.mxu0 0
  %3012 = vmatpush1.bf16.msra.mxu0 0
  %3013 = vmatprep.subr.bf16.mxu0 0
  %3014 = vmatpush1.bf16.msra.mxu0 0
  %3015 = vmatprep.subr.bf16.mxu0 0
  %3016 = vmatpush1.bf16.msra.mxu0 0
  %3017 = vmatprep.subr.bf16.mxu0 0
  %3018 = vmatpush1.bf16.msra.mxu0 0
  %3019 = vmatprep.subr.bf16.mxu0 0
  %3020 = vmatpush1.bf16.msra.mxu0 0
  %3021 = vmatprep.subr.bf16.mxu0 0
  %3022 = vmatpush1.bf16.msra.mxu0 0
  %3023 = vmatprep.subr.bf16.mxu0 0
  %3024 = vmatpush1.bf16.msra.mxu0 0
  %3025 = vmatprep.subr.bf16.mxu0 0
  %3026 = vmatpush1.bf16.msra.mxu0 0
  %3027 = vmatprep.subr.bf16.mxu0 0
  %3028 = vmatpush1.bf16.msra.mxu0 0
  %3029 = vmatprep.subr.bf16.mxu0 0
  %3030 = vmatpush1.bf16.msra.mxu0 0
  %3031 = vmatprep.subr.bf16.mxu0 0
  %3032 = vmatpush1.bf16.msra.mxu0 0
  %3033 = vmatprep.subr.bf16.mxu0 0
  %3034 = vmatpush1.bf16.msra.mxu0 0
  %3035 = vmatprep.subr.bf16.mxu0 0
  %3036 = vmatpush1.bf16.msra.mxu0 0
  %3037 = vmatprep.mubr.bf16.mxu0 0
  %3038 = vmatmul.mubr.bf16.gmra.mrb[0].mxu0 %v3000
  %v3039 = vpop.f32.mrb[0].mxu0
  %v3040 = vadd.f32 %v2985, %v3039
  %v3041 = vpop.f32.mrb[0].mxu0
  %v3042 = vpop.f32.mrb[0].mxu0
  %v3043 = vadd.f32 %v2985, %v3042
  %v3044 = vpop.f32.mrb[0].mxu0
  %3045 = vmatprep.mubr.bf16.mxu0 0
  %3046 = vmatmul.mubr.bf16.gmra.mrb[0].mxu0 %v3003
  %v3047 = vpop.f32.mrb[0].mxu0
  %v3048 = vadd.f32 %v2985, %v3047
  %v3049 = vpop.f32.mrb[0].mxu0
  %v3050 = vpop.f32.mrb[0].mxu0
  %v3051 = vadd.f32 %v2985, %v3050
  %v3052 = vpop.f32.mrb[0].mxu0
  %3053 = vdwg.mxu0
  %v3054 = vadd.f32 %v2664, %v3040
  %v3055 = vadd.f32 %v2665, %v3043
  %v3056 = vadd.f32 %v2666, %v3048
  %v3057 = vadd.f32 %v2667, %v3051
  %v3058 = vpack.c.bf16 %v3055, %v3054
  %v3059 = vpack.c.bf16 %v3057, %v3056
  %v3064 = vunpack.c.l.b16 %v2668
  %v3065 = vunpack.c.l.b16 %v2669
  %v3066 = vunpack.c.l.b16 %v2670
  %v3067 = vunpack.c.l.b16 %v2671
  %v3068 = vpack.c.b16 %v3065, %v3064
  %v3069 = vpack.c.b16 %v3067, %v3066
  %v3071 = vsel %vm84, %v3068, 0
  %v3074 = vsel %vm84, %v3069, 0
  %3076 = vmatprep.subr.bf16.mxu0 0
  %3077 = vmatpush1.bf16.msra.mxu0 %v3058
  %3078 = vmatprep.subr.bf16.mxu0 0
  %3079 = vmatpush1.bf16.msra.mxu0 %v3059
  %3080 = vmatprep.subr.bf16.mxu0 0
  %3081 = vmatpush1.bf16.msra.mxu0 0
  %3082 = vmatprep.subr.bf16.mxu0 0
  %3083 = vmatpush1.bf16.msra.mxu0 0
  %3084 = vmatprep.subr.bf16.mxu0 0
  %3085 = vmatpush1.bf16.msra.mxu0 0
  %3086 = vmatprep.subr.bf16.mxu0 0
  %3087 = vmatpush1.bf16.msra.mxu0 0
  %3088 = vmatprep.subr.bf16.mxu0 0
  %3089 = vmatpush1.bf16.msra.mxu0 0
  %3090 = vmatprep.subr.bf16.mxu0 0
  %3091 = vmatpush1.bf16.msra.mxu0 0
  %3092 = vmatprep.subr.bf16.mxu0 0
  %3093 = vmatpush1.bf16.msra.mxu0 0
  %3094 = vmatprep.subr.bf16.mxu0 0
  %3095 = vmatpush1.bf16.msra.mxu0 0
  %3096 = vmatprep.subr.bf16.mxu0 0
  %3097 = vmatpush1.bf16.msra.mxu0 0
  %3098 = vmatprep.subr.bf16.mxu0 0
  %3099 = vmatpush1.bf16.msra.mxu0 0
  %3100 = vmatprep.subr.bf16.mxu0 0
  %3101 = vmatpush1.bf16.msra.mxu0 0
  %3102 = vmatprep.subr.bf16.mxu0 0
  %3103 = vmatpush1.bf16.msra.mxu0 0
  %3104 = vmatprep.subr.bf16.mxu0 0
  %3105 = vmatpush1.bf16.msra.mxu0 0
  %3106 = vmatprep.subr.bf16.mxu0 0
  %3107 = vmatpush1.bf16.msra.mxu0 0
  %3108 = vmatprep.mubr.bf16.mxu0 0
  %3109 = vmatmul.mubr.bf16.gmra.mrb[0].mxu0 %v3071
  %v3110 = vpop.f32.mrb[0].mxu0
  %v3111 = vadd.f32 0.0, %v3110
  %v3112 = vpop.f32.mrb[0].mxu0
  %v3113 = vpop.f32.mrb[0].mxu0
  %v3114 = vadd.f32 0.0, %v3113
  %v3115 = vpop.f32.mrb[0].mxu0
  %3116 = vmatprep.mubr.bf16.mxu0 0
  %3117 = vmatmul.mubr.bf16.gmra.mrb[0].mxu0 %v3074
  %v3118 = vpop.f32.mrb[0].mxu0
  %v3119 = vadd.f32 0.0, %v3118
  %v3120 = vpop.f32.mrb[0].mxu0
  %v3121 = vpop.f32.mrb[0].mxu0
  %v3122 = vadd.f32 0.0, %v3121
  %v3123 = vpop.f32.mrb[0].mxu0
  %3124 = vdwg.mxu0
  %v3125 = vsub.f32 %v3054, %v3111
  %v3126 = vsub.f32 %v3055, %v3114
  %v3127 = vsub.f32 %v3056, %v3119
  %v3128 = vsub.f32 %v3057, %v3122
  %v3129 = vld [vmem:[%s3 + $0x190] sm:$0xf]
  %v3130 = vld [vmem:[%s3 + $0x194] sm:$0xf]
  %v3131 = vld [vmem:[%s3 + $0x198] sm:$0xf]
  %v3132 = vld [vmem:[%s3 + $0x19c] sm:$0xf]
  %v3133 = vpack.c.bf16 %v3126, %v3125
  %v3134 = vpack.c.bf16 %v3128, %v3127
  %s3135 = scalar_lea.vmem %s9, 6
  %v3136 = vld [vmem:[%s3135] sm:$0x1]
  %v3138 = vlaneseq
  %v3139 = vshrl.u32 %v3138, 7
  %v3140 = vsub.s32 0, %v3139
  %v3141 = vrot.slane %v3136, %v3140
  %v3147 = vunpack.c.l.b16 %v3129
  %v3148 = vunpack.c.l.b16 %v3130
  %v3149 = vunpack.c.l.b16 %v3131
  %v3150 = vunpack.c.l.b16 %v3132
  %v3151 = vpack.c.b16 %v3148, %v3147
  %v3152 = vpack.c.b16 %v3150, %v3149
  %v3156 = vsel %vm84, %v3133, 0
  %v3159 = vsel %vm84, %v3134, 0
  %3161 = vmatprep.subr.bf16.mxu0 0
  %3162 = vmatpush1.bf16.msra.mxu0 %v3151
  %3163 = vmatprep.subr.bf16.mxu0 0
  %3164 = vmatpush1.bf16.msra.mxu0 %v3152
  %3165 = vmatprep.subr.bf16.mxu0 0
  %3166 = vmatpush1.bf16.msra.mxu0 0
  %3167 = vmatprep.subr.bf16.mxu0 0
  %3168 = vmatpush1.bf16.msra.mxu0 0
  %3169 = vmatprep.subr.bf16.mxu0 0
  %3170 = vmatpush1.bf16.msra.mxu0 0
  %3171 = vmatprep.subr.bf16.mxu0 0
  %3172 = vmatpush1.bf16.msra.mxu0 0
  %3173 = vmatprep.subr.bf16.mxu0 0
  %3174 = vmatpush1.bf16.msra.mxu0 0
  %3175 = vmatprep.subr.bf16.mxu0 0
  %3176 = vmatpush1.bf16.msra.mxu0 0
  %3177 = vmatprep.subr.bf16.mxu0 0
  %3178 = vmatpush1.bf16.msra.mxu0 0
  %3179 = vmatprep.subr.bf16.mxu0 0
  %3180 = vmatpush1.bf16.msra.mxu0 0
  %3181 = vmatprep.subr.bf16.mxu0 0
  %3182 = vmatpush1.bf16.msra.mxu0 0
  %3183 = vmatprep.subr.bf16.mxu0 0
  %3184 = vmatpush1.bf16.msra.mxu0 0
  %3185 = vmatprep.subr.bf16.mxu0 0
  %3186 = vmatpush1.bf16.msra.mxu0 0
  %3187 = vmatprep.subr.bf16.mxu0 0
  %3188 = vmatpush1.bf16.msra.mxu0 0
  %3189 = vmatprep.subr.bf16.mxu0 0
  %3190 = vmatpush1.bf16.msra.mxu0 0
  %3191 = vmatprep.subr.bf16.mxu0 0
  %3192 = vmatpush1.bf16.msra.mxu0 0
  %3193 = vmatprep.mubr.bf16.mxu0 0
  %3194 = vmatmul.mubr.bf16.gmra.mrb[0].mxu0 %v3156
  %v3195 = vpop.f32.mrb[0].mxu0
  %v3196 = vadd.f32 %v3141, %v3195
  %v3197 = vpop.f32.mrb[0].mxu0
  %v3198 = vpop.f32.mrb[0].mxu0
  %v3199 = vadd.f32 %v3141, %v3198
  %v3200 = vpop.f32.mrb[0].mxu0
  %3201 = vmatprep.mubr.bf16.mxu0 0
  %3202 = vmatmul.mubr.bf16.gmra.mrb[0].mxu0 %v3159
  %v3203 = vpop.f32.mrb[0].mxu0
  %v3204 = vadd.f32 %v3141, %v3203
  %v3205 = vpop.f32.mrb[0].mxu0
  %v3206 = vpop.f32.mrb[0].mxu0
  %v3207 = vadd.f32 %v3141, %v3206
  %v3208 = vpop.f32.mrb[0].mxu0
  %3209 = vdwg.mxu0
  %v3210 = vld [vmem:[%s3 + $0x1a0] sm:$0xf]
  %v3211 = vld [vmem:[%s3 + $0x1a4] sm:$0xf]
  %v3212 = vld [vmem:[%s3 + $0x1a8] sm:$0xf]
  %v3213 = vld [vmem:[%s3 + $0x1ac] sm:$0xf]
  %v3214 = vpack.c.bf16 %v2275, %v2274
  %v3215 = vpack.c.bf16 %v2277, %v2276
  %s3216 = scalar_lea.vmem %s9, 7
  %v3217 = vld [vmem:[%s3216] sm:$0x1]
  %v3219 = vlaneseq
  %v3220 = vshrl.u32 %v3219, 7
  %v3221 = vsub.s32 0, %v3220
  %v3222 = vrot.slane %v3217, %v3221
  %v3228 = vunpack.c.l.b16 %v3210
  %v3229 = vunpack.c.l.b16 %v3211
  %v3230 = vunpack.c.l.b16 %v3212
  %v3231 = vunpack.c.l.b16 %v3213
  %v3232 = vpack.c.b16 %v3229, %v3228
  %v3233 = vpack.c.b16 %v3231, %v3230
  %v3237 = vsel %vm84, %v3214, 0
  %v3240 = vsel %vm84, %v3215, 0
  %3242 = vmatprep.subr.bf16.mxu0 0
  %3243 = vmatpush1.bf16.msra.mxu0 %v3232
  %3244 = vmatprep.subr.bf16.mxu0 0
  %3245 = vmatpush1.bf16.msra.mxu0 %v3233
  %3246 = vmatprep.subr.bf16.mxu0 0
  %3247 = vmatpush1.bf16.msra.mxu0 0
  %3248 = vmatprep.subr.bf16.mxu0 0
  %3249 = vmatpush1.bf16.msra.mxu0 0
  %3250 = vmatprep.subr.bf16.mxu0 0
  %3251 = vmatpush1.bf16.msra.mxu0 0
  %3252 = vmatprep.subr.bf16.mxu0 0
  %3253 = vmatpush1.bf16.msra.mxu0 0
  %3254 = vmatprep.subr.bf16.mxu0 0
  %3255 = vmatpush1.bf16.msra.mxu0 0
  %3256 = vmatprep.subr.bf16.mxu0 0
  %3257 = vmatpush1.bf16.msra.mxu0 0
  %3258 = vmatprep.subr.bf16.mxu0 0
  %3259 = vmatpush1.bf16.msra.mxu0 0
  %3260 = vmatprep.subr.bf16.mxu0 0
  %3261 = vmatpush1.bf16.msra.mxu0 0
  %3262 = vmatprep.subr.bf16.mxu0 0
  %3263 = vmatpush1.bf16.msra.mxu0 0
  %3264 = vmatprep.subr.bf16.mxu0 0
  %3265 = vmatpush1.bf16.msra.mxu0 0
  %3266 = vmatprep.subr.bf16.mxu0 0
  %3267 = vmatpush1.bf16.msra.mxu0 0
  %3268 = vmatprep.subr.bf16.mxu0 0
  %3269 = vmatpush1.bf16.msra.mxu0 0
  %3270 = vmatprep.subr.bf16.mxu0 0
  %3271 = vmatpush1.bf16.msra.mxu0 0
  %3272 = vmatprep.subr.bf16.mxu0 0
  %3273 = vmatpush1.bf16.msra.mxu0 0
  %3274 = vmatprep.mubr.bf16.mxu0 0
  %3275 = vmatmul.mubr.bf16.gmra.mrb[0].mxu0 %v3237
  %v3276 = vpop.f32.mrb[0].mxu0
  %v3277 = vadd.f32 %v3222, %v3276
  %v3278 = vpop.f32.mrb[0].mxu0
  %v3279 = vpop.f32.mrb[0].mxu0
  %v3280 = vadd.f32 %v3222, %v3279
  %v3281 = vpop.f32.mrb[0].mxu0
  %3282 = vmatprep.mubr.bf16.mxu0 0
  %3283 = vmatmul.mubr.bf16.gmra.mrb[0].mxu0 %v3240
  %v3284 = vpop.f32.mrb[0].mxu0
  %v3285 = vadd.f32 %v3222, %v3284
  %v3286 = vpop.f32.mrb[0].mxu0
  %v3287 = vpop.f32.mrb[0].mxu0
  %v3288 = vadd.f32 %v3222, %v3287
  %v3289 = vpop.f32.mrb[0].mxu0
  %3290 = vdwg.mxu0
  %v3291 = vpack.c.bf16 %v3199, %v3196
  %v3292 = vpack.c.bf16 %v3207, %v3204
  %3293 = vmatprep.subr.bf16.mxu0 0
  %3294 = vmatpush1.bf16.msra.mxu0 %v3291
  %3295 = vmatprep.subr.bf16.mxu0 0
  %3296 = vmatpush1.bf16.msra.mxu0 %v3292
  %3297 = vmatprep.subr.bf16.mxu0 0
  %3298 = vmatpush1.bf16.msra.mxu0 0
  %3299 = vmatprep.subr.bf16.mxu0 0
  %3300 = vmatpush1.bf16.msra.mxu0 0
  %3301 = vmatprep.subr.bf16.mxu0 0
  %3302 = vmatpush1.bf16.msra.mxu0 0
  %3303 = vmatprep.subr.bf16.mxu0 0
  %3304 = vmatpush1.bf16.msra.mxu0 0
  %3305 = vmatprep.subr.bf16.mxu0 0
  %3306 = vmatpush1.bf16.msra.mxu0 0
  %3307 = vmatprep.subr.bf16.mxu0 0
  %3308 = vmatpush1.bf16.msra.mxu0 0
  %3309 = vmatprep.subr.bf16.mxu0 0
  %3310 = vmatpush1.bf16.msra.mxu0 0
  %3311 = vmatprep.subr.bf16.mxu0 0
  %3312 = vmatpush1.bf16.msra.mxu0 0
  %3313 = vmatprep.subr.bf16.mxu0 0
  %3314 = vmatpush1.bf16.msra.mxu0 0
  %3315 = vmatprep.subr.bf16.mxu0 0
  %3316 = vmatpush1.bf16.msra.mxu0 0
  %3317 = vmatprep.subr.bf16.mxu0 0
  %3318 = vmatpush1.bf16.msra.mxu0 0
  %3319 = vmatprep.subr.bf16.mxu0 0
  %3320 = vmatpush1.bf16.msra.mxu0 0
  %3321 = vmatprep.subr.bf16.mxu0 0
  %3322 = vmatpush1.bf16.msra.mxu0 0
  %3323 = vmatprep.subr.bf16.mxu0 0
  %3324 = vmatpush1.bf16.msra.mxu0 0
  %3325 = vmatprep.mubr.bf16.mxu0 0
  %3326 = vmatmul.mubr.bf16.gmra.mrb[0].mxu0 %v2763
  %v3327 = vpop.f32.mrb[0].mxu0
  %v3328 = vadd.f32 0.0, %v3327
  %v3329 = vpop.f32.mrb[0].mxu0
  %v3330 = vpop.f32.mrb[0].mxu0
  %v3331 = vadd.f32 0.0, %v3330
  %v3332 = vpop.f32.mrb[0].mxu0
  %3333 = vdwg.mxu0
  %v3334 = vpack.c.bf16 %v3280, %v3277
  %v3335 = vpack.c.bf16 %v3288, %v3285
  %3336 = vmatprep.subr.bf16.mxu0 0
  %3337 = vmatpush1.bf16.msra.mxu0 %v3334
  %3338 = vmatprep.subr.bf16.mxu0 0
  %3339 = vmatpush1.bf16.msra.mxu0 %v3335
  %3340 = vmatprep.subr.bf16.mxu0 0
  %3341 = vmatpush1.bf16.msra.mxu0 0
  %3342 = vmatprep.subr.bf16.mxu0 0
  %3343 = vmatpush1.bf16.msra.mxu0 0
  %3344 = vmatprep.subr.bf16.mxu0 0
  %3345 = vmatpush1.bf16.msra.mxu0 0
  %3346 = vmatprep.subr.bf16.mxu0 0
  %3347 = vmatpush1.bf16.msra.mxu0 0
  %3348 = vmatprep.subr.bf16.mxu0 0
  %3349 = vmatpush1.bf16.msra.mxu0 0
  %3350 = vmatprep.subr.bf16.mxu0 0
  %3351 = vmatpush1.bf16.msra.mxu0 0
  %3352 = vmatprep.subr.bf16.mxu0 0
  %3353 = vmatpush1.bf16.msra.mxu0 0
  %3354 = vmatprep.subr.bf16.mxu0 0
  %3355 = vmatpush1.bf16.msra.mxu0 0
  %3356 = vmatprep.subr.bf16.mxu0 0
  %3357 = vmatpush1.bf16.msra.mxu0 0
  %3358 = vmatprep.subr.bf16.mxu0 0
  %3359 = vmatpush1.bf16.msra.mxu0 0
  %3360 = vmatprep.subr.bf16.mxu0 0
  %3361 = vmatpush1.bf16.msra.mxu0 0
  %3362 = vmatprep.subr.bf16.mxu0 0
  %3363 = vmatpush1.bf16.msra.mxu0 0
  %3364 = vmatprep.subr.bf16.mxu0 0
  %3365 = vmatpush1.bf16.msra.mxu0 0
  %3366 = vmatprep.subr.bf16.mxu0 0
  %3367 = vmatpush1.bf16.msra.mxu0 0
  %3368 = vmatprep.mubr.bf16.mxu0 0
  %3369 = vmatmul.mubr.bf16.gmra.mrb[0].mxu0 %v646
  %v3370 = vpop.f32.mrb[0].mxu0
  %v3371 = vadd.f32 0.0, %v3370
  %v3372 = vpop.f32.mrb[0].mxu0
  %v3373 = vpop.f32.mrb[0].mxu0
  %v3374 = vadd.f32 0.0, %v3373
  %v3375 = vpop.f32.mrb[0].mxu0
  %3376 = vdwg.mxu0
  %v3377 = vld [vmem:[%s4 + $0x20] sm:$0xf]
  %v3378 = vld [vmem:[%s4 + $0x24] sm:$0xf]
  %v3379 = vld [vmem:[%s4 + $0x28] sm:$0xf]
  %v3380 = vld [vmem:[%s4 + $0x2c] sm:$0xf]
  %v3381 = vld [vmem:[%s4 + $0x30] sm:$0xf]
  %v3382 = vld [vmem:[%s4 + $0x34] sm:$0xf]
  %v3383 = vld [vmem:[%s4 + $0x38] sm:$0xf]
  %v3384 = vld [vmem:[%s4 + $0x3c] sm:$0xf]
  %v3385 = vld [vmem:[%s4 + $0x40] sm:$0xf]
  %v3386 = vld [vmem:[%s4 + $0x44] sm:$0xf]
  %v3387 = vld [vmem:[%s4 + $0x48] sm:$0xf]
  %v3388 = vld [vmem:[%s4 + $0x4c] sm:$0xf]
  %v3389 = vld [vmem:[%s4 + $0x50] sm:$0xf]
  %v3390 = vld [vmem:[%s4 + $0x54] sm:$0xf]
  %v3391 = vld [vmem:[%s4 + $0x58] sm:$0xf]
  %v3392 = vld [vmem:[%s4 + $0x5c] sm:$0xf]
  %v3393 = vpack.c.bf16 %v3374, %v3371
  %v3410 = vunpack.c.l.b16 %v3377
  %v3411 = vunpack.c.l.b16 %v3378
  %v3412 = vunpack.c.l.b16 %v3379
  %v3413 = vunpack.c.l.b16 %v3380
  %v3414 = vunpack.c.l.b16 %v3381
  %v3415 = vunpack.c.l.b16 %v3382
  %v3416 = vunpack.c.l.b16 %v3383
  %v3417 = vunpack.c.l.b16 %v3384
  %v3418 = vunpack.c.l.b16 %v3385
  %v3419 = vunpack.c.l.b16 %v3386
  %v3420 = vunpack.c.l.b16 %v3387
  %v3421 = vunpack.c.l.b16 %v3388
  %v3422 = vunpack.c.l.b16 %v3389
  %v3423 = vunpack.c.l.b16 %v3390
  %v3424 = vunpack.c.l.b16 %v3391
  %v3425 = vunpack.c.l.b16 %v3392
  %v3426 = vpack.c.b16 %v3411, %v3410
  %v3427 = vpack.c.b16 %v3413, %v3412
  %v3428 = vpack.c.b16 %v3415, %v3414
  %v3429 = vpack.c.b16 %v3417, %v3416
  %v3430 = vpack.c.b16 %v3419, %v3418
  %v3431 = vpack.c.b16 %v3421, %v3420
  %v3432 = vpack.c.b16 %v3423, %v3422
  %v3433 = vpack.c.b16 %v3425, %v3424
  %v3435 = vsel %vm881, %v3426, 0
  %v3438 = vsel %vm881, %v3427, 0
  %v3441 = vsel %vm881, %v3428, 0
  %v3444 = vsel %vm881, %v3429, 0
  %v3447 = vsel %vm881, %v3430, 0
  %v3450 = vsel %vm881, %v3431, 0
  %v3453 = vsel %vm881, %v3432, 0
  %v3456 = vsel %vm881, %v3433, 0
  %3458 = vmatprep.subr.bf16.mxu0 0
  %3459 = vmatpush1.bf16.msra.mxu0 %v3393
  %3460 = vmatprep.subr.bf16.mxu0 0
  %3461 = vmatpush1.bf16.msra.mxu0 0
  %3462 = vmatprep.subr.bf16.mxu0 0
  %3463 = vmatpush1.bf16.msra.mxu0 0
  %3464 = vmatprep.subr.bf16.mxu0 0
  %3465 = vmatpush1.bf16.msra.mxu0 0
  %3466 = vmatprep.subr.bf16.mxu0 0
  %3467 = vmatpush1.bf16.msra.mxu0 0
  %3468 = vmatprep.subr.bf16.mxu0 0
  %3469 = vmatpush1.bf16.msra.mxu0 0
  %3470 = vmatprep.subr.bf16.mxu0 0
  %3471 = vmatpush1.bf16.msra.mxu0 0
  %3472 = vmatprep.subr.bf16.mxu0 0
  %3473 = vmatpush1.bf16.msra.mxu0 0
  %3474 = vmatprep.subr.bf16.mxu0 0
  %3475 = vmatpush1.bf16.msra.mxu0 0
  %3476 = vmatprep.subr.bf16.mxu0 0
  %3477 = vmatpush1.bf16.msra.mxu0 0
  %3478 = vmatprep.subr.bf16.mxu0 0
  %3479 = vmatpush1.bf16.msra.mxu0 0
  %3480 = vmatprep.subr.bf16.mxu0 0
  %3481 = vmatpush1.bf16.msra.mxu0 0
  %3482 = vmatprep.subr.bf16.mxu0 0
  %3483 = vmatpush1.bf16.msra.mxu0 0
  %3484 = vmatprep.subr.bf16.mxu0 0
  %3485 = vmatpush1.bf16.msra.mxu0 0
  %3486 = vmatprep.subr.bf16.mxu0 0
  %3487 = vmatpush1.bf16.msra.mxu0 0
  %3488 = vmatprep.subr.bf16.mxu0 0
  %3489 = vmatpush1.bf16.msra.mxu0 0
  %3490 = vmatprep.mubr.bf16.mxu0 0
  %3491 = vmatmul.mubr.bf16.gmra.mrb[0].mxu0 %v3435
  %v3492 = vpop.f32.mrb[0].mxu0
  %v3493 = vadd.f32 0.0, %v3492
  %v3494 = vpop.f32.mrb[0].mxu0
  %v3495 = vpop.f32.mrb[0].mxu0
  %v3496 = vadd.f32 0.0, %v3495
  %v3497 = vpop.f32.mrb[0].mxu0
  %3498 = vmatprep.mubr.bf16.mxu0 0
  %3499 = vmatmul.mubr.bf16.gmra.mrb[0].mxu0 %v3438
  %v3500 = vpop.f32.mrb[0].mxu0
  %v3501 = vadd.f32 0.0, %v3500
  %v3502 = vpop.f32.mrb[0].mxu0
  %v3503 = vpop.f32.mrb[0].mxu0
  %v3504 = vadd.f32 0.0, %v3503
  %v3505 = vpop.f32.mrb[0].mxu0
  %3506 = vmatprep.mubr.bf16.mxu0 0
  %3507 = vmatmul.mubr.bf16.gmra.mrb[0].mxu0 %v3441
  %v3508 = vpop.f32.mrb[0].mxu0
  %v3509 = vadd.f32 0.0, %v3508
  %v3510 = vpop.f32.mrb[0].mxu0
  %v3511 = vpop.f32.mrb[0].mxu0
  %v3512 = vadd.f32 0.0, %v3511
  %v3513 = vpop.f32.mrb[0].mxu0
  %3514 = vmatprep.mubr.bf16.mxu0 0
  %3515 = vmatmul.mubr.bf16.gmra.mrb[0].mxu0 %v3444
  %v3516 = vpop.f32.mrb[0].mxu0
  %v3517 = vadd.f32 0.0, %v3516
  %v3518 = vpop.f32.mrb[0].mxu0
  %v3519 = vpop.f32.mrb[0].mxu0
  %v3520 = vadd.f32 0.0, %v3519
  %v3521 = vpop.f32.mrb[0].mxu0
  %3522 = vmatprep.mubr.bf16.mxu0 0
  %3523 = vmatmul.mubr.bf16.gmra.mrb[0].mxu0 %v3447
  %v3524 = vpop.f32.mrb[0].mxu0
  %v3525 = vadd.f32 0.0, %v3524
  %v3526 = vpop.f32.mrb[0].mxu0
  %v3527 = vpop.f32.mrb[0].mxu0
  %v3528 = vadd.f32 0.0, %v3527
  %v3529 = vpop.f32.mrb[0].mxu0
  %3530 = vmatprep.mubr.bf16.mxu0 0
  %3531 = vmatmul.mubr.bf16.gmra.mrb[0].mxu0 %v3450
  %v3532 = vpop.f32.mrb[0].mxu0
  %v3533 = vadd.f32 0.0, %v3532
  %v3534 = vpop.f32.mrb[0].mxu0
  %v3535 = vpop.f32.mrb[0].mxu0
  %v3536 = vadd.f32 0.0, %v3535
  %v3537 = vpop.f32.mrb[0].mxu0
  %3538 = vmatprep.mubr.bf16.mxu0 0
  %3539 = vmatmul.mubr.bf16.gmra.mrb[0].mxu0 %v3453
  %v3540 = vpop.f32.mrb[0].mxu0
  %v3541 = vadd.f32 0.0, %v3540
  %v3542 = vpop.f32.mrb[0].mxu0
  %v3543 = vpop.f32.mrb[0].mxu0
  %v3544 = vadd.f32 0.0, %v3543
  %v3545 = vpop.f32.mrb[0].mxu0
  %3546 = vmatprep.mubr.bf16.mxu0 0
  %3547 = vmatmul.mubr.bf16.gmra.mrb[0].mxu0 %v3456
  %v3548 = vpop.f32.mrb[0].mxu0
  %v3549 = vadd.f32 0.0, %v3548
  %v3550 = vpop.f32.mrb[0].mxu0
  %v3551 = vpop.f32.mrb[0].mxu0
  %v3552 = vadd.f32 0.0, %v3551
  %v3553 = vpop.f32.mrb[0].mxu0
  %3554 = vdwg.mxu0
  %v3555 = vld [vmem:[%s7] sm:$0xff]
  %v3556 = vld [vmem:[%s7 + $0x8] sm:$0xff]
  %v3557 = vld [vmem:[%s7 + $0x10] sm:$0xff]
  %v3558 = vld [vmem:[%s7 + $0x18] sm:$0xff]
  %v3559 = vld [vmem:[%s7 + $0x20] sm:$0xff]
  %v3560 = vld [vmem:[%s7 + $0x28] sm:$0xff]
  %v3561 = vld [vmem:[%s7 + $0x30] sm:$0xff]
  %v3562 = vld [vmem:[%s7 + $0x38] sm:$0xff]
  %v3563 = vld [vmem:[%s7 + $0x40] sm:$0xff]
  %v3564 = vld [vmem:[%s7 + $0x48] sm:$0xff]
  %v3565 = vld [vmem:[%s7 + $0x50] sm:$0xff]
  %v3566 = vld [vmem:[%s7 + $0x58] sm:$0xff]
  %v3567 = vld [vmem:[%s7 + $0x60] sm:$0xff]
  %v3568 = vld [vmem:[%s7 + $0x68] sm:$0xff]
  %v3569 = vld [vmem:[%s7 + $0x70] sm:$0xff]
  %v3570 = vld [vmem:[%s7 + $0x78] sm:$0xff]
  %v3571 = vmul.f32 %v3493, %v3555
  %v3572 = vmul.f32 %v3496, %v3556
  %v3573 = vmul.f32 %v3501, %v3557
  %v3574 = vmul.f32 %v3504, %v3558
  %v3575 = vmul.f32 %v3509, %v3559
  %v3576 = vmul.f32 %v3512, %v3560
  %v3577 = vmul.f32 %v3517, %v3561
  %v3578 = vmul.f32 %v3520, %v3562
  %v3579 = vmul.f32 %v3525, %v3563
  %v3580 = vmul.f32 %v3528, %v3564
  %v3581 = vmul.f32 %v3533, %v3565
  %v3582 = vmul.f32 %v3536, %v3566
  %v3583 = vmul.f32 %v3541, %v3567
  %v3584 = vmul.f32 %v3544, %v3568
  %v3585 = vmul.f32 %v3549, %v3569
  %v3586 = vmul.f32 %v3552, %v3570
  %v3587 = vpack.c.bf16 %v3331, %v3328
  %v3588 = vpack.c.bf16 %v3572, %v3571
  %v3589 = vpack.c.bf16 %v3574, %v3573
  %v3590 = vpack.c.bf16 %v3576, %v3575
  %v3591 = vpack.c.bf16 %v3578, %v3577
  %v3593 = vsel %vm84, %v3587, 0
  %v3596 = vsel %vm84, %v3588, 0
  %v3599 = vsel %vm84, %v3589, 0
  %v3602 = vsel %vm84, %v3590, 0
  %v3605 = vsel %vm84, %v3591, 0
  %3607 = vmatprep.subr.bf16.mxu0 0
  %3608 = vmatpush1.bf16.xpose.msra.mxu0 %v3596
  %3609 = vmatprep.subr.bf16.mxu0 0
  %3610 = vmatpush1.bf16.xpose.msra.mxu0 %v3599
  %3611 = vmatprep.subr.bf16.mxu0 0
  %3612 = vmatpush1.bf16.xpose.msra.mxu0 %v3602
  %3613 = vmatprep.subr.bf16.mxu0 0
  %3614 = vmatpush1.bf16.xpose.msra.mxu0 %v3605
  %3615 = vmatprep.subr.bf16.mxu0 0
  %3616 = vmatpush1.bf16.xpose.msra.mxu0 0
  %3617 = vmatprep.subr.bf16.mxu0 0
  %3618 = vmatpush1.bf16.xpose.msra.mxu0 0
  %3619 = vmatprep.subr.bf16.mxu0 0
  %3620 = vmatpush1.bf16.xpose.msra.mxu0 0
  %3621 = vmatprep.subr.bf16.mxu0 0
  %3622 = vmatpush1.bf16.xpose.msra.mxu0 0
  %3623 = vmatprep.subr.bf16.mxu0 0
  %3624 = vmatpush1.bf16.xpose.msra.mxu0 0
  %3625 = vmatprep.subr.bf16.mxu0 0
  %3626 = vmatpush1.bf16.xpose.msra.mxu0 0
  %3627 = vmatprep.subr.bf16.mxu0 0
  %3628 = vmatpush1.bf16.xpose.msra.mxu0 0
  %3629 = vmatprep.subr.bf16.mxu0 0
  %3630 = vmatpush1.bf16.xpose.msra.mxu0 0
  %3631 = vmatprep.subr.bf16.mxu0 0
  %3632 = vmatpush1.bf16.xpose.msra.mxu0 0
  %3633 = vmatprep.subr.bf16.mxu0 0
  %3634 = vmatpush1.bf16.xpose.msra.mxu0 0
  %3635 = vmatprep.subr.bf16.mxu0 0
  %3636 = vmatpush1.bf16.xpose.msra.mxu0 0
  %3637 = vmatprep.subr.bf16.mxu0 0
  %3638 = vmatpush1.bf16.xpose.msra.mxu0 0
  %3639 = vmatprep.mubr.bf16.mxu0 0
  %3640 = vmatmul.mubr.bf16.gmra.mrb[0].mxu0 %v3593
  %v3641 = vpop.f32.mrb[0].mxu0
  %v3642 = vadd.f32 0.0, %v3641
  %v3643 = vpop.f32.mrb[0].mxu0
  %v3644 = vpop.f32.mrb[0].mxu0
  %v3645 = vadd.f32 0.0, %v3644
  %v3646 = vpop.f32.mrb[0].mxu0
  %3647 = vdwg.mxu0
  %v3648 = vpack.c.bf16 %v3580, %v3579
  %v3649 = vpack.c.bf16 %v3582, %v3581
  %v3650 = vpack.c.bf16 %v3584, %v3583
  %v3651 = vpack.c.bf16 %v3586, %v3585
  %v3653 = vsel %vm84, %v3648, 0
  %v3656 = vsel %vm84, %v3649, 0
  %v3659 = vsel %vm84, %v3650, 0
  %v3662 = vsel %vm84, %v3651, 0
  %3664 = vmatprep.subr.bf16.mxu0 0
  %3665 = vmatpush1.bf16.xpose.msra.mxu0 %v3653
  %3666 = vmatprep.subr.bf16.mxu0 0
  %3667 = vmatpush1.bf16.xpose.msra.mxu0 %v3656
  %3668 = vmatprep.subr.bf16.mxu0 0
  %3669 = vmatpush1.bf16.xpose.msra.mxu0 %v3659
  %3670 = vmatprep.subr.bf16.mxu0 0
  %3671 = vmatpush1.bf16.xpose.msra.mxu0 %v3662
  %3672 = vmatprep.subr.bf16.mxu0 0
  %3673 = vmatpush1.bf16.xpose.msra.mxu0 0
  %3674 = vmatprep.subr.bf16.mxu0 0
  %3675 = vmatpush1.bf16.xpose.msra.mxu0 0
  %3676 = vmatprep.subr.bf16.mxu0 0
  %3677 = vmatpush1.bf16.xpose.msra.mxu0 0
  %3678 = vmatprep.subr.bf16.mxu0 0
  %3679 = vmatpush1.bf16.xpose.msra.mxu0 0
  %3680 = vmatprep.subr.bf16.mxu0 0
  %3681 = vmatpush1.bf16.xpose.msra.mxu0 0
  %3682 = vmatprep.subr.bf16.mxu0 0
  %3683 = vmatpush1.bf16.xpose.msra.mxu0 0
  %3684 = vmatprep.subr.bf16.mxu0 0
  %3685 = vmatpush1.bf16.xpose.msra.mxu0 0
  %3686 = vmatprep.subr.bf16.mxu0 0
  %3687 = vmatpush1.bf16.xpose.msra.mxu0 0
  %3688 = vmatprep.subr.bf16.mxu0 0
  %3689 = vmatpush1.bf16.xpose.msra.mxu0 0
  %3690 = vmatprep.subr.bf16.mxu0 0
  %3691 = vmatpush1.bf16.xpose.msra.mxu0 0
  %3692 = vmatprep.subr.bf16.mxu0 0
  %3693 = vmatpush1.bf16.xpose.msra.mxu0 0
  %3694 = vmatprep.subr.bf16.mxu0 0
  %3695 = vmatpush1.bf16.xpose.msra.mxu0 0
  %3696 = vmatprep.mubr.bf16.mxu0 0
  %3697 = vmatmul.mubr.bf16.gmra.mrb[0].mxu0 %v3593
  %v3698 = vpop.f32.mrb[0].mxu0
  %v3699 = vadd.f32 0.0, %v3698
  %v3700 = vpop.f32.mrb[0].mxu0
  %v3701 = vpop.f32.mrb[0].mxu0
  %v3702 = vadd.f32 0.0, %v3701
  %v3703 = vpop.f32.mrb[0].mxu0
  %3704 = vdwg.mxu0
  %v3705 = vld [vmem:[%s8] sm:$0xff]
  %v3706 = vsub.f32 %v3642, %v3702
  %v3707 = vmul.f32 %v3706, %v3705
  %v3708 = vadd.f32 %v3699, %v3645
  %v3709 = vmul.f32 %v3708, %v3705
  %v3710 = vmul.f32 %v3707, 2.0
  %v3711 = vtanh.pop %v3710
  %v3712 = vand.u32 2147483647, %v3707
  %v3713 = vmul.f32 %v3712, -2.0
  %v3714 = vmul.f32 %v3713, 1.442695
  %v3715 = vpow.pop %v3714
  %v3716 = vmul.f32 %v3715, 2.0
  %v3717 = vmul.f32 %v3715, %v3715
  %v3718 = vadd.f32 %v3717, 1.0
  %v3719 = vrcp.pop %v3718
  %v3720 = vmul.f32 %v3716, %v3719
  %v3721 = vmul.f32 %v3709, 2.0
  %v3722 = vand.u32 2147483647, %v3721
  %vm3723 = vcmp.le.f32.partialorder %v3722, 0.7853982
  %vm3724 = vcmp.lt.s32.totalorder %v3721, 0
  %v3725 = vand.u32 %v3721, 2139095040
  %v3726 = vshrl.u32 %v3725, 23
  %v3727 = vsub.s32 %v3726, 127
  %v3728 = vand.u32 2147483647, %v3721
  %v3729 = vand.u32 %v3728, 8388607
  %v3730 = vor.u32 %v3729, 8388608
  %v3731 = vsub.s32 0, %v3730
  %v3732 = vadd.s32 %v3727, 1
  %vm3733 = vcmp.gt.s32.totalorder %v3732, 0
  %v3734 = vsel %vm3733, %v3732, 0
  %v3735 = vshrl.u32 %v3734, 5
  %v3736 = vand.u32 %v3734, 31
  %v3737 = vsub.s32 32, %v3736
  %v3738 = vshrl.u32 683565275, %v3737
  %v3739 = vshll.u32 683565275, %v3736
  %v3740 = vshrl.u32 2475754826, %v3737
  %v3741 = vor.u32 %v3739, %v3740
  %v3742 = vshll.u32 2475754826, %v3736
  %v3743 = vshrl.u32 2131351028, %v3737
  %v3744 = vor.u32 %v3742, %v3743
  %v3745 = vshll.u32 2131351028, %v3736
  %v3746 = vshrl.u32 2102212464, %v3737
  %v3747 = vor.u32 %v3745, %v3746
  %v3748 = vshll.u32 2102212464, %v3736
  %v3749 = vshrl.u32 920167782, %v3737
  %v3750 = vor.u32 %v3748, %v3749
  %v3751 = vshll.u32 920167782, %v3736
  %v3752 = vshrl.u32 1326507024, %v3737
  %v3753 = vor.u32 %v3751, %v3752
  %vm3754 = vcmp.lt.s32.totalorder %v3735, 1
  %vm3755 = vcmp.lt.s32.totalorder %v3735, 2
  %vm3756 = vcmp.lt.s32.totalorder %v3735, 3
  %vm3757 = vcmp.lt.s32.totalorder %v3735, 4
  %v3758 = vsel %vm3754, %v3738, %v3741
  %v3759 = vsel %vm3757, %v3747, 2102212464
  %v3760 = vsel %vm3756, %v3744, %v3759
  %v3761 = vsel %vm3755, %v3758, %v3760
  %v3762 = vsel %vm3754, %v3741, %v3744
  %v3763 = vsel %vm3757, %v3750, 920167782
  %v3764 = vsel %vm3756, %v3747, %v3763
  %v3765 = vsel %vm3755, %v3762, %v3764
  %v3766 = vsel %vm3754, %v3744, %v3747
  %v3767 = vsel %vm3757, %v3753, 1326507024
  %v3768 = vsel %vm3756, %v3750, %v3767
  %v3769 = vsel %vm3755, %v3766, %v3768
  %v3770 = vshll.u32 %v3730, 8
  %v3771 = vmul.u32.u64.compose %v3770, %v3769
  %v3772 = vextract.low.u32 %v3771
  %v3773 = vextract.high.u32 %v3771
  %v3774 = vmul.u32.u64.compose %v3770, %v3765
  %v3775 = vextract.low.u32 %v3774
  %v3776 = vextract.high.u32 %v3774
  %v3777 = vmul.u32 %v3770, %v3761
  %v3778 = vadd.s32 %v3773, %v3775
  %vm3779 = vc.u32 %v3773, %v3775
  %v3780 = vadd.s32 %v3776, 1
  %v3781 = vsel %vm3779, %v3780, %v3776
  %v3782 = vadd.s32 %v3777, %v3781
  %v3783 = vadd.s32 %v3782, 536870912
  %v3784 = vshrl.u32 %v3783, 30
  %v3785 = vshll.u32 %v3784, 30
  %v3786 = vsub.s32 %v3782, %v3785
  %vm3787 = vcmp.lt.s32.totalorder %v3786, 0
  %v3788 = vsub.s32 0, %v3786
  %v3789 = vsel %vm3787, %v3788, %v3786
  %v3790 = vclz %v3789
  %v3791 = vsub.s32 %v3790, 2
  %vm3792 = vcmp.gt.s32.totalorder 0, %v3791
  %v3793 = vsel %vm3792, 0, %v3791
  %v3794 = vsub.s32 32, %v3793
  %v3795 = vshll.u32 %v3786, %v3793
  %v3796 = vshrl.u32 %v3778, %v3794
  %v3797 = vor.u32 %v3795, %v3796
  %v3798 = vsub.s32 4294967266, %v3793
  %v3799 = vadd.s32 %v3798, 127
  %v3800 = vshll.u32 %v3799, 23
  %v3801 = vor.u32 4788187, %v3800
  %v3802 = vand.u32 2147483647, %v3801
  %v3804 = vcvt.s32.f32 %v3797
  %v3805 = vmul.f32 %v3804, %v3802
  %v3806 = vxor.u32 %v3805, 2147483648
  %v3807 = vsel %vm3724, %v3806, %v3805
  %v3808 = vsub.s32 4, %v3784
  %v3809 = vsel %vm3724, %v3808, %v3784
  %v3810 = vsel %vm3723, %v3721, %v3807
  %v3811 = vsel %vm3723, 0, %v3809
  %v3812 = vcosq.f32.pop %v3810
  %v3813 = vsinq.f32.pop %v3810
  %vm3814 = vweird.f32 %v3721
  %v3815 = vand.u32 %v3811, 3
  %vm3816 = vcmp.lt.s32.totalorder %v3815, 2
  %vm3817 = vcmp.eq.s32.totalorder %v3815, 0
  %v3818 = vxor.u32 %v3813, 2147483648
  %v3819 = vsel %vm3817, %v3812, %v3818
  %vm3820 = vcmp.eq.s32.totalorder %v3815, 2
  %v3821 = vxor.u32 %v3812, 2147483648
  %v3822 = vsel %vm3820, %v3821, %v3813
  %v3823 = vsel %vm3816, %v3819, %v3822
  %v3824 = vsel %vm3814, nan, %v3823
  %v3825 = vand.u32 2147483647, %v3721
  %vm3826 = vcmp.le.f32.partialorder %v3825, 0.7853982
  %vm3827 = vcmp.lt.s32.totalorder %v3721, 0
  %v3828 = vand.u32 %v3721, 2139095040
  %v3829 = vshrl.u32 %v3828, 23
  %v3830 = vsub.s32 %v3829, 127
  %v3831 = vand.u32 2147483647, %v3721
  %v3832 = vand.u32 %v3831, 8388607
  %v3833 = vor.u32 %v3832, 8388608
  %v3834 = vsub.s32 0, %v3833
  %v3835 = vadd.s32 %v3830, 1
  %vm3836 = vcmp.gt.s32.totalorder %v3835, 0
  %v3837 = vsel %vm3836, %v3835, 0
  %v3838 = vshrl.u32 %v3837, 5
  %v3839 = vand.u32 %v3837, 31
  %v3840 = vsub.s32 32, %v3839
  %v3841 = vshrl.u32 683565275, %v3840
  %v3842 = vshll.u32 683565275, %v3839
  %v3843 = vshrl.u32 2475754826, %v3840
  %v3844 = vor.u32 %v3842, %v3843
  %v3845 = vshll.u32 2475754826, %v3839
  %v3846 = vshrl.u32 2131351028, %v3840
  %v3847 = vor.u32 %v3845, %v3846
  %v3848 = vshll.u32 2131351028, %v3839
  %v3849 = vshrl.u32 2102212464, %v3840
  %v3850 = vor.u32 %v3848, %v3849
  %v3851 = vshll.u32 2102212464, %v3839
  %v3852 = vshrl.u32 920167782, %v3840
  %v3853 = vor.u32 %v3851, %v3852
  %v3854 = vshll.u32 920167782, %v3839
  %v3855 = vshrl.u32 1326507024, %v3840
  %v3856 = vor.u32 %v3854, %v3855
  %vm3857 = vcmp.lt.s32.totalorder %v3838, 1
  %vm3858 = vcmp.lt.s32.totalorder %v3838, 2
  %vm3859 = vcmp.lt.s32.totalorder %v3838, 3
  %vm3860 = vcmp.lt.s32.totalorder %v3838, 4
  %v3861 = vsel %vm3857, %v3841, %v3844
  %v3862 = vsel %vm3860, %v3850, 2102212464
  %v3863 = vsel %vm3859, %v3847, %v3862
  %v3864 = vsel %vm3858, %v3861, %v3863
  %v3865 = vsel %vm3857, %v3844, %v3847
  %v3866 = vsel %vm3860, %v3853, 920167782
  %v3867 = vsel %vm3859, %v3850, %v3866
  %v3868 = vsel %vm3858, %v3865, %v3867
  %v3869 = vsel %vm3857, %v3847, %v3850
  %v3870 = vsel %vm3860, %v3856, 1326507024
  %v3871 = vsel %vm3859, %v3853, %v3870
  %v3872 = vsel %vm3858, %v3869, %v3871
  %v3873 = vshll.u32 %v3833, 8
  %v3874 = vmul.u32.u64.compose %v3873, %v3872
  %v3875 = vextract.low.u32 %v3874
  %v3876 = vextract.high.u32 %v3874
  %v3877 = vmul.u32.u64.compose %v3873, %v3868
  %v3878 = vextract.low.u32 %v3877
  %v3879 = vextract.high.u32 %v3877
  %v3880 = vmul.u32 %v3873, %v3864
  %v3881 = vadd.s32 %v3876, %v3878
  %vm3882 = vc.u32 %v3876, %v3878
  %v3883 = vadd.s32 %v3879, 1
  %v3884 = vsel %vm3882, %v3883, %v3879
  %v3885 = vadd.s32 %v3880, %v3884
  %v3886 = vadd.s32 %v3885, 536870912
  %v3887 = vshrl.u32 %v3886, 30
  %v3888 = vshll.u32 %v3887, 30
  %v3889 = vsub.s32 %v3885, %v3888
  %vm3890 = vcmp.lt.s32.totalorder %v3889, 0
  %v3891 = vsub.s32 0, %v3889
  %v3892 = vsel %vm3890, %v3891, %v3889
  %v3893 = vclz %v3892
  %v3894 = vsub.s32 %v3893, 2
  %vm3895 = vcmp.gt.s32.totalorder 0, %v3894
  %v3896 = vsel %vm3895, 0, %v3894
  %v3897 = vsub.s32 32, %v3896
  %v3898 = vshll.u32 %v3889, %v3896
  %v3899 = vshrl.u32 %v3881, %v3897
  %v3900 = vor.u32 %v3898, %v3899
  %v3901 = vsub.s32 4294967266, %v3896
  %v3902 = vadd.s32 %v3901, 127
  %v3903 = vshll.u32 %v3902, 23
  %v3904 = vor.u32 4788187, %v3903
  %v3905 = vand.u32 2147483647, %v3904
  %v3907 = vcvt.s32.f32 %v3900
  %v3908 = vmul.f32 %v3907, %v3905
  %v3909 = vxor.u32 %v3908, 2147483648
  %v3910 = vsel %vm3827, %v3909, %v3908
  %v3911 = vsub.s32 4, %v3887
  %v3912 = vsel %vm3827, %v3911, %v3887
  %v3913 = vsel %vm3826, %v3721, %v3910
  %v3914 = vsel %vm3826, 0, %v3912
  %v3915 = vcosq.f32.pop %v3913
  %v3916 = vsinq.f32.pop %v3913
  %vm3917 = vweird.f32 %v3721
  %v3918 = vadd.s32 %v3914, 3
  %v3919 = vand.u32 %v3918, 3
  %vm3920 = vcmp.lt.s32.totalorder %v3919, 2
  %vm3921 = vcmp.eq.s32.totalorder %v3919, 0
  %v3922 = vxor.u32 %v3916, 2147483648
  %v3923 = vsel %vm3921, %v3915, %v3922
  %vm3924 = vcmp.eq.s32.totalorder %v3919, 2
  %v3925 = vxor.u32 %v3915, 2147483648
  %v3926 = vsel %vm3924, %v3925, %v3916
  %v3927 = vsel %vm3920, %v3923, %v3926
  %v3928 = vsel %vm3917, nan, %v3927
  %v3929 = vmul.f32 %v3824, %v3720
  %v3930 = vadd.f32 %v3929, 1.0
  %v3931 = vrcp.pop %v3930
  %v3932 = vmul.f32 %v3711, %v3931
  %v3933 = vmul.f32 %v3928, %v3720
  %v3934 = vmul.f32 %v3933, %v3931
  %v3935 = vpack.c.bf16 %v3934, %v3932
  %vm3936 = vcmask 523264
  %v3938 = vsel %vm3936, %v3935, 0
  %3940 = vmatprep.subr.bf16.mxu0 0
  %3941 = vmatpush1.bf16.msra.mxu0 %v3588
  %3942 = vmatprep.subr.bf16.mxu0 0
  %3943 = vmatpush1.bf16.msra.mxu0 %v3589
  %3944 = vmatprep.subr.bf16.mxu0 0
  %3945 = vmatpush1.bf16.msra.mxu0 %v3590
  %3946 = vmatprep.subr.bf16.mxu0 0
  %3947 = vmatpush1.bf16.msra.mxu0 %v3591
  %3948 = vmatprep.subr.bf16.mxu0 0
  %3949 = vmatpush1.bf16.msra.mxu0 0
  %3950 = vmatprep.subr.bf16.mxu0 0
  %3951 = vmatpush1.bf16.msra.mxu0 0
  %3952 = vmatprep.subr.bf16.mxu0 0
  %3953 = vmatpush1.bf16.msra.mxu0 0
  %3954 = vmatprep.subr.bf16.mxu0 0
  %3955 = vmatpush1.bf16.msra.mxu0 0
  %3956 = vmatprep.subr.bf16.mxu0 0
  %3957 = vmatpush1.bf16.msra.mxu0 0
  %3958 = vmatprep.subr.bf16.mxu0 0
  %3959 = vmatpush1.bf16.msra.mxu0 0
  %3960 = vmatprep.subr.bf16.mxu0 0
  %3961 = vmatpush1.bf16.msra.mxu0 0
  %3962 = vmatprep.subr.bf16.mxu0 0
  %3963 = vmatpush1.bf16.msra.mxu0 0
  %3964 = vmatprep.subr.bf16.mxu0 0
  %3965 = vmatpush1.bf16.msra.mxu0 0
  %3966 = vmatprep.subr.bf16.mxu0 0
  %3967 = vmatpush1.bf16.msra.mxu0 0
  %3968 = vmatprep.subr.bf16.mxu0 0
  %3969 = vmatpush1.bf16.msra.mxu0 0
  %3970 = vmatprep.subr.bf16.mxu0 0
  %3971 = vmatpush1.bf16.msra.mxu0 0
  %3972 = vmatprep.mubr.bf16.mxu0 0
  %3973 = vmatmul.mubr.bf16.gmra.mrb[0].mxu0 %v3938
  %v3974 = vpop.f32.mrb[0].mxu0
  %v3975 = vadd.f32 0.0, %v3974
  %v3976 = vpop.f32.mrb[0].mxu0
  %v3977 = vpop.f32.mrb[0].mxu0
  %v3978 = vadd.f32 0.0, %v3977
  %v3979 = vpop.f32.mrb[0].mxu0
  %3980 = vdwg.mxu0
  %3981 = vmatprep.subr.bf16.mxu0 0
  %3982 = vmatpush1.bf16.msra.mxu0 %v3648
  %3983 = vmatprep.subr.bf16.mxu0 0
  %3984 = vmatpush1.bf16.msra.mxu0 %v3649
  %3985 = vmatprep.subr.bf16.mxu0 0
  %3986 = vmatpush1.bf16.msra.mxu0 %v3650
  %3987 = vmatprep.subr.bf16.mxu0 0
  %3988 = vmatpush1.bf16.msra.mxu0 %v3651
  %3989 = vmatprep.subr.bf16.mxu0 0
  %3990 = vmatpush1.bf16.msra.mxu0 0
  %3991 = vmatprep.subr.bf16.mxu0 0
  %3992 = vmatpush1.bf16.msra.mxu0 0
  %3993 = vmatprep.subr.bf16.mxu0 0
  %3994 = vmatpush1.bf16.msra.mxu0 0
  %3995 = vmatprep.subr.bf16.mxu0 0
  %3996 = vmatpush1.bf16.msra.mxu0 0
  %3997 = vmatprep.subr.bf16.mxu0 0
  %3998 = vmatpush1.bf16.msra.mxu0 0
  %3999 = vmatprep.subr.bf16.mxu0 0
  %4000 = vmatpush1.bf16.msra.mxu0 0
  %4001 = vmatprep.subr.bf16.mxu0 0
  %4002 = vmatpush1.bf16.msra.mxu0 0
  %4003 = vmatprep.subr.bf16.mxu0 0
  %4004 = vmatpush1.bf16.msra.mxu0 0
  %4005 = vmatprep.subr.bf16.mxu0 0
  %4006 = vmatpush1.bf16.msra.mxu0 0
  %4007 = vmatprep.subr.bf16.mxu0 0
  %4008 = vmatpush1.bf16.msra.mxu0 0
  %4009 = vmatprep.subr.bf16.mxu0 0
  %4010 = vmatpush1.bf16.msra.mxu0 0
  %4011 = vmatprep.subr.bf16.mxu0 0
  %4012 = vmatpush1.bf16.msra.mxu0 0
  %4013 = vmatprep.mubr.bf16.mxu0 0
  %4014 = vmatmul.mubr.bf16.gmra.mrb[0].mxu0 %v3938
  %v4015 = vpop.f32.mrb[0].mxu0
  %v4016 = vadd.f32 0.0, %v4015
  %v4017 = vpop.f32.mrb[0].mxu0
  %v4018 = vpop.f32.mrb[0].mxu0
  %v4019 = vadd.f32 0.0, %v4018
  %v4020 = vpop.f32.mrb[0].mxu0
  %4021 = vdwg.mxu0
  %v4022 = vsub.f32 %v3975, %v4019
  %v4023 = vadd.f32 %v4016, %v3978
  %v4024 = vpack.c.bf16 %v4023, %v4022
  %v4026 = vsel %vm84, %v4024, 0
  %4028 = vmatprep.subr.bf16.mxu0 0
  %4029 = vmatpush1.bf16.msra.mxu0 %v702
  %4030 = vmatprep.subr.bf16.mxu0 0
  %4031 = vmatpush1.bf16.msra.mxu0 %v703
  %4032 = vmatprep.subr.bf16.mxu0 0
  %4033 = vmatpush1.bf16.msra.mxu0 0
  %4034 = vmatprep.subr.bf16.mxu0 0
  %4035 = vmatpush1.bf16.msra.mxu0 0
  %4036 = vmatprep.subr.bf16.mxu0 0
  %4037 = vmatpush1.bf16.msra.mxu0 0
  %4038 = vmatprep.subr.bf16.mxu0 0
  %4039 = vmatpush1.bf16.msra.mxu0 0
  %4040 = vmatprep.subr.bf16.mxu0 0
  %4041 = vmatpush1.bf16.msra.mxu0 0
  %4042 = vmatprep.subr.bf16.mxu0 0
  %4043 = vmatpush1.bf16.msra.mxu0 0
  %4044 = vmatprep.subr.bf16.mxu0 0
  %4045 = vmatpush1.bf16.msra.mxu0 0
  %4046 = vmatprep.subr.bf16.mxu0 0
  %4047 = vmatpush1.bf16.msra.mxu0 0
  %4048 = vmatprep.subr.bf16.mxu0 0
  %4049 = vmatpush1.bf16.msra.mxu0 0
  %4050 = vmatprep.subr.bf16.mxu0 0
  %4051 = vmatpush1.bf16.msra.mxu0 0
  %4052 = vmatprep.subr.bf16.mxu0 0
  %4053 = vmatpush1.bf16.msra.mxu0 0
  %4054 = vmatprep.subr.bf16.mxu0 0
  %4055 = vmatpush1.bf16.msra.mxu0 0
  %4056 = vmatprep.subr.bf16.mxu0 0
  %4057 = vmatpush1.bf16.msra.mxu0 0
  %4058 = vmatprep.subr.bf16.mxu0 0
  %4059 = vmatpush1.bf16.msra.mxu0 0
  %4060 = vmatprep.mubr.bf16.mxu0 0
  %4061 = vmatmul.mubr.bf16.gmra.mrb[0].mxu0 %v4026
  %v4062 = vpop.f32.mrb[0].mxu0
  %v4063 = vadd.f32 0.0, %v4062
  %v4064 = vpop.f32.mrb[0].mxu0
  %v4065 = vpop.f32.mrb[0].mxu0
  %v4066 = vadd.f32 0.0, %v4065
  %v4067 = vpop.f32.mrb[0].mxu0
  %4068 = vdwg.mxu0
  %v4069 = vld [vmem:[%s6 + $0x40] sm:$0xff]
  %v4070 = vld [vmem:[%s6 + $0x48] sm:$0xff]
  %v4071 = vld [vmem:[%s6 + $0x50] sm:$0xff]
  %v4072 = vld [vmem:[%s6 + $0x58] sm:$0xff]
  %v4073 = vmul.f32 %v4063, %v4069
  %v4074 = vmul.f32 %v4066, %v4070
  %v4075 = vmul.f32 %v4066, %v4071
  %v4076 = vmul.f32 %v4063, %v4072
  %v4077 = vadd.f32 %v4073, %v4075
  %v4078 = vadd.f32 %v4074, %v4076
  %v4079 = vpack.c.bf16 %v4078, %v4077
  %4080 = vmatprep.subr.bf16.mxu0 0
  %4081 = vmatpush1.bf16.msra.mxu0 %v809
  %4082 = vmatprep.subr.bf16.mxu0 0
  %4083 = vmatpush1.bf16.msra.mxu0 %v810
  %4084 = vmatprep.subr.bf16.mxu0 0
  %4085 = vmatpush1.bf16.msra.mxu0 %v811
  %4086 = vmatprep.subr.bf16.mxu0 0
  %4087 = vmatpush1.bf16.msra.mxu0 %v812
  %4088 = vmatprep.subr.bf16.mxu0 0
  %4089 = vmatpush1.bf16.msra.mxu0 %v813
  %4090 = vmatprep.subr.bf16.mxu0 0
  %4091 = vmatpush1.bf16.msra.mxu0 %v814
  %4092 = vmatprep.subr.bf16.mxu0 0
  %4093 = vmatpush1.bf16.msra.mxu0 %v815
  %4094 = vmatprep.subr.bf16.mxu0 0
  %4095 = vmatpush1.bf16.msra.mxu0 %v816
  %4096 = vmatprep.subr.bf16.mxu0 0
  %4097 = vmatpush1.bf16.msra.mxu0 0
  %4098 = vmatprep.subr.bf16.mxu0 0
  %4099 = vmatpush1.bf16.msra.mxu0 0
  %4100 = vmatprep.subr.bf16.mxu0 0
  %4101 = vmatpush1.bf16.msra.mxu0 0
  %4102 = vmatprep.subr.bf16.mxu0 0
  %4103 = vmatpush1.bf16.msra.mxu0 0
  %4104 = vmatprep.subr.bf16.mxu0 0
  %4105 = vmatpush1.bf16.msra.mxu0 0
  %4106 = vmatprep.subr.bf16.mxu0 0
  %4107 = vmatpush1.bf16.msra.mxu0 0
  %4108 = vmatprep.subr.bf16.mxu0 0
  %4109 = vmatpush1.bf16.msra.mxu0 0
  %4110 = vmatprep.subr.bf16.mxu0 0
  %4111 = vmatpush1.bf16.msra.mxu0 0
  %4112 = vmatprep.mubr.bf16.mxu0 0
  %4113 = vmatmul.mubr.bf16.gmra.mrb[0].mxu0 %v4079
  %v4114 = vpop.f32.mrb[0].mxu0
  %v4115 = vadd.f32 0.0, %v4114
  %v4116 = vpop.f32.mrb[0].mxu0
  %v4117 = vpop.f32.mrb[0].mxu0
  %v4118 = vadd.f32 0.0, %v4117
  %v4119 = vpop.f32.mrb[0].mxu0
  %4120 = vdwg.mxu0
  %v4121 = vpack.c.bf16 %v4118, %v4115
  %4122 = vmatprep.subr.bf16.mxu0 0
  %4123 = vmatpush1.bf16.msra.mxu0 %v4121
  %4124 = vmatprep.subr.bf16.mxu0 0
  %4125 = vmatpush1.bf16.msra.mxu0 0
  %4126 = vmatprep.subr.bf16.mxu0 0
  %4127 = vmatpush1.bf16.msra.mxu0 0
  %4128 = vmatprep.subr.bf16.mxu0 0
  %4129 = vmatpush1.bf16.msra.mxu0 0
  %4130 = vmatprep.subr.bf16.mxu0 0
  %4131 = vmatpush1.bf16.msra.mxu0 0
  %4132 = vmatprep.subr.bf16.mxu0 0
  %4133 = vmatpush1.bf16.msra.mxu0 0
  %4134 = vmatprep.subr.bf16.mxu0 0
  %4135 = vmatpush1.bf16.msra.mxu0 0
  %4136 = vmatprep.subr.bf16.mxu0 0
  %4137 = vmatpush1.bf16.msra.mxu0 0
  %4138 = vmatprep.subr.bf16.mxu0 0
  %4139 = vmatpush1.bf16.msra.mxu0 0
  %4140 = vmatprep.subr.bf16.mxu0 0
  %4141 = vmatpush1.bf16.msra.mxu0 0
  %4142 = vmatprep.subr.bf16.mxu0 0
  %4143 = vmatpush1.bf16.msra.mxu0 0
  %4144 = vmatprep.subr.bf16.mxu0 0
  %4145 = vmatpush1.bf16.msra.mxu0 0
  %4146 = vmatprep.subr.bf16.mxu0 0
  %4147 = vmatpush1.bf16.msra.mxu0 0
  %4148 = vmatprep.subr.bf16.mxu0 0
  %4149 = vmatpush1.bf16.msra.mxu0 0
  %4150 = vmatprep.subr.bf16.mxu0 0
  %4151 = vmatpush1.bf16.msra.mxu0 0
  %4152 = vmatprep.subr.bf16.mxu0 0
  %4153 = vmatpush1.bf16.msra.mxu0 0
  %4154 = vmatprep.mubr.bf16.mxu0 0
  %4155 = vmatmul.mubr.bf16.gmra.mrb[0].mxu0 %v2919
  %v4156 = vpop.f32.mrb[0].mxu0
  %v4157 = vadd.f32 0.0, %v4156
  %v4158 = vpop.f32.mrb[0].mxu0
  %v4159 = vpop.f32.mrb[0].mxu0
  %v4160 = vadd.f32 0.0, %v4159
  %v4161 = vpop.f32.mrb[0].mxu0
  %4162 = vmatprep.mubr.bf16.mxu0 0
  %4163 = vmatmul.mubr.bf16.gmra.mrb[0].mxu0 %v2922
  %v4164 = vpop.f32.mrb[0].mxu0
  %v4165 = vadd.f32 0.0, %v4164
  %v4166 = vpop.f32.mrb[0].mxu0
  %v4167 = vpop.f32.mrb[0].mxu0
  %v4168 = vadd.f32 0.0, %v4167
  %v4169 = vpop.f32.mrb[0].mxu0
  %4170 = vdwg.mxu0
  %v4171 = vld [vmem:[%s3 + $0x1b0] sm:$0xf]
  %v4172 = vld [vmem:[%s3 + $0x1b4] sm:$0xf]
  %v4173 = vld [vmem:[%s3 + $0x1b8] sm:$0xf]
  %v4174 = vld [vmem:[%s3 + $0x1bc] sm:$0xf]
  %v4175 = vpack.c.bf16 %v4160, %v4157
  %v4176 = vpack.c.bf16 %v4168, %v4165
  %s4177 = scalar_lea.vmem %s9, 8
  %v4178 = vld [vmem:[%s4177] sm:$0x1]
  %v4180 = vlaneseq
  %v4181 = vshrl.u32 %v4180, 7
  %v4182 = vsub.s32 0, %v4181
  %v4183 = vrot.slane %v4178, %v4182
  %v4189 = vunpack.c.l.b16 %v4171
  %v4190 = vunpack.c.l.b16 %v4172
  %v4191 = vunpack.c.l.b16 %v4173
  %v4192 = vunpack.c.l.b16 %v4174
  %v4193 = vpack.c.b16 %v4190, %v4189
  %v4194 = vpack.c.b16 %v4192, %v4191
  %v4198 = vsel %vm84, %v4175, 0
  %v4201 = vsel %vm84, %v4176, 0
  %4203 = vmatprep.subr.bf16.mxu0 0
  %4204 = vmatpush1.bf16.msra.mxu0 %v4193
  %4205 = vmatprep.subr.bf16.mxu0 0
  %4206 = vmatpush1.bf16.msra.mxu0 %v4194
  %4207 = vmatprep.subr.bf16.mxu0 0
  %4208 = vmatpush1.bf16.msra.mxu0 0
  %4209 = vmatprep.subr.bf16.mxu0 0
  %4210 = vmatpush1.bf16.msra.mxu0 0
  %4211 = vmatprep.subr.bf16.mxu0 0
  %4212 = vmatpush1.bf16.msra.mxu0 0
  %4213 = vmatprep.subr.bf16.mxu0 0
  %4214 = vmatpush1.bf16.msra.mxu0 0
  %4215 = vmatprep.subr.bf16.mxu0 0
  %4216 = vmatpush1.bf16.msra.mxu0 0
  %4217 = vmatprep.subr.bf16.mxu0 0
  %4218 = vmatpush1.bf16.msra.mxu0 0
  %4219 = vmatprep.subr.bf16.mxu0 0
  %4220 = vmatpush1.bf16.msra.mxu0 0
  %4221 = vmatprep.subr.bf16.mxu0 0
  %4222 = vmatpush1.bf16.msra.mxu0 0
  %4223 = vmatprep.subr.bf16.mxu0 0
  %4224 = vmatpush1.bf16.msra.mxu0 0
  %4225 = vmatprep.subr.bf16.mxu0 0
  %4226 = vmatpush1.bf16.msra.mxu0 0
  %4227 = vmatprep.subr.bf16.mxu0 0
  %4228 = vmatpush1.bf16.msra.mxu0 0
  %4229 = vmatprep.subr.bf16.mxu0 0
  %4230 = vmatpush1.bf16.msra.mxu0 0
  %4231 = vmatprep.subr.bf16.mxu0 0
  %4232 = vmatpush1.bf16.msra.mxu0 0
  %4233 = vmatprep.subr.bf16.mxu0 0
  %4234 = vmatpush1.bf16.msra.mxu0 0
  %4235 = vmatprep.mubr.bf16.mxu0 0
  %4236 = vmatmul.mubr.bf16.gmra.mrb[0].mxu0 %v4198
  %v4237 = vpop.f32.mrb[0].mxu0
  %v4238 = vadd.f32 %v4183, %v4237
  %v4239 = vpop.f32.mrb[0].mxu0
  %v4240 = vpop.f32.mrb[0].mxu0
  %v4241 = vadd.f32 %v4183, %v4240
  %v4242 = vpop.f32.mrb[0].mxu0
  %4243 = vmatprep.mubr.bf16.mxu0 0
  %4244 = vmatmul.mubr.bf16.gmra.mrb[0].mxu0 %v4201
  %v4245 = vpop.f32.mrb[0].mxu0
  %v4246 = vadd.f32 %v4183, %v4245
  %v4247 = vpop.f32.mrb[0].mxu0
  %v4248 = vpop.f32.mrb[0].mxu0
  %v4249 = vadd.f32 %v4183, %v4248
  %v4250 = vpop.f32.mrb[0].mxu0
  %4251 = vdwg.mxu0
  %v4252 = vadd.f32 %v3125, %v4238
  %v4253 = vadd.f32 %v3126, %v4241
  %v4254 = vadd.f32 %v3127, %v4246
  %v4255 = vadd.f32 %v3128, %v4249
  %v4256 = vpack.c.bf16 %v4253, %v4252
  %v4257 = vpack.c.bf16 %v4255, %v4254
  %4258 = vmatprep.subr.bf16.mxu0 0
  %4259 = vmatpush1.bf16.msra.mxu0 %v4256
  %4260 = vmatprep.subr.bf16.mxu0 0
  %4261 = vmatpush1.bf16.msra.mxu0 %v4257
  %4262 = vmatprep.subr.bf16.mxu0 0
  %4263 = vmatpush1.bf16.msra.mxu0 0
  %4264 = vmatprep.subr.bf16.mxu0 0
  %4265 = vmatpush1.bf16.msra.mxu0 0
  %4266 = vmatprep.subr.bf16.mxu0 0
  %4267 = vmatpush1.bf16.msra.mxu0 0
  %4268 = vmatprep.subr.bf16.mxu0 0
  %4269 = vmatpush1.bf16.msra.mxu0 0
  %4270 = vmatprep.subr.bf16.mxu0 0
  %4271 = vmatpush1.bf16.msra.mxu0 0
  %4272 = vmatprep.subr.bf16.mxu0 0
  %4273 = vmatpush1.bf16.msra.mxu0 0
  %4274 = vmatprep.subr.bf16.mxu0 0
  %4275 = vmatpush1.bf16.msra.mxu0 0
  %4276 = vmatprep.subr.bf16.mxu0 0
  %4277 = vmatpush1.bf16.msra.mxu0 0
  %4278 = vmatprep.subr.bf16.mxu0 0
  %4279 = vmatpush1.bf16.msra.mxu0 0
  %4280 = vmatprep.subr.bf16.mxu0 0
  %4281 = vmatpush1.bf16.msra.mxu0 0
  %4282 = vmatprep.subr.bf16.mxu0 0
  %4283 = vmatpush1.bf16.msra.mxu0 0
  %4284 = vmatprep.subr.bf16.mxu0 0
  %4285 = vmatpush1.bf16.msra.mxu0 0
  %4286 = vmatprep.subr.bf16.mxu0 0
  %4287 = vmatpush1.bf16.msra.mxu0 0
  %4288 = vmatprep.subr.bf16.mxu0 0
  %4289 = vmatpush1.bf16.msra.mxu0 0
  %4290 = vmatprep.mubr.bf16.mxu0 0
  %4291 = vmatmul.mubr.bf16.gmra.mrb[0].mxu0 %v3071
  %v4292 = vpop.f32.mrb[0].mxu0
  %v4293 = vadd.f32 0.0, %v4292
  %v4294 = vpop.f32.mrb[0].mxu0
  %v4295 = vpop.f32.mrb[0].mxu0
  %v4296 = vadd.f32 0.0, %v4295
  %v4297 = vpop.f32.mrb[0].mxu0
  %4298 = vmatprep.mubr.bf16.mxu0 0
  %4299 = vmatmul.mubr.bf16.gmra.mrb[0].mxu0 %v3074
  %v4300 = vpop.f32.mrb[0].mxu0
  %v4301 = vadd.f32 0.0, %v4300
  %v4302 = vpop.f32.mrb[0].mxu0
  %v4303 = vpop.f32.mrb[0].mxu0
  %v4304 = vadd.f32 0.0, %v4303
  %v4305 = vpop.f32.mrb[0].mxu0
  %4306 = vdwg.mxu0
  %v4307 = vsub.f32 %v4252, %v4293
  %v4308 = vsub.f32 %v4253, %v4296
  %v4309 = vsub.f32 %v4254, %v4301
  %v4310 = vsub.f32 %v4255, %v4304
  %v4311 = vld [vmem:[%s3 + $0x1c0] sm:$0xf]
  %v4312 = vld [vmem:[%s3 + $0x1c4] sm:$0xf]
  %v4313 = vld [vmem:[%s3 + $0x1c8] sm:$0xf]
  %v4314 = vld [vmem:[%s3 + $0x1cc] sm:$0xf]
  %v4315 = vpack.c.bf16 %v4308, %v4307
  %v4316 = vpack.c.bf16 %v4310, %v4309
  %v4321 = vunpack.c.l.b16 %v4311
  %v4322 = vunpack.c.l.b16 %v4312
  %v4323 = vunpack.c.l.b16 %v4313
  %v4324 = vunpack.c.l.b16 %v4314
  %v4325 = vpack.c.b16 %v4322, %v4321
  %v4326 = vpack.c.b16 %v4324, %v4323
  %v4330 = vsel %vm84, %v4315, 0
  %v4333 = vsel %vm84, %v4316, 0
  %4335 = vmatprep.subr.bf16.mxu0 0
  %4336 = vmatpush1.bf16.msra.mxu0 %v4325
  %4337 = vmatprep.subr.bf16.mxu0 0
  %4338 = vmatpush1.bf16.msra.mxu0 %v4326
  %4339 = vmatprep.subr.bf16.mxu0 0
  %4340 = vmatpush1.bf16.msra.mxu0 0
  %4341 = vmatprep.subr.bf16.mxu0 0
  %4342 = vmatpush1.bf16.msra.mxu0 0
  %4343 = vmatprep.subr.bf16.mxu0 0
  %4344 = vmatpush1.bf16.msra.mxu0 0
  %4345 = vmatprep.subr.bf16.mxu0 0
  %4346 = vmatpush1.bf16.msra.mxu0 0
  %4347 = vmatprep.subr.bf16.mxu0 0
  %4348 = vmatpush1.bf16.msra.mxu0 0
  %4349 = vmatprep.subr.bf16.mxu0 0
  %4350 = vmatpush1.bf16.msra.mxu0 0
  %4351 = vmatprep.subr.bf16.mxu0 0
  %4352 = vmatpush1.bf16.msra.mxu0 0
  %4353 = vmatprep.subr.bf16.mxu0 0
  %4354 = vmatpush1.bf16.msra.mxu0 0
  %4355 = vmatprep.subr.bf16.mxu0 0
  %4356 = vmatpush1.bf16.msra.mxu0 0
  %4357 = vmatprep.subr.bf16.mxu0 0
  %4358 = vmatpush1.bf16.msra.mxu0 0
  %4359 = vmatprep.subr.bf16.mxu0 0
  %4360 = vmatpush1.bf16.msra.mxu0 0
  %4361 = vmatprep.subr.bf16.mxu0 0
  %4362 = vmatpush1.bf16.msra.mxu0 0
  %4363 = vmatprep.subr.bf16.mxu0 0
  %4364 = vmatpush1.bf16.msra.mxu0 0
  %4365 = vmatprep.subr.bf16.mxu0 0
  %4366 = vmatpush1.bf16.msra.mxu0 0
  %4367 = vmatprep.mubr.bf16.mxu0 0
  %4368 = vmatmul.mubr.bf16.gmra.mrb[0].mxu0 %v4330
  %v4369 = vpop.f32.mrb[0].mxu0
  %v4370 = vadd.f32 0.0, %v4369
  %v4371 = vpop.f32.mrb[0].mxu0
  %v4372 = vpop.f32.mrb[0].mxu0
  %v4373 = vadd.f32 0.0, %v4372
  %v4374 = vpop.f32.mrb[0].mxu0
  %4375 = vmatprep.mubr.bf16.mxu0 0
  %4376 = vmatmul.mubr.bf16.gmra.mrb[0].mxu0 %v4333
  %v4377 = vpop.f32.mrb[0].mxu0
  %v4378 = vadd.f32 0.0, %v4377
  %v4379 = vpop.f32.mrb[0].mxu0
  %v4380 = vpop.f32.mrb[0].mxu0
  %v4381 = vadd.f32 0.0, %v4380
  %v4382 = vpop.f32.mrb[0].mxu0
  %4383 = vdwg.mxu0
  %v4384 = vmul.f32 %v4370, 0.5
  %v4385 = vmul.f32 %v4373, 0.5
  %v4386 = vmul.f32 %v4378, 0.5
  %v4387 = vmul.f32 %v4381, 0.5
  %v4388 = vmul.f32 %v4370, 0.70710677
  %v4389 = vmul.f32 %v4373, 0.70710677
  %v4390 = vmul.f32 %v4378, 0.70710677
  %v4391 = vmul.f32 %v4381, 0.70710677
  %v4392 = vand.u32 2147483647, %v4388
  %v4393 = vand.u32 2147483647, %v4389
  %v4394 = vand.u32 2147483647, %v4390
  %v4395 = vand.u32 2147483647, %v4391
  %v4396 = vmul.f32 %v4392, 0.3275911
  %v4397 = vmul.f32 %v4393, 0.3275911
  %v4398 = vmul.f32 %v4394, 0.3275911
  %v4399 = vmul.f32 %v4395, 0.3275911
  %v4400 = vadd.f32 %v4396, 1.0
  %v4401 = vadd.f32 %v4397, 1.0
  %v4402 = vadd.f32 %v4398, 1.0
  %v4403 = vadd.f32 %v4399, 1.0
  %v4404 = vrcp.pop %v4400
  %v4405 = vmul.f32 1.0, %v4404
  %v4406 = vrcp.pop %v4401
  %v4407 = vmul.f32 1.0, %v4406
  %v4408 = vrcp.pop %v4402
  %v4409 = vmul.f32 1.0, %v4408
  %v4410 = vrcp.pop %v4403
  %v4411 = vmul.f32 1.0, %v4410
  %v4412 = vmul.f32 %v4405, 1.0614054
  %v4413 = vmul.f32 %v4407, 1.0614054
  %v4414 = vmul.f32 %v4409, 1.0614054
  %v4415 = vmul.f32 %v4411, 1.0614054
  %v4416 = vadd.f32 %v4412, -1.4531521
  %v4417 = vadd.f32 %v4413, -1.4531521
  %v4418 = vadd.f32 %v4414, -1.4531521
  %v4419 = vadd.f32 %v4415, -1.4531521
  %v4420 = vmul.f32 %v4416, %v4405
  %v4421 = vmul.f32 %v4417, %v4407
  %v4422 = vmul.f32 %v4418, %v4409
  %v4423 = vmul.f32 %v4419, %v4411
  %v4424 = vadd.f32 %v4420, 1.4214138
  %v4425 = vadd.f32 %v4421, 1.4214138
  %v4426 = vadd.f32 %v4422, 1.4214138
  %v4427 = vadd.f32 %v4423, 1.4214138
  %v4428 = vmul.f32 %v4424, %v4405
  %v4429 = vmul.f32 %v4425, %v4407
  %v4430 = vmul.f32 %v4426, %v4409
  %v4431 = vmul.f32 %v4427, %v4411
  %v4432 = vadd.f32 %v4428, -0.28449672
  %v4433 = vadd.f32 %v4429, -0.28449672
  %v4434 = vadd.f32 %v4430, -0.28449672
  %v4435 = vadd.f32 %v4431, -0.28449672
  %v4436 = vmul.f32 %v4432, %v4405
  %v4437 = vmul.f32 %v4433, %v4407
  %v4438 = vmul.f32 %v4434, %v4409
  %v4439 = vmul.f32 %v4435, %v4411
  %v4440 = vadd.f32 %v4436, 0.2548296
  %v4441 = vadd.f32 %v4437, 0.2548296
  %v4442 = vadd.f32 %v4438, 0.2548296
  %v4443 = vadd.f32 %v4439, 0.2548296
  %v4444 = vmul.f32 %v4440, %v4405
  %v4445 = vmul.f32 %v4441, %v4407
  %v4446 = vmul.f32 %v4442, %v4409
  %v4447 = vmul.f32 %v4443, %v4411
  %v4448 = vsub.f32 0.0, %v4392
  %v4449 = vsub.f32 0.0, %v4393
  %v4450 = vsub.f32 0.0, %v4394
  %v4451 = vsub.f32 0.0, %v4395
  %v4452 = vmul.f32 %v4448, %v4392
  %v4453 = vmul.f32 %v4449, %v4393
  %v4454 = vmul.f32 %v4450, %v4394
  %v4455 = vmul.f32 %v4451, %v4395
  %v4456 = vmul.f32 %v4452, 1.442695
  %v4457 = vpow.pop %v4456
  %v4458 = vmul.f32 %v4453, 1.442695
  %v4459 = vpow.pop %v4458
  %v4460 = vmul.f32 %v4454, 1.442695
  %v4461 = vpow.pop %v4460
  %v4462 = vmul.f32 %v4455, 1.442695
  %v4463 = vpow.pop %v4462
  %v4464 = vmul.f32 %v4444, %v4457
  %v4465 = vmul.f32 %v4445, %v4459
  %v4466 = vmul.f32 %v4446, %v4461
  %v4467 = vmul.f32 %v4447, %v4463
  %v4468 = vsub.f32 1.0, %v4464
  %v4469 = vsub.f32 1.0, %v4465
  %v4470 = vsub.f32 1.0, %v4466
  %v4471 = vsub.f32 1.0, %v4467
  %vm4472 = vcmp.ge.f32.partialorder %v4388, 0.0
  %vm4473 = vcmp.ge.f32.partialorder %v4389, 0.0
  %vm4474 = vcmp.ge.f32.partialorder %v4390, 0.0
  %vm4475 = vcmp.ge.f32.partialorder %v4391, 0.0
  %v4476 = vsub.f32 0.0, %v4468
  %v4477 = vsub.f32 0.0, %v4469
  %v4478 = vsub.f32 0.0, %v4470
  %v4479 = vsub.f32 0.0, %v4471
  %v4480 = vsel %vm4472, %v4468, %v4476
  %v4481 = vsel %vm4473, %v4469, %v4477
  %v4482 = vsel %vm4474, %v4470, %v4478
  %v4483 = vsel %vm4475, %v4471, %v4479
  %v4484 = vadd.f32 %v4480, 1.0
  %v4485 = vadd.f32 %v4481, 1.0
  %v4486 = vadd.f32 %v4482, 1.0
  %v4487 = vadd.f32 %v4483, 1.0
  %v4488 = vmul.f32 %v4384, %v4484
  %v4489 = vmul.f32 %v4385, %v4485
  %v4490 = vmul.f32 %v4386, %v4486
  %v4491 = vmul.f32 %v4387, %v4487
  %v4492 = vld [vmem:[%s3 + $0x1d0] sm:$0xf]
  %v4493 = vld [vmem:[%s3 + $0x1d4] sm:$0xf]
  %v4494 = vld [vmem:[%s3 + $0x1d8] sm:$0xf]
  %v4495 = vld [vmem:[%s3 + $0x1dc] sm:$0xf]
  %v4496 = vpack.c.bf16 %v4489, %v4488
  %v4497 = vpack.c.bf16 %v4491, %v4490
  %v4502 = vunpack.c.l.b16 %v4492
  %v4503 = vunpack.c.l.b16 %v4493
  %v4504 = vunpack.c.l.b16 %v4494
  %v4505 = vunpack.c.l.b16 %v4495
  %v4506 = vpack.c.b16 %v4503, %v4502
  %v4507 = vpack.c.b16 %v4505, %v4504
  %v4511 = vsel %vm84, %v4496, 0
  %v4514 = vsel %vm84, %v4497, 0
  %4516 = vmatprep.subr.bf16.mxu0 0
  %4517 = vmatpush1.bf16.msra.mxu0 %v4506
  %4518 = vmatprep.subr.bf16.mxu0 0
  %4519 = vmatpush1.bf16.msra.mxu0 %v4507
  %4520 = vmatprep.subr.bf16.mxu0 0
  %4521 = vmatpush1.bf16.msra.mxu0 0
  %4522 = vmatprep.subr.bf16.mxu0 0
  %4523 = vmatpush1.bf16.msra.mxu0 0
  %4524 = vmatprep.subr.bf16.mxu0 0
  %4525 = vmatpush1.bf16.msra.mxu0 0
  %4526 = vmatprep.subr.bf16.mxu0 0
  %4527 = vmatpush1.bf16.msra.mxu0 0
  %4528 = vmatprep.subr.bf16.mxu0 0
  %4529 = vmatpush1.bf16.msra.mxu0 0
  %4530 = vmatprep.subr.bf16.mxu0 0
  %4531 = vmatpush1.bf16.msra.mxu0 0
  %4532 = vmatprep.subr.bf16.mxu0 0
  %4533 = vmatpush1.bf16.msra.mxu0 0
  %4534 = vmatprep.subr.bf16.mxu0 0
  %4535 = vmatpush1.bf16.msra.mxu0 0
  %4536 = vmatprep.subr.bf16.mxu0 0
  %4537 = vmatpush1.bf16.msra.mxu0 0
  %4538 = vmatprep.subr.bf16.mxu0 0
  %4539 = vmatpush1.bf16.msra.mxu0 0
  %4540 = vmatprep.subr.bf16.mxu0 0
  %4541 = vmatpush1.bf16.msra.mxu0 0
  %4542 = vmatprep.subr.bf16.mxu0 0
  %4543 = vmatpush1.bf16.msra.mxu0 0
  %4544 = vmatprep.subr.bf16.mxu0 0
  %4545 = vmatpush1.bf16.msra.mxu0 0
  %4546 = vmatprep.subr.bf16.mxu0 0
  %4547 = vmatpush1.bf16.msra.mxu0 0
  %4548 = vmatprep.mubr.bf16.mxu0 0
  %4549 = vmatmul.mubr.bf16.gmra.mrb[0].mxu0 %v4511
  %v4550 = vpop.f32.mrb[0].mxu0
  %v4551 = vadd.f32 0.0, %v4550
  %v4552 = vpop.f32.mrb[0].mxu0
  %v4553 = vpop.f32.mrb[0].mxu0
  %v4554 = vadd.f32 0.0, %v4553
  %v4555 = vpop.f32.mrb[0].mxu0
  %4556 = vmatprep.mubr.bf16.mxu0 0
  %4557 = vmatmul.mubr.bf16.gmra.mrb[0].mxu0 %v4514
  %v4558 = vpop.f32.mrb[0].mxu0
  %v4559 = vadd.f32 0.0, %v4558
  %v4560 = vpop.f32.mrb[0].mxu0
  %v4561 = vpop.f32.mrb[0].mxu0
  %v4562 = vadd.f32 0.0, %v4561
  %v4563 = vpop.f32.mrb[0].mxu0
  %4564 = vdwg.mxu0
  %v4565 = vadd.f32 %v4307, %v4551
  %v4566 = vadd.f32 %v4308, %v4554
  %v4567 = vadd.f32 %v4309, %v4559
  %v4568 = vadd.f32 %v4310, %v4562
  %v4569 = vpack.c.bf16 %v4566, %v4565
  %v4570 = vpack.c.bf16 %v4568, %v4567
  %4571 = vmatprep.subr.bf16.mxu0 0
  %4572 = vmatpush1.bf16.msra.mxu0 %v4569
  %4573 = vmatprep.subr.bf16.mxu0 0
  %4574 = vmatpush1.bf16.msra.mxu0 %v4570
  %4575 = vmatprep.subr.bf16.mxu0 0
  %4576 = vmatpush1.bf16.msra.mxu0 0
  %4577 = vmatprep.subr.bf16.mxu0 0
  %4578 = vmatpush1.bf16.msra.mxu0 0
  %4579 = vmatprep.subr.bf16.mxu0 0
  %4580 = vmatpush1.bf16.msra.mxu0 0
  %4581 = vmatprep.subr.bf16.mxu0 0
  %4582 = vmatpush1.bf16.msra.mxu0 0
  %4583 = vmatprep.subr.bf16.mxu0 0
  %4584 = vmatpush1.bf16.msra.mxu0 0
  %4585 = vmatprep.subr.bf16.mxu0 0
  %4586 = vmatpush1.bf16.msra.mxu0 0
  %4587 = vmatprep.subr.bf16.mxu0 0
  %4588 = vmatpush1.bf16.msra.mxu0 0
  %4589 = vmatprep.subr.bf16.mxu0 0
  %4590 = vmatpush1.bf16.msra.mxu0 0
  %4591 = vmatprep.subr.bf16.mxu0 0
  %4592 = vmatpush1.bf16.msra.mxu0 0
  %4593 = vmatprep.subr.bf16.mxu0 0
  %4594 = vmatpush1.bf16.msra.mxu0 0
  %4595 = vmatprep.subr.bf16.mxu0 0
  %4596 = vmatpush1.bf16.msra.mxu0 0
  %4597 = vmatprep.subr.bf16.mxu0 0
  %4598 = vmatpush1.bf16.msra.mxu0 0
  %4599 = vmatprep.subr.bf16.mxu0 0
  %4600 = vmatpush1.bf16.msra.mxu0 0
  %4601 = vmatprep.subr.bf16.mxu0 0
  %4602 = vmatpush1.bf16.msra.mxu0 0
  %4603 = vmatprep.mubr.bf16.mxu0 0
  %4604 = vmatmul.mubr.bf16.gmra.mrb[0].mxu0 %v3071
  %v4605 = vpop.f32.mrb[0].mxu0
  %v4606 = vadd.f32 0.0, %v4605
  %v4607 = vpop.f32.mrb[0].mxu0
  %v4608 = vpop.f32.mrb[0].mxu0
  %v4609 = vadd.f32 0.0, %v4608
  %v4610 = vpop.f32.mrb[0].mxu0
  %4611 = vmatprep.mubr.bf16.mxu0 0
  %4612 = vmatmul.mubr.bf16.gmra.mrb[0].mxu0 %v3074
  %v4613 = vpop.f32.mrb[0].mxu0
  %v4614 = vadd.f32 0.0, %v4613
  %v4615 = vpop.f32.mrb[0].mxu0
  %v4616 = vpop.f32.mrb[0].mxu0
  %v4617 = vadd.f32 0.0, %v4616
  %v4618 = vpop.f32.mrb[0].mxu0
  %4619 = vdwg.mxu0
  %v4620 = vsub.f32 %v4565, %v4606
  %v4621 = vsub.f32 %v4566, %v4609
  %v4622 = vsub.f32 %v4567, %v4614
  %v4623 = vsub.f32 %v4568, %v4617
  %v4624 = vadd.f32 %v3111, %v4293
  %v4625 = vadd.f32 %v3114, %v4296
  %v4626 = vadd.f32 %v3119, %v4301
  %v4627 = vadd.f32 %v3122, %v4304
  %v4628 = vadd.f32 %v4624, %v4606
  %v4629 = vadd.f32 %v4625, %v4609
  %v4630 = vadd.f32 %v4626, %v4614
  %v4631 = vadd.f32 %v4627, %v4617
  %v4632 = vld [vmem:[%s10] sm:$0xf]
  %v4633 = vld [vmem:[%s10 + $0x4] sm:$0xf]
  %v4634 = vld [vmem:[%s10 + $0x8] sm:$0xf]
  %v4635 = vld [vmem:[%s10 + $0xc] sm:$0xf]
  %v4636 = vld [vmem:[%s10 + $0x10] sm:$0xf]
  %v4637 = vld [vmem:[%s10 + $0x14] sm:$0xf]
  %v4638 = vld [vmem:[%s10 + $0x18] sm:$0xf]
  %v4639 = vld [vmem:[%s10 + $0x1c] sm:$0xf]
  %v4640 = vld [vmem:[%s10 + $0x20] sm:$0xf]
  %v4641 = vld [vmem:[%s10 + $0x24] sm:$0xf]
  %v4642 = vld [vmem:[%s10 + $0x28] sm:$0xf]
  %v4643 = vld [vmem:[%s10 + $0x2c] sm:$0xf]
  %v4644 = vld [vmem:[%s10 + $0x30] sm:$0xf]
  %v4645 = vld [vmem:[%s10 + $0x34] sm:$0xf]
  %v4646 = vld [vmem:[%s10 + $0x38] sm:$0xf]
  %v4647 = vld [vmem:[%s10 + $0x3c] sm:$0xf]
  %v4648 = vpack.c.bf16 %v4629, %v4628
  %v4649 = vpack.c.bf16 %v4631, %v4630
  %4650 = vmatprep.subr.bf16.mxu0 0
  %4651 = vmatpush1.bf16.msra.mxu0 %v4648
  %4652 = vmatprep.subr.bf16.mxu0 0
  %4653 = vmatpush1.bf16.msra.mxu0 %v4649
  %4654 = vmatprep.subr.bf16.mxu0 0
  %4655 = vmatpush1.bf16.msra.mxu0 0
  %4656 = vmatprep.subr.bf16.mxu0 0
  %4657 = vmatpush1.bf16.msra.mxu0 0
  %4658 = vmatprep.subr.bf16.mxu0 0
  %4659 = vmatpush1.bf16.msra.mxu0 0
  %4660 = vmatprep.subr.bf16.mxu0 0
  %4661 = vmatpush1.bf16.msra.mxu0 0
  %4662 = vmatprep.subr.bf16.mxu0 0
  %4663 = vmatpush1.bf16.msra.mxu0 0
  %4664 = vmatprep.subr.bf16.mxu0 0
  %4665 = vmatpush1.bf16.msra.mxu0 0
  %4666 = vmatprep.subr.bf16.mxu0 0
  %4667 = vmatpush1.bf16.msra.mxu0 0
  %4668 = vmatprep.subr.bf16.mxu0 0
  %4669 = vmatpush1.bf16.msra.mxu0 0
  %4670 = vmatprep.subr.bf16.mxu0 0
  %4671 = vmatpush1.bf16.msra.mxu0 0
  %4672 = vmatprep.subr.bf16.mxu0 0
  %4673 = vmatpush1.bf16.msra.mxu0 0
  %4674 = vmatprep.subr.bf16.mxu0 0
  %4675 = vmatpush1.bf16.msra.mxu0 0
  %4676 = vmatprep.subr.bf16.mxu0 0
  %4677 = vmatpush1.bf16.msra.mxu0 0
  %4678 = vmatprep.subr.bf16.mxu0 0
  %4679 = vmatpush1.bf16.msra.mxu0 0
  %4680 = vmatprep.subr.bf16.mxu0 0
  %4681 = vmatpush1.bf16.msra.mxu0 0
  %4682 = vmatprep.mubr.bf16.mxu0 0
  %4683 = vmatmul.mubr.bf16.gmra.mrb[0].mxu0 %v2299
  %v4684 = vpop.f32.mrb[0].mxu0
  %v4685 = vadd.f32 0.0, %v4684
  %v4686 = vpop.f32.mrb[0].mxu0
  %v4687 = vpop.f32.mrb[0].mxu0
  %v4688 = vadd.f32 0.0, %v4687
  %v4689 = vpop.f32.mrb[0].mxu0
  %4690 = vmatprep.mubr.bf16.mxu0 0
  %4691 = vmatmul.mubr.bf16.gmra.mrb[0].mxu0 %v2302
  %v4692 = vpop.f32.mrb[0].mxu0
  %v4693 = vadd.f32 0.0, %v4692
  %v4694 = vpop.f32.mrb[0].mxu0
  %v4695 = vpop.f32.mrb[0].mxu0
  %v4696 = vadd.f32 0.0, %v4695
  %v4697 = vpop.f32.mrb[0].mxu0
  %4698 = vdwg.mxu0
  %v4699 = vpack.c.bf16 %v4688, %v4685
  %v4700 = vpack.c.bf16 %v4696, %v4693
  %v4705 = vunpack.c.l.b16 %v4640
  %v4706 = vunpack.c.l.b16 %v4641
  %v4707 = vunpack.c.l.b16 %v4642
  %v4708 = vunpack.c.l.b16 %v4643
  %v4709 = vpack.c.b16 %v4706, %v4705
  %v4710 = vpack.c.b16 %v4708, %v4707
  %v4714 = vsel %vm84, %v4648, 0
  %v4717 = vsel %vm84, %v4649, 0
  %4719 = vmatprep.subr.bf16.mxu0 0
  %4720 = vmatpush1.bf16.msra.mxu0 %v4709
  %4721 = vmatprep.subr.bf16.mxu0 0
  %4722 = vmatpush1.bf16.msra.mxu0 %v4710
  %4723 = vmatprep.subr.bf16.mxu0 0
  %4724 = vmatpush1.bf16.msra.mxu0 0
  %4725 = vmatprep.subr.bf16.mxu0 0
  %4726 = vmatpush1.bf16.msra.mxu0 0
  %4727 = vmatprep.subr.bf16.mxu0 0
  %4728 = vmatpush1.bf16.msra.mxu0 0
  %4729 = vmatprep.subr.bf16.mxu0 0
  %4730 = vmatpush1.bf16.msra.mxu0 0
  %4731 = vmatprep.subr.bf16.mxu0 0
  %4732 = vmatpush1.bf16.msra.mxu0 0
  %4733 = vmatprep.subr.bf16.mxu0 0
  %4734 = vmatpush1.bf16.msra.mxu0 0
  %4735 = vmatprep.subr.bf16.mxu0 0
  %4736 = vmatpush1.bf16.msra.mxu0 0
  %4737 = vmatprep.subr.bf16.mxu0 0
  %4738 = vmatpush1.bf16.msra.mxu0 0
  %4739 = vmatprep.subr.bf16.mxu0 0
  %4740 = vmatpush1.bf16.msra.mxu0 0
  %4741 = vmatprep.subr.bf16.mxu0 0
  %4742 = vmatpush1.bf16.msra.mxu0 0
  %4743 = vmatprep.subr.bf16.mxu0 0
  %4744 = vmatpush1.bf16.msra.mxu0 0
  %4745 = vmatprep.subr.bf16.mxu0 0
  %4746 = vmatpush1.bf16.msra.mxu0 0
  %4747 = vmatprep.subr.bf16.mxu0 0
  %4748 = vmatpush1.bf16.msra.mxu0 0
  %4749 = vmatprep.subr.bf16.mxu0 0
  %4750 = vmatpush1.bf16.msra.mxu0 0
  %4751 = vmatprep.mubr.bf16.mxu0 0
  %4752 = vmatmul.mubr.bf16.gmra.mrb[0].mxu0 %v4714
  %v4753 = vpop.f32.mrb[0].mxu0
  %v4754 = vadd.f32 0.0, %v4753
  %v4755 = vpop.f32.mrb[0].mxu0
  %v4756 = vpop.f32.mrb[0].mxu0
  %v4757 = vadd.f32 0.0, %v4756
  %v4758 = vpop.f32.mrb[0].mxu0
  %4759 = vmatprep.mubr.bf16.mxu0 0
  %4760 = vmatmul.mubr.bf16.gmra.mrb[0].mxu0 %v4717
  %v4761 = vpop.f32.mrb[0].mxu0
  %v4762 = vadd.f32 0.0, %v4761
  %v4763 = vpop.f32.mrb[0].mxu0
  %v4764 = vpop.f32.mrb[0].mxu0
  %v4765 = vadd.f32 0.0, %v4764
  %v4766 = vpop.f32.mrb[0].mxu0
  %4767 = vdwg.mxu0
  %v4772 = vunpack.c.l.b16 %v4636
  %v4773 = vunpack.c.l.b16 %v4637
  %v4774 = vunpack.c.l.b16 %v4638
  %v4775 = vunpack.c.l.b16 %v4639
  %v4776 = vpack.c.b16 %v4773, %v4772
  %v4777 = vpack.c.b16 %v4775, %v4774
  %v4781 = vsel %vm84, %v4699, 0
  %v4784 = vsel %vm84, %v4700, 0
  %4786 = vmatprep.subr.bf16.mxu0 0
  %4787 = vmatpush1.bf16.msra.mxu0 %v4776
  %4788 = vmatprep.subr.bf16.mxu0 0
  %4789 = vmatpush1.bf16.msra.mxu0 %v4777
  %4790 = vmatprep.subr.bf16.mxu0 0
  %4791 = vmatpush1.bf16.msra.mxu0 0
  %4792 = vmatprep.subr.bf16.mxu0 0
  %4793 = vmatpush1.bf16.msra.mxu0 0
  %4794 = vmatprep.subr.bf16.mxu0 0
  %4795 = vmatpush1.bf16.msra.mxu0 0
  %4796 = vmatprep.subr.bf16.mxu0 0
  %4797 = vmatpush1.bf16.msra.mxu0 0
  %4798 = vmatprep.subr.bf16.mxu0 0
  %4799 = vmatpush1.bf16.msra.mxu0 0
  %4800 = vmatprep.subr.bf16.mxu0 0
  %4801 = vmatpush1.bf16.msra.mxu0 0
  %4802 = vmatprep.subr.bf16.mxu0 0
  %4803 = vmatpush1.bf16.msra.mxu0 0
  %4804 = vmatprep.subr.bf16.mxu0 0
  %4805 = vmatpush1.bf16.msra.mxu0 0
  %4806 = vmatprep.subr.bf16.mxu0 0
  %4807 = vmatpush1.bf16.msra.mxu0 0
  %4808 = vmatprep.subr.bf16.mxu0 0
  %4809 = vmatpush1.bf16.msra.mxu0 0
  %4810 = vmatprep.subr.bf16.mxu0 0
  %4811 = vmatpush1.bf16.msra.mxu0 0
  %4812 = vmatprep.subr.bf16.mxu0 0
  %4813 = vmatpush1.bf16.msra.mxu0 0
  %4814 = vmatprep.subr.bf16.mxu0 0
  %4815 = vmatpush1.bf16.msra.mxu0 0
  %4816 = vmatprep.subr.bf16.mxu0 0
  %4817 = vmatpush1.bf16.msra.mxu0 0
  %4818 = vmatprep.mubr.bf16.mxu0 0
  %4819 = vmatmul.mubr.bf16.gmra.mrb[0].mxu0 %v4781
  %v4820 = vpop.f32.mrb[0].mxu0
  %v4821 = vadd.f32 %v4754, %v4820
  %v4822 = vpop.f32.mrb[0].mxu0
  %v4823 = vpop.f32.mrb[0].mxu0
  %v4824 = vadd.f32 %v4757, %v4823
  %v4825 = vpop.f32.mrb[0].mxu0
  %4826 = vmatprep.mubr.bf16.mxu0 0
  %4827 = vmatmul.mubr.bf16.gmra.mrb[0].mxu0 %v4784
  %v4828 = vpop.f32.mrb[0].mxu0
  %v4829 = vadd.f32 %v4762, %v4828
  %v4830 = vpop.f32.mrb[0].mxu0
  %v4831 = vpop.f32.mrb[0].mxu0
  %v4832 = vadd.f32 %v4765, %v4831
  %v4833 = vpop.f32.mrb[0].mxu0
  %4834 = vdwg.mxu0
  %4835 = vmatprep.subr.bf16.mxu0 0
  %4836 = vmatpush1.bf16.msra.mxu0 %v4648
  %4837 = vmatprep.subr.bf16.mxu0 0
  %4838 = vmatpush1.bf16.msra.mxu0 %v4649
  %4839 = vmatprep.subr.bf16.mxu0 0
  %4840 = vmatpush1.bf16.msra.mxu0 0
  %4841 = vmatprep.subr.bf16.mxu0 0
  %4842 = vmatpush1.bf16.msra.mxu0 0
  %4843 = vmatprep.subr.bf16.mxu0 0
  %4844 = vmatpush1.bf16.msra.mxu0 0
  %4845 = vmatprep.subr.bf16.mxu0 0
  %4846 = vmatpush1.bf16.msra.mxu0 0
  %4847 = vmatprep.subr.bf16.mxu0 0
  %4848 = vmatpush1.bf16.msra.mxu0 0
  %4849 = vmatprep.subr.bf16.mxu0 0
  %4850 = vmatpush1.bf16.msra.mxu0 0
  %4851 = vmatprep.subr.bf16.mxu0 0
  %4852 = vmatpush1.bf16.msra.mxu0 0
  %4853 = vmatprep.subr.bf16.mxu0 0
  %4854 = vmatpush1.bf16.msra.mxu0 0
  %4855 = vmatprep.subr.bf16.mxu0 0
  %4856 = vmatpush1.bf16.msra.mxu0 0
  %4857 = vmatprep.subr.bf16.mxu0 0
  %4858 = vmatpush1.bf16.msra.mxu0 0
  %4859 = vmatprep.subr.bf16.mxu0 0
  %4860 = vmatpush1.bf16.msra.mxu0 0
  %4861 = vmatprep.subr.bf16.mxu0 0
  %4862 = vmatpush1.bf16.msra.mxu0 0
  %4863 = vmatprep.subr.bf16.mxu0 0
  %4864 = vmatpush1.bf16.msra.mxu0 0
  %4865 = vmatprep.subr.bf16.mxu0 0
  %4866 = vmatpush1.bf16.msra.mxu0 0
  %4867 = vmatprep.mubr.bf16.mxu0 0
  %4868 = vmatmul.mubr.bf16.gmra.mrb[0].mxu0 %v2484
  %v4869 = vpop.f32.mrb[0].mxu0
  %v4870 = vadd.f32 0.0, %v4869
  %v4871 = vpop.f32.mrb[0].mxu0
  %v4872 = vpop.f32.mrb[0].mxu0
  %v4873 = vadd.f32 0.0, %v4872
  %v4874 = vpop.f32.mrb[0].mxu0
  %4875 = vmatprep.mubr.bf16.mxu0 0
  %4876 = vmatmul.mubr.bf16.gmra.mrb[0].mxu0 %v2487
  %v4877 = vpop.f32.mrb[0].mxu0
  %v4878 = vadd.f32 0.0, %v4877
  %v4879 = vpop.f32.mrb[0].mxu0
  %v4880 = vpop.f32.mrb[0].mxu0
  %v4881 = vadd.f32 0.0, %v4880
  %v4882 = vpop.f32.mrb[0].mxu0
  %4883 = vdwg.mxu0
  %v4884 = vpack.c.bf16 %v4873, %v4870
  %v4885 = vpack.c.bf16 %v4881, %v4878
  %v4890 = vunpack.c.l.b16 %v4644
  %v4891 = vunpack.c.l.b16 %v4645
  %v4892 = vunpack.c.l.b16 %v4646
  %v4893 = vunpack.c.l.b16 %v4647
  %v4894 = vpack.c.b16 %v4891, %v4890
  %v4895 = vpack.c.b16 %v4893, %v4892
  %v4899 = vsel %vm84, %v4884, 0
  %v4902 = vsel %vm84, %v4885, 0
  %4904 = vmatprep.subr.bf16.mxu0 0
  %4905 = vmatpush1.bf16.msra.mxu0 %v4894
  %4906 = vmatprep.subr.bf16.mxu0 0
  %4907 = vmatpush1.bf16.msra.mxu0 %v4895
  %4908 = vmatprep.subr.bf16.mxu0 0
  %4909 = vmatpush1.bf16.msra.mxu0 0
  %4910 = vmatprep.subr.bf16.mxu0 0
  %4911 = vmatpush1.bf16.msra.mxu0 0
  %4912 = vmatprep.subr.bf16.mxu0 0
  %4913 = vmatpush1.bf16.msra.mxu0 0
  %4914 = vmatprep.subr.bf16.mxu0 0
  %4915 = vmatpush1.bf16.msra.mxu0 0
  %4916 = vmatprep.subr.bf16.mxu0 0
  %4917 = vmatpush1.bf16.msra.mxu0 0
  %4918 = vmatprep.subr.bf16.mxu0 0
  %4919 = vmatpush1.bf16.msra.mxu0 0
  %4920 = vmatprep.subr.bf16.mxu0 0
  %4921 = vmatpush1.bf16.msra.mxu0 0
  %4922 = vmatprep.subr.bf16.mxu0 0
  %4923 = vmatpush1.bf16.msra.mxu0 0
  %4924 = vmatprep.subr.bf16.mxu0 0
  %4925 = vmatpush1.bf16.msra.mxu0 0
  %4926 = vmatprep.subr.bf16.mxu0 0
  %4927 = vmatpush1.bf16.msra.mxu0 0
  %4928 = vmatprep.subr.bf16.mxu0 0
  %4929 = vmatpush1.bf16.msra.mxu0 0
  %4930 = vmatprep.subr.bf16.mxu0 0
  %4931 = vmatpush1.bf16.msra.mxu0 0
  %4932 = vmatprep.subr.bf16.mxu0 0
  %4933 = vmatpush1.bf16.msra.mxu0 0
  %4934 = vmatprep.subr.bf16.mxu0 0
  %4935 = vmatpush1.bf16.msra.mxu0 0
  %4936 = vmatprep.mubr.bf16.mxu0 0
  %4937 = vmatmul.mubr.bf16.gmra.mrb[0].mxu0 %v4899
  %v4938 = vpop.f32.mrb[0].mxu0
  %v4939 = vadd.f32 0.0, %v4938
  %v4940 = vpop.f32.mrb[0].mxu0
  %v4941 = vpop.f32.mrb[0].mxu0
  %v4942 = vadd.f32 0.0, %v4941
  %v4943 = vpop.f32.mrb[0].mxu0
  %4944 = vmatprep.mubr.bf16.mxu0 0
  %4945 = vmatmul.mubr.bf16.gmra.mrb[0].mxu0 %v4902
  %v4946 = vpop.f32.mrb[0].mxu0
  %v4947 = vadd.f32 0.0, %v4946
  %v4948 = vpop.f32.mrb[0].mxu0
  %v4949 = vpop.f32.mrb[0].mxu0
  %v4950 = vadd.f32 0.0, %v4949
  %v4951 = vpop.f32.mrb[0].mxu0
  %4952 = vdwg.mxu0
  %v4953 = vadd.f32 %v4821, %v4939
  %v4954 = vadd.f32 %v4824, %v4942
  %v4955 = vadd.f32 %v4829, %v4947
  %v4956 = vadd.f32 %v4832, %v4950
  %v4957 = vadd.f32 %v132, %v4953
  %v4958 = vadd.f32 %v135, %v4954
  %v4959 = vadd.f32 %v140, %v4955
  %v4960 = vadd.f32 %v143, %v4956
  %v4961 = vld [vmem:[%s3 + $0x50] sm:$0xf]
  %v4962 = vld [vmem:[%s3 + $0x54] sm:$0xf]
  %v4963 = vld [vmem:[%s3 + $0x58] sm:$0xf]
  %v4964 = vld [vmem:[%s3 + $0x5c] sm:$0xf]
  %v4965 = vsel %vm84, %v4620, 0.0
  %4966 = vadd.xlane.f32.xlu0 %v4965
  %v4967 = vpop.xlane.xlu0 %4966
  %v4968 = vsel %vm84, %v4621, 0.0
  %4969 = vadd.xlane.f32.xlu0 %v4968
  %v4970 = vpop.xlane.xlu0 %4969
  %v4971 = vsel %vm84, %v4622, 0.0
  %4972 = vadd.xlane.f32.xlu0 %v4971
  %v4973 = vpop.xlane.xlu0 %4972
  %v4974 = vsel %vm84, %v4623, 0.0
  %4975 = vadd.xlane.f32.xlu0 %v4974
  %v4976 = vpop.xlane.xlu0 %4975
  %v4977 = vmul.f32 %v4967, %v2142
  %v4978 = vmul.f32 %v4970, %v2142
  %v4979 = vmul.f32 %v4973, %v2142
  %v4980 = vmul.f32 %v4976, %v2142
  %v4981 = vsub.f32 %v4620, %v4977
  %v4982 = vsub.f32 %v4621, %v4978
  %v4983 = vsub.f32 %v4622, %v4979
  %v4984 = vsub.f32 %v4623, %v4980
  %v4985 = vmul.f32 %v4981, %v4981
  %v4986 = vmul.f32 %v4982, %v4982
  %v4987 = vmul.f32 %v4983, %v4983
  %v4988 = vmul.f32 %v4984, %v4984
  %v4989 = vsel %vm84, %v4985, 0.0
  %4990 = vadd.xlane.f32.xlu0 %v4989
  %v4991 = vpop.xlane.xlu0 %4990
  %v4992 = vsel %vm84, %v4986, 0.0
  %4993 = vadd.xlane.f32.xlu0 %v4992
  %v4994 = vpop.xlane.xlu0 %4993
  %v4995 = vsel %vm84, %v4987, 0.0
  %4996 = vadd.xlane.f32.xlu0 %v4995
  %v4997 = vpop.xlane.xlu0 %4996
  %v4998 = vsel %vm84, %v4988, 0.0
  %4999 = vadd.xlane.f32.xlu0 %v4998
  %v5000 = vpop.xlane.xlu0 %4999
  %v5001 = vmul.f32 %v4991, %v2142
  %v5002 = vmul.f32 %v4994, %v2142
  %v5003 = vmul.f32 %v4997, %v2142
  %v5004 = vmul.f32 %v5000, %v2142
  %v5005 = vadd.f32 %v5001, 1e-05
  %v5006 = vadd.f32 %v5002, 1e-05
  %v5007 = vadd.f32 %v5003, 1e-05
  %v5008 = vadd.f32 %v5004, 1e-05
  %v5009 = vrsqrt.pop %v5005
  %v5010 = vrsqrt.pop %v5006
  %v5011 = vrsqrt.pop %v5007
  %v5012 = vrsqrt.pop %v5008
  %v5013 = vmul.f32 %v4981, %v5009
  %v5014 = vmul.f32 %v4982, %v5010
  %v5015 = vmul.f32 %v4983, %v5011
  %v5016 = vmul.f32 %v4984, %v5012
  %s5017 = scalar_lea.vmem %s9, 11
  %v5018 = vld [vmem:[%s5017] sm:$0x1]
  %v5020 = vlaneseq
  %v5021 = vshrl.u32 %v5020, 7
  %v5022 = vsub.s32 0, %v5021
  %v5023 = vrot.slane %v5018, %v5022
  %v5025 = vmul.f32 %v5013, %v5023
  %v5026 = vmul.f32 %v5014, %v5023
  %v5027 = vmul.f32 %v5015, %v5023
  %v5028 = vmul.f32 %v5016, %v5023
  %s5029 = scalar_lea.vmem %s9, 12
  %v5030 = vld [vmem:[%s5029] sm:$0x1]
  %v5032 = vlaneseq
  %v5033 = vshrl.u32 %v5032, 7
  %v5034 = vsub.s32 0, %v5033
  %v5035 = vrot.slane %v5030, %v5034
  %v5037 = vadd.f32 %v5025, %v5035
  %v5038 = vadd.f32 %v5026, %v5035
  %v5039 = vadd.f32 %v5027, %v5035
  %v5040 = vadd.f32 %v5028, %v5035
  %v5041 = vpack.c.bf16 %v5038, %v5037
  %v5042 = vpack.c.bf16 %v5040, %v5039
  %v5047 = vunpack.c.l.b16 %v4961
  %v5048 = vunpack.c.l.b16 %v4962
  %v5049 = vunpack.c.l.b16 %v4963
  %v5050 = vunpack.c.l.b16 %v4964
  %v5051 = vpack.c.b16 %v5048, %v5047
  %v5052 = vpack.c.b16 %v5050, %v5049
  %v5054 = vsel %vm84, %v5051, 0
  %v5057 = vsel %vm84, %v5052, 0
  %5059 = vmatprep.subr.bf16.mxu0 0
  %5060 = vmatpush1.bf16.msra.mxu0 %v5041
  %5061 = vmatprep.subr.bf16.mxu0 0
  %5062 = vmatpush1.bf16.msra.mxu0 %v5042
  %5063 = vmatprep.subr.bf16.mxu0 0
  %5064 = vmatpush1.bf16.msra.mxu0 0
  %5065 = vmatprep.subr.bf16.mxu0 0
  %5066 = vmatpush1.bf16.msra.mxu0 0
  %5067 = vmatprep.subr.bf16.mxu0 0
  %5068 = vmatpush1.bf16.msra.mxu0 0
  %5069 = vmatprep.subr.bf16.mxu0 0
  %5070 = vmatpush1.bf16.msra.mxu0 0
  %5071 = vmatprep.subr.bf16.mxu0 0
  %5072 = vmatpush1.bf16.msra.mxu0 0
  %5073 = vmatprep.subr.bf16.mxu0 0
  %5074 = vmatpush1.bf16.msra.mxu0 0
  %5075 = vmatprep.subr.bf16.mxu0 0
  %5076 = vmatpush1.bf16.msra.mxu0 0
  %5077 = vmatprep.subr.bf16.mxu0 0
  %5078 = vmatpush1.bf16.msra.mxu0 0
  %5079 = vmatprep.subr.bf16.mxu0 0
  %5080 = vmatpush1.bf16.msra.mxu0 0
  %5081 = vmatprep.subr.bf16.mxu0 0
  %5082 = vmatpush1.bf16.msra.mxu0 0
  %5083 = vmatprep.subr.bf16.mxu0 0
  %5084 = vmatpush1.bf16.msra.mxu0 0
  %5085 = vmatprep.subr.bf16.mxu0 0
  %5086 = vmatpush1.bf16.msra.mxu0 0
  %5087 = vmatprep.subr.bf16.mxu0 0
  %5088 = vmatpush1.bf16.msra.mxu0 0
  %5089 = vmatprep.subr.bf16.mxu0 0
  %5090 = vmatpush1.bf16.msra.mxu0 0
  %5091 = vmatprep.mubr.bf16.mxu0 0
  %5092 = vmatmul.mubr.bf16.gmra.mrb[0].mxu0 %v5054
  %v5093 = vpop.f32.mrb[0].mxu0
  %v5094 = vadd.f32 0.0, %v5093
  %v5095 = vpop.f32.mrb[0].mxu0
  %v5096 = vpop.f32.mrb[0].mxu0
  %v5097 = vadd.f32 0.0, %v5096
  %v5098 = vpop.f32.mrb[0].mxu0
  %5099 = vmatprep.mubr.bf16.mxu0 0
  %5100 = vmatmul.mubr.bf16.gmra.mrb[0].mxu0 %v5057
  %v5101 = vpop.f32.mrb[0].mxu0
  %v5102 = vadd.f32 0.0, %v5101
  %v5103 = vpop.f32.mrb[0].mxu0
  %v5104 = vpop.f32.mrb[0].mxu0
  %v5105 = vadd.f32 0.0, %v5104
  %v5106 = vpop.f32.mrb[0].mxu0
  %5107 = vdwg.mxu0
  %v5108 = vsub.f32 %v5037, %v5094
  %v5109 = vsub.f32 %v5038, %v5097
  %v5110 = vsub.f32 %v5039, %v5102
  %v5111 = vsub.f32 %v5040, %v5105
  %v5112 = vpack.c.bf16 %v5109, %v5108
  %v5113 = vpack.c.bf16 %v5111, %v5110
  %v5114 = vld [vmem:[%s11] sm:$0x1]
  %v5116 = vlaneseq
  %v5117 = vshrl.u32 %v5116, 7
  %v5118 = vsub.s32 0, %v5117
  %v5119 = vrot.slane %v5114, %v5118
  %v5125 = vunpack.c.l.b16 %v4632
  %v5126 = vunpack.c.l.b16 %v4633
  %v5127 = vunpack.c.l.b16 %v4634
  %v5128 = vunpack.c.l.b16 %v4635
  %v5129 = vpack.c.b16 %v5126, %v5125
  %v5130 = vpack.c.b16 %v5128, %v5127
  %v5134 = vsel %vm84, %v5112, 0
  %v5137 = vsel %vm84, %v5113, 0
  %5139 = vmatprep.subr.bf16.mxu0 0
  %5140 = vmatpush1.bf16.msra.mxu0 %v5129
  %5141 = vmatprep.subr.bf16.mxu0 0
  %5142 = vmatpush1.bf16.msra.mxu0 %v5130
  %5143 = vmatprep.subr.bf16.mxu0 0
  %5144 = vmatpush1.bf16.msra.mxu0 0
  %5145 = vmatprep.subr.bf16.mxu0 0
  %5146 = vmatpush1.bf16.msra.mxu0 0
  %5147 = vmatprep.subr.bf16.mxu0 0
  %5148 = vmatpush1.bf16.msra.mxu0 0
  %5149 = vmatprep.subr.bf16.mxu0 0
  %5150 = vmatpush1.bf16.msra.mxu0 0
  %5151 = vmatprep.subr.bf16.mxu0 0
  %5152 = vmatpush1.bf16.msra.mxu0 0
  %5153 = vmatprep.subr.bf16.mxu0 0
  %5154 = vmatpush1.bf16.msra.mxu0 0
  %5155 = vmatprep.subr.bf16.mxu0 0
  %5156 = vmatpush1.bf16.msra.mxu0 0
  %5157 = vmatprep.subr.bf16.mxu0 0
  %5158 = vmatpush1.bf16.msra.mxu0 0
  %5159 = vmatprep.subr.bf16.mxu0 0
  %5160 = vmatpush1.bf16.msra.mxu0 0
  %5161 = vmatprep.subr.bf16.mxu0 0
  %5162 = vmatpush1.bf16.msra.mxu0 0
  %5163 = vmatprep.subr.bf16.mxu0 0
  %5164 = vmatpush1.bf16.msra.mxu0 0
  %5165 = vmatprep.subr.bf16.mxu0 0
  %5166 = vmatpush1.bf16.msra.mxu0 0
  %5167 = vmatprep.subr.bf16.mxu0 0
  %5168 = vmatpush1.bf16.msra.mxu0 0
  %5169 = vmatprep.subr.bf16.mxu0 0
  %5170 = vmatpush1.bf16.msra.mxu0 0
  %5171 = vmatprep.mubr.bf16.mxu0 0
  %5172 = vmatmul.mubr.bf16.gmra.mrb[0].mxu0 %v5134
  %v5173 = vpop.f32.mrb[0].mxu0
  %v5174 = vadd.f32 %v5119, %v5173
  %v5175 = vpop.f32.mrb[0].mxu0
  %v5176 = vpop.f32.mrb[0].mxu0
  %v5177 = vadd.f32 %v5119, %v5176
  %v5178 = vpop.f32.mrb[0].mxu0
  %5179 = vmatprep.mubr.bf16.mxu0 0
  %5180 = vmatmul.mubr.bf16.gmra.mrb[0].mxu0 %v5137
  %v5181 = vpop.f32.mrb[0].mxu0
  %v5182 = vadd.f32 %v5119, %v5181
  %v5183 = vpop.f32.mrb[0].mxu0
  %v5184 = vpop.f32.mrb[0].mxu0
  %v5185 = vadd.f32 %v5119, %v5184
  %v5186 = vpop.f32.mrb[0].mxu0
  %5187 = vdwg.mxu0
  %v5188 = vadd.f32 %v4957, %v5174
  %v5189 = vadd.f32 %v4958, %v5177
  %v5190 = vadd.f32 %v4959, %v5182
  %v5191 = vadd.f32 %v4960, %v5185
  %5192 = vst.msk [vmem:[%s12] sm:$0xff] %vm239, %v5188
  %5193 = vst.msk [vmem:[%s12 + $0x8] sm:$0xff] %vm239, %v5189
  %5194 = vst.msk [vmem:[%s12 + $0x10] sm:$0xff] %vm239, %v5190
  %5195 = vst.msk [vmem:[%s12 + $0x18] sm:$0xff] %vm239, %v5191
  // Predicated region
  $region50: #{forward.1} parent=0 // pred_check
    _
  $region51: #{forward.1} parent=0 // pred_check_branch
    %5197 = sbr.rel (0) target = $region53
  $region52: #{forward.1} parent=0 // pred_region
    _
  $region53: #{forward.1} parent=0 // pred_fallthru
    _
  // Predicated region
  $region54: #{forward.1} parent=0 // pred_check
    _
  $region55: #{forward.1} parent=0 // pred_check_branch
    %5199 = sbr.rel (0) target = $region57
  $region56: #{forward.1} parent=0 // pred_region
    _
  $region57: #{forward.1} parent=0 // pred_fallthru
    _

</llo_original>
